<compile_context>
chip_gen: v6e
topology: v6e:2x2x1
jax: 0.10.0
libtpu: 0.0.40
codegen_flags: <defaults>
</compile_context>

<pallas_src>
import functools
import math

import jax
import jax.numpy as jnp
from jax.experimental import pallas as pl
from jax.experimental.pallas import tpu as pltpu  # noqa: F401  (TPU backend)


# --------------------------- BlockSpec helpers -------------------------------

def _full_spec_shape(shape):
    nd = len(shape)
    return pl.BlockSpec(shape, lambda i, _nd=nd: (0,) * _nd)


def _full_spec(a):
    return _full_spec_shape(a.shape)


# --------------------------- kernel 1: gate + node_emb -----------------------

def _gate_node_kernel(x_ref, fw_ref, fb_ref, nw_ref, nb_ref, o_ref):
    """node_emb = relu((f*x + (1-f)*tanh(x)) @ Wn + bn), f = sigmoid(x @ Wf + bf)."""
    x = x_ref[...]
    f = jax.nn.sigmoid(
        jnp.dot(x, fw_ref[...], preferred_element_type=jnp.float32) + fb_ref[...])
    h_enc = f * x + (1.0 - f) * jnp.tanh(x)
    ne = jnp.dot(h_enc, nw_ref[...], preferred_element_type=jnp.float32) + nb_ref[...]
    o_ref[...] = jnp.maximum(ne, 0.0)


def gate_node_call(x2, p):
    M, _ = x2.shape
    G = p["node_emb"]["w"].shape[1]
    args = [x2, p["f_gate"]["w"], p["f_gate"]["b"],
            p["node_emb"]["w"], p["node_emb"]["b"]]
    return pl.pallas_call(
        _gate_node_kernel,
        grid=(1,),
        in_specs=[_full_spec(a) for a in args],
        out_specs=_full_spec_shape((M, G)),
        out_shape=jax.ShapeDtypeStruct((M, G), jnp.float32),
    )(*args)


# --------------------------- kernel 2: fused edge / encoder / heads ----------

def _edge_fused_kernel(
        pairs_ref, n1_ref, n2_ref, seg_ref,
        e0_w, e0_b, e1_w, e1_b, e2_w, e2_b,
        pe_w, pe_b, peg_w, peg_b, peb_w, peb_b,
        pm_w, pm_b, ps_w, ps_b, pmij_w, pmij_b,
        qe_w, qe_b, qeg_w, qeg_b, qeb_w, qeb_b,
        qm_w, qm_b, qs_w, qs_b, qma_w, qma_b, qsa_w, qsa_b,
        tr_w, tr_b,
        tei_ref, at_ref, ab_ref, klg_ref, klb_ref):
    eps = 1e-6

    def lin(v, w_ref, b_ref, act=None):
        y = jnp.dot(v, w_ref[...], preferred_element_type=jnp.float32) + b_ref[...]
        if act == "relu":
            y = jnp.maximum(y, 0.0)
        elif act == "sigmoid":
            y = jax.nn.sigmoid(y)
        elif act == "softplus":
            y = jax.nn.softplus(y)
        return y

    pairs = pairs_ref[...]                                   # (M, 2G)

    # gen_edge_emb (Dropout = identity at inference)
    e = lin(pairs, e0_w, e0_b, "relu")
    e = lin(e, e1_w, e1_b, "relu")
    edge_emb = lin(e, e2_w, e2_b)                            # (M, G)

    # prior encode_mean_std + prior_mij
    pr_enc = lin(edge_emb, pe_w, pe_b, "relu")
    pr_g = lin(pr_enc, peg_w, peg_b, "relu")
    pr_bv = lin(pr_enc, peb_w, peb_b, "relu")
    prior_mean = lin(pr_g, pm_w, pm_b)                       # (M, 1)
    prior_std = lin(pr_g, ps_w, ps_b, "softplus")            # (M, 1)
    prior_mij = 0.4 * lin(pr_bv, pmij_w, pmij_b, "sigmoid")  # (M, G)

    # posterior encode_mean_std + approx heads
    po_enc = lin(edge_emb, qe_w, qe_b, "relu")
    po_g = lin(po_enc, qeg_w, qeg_b, "relu")
    po_bv = lin(po_enc, qeb_w, qeb_b, "relu")
    post_mean = lin(po_g, qm_w, qm_b)                        # (M, 1)
    post_std = lin(po_g, qs_w, qs_b, "softplus")             # (M, 1)
    post_mean_approx = lin(po_bv, qma_w, qma_b)              # (M, 1)
    post_std_approx = lin(po_bv, qsa_w, qsa_b, "softplus")   # (M, 1)

    # Poisson post_mij
    nij = 2.0 * post_mean_approx - 1.0
    nij_ = nij * nij + 8.0 * post_std_approx * post_std_approx
    post_mij = 0.25 * (nij + jnp.sqrt(nij_)) + eps           # (M, 1)

    # sample_repara
    std_alpha = jnp.sqrt(post_mij)
    alpha_tilde = jax.nn.softplus(n1_ref[...] * std_alpha + post_mij)
    sqrt_at = jnp.sqrt(alpha_tilde)
    mean_sij = alpha_tilde * post_mean
    std_sij = sqrt_at * post_std
    s_ij = n2_ref[...] * std_sij + mean_sij
    alpha_bar = jnp.maximum(s_ij * alpha_tilde, 0.0)         # relu(alpha_bar)

    at_ref[...] = alpha_tilde
    ab_ref[...] = alpha_bar

    # ei = sum_P(alpha_bar * edge_emb) / (sum_P(alpha_bar) + eps), per batch,
    # expressed as a segment-matrix matmul so the reduction runs on the MXU.
    seg = seg_ref[...]                                       # (B, M)
    num = jnp.dot(seg, alpha_bar * edge_emb,
                  preferred_element_type=jnp.float32)        # (B, G)
    den = jnp.dot(seg, alpha_bar,
                  preferred_element_type=jnp.float32) + 1e-6  # (B, 1)
    ei = num / den
    tei_ref[...] = lin(ei, tr_w, tr_b)                       # transform(ei) (B, G)

    # KL (Gaussian)
    mean_prior = alpha_tilde * prior_mean
    std_prior = sqrt_at * prior_std
    kld_g = (2.0 * jnp.log(std_prior + eps) - 2.0 * jnp.log(std_sij + eps)
             + (std_sij * std_sij + (mean_sij - mean_prior) ** 2)
             / ((std_prior + eps) * (std_prior + eps)) - 1.0)  # (M, 1)
    klg_ref[...] = 0.5 * jnp.sum(jnp.abs(kld_g), axis=0, keepdims=True)  # (1, 1)

    # KL (Poisson upper bound)
    kld_b = (prior_mij - post_mij
             + post_mij * (jnp.log(post_mij + eps) - jnp.log(prior_mij + eps)))  # (M, G)
    klb_ref[...] = jnp.sum(jnp.sum(jnp.abs(kld_b), axis=1, keepdims=True),
                           axis=0, keepdims=True)            # (1, 1)


def edge_fused_call(node_pairs, noise1, noise2, seg, p):
    M = node_pairs.shape[0]
    G = node_pairs.shape[1] // 2
    B = seg.shape[0]
    args = [
        node_pairs, noise1, noise2, seg,
        p["edge0"]["w"], p["edge0"]["b"],
        p["edge1"]["w"], p["edge1"]["b"],
        p["edge2"]["w"], p["edge2"]["b"],
        p["prior_enc"]["w"], p["prior_enc"]["b"],
        p["prior_enc_g"]["w"], p["prior_enc_g"]["b"],
        p["prior_enc_b"]["w"], p["prior_enc_b"]["b"],
        p["prior_mean"]["w"], p["prior_mean"]["b"],
        p["prior_std"]["w"], p["prior_std"]["b"],
        p["prior_mij"]["w"], p["prior_mij"]["b"],
        p["post_enc"]["w"], p["post_enc"]["b"],
        p["post_enc_g"]["w"], p["post_enc_g"]["b"],
        p["post_enc_b"]["w"], p["post_enc_b"]["b"],
        p["post_mean"]["w"], p["post_mean"]["b"],
        p["post_std"]["w"], p["post_std"]["b"],
        p["post_mean_approx"]["w"], p["post_mean_approx"]["b"],
        p["post_std_approx"]["w"], p["post_std_approx"]["b"],
        p["transform"]["w"], p["transform"]["b"],
    ]
    out_shape = (
        jax.ShapeDtypeStruct((B, G), jnp.float32),   # transformed ei
        jax.ShapeDtypeStruct((M, 1), jnp.float32),   # alpha_tilde
        jax.ShapeDtypeStruct((M, 1), jnp.float32),   # alpha_bar
        jax.ShapeDtypeStruct((1, 1), jnp.float32),   # kl_g
        jax.ShapeDtypeStruct((1, 1), jnp.float32),   # kl_b
    )
    out_specs = [
        _full_spec_shape((B, G)),
        _full_spec_shape((M, 1)),
        _full_spec_shape((M, 1)),
        _full_spec_shape((1, 1)),
        _full_spec_shape((1, 1)),
    ]
    return pl.pallas_call(
        _edge_fused_kernel,
        grid=(1,),
        in_specs=[_full_spec(a) for a in args],
        out_specs=out_specs,
        out_shape=out_shape,
    )(*args)


# --------------------------- kernel 3: SRU stack ------------------------------

def _sru_stack_kernel(*refs, T, B, H, projs):
    # TODO(synk): the reference uses the external `sru` package; a classic SRU
    # cell (Lei et al. 2017) recurrence with a projection highway when
    # input_size != hidden_size is implemented here, which may differ from the
    # library's variant.
    it = iter(refs)
    x_ref = next(it)
    layers = []
    for proj in projs:
        n = 8 if proj else 6
        layers.append((proj, [next(it) for _ in range(n)]))
    o_ref = next(it)

    x = x_ref[...]                                            # (T*B, Din)
    for proj, ws in layers:
        if proj:
            wx, bx, wf, bf, wr, br, whw, bhw = ws
        else:
            wx, bx, wf, bf, wr, br = ws
            whw = bhw = None
        xt_all = jnp.dot(x, wx[...], preferred_element_type=jnp.float32) + bx[...]
        f_all = jax.nn.sigmoid(
            jnp.dot(x, wf[...], preferred_element_type=jnp.float32) + bf[...])
        r_all = jax.nn.sigmoid(
            jnp.dot(x, wr[...], preferred_element_type=jnp.float32) + br[...])
        if proj:
            xh_all = jnp.dot(x, whw[...], preferred_element_type=jnp.float32) + bhw[...]
        else:
            xh_all = x
        c = jnp.zeros((B, H), jnp.float32)
        hs = []
        for t in range(T):                                    # static unroll, T small
            lo, hi = t * B, (t + 1) * B
            ft = f_all[lo:hi, :]
            rt = r_all[lo:hi, :]
            c = ft * c + (1.0 - ft) * xt_all[lo:hi, :]
            h = rt * jnp.tanh(c) + (1.0 - rt) * xh_all[lo:hi, :]
            hs.append(h)
        x = jnp.concatenate(hs, axis=0)                       # (T*B, H)
    o_ref[...] = x


def sru_stack_call(x0, sru_params, *, T, B, H):
    args = [x0]
    projs = []
    for layer in sru_params:
        args += [layer["wx"]["w"], layer["wx"]["b"],
                 layer["wf"]["w"], layer["wf"]["b"],
                 layer["wr"]["w"], layer["wr"]["b"]]
        if "hw" in layer:
            args += [layer["hw"]["w"], layer["hw"]["b"]]
            projs.append(True)
        else:
            projs.append(False)
    kernel = functools.partial(_sru_stack_kernel, T=T, B=B, H=H, projs=tuple(projs))
    return pl.pallas_call(
        kernel,
        grid=(1,),
        in_specs=[_full_spec(a) for a in args],
        out_specs=_full_spec_shape((T * B, H)),
        out_shape=jax.ShapeDtypeStruct((T * B, H), jnp.float32),
    )(*args)


# --------------------------- parameters ---------------------------------------

def init_params(key, h_dim, graph_node_dim, layer_num_rnn):
    keys = iter(jax.random.split(key, 128))

    def lin(in_f, out_f):
        k1, k2 = jax.random.split(next(keys))
        s = 1.0 / math.sqrt(in_f)
        # Weights stored pre-transposed to (in, out); bias pre-reshaped to (1, out)
        # so no transposes/reshapes are emitted per call.
        w = jax.random.uniform(k1, (in_f, out_f), jnp.float32, -s, s)
        b = jax.random.uniform(k2, (1, out_f), jnp.float32, -s, s)
        return {"w": w, "b": b}

    G, H = graph_node_dim, h_dim
    p = {
        "f_gate": lin(H, H),
        "node_emb": lin(H, G),
        "transform": lin(G, G),
        "edge0": lin(2 * G, G),
        "edge1": lin(G, G),
        "edge2": lin(G, G),
        "prior_enc": lin(G, G),
        "prior_enc_g": lin(G, G),
        "prior_enc_b": lin(G, G),
        "prior_mean": lin(G, 1),
        "prior_std": lin(G, 1),
        "prior_mij": lin(G, G),
        "post_enc": lin(G, G),
        "post_enc_g": lin(G, G),
        "post_enc_b": lin(G, G),
        "post_mean": lin(G, 1),
        "post_std": lin(G, 1),
        "post_mean_approx": lin(G, 1),
        "post_std_approx": lin(G, 1),
    }
    sru = []
    d_in = G
    for _ in range(layer_num_rnn):
        layer = {"wx": lin(d_in, H), "wf": lin(d_in, H), "wr": lin(d_in, H)}
        if d_in != H:
            layer["hw"] = lin(d_in, H)
        sru.append(layer)
        d_in = H
    p["sru"] = sru
    return p


# --------------------------- forward ------------------------------------------

def rtn_forward(params, x, noise1, noise2, *, graph_node_dim, window_size):
    T, B, H = x.shape
    G = graph_node_dim
    W = window_size
    P = W * (W - 1) // 2
    M = B * P

    # kernel 1: f_t = sigmoid(f_gate(ht_enc)); h_enc = f*h + (1-f)*tanh(h);
    #           node_emb = relu(node_emb(h_enc))      -- all fused.
    ht_enc = jnp.transpose(x, (1, 0, 2)).reshape(B * T, H).astype(jnp.float32)
    node_emb = gate_node_call(ht_enc, params).reshape(B, T, G)

    # node pairs (static slicing/concat, same ordering as the PyTorch loop)
    chunks = []
    for i in range(W - 1):
        start = (W - i - 2) * (W - i - 1) // 2
        one = jnp.broadcast_to(node_emb[:, W - i - 1:W - i, :], (B, W - i - 1, G))
        two = node_emb[:, :W - i - 1, :]
        chunks.append((start, jnp.concatenate([one, two], axis=2)))
    chunks.sort(key=lambda c: c[0])
    node_pairs = jnp.concatenate([c for _, c in chunks], axis=1)     # (B, P, 2G)
    node_pairs2 = node_pairs.reshape(M, 2 * G)

    # constant per-batch segment matrix for the weighted pool (row m -> batch m // P)
    seg = jnp.repeat(jnp.eye(B, dtype=jnp.float32), P, axis=1)       # (B, M)

    # kernel 2: edge MLP + prior/post encoders + heads + Poisson + sampling +
    #           weighted pool + transform + KL reductions, one launch.
    t_ei, alpha_tilde, alpha_bar, klg, klb = edge_fused_call(
        node_pairs2, noise1.reshape(M, 1).astype(jnp.float32),
        noise2.reshape(M, 1).astype(jnp.float32), seg, params)

    # kernel 3: SRU stack (res=False branch) on the time-broadcast transformed ei.
    x0 = jnp.broadcast_to(t_ei[None, :, :], (T, B, G)).reshape(T * B, G)
    ht_res = sru_stack_call(x0, params["sru"], T=T, B=B, H=H).reshape(T, B, H)

    return {"ht_output": ht_res,
            "kl_g": klg[0, 0],
            "kl_b": klb[0, 0],
            "summ_graph": alpha_tilde.reshape(B, P, 1),
            "spec_graph": alpha_bar.reshape(B, P, 1)}


# --------------------------- driver ------------------------------------------

if __name__ == "__main__":
    h_dim = 32
    graph_node_dim = 16
    layer_num_rnn = 2
    window_size = 8            # == time_step (forward indexes node_emb by window)
    batch = 2
    time_step = window_size
    total_window = window_size * (window_size - 1) // 2

    key = jax.random.PRNGKey(0)
    kx, kn1, kn2, kp = jax.random.split(key, 4)
    x = jax.random.normal(kx, (time_step, batch, h_dim), jnp.float32)
    noise1 = jax.random.normal(kn1, (batch, total_window, 1), jnp.float32)
    noise2 = jax.random.normal(kn2, (batch, total_window, 1), jnp.float32)
    params = init_params(kp, h_dim, graph_node_dim, layer_num_rnn)

    fwd = jax.jit(functools.partial(rtn_forward,
                                    graph_node_dim=graph_node_dim,
                                    window_size=window_size))
    out = fwd(params, x, noise1, noise2)
    jax.block_until_ready(out)

    assert out["ht_output"].shape == (time_step, batch, h_dim)
    assert out["summ_graph"].shape == (batch, total_window, 1)
    assert out["spec_graph"].shape == (batch, total_window, 1)
    assert out["kl_g"].shape == () and out["kl_b"].shape == ()
    print("KERNEL_OK")
</pallas_src>

<mosaic_0001>
module attributes {stable_mosaic.version = 11 : i64} {
  func.func @_gate_node_kernel(%arg0: i32, %arg1: memref<16x32xf32, #tpu.memory_space<vmem>>, %arg2: memref<32x32xf32, #tpu.memory_space<vmem>>, %arg3: memref<1x32xf32, #tpu.memory_space<vmem>>, %arg4: memref<32x16xf32, #tpu.memory_space<vmem>>, %arg5: memref<1x16xf32, #tpu.memory_space<vmem>>, %arg6: memref<16x16xf32, #tpu.memory_space<vmem>>) attributes {dimension_semantics = [#tpu.dimension_semantics<arbitrary>], iteration_bounds = array<i64: 1>, scalar_prefetch = 0 : i64, scratch_operands = 0 : i64, tpu.core_type = #tpu.core_type<tc>, window_params = [{pipeline_mode = #tpu.pipeline_mode<synchronous>, transform_indices = @transform_0, window_bounds = array<i64: 16, 32>}, {pipeline_mode = #tpu.pipeline_mode<synchronous>, transform_indices = @transform_1, window_bounds = array<i64: 32, 32>}, {pipeline_mode = #tpu.pipeline_mode<synchronous>, transform_indices = @transform_2, window_bounds = array<i64: 1, 32>}, {pipeline_mode = #tpu.pipeline_mode<synchronous>, transform_indices = @transform_3, window_bounds = array<i64: 32, 16>}, {pipeline_mode = #tpu.pipeline_mode<synchronous>, transform_indices = @transform_4, window_bounds = array<i64: 1, 16>}, {pipeline_mode = #tpu.pipeline_mode<synchronous>, transform_indices = @transform_5, window_bounds = array<i64: 16, 16>}]} {
    %c0 = arith.constant 0 : index
    %c0_0 = arith.constant 0 : index
    %0 = vector.load %arg1[%c0, %c0_0] : memref<16x32xf32, #tpu.memory_space<vmem>>, vector<16x32xf32>
    %c0_1 = arith.constant 0 : index
    %c0_2 = arith.constant 0 : index
    %1 = vector.load %arg2[%c0_1, %c0_2] : memref<32x32xf32, #tpu.memory_space<vmem>>, vector<32x32xf32>
    %cst = arith.constant dense<0.000000e+00> : vector<16x32xf32>
    %2 = tpu.matmul %0, %1, %cst {dimension_numbers = #tpu.dot_dimension_numbers<[1], [0], [0], [1], [0, 0, 1, 1], [], []>} : vector<16x32xf32>, vector<32x32xf32>, vector<16x32xf32> -> vector<16x32xf32>
    %c0_3 = arith.constant 0 : index
    %c0_4 = arith.constant 0 : index
    %3 = vector.load %arg3[%c0_3, %c0_4] : memref<1x32xf32, #tpu.memory_space<vmem>>, vector<1x32xf32>
    %4 = vector.broadcast %3 : vector<1x32xf32> to vector<16x32xf32>
    %5 = arith.addf %2, %4 : vector<16x32xf32>
    %6 = arith.negf %5 : vector<16x32xf32>
    %7 = math.exp %6 : vector<16x32xf32>
    %cst_5 = arith.constant 1.000000e+00 : f32
    %8 = vector.broadcast %cst_5 : f32 to vector<16x32xf32>
    %9 = arith.addf %8, %7 : vector<16x32xf32>
    %10 = arith.divf %8, %9 : vector<16x32xf32>
    %11 = arith.mulf %10, %0 : vector<16x32xf32>
    %cst_6 = arith.constant 1.000000e+00 : f32
    %12 = vector.broadcast %cst_6 : f32 to vector<16x32xf32>
    %13 = arith.subf %12, %10 : vector<16x32xf32>
    %14 = math.tanh %0 : vector<16x32xf32>
    %15 = arith.mulf %13, %14 : vector<16x32xf32>
    %16 = arith.addf %11, %15 : vector<16x32xf32>
    %c0_7 = arith.constant 0 : index
    %c0_8 = arith.constant 0 : index
    %17 = vector.load %arg4[%c0_7, %c0_8] : memref<32x16xf32, #tpu.memory_space<vmem>>, vector<32x16xf32>
    %cst_9 = arith.constant dense<0.000000e+00> : vector<16x16xf32>
    %18 = tpu.matmul %16, %17, %cst_9 {dimension_numbers = #tpu.dot_dimension_numbers<[1], [0], [0], [1], [0, 0, 1, 1], [], []>} : vector<16x32xf32>, vector<32x16xf32>, vector<16x16xf32> -> vector<16x16xf32>
    %c0_10 = arith.constant 0 : index
    %c0_11 = arith.constant 0 : index
    %19 = vector.load %arg5[%c0_10, %c0_11] : memref<1x16xf32, #tpu.memory_space<vmem>>, vector<1x16xf32>
    %20 = vector.broadcast %19 : vector<1x16xf32> to vector<16x16xf32>
    %21 = arith.addf %18, %20 : vector<16x16xf32>
    %cst_12 = arith.constant 0.000000e+00 : f32
    %22 = vector.broadcast %cst_12 : f32 to vector<16x16xf32>
    %23 = arith.maximumf %21, %22 : vector<16x16xf32>
    %c0_13 = arith.constant 0 : index
    %c0_14 = arith.constant 0 : index
    %24 = vector.load %arg6[%c0_13, %c0_14] : memref<16x16xf32, #tpu.memory_space<vmem>>, vector<16x16xf32>
    tpu.vector_store %arg6[%c0_13, %c0_14], %23 {strides = array<i32>} : memref<16x16xf32, #tpu.memory_space<vmem>>, vector<16x16xf32>,
    return
  }
  func.func @transform_0(%arg0: i32) -> (i32, i32) {
    %c0_i32 = arith.constant 0 : i32
    %c0_i32_0 = arith.constant 0 : i32
    %c0_i32_1 = arith.constant 0 : i32
    return %c0_i32, %c0_i32_0 : i32, i32
  }
  func.func @transform_1(%arg0: i32) -> (i32, i32) {
    %c0_i32 = arith.constant 0 : i32
    %c0_i32_0 = arith.constant 0 : i32
    %c0_i32_1 = arith.constant 0 : i32
    return %c0_i32, %c0_i32_0 : i32, i32
  }
  func.func @transform_2(%arg0: i32) -> (i32, i32) {
    %c0_i32 = arith.constant 0 : i32
    %c0_i32_0 = arith.constant 0 : i32
    %c0_i32_1 = arith.constant 0 : i32
    return %c0_i32, %c0_i32_0 : i32, i32
  }
  func.func @transform_3(%arg0: i32) -> (i32, i32) {
    %c0_i32 = arith.constant 0 : i32
    %c0_i32_0 = arith.constant 0 : i32
    %c0_i32_1 = arith.constant 0 : i32
    return %c0_i32, %c0_i32_0 : i32, i32
  }
  func.func @transform_4(%arg0: i32) -> (i32, i32) {
    %c0_i32 = arith.constant 0 : i32
    %c0_i32_0 = arith.constant 0 : i32
    %c0_i32_1 = arith.constant 0 : i32
    return %c0_i32, %c0_i32_0 : i32, i32
  }
  func.func @transform_5(%arg0: i32) -> (i32, i32) {
    %c0_i32 = arith.constant 0 : i32
    %c0_i32_0 = arith.constant 0 : i32
    %c0_i32_1 = arith.constant 0 : i32
    return %c0_i32, %c0_i32_0 : i32, i32
  }
}

module attributes {stable_mosaic.version = 11 : i64} {
  func.func @_edge_fused_kernel(%arg0: i32, %arg1: memref<56x32xf32, #tpu.memory_space<vmem>>, %arg2: memref<56x1xf32, #tpu.memory_space<vmem>>, %arg3: memref<56x1xf32, #tpu.memory_space<vmem>>, %arg4: memref<2x56xf32, #tpu.memory_space<vmem>>, %arg5: memref<32x16xf32, #tpu.memory_space<vmem>>, %arg6: memref<1x16xf32, #tpu.memory_space<vmem>>, %arg7: memref<16x16xf32, #tpu.memory_space<vmem>>, %arg8: memref<1x16xf32, #tpu.memory_space<vmem>>, %arg9: memref<16x16xf32, #tpu.memory_space<vmem>>, %arg10: memref<1x16xf32, #tpu.memory_space<vmem>>, %arg11: memref<16x16xf32, #tpu.memory_space<vmem>>, %arg12: memref<1x16xf32, #tpu.memory_space<vmem>>, %arg13: memref<16x16xf32, #tpu.memory_space<vmem>>, %arg14: memref<1x16xf32, #tpu.memory_space<vmem>>, %arg15: memref<16x16xf32, #tpu.memory_space<vmem>>, %arg16: memref<1x16xf32, #tpu.memory_space<vmem>>, %arg17: memref<16x1xf32, #tpu.memory_space<vmem>>, %arg18: memref<1x1xf32, #tpu.memory_space<vmem>>, %arg19: memref<16x1xf32, #tpu.memory_space<vmem>>, %arg20: memref<1x1xf32, #tpu.memory_space<vmem>>, %arg21: memref<16x16xf32, #tpu.memory_space<vmem>>, %arg22: memref<1x16xf32, #tpu.memory_space<vmem>>, %arg23: memref<16x16xf32, #tpu.memory_space<vmem>>, %arg24: memref<1x16xf32, #tpu.memory_space<vmem>>, %arg25: memref<16x16xf32, #tpu.memory_space<vmem>>, %arg26: memref<1x16xf32, #tpu.memory_space<vmem>>, %arg27: memref<16x16xf32, #tpu.memory_space<vmem>>, %arg28: memref<1x16xf32, #tpu.memory_space<vmem>>, %arg29: memref<16x1xf32, #tpu.memory_space<vmem>>, %arg30: memref<1x1xf32, #tpu.memory_space<vmem>>, %arg31: memref<16x1xf32, #tpu.memory_space<vmem>>, %arg32: memref<1x1xf32, #tpu.memory_space<vmem>>, %arg33: memref<16x1xf32, #tpu.memory_space<vmem>>, %arg34: memref<1x1xf32, #tpu.memory_space<vmem>>, %arg35: memref<16x1xf32, #tpu.memory_space<vmem>>, %arg36: memref<1x1xf32, #tpu.memory_space<vmem>>, %arg37: memref<16x16xf32, #tpu.memory_space<vmem>>, %arg38: memref<1x16xf32, #tpu.memory_space<vmem>>, %arg39: memref<2x16xf32, #tpu.memory_space<vmem>>, %arg40: memref<56x1xf32, #tpu.memory_space<vmem>>, %arg41: memref<56x1xf32, #tpu.memory_space<vmem>>, %arg42: memref<1x1xf32, #tpu.memory_space<vmem>>, %arg43: memref<1x1xf32, #tpu.memory_space<vmem>>) attributes {dimension_semantics = [#tpu.dimension_semantics<arbitrary>], iteration_bounds = array<i64: 1>, scalar_prefetch = 0 : i64, scratch_operands = 0 : i64, tpu.core_type = #tpu.core_type<tc>, window_params = [{pipeline_mode = #tpu.pipeline_mode<synchronous>, transform_indices = @transform_0, window_bounds = array<i64: 56, 32>}, {pipeline_mode = #tpu.pipeline_mode<synchronous>, transform_indices = @transform_1, window_bounds = array<i64: 56, 1>}, {pipeline_mode = #tpu.pipeline_mode<synchronous>, transform_indices = @transform_2, window_bounds = array<i64: 56, 1>}, {pipeline_mode = #tpu.pipeline_mode<synchronous>, transform_indices = @transform_3, window_bounds = array<i64: 2, 56>}, {pipeline_mode = #tpu.pipeline_mode<synchronous>, transform_indices = @transform_4, window_bounds = array<i64: 32, 16>}, {pipeline_mode = #tpu.pipeline_mode<synchronous>, transform_indices = @transform_5, window_bounds = array<i64: 1, 16>}, {pipeline_mode = #tpu.pipeline_mode<synchronous>, transform_indices = @transform_6, window_bounds = array<i64: 16, 16>}, {pipeline_mode = #tpu.pipeline_mode<synchronous>, transform_indices = @transform_7, window_bounds = array<i64: 1, 16>}, {pipeline_mode = #tpu.pipeline_mode<synchronous>, transform_indices = @transform_8, window_bounds = array<i64: 16, 16>}, {pipeline_mode = #tpu.pipeline_mode<synchronous>, transform_indices = @transform_9, window_bounds = array<i64: 1, 16>}, {pipeline_mode = #tpu.pipeline_mode<synchronous>, transform_indices = @transform_10, window_bounds = array<i64: 16, 16>}, {pipeline_mode = #tpu.pipeline_mode<synchronous>, transform_indices = @transform_11, window_bounds = array<i64: 1, 16>}, {pipeline_mode = #tpu.pipeline_mode<synchronous>, transform_indices = @transform_12, window_bounds = array<i64: 16, 16>}, {pipeline_mode = #tpu.pipeline_mode<synchronous>, transform_indices = @transform_13, window_bounds = array<i64: 1, 16>}, {pipeline_mode = #tpu.pipeline_mode<synchronous>, transform_indices = @transform_14, window_bounds = array<i64: 16, 16>}, {pipeline_mode = #tpu.pipeline_mode<synchronous>, transform_indices = @transform_15, window_bounds = array<i64: 1, 16>}, {pipeline_mode = #tpu.pipeline_mode<synchronous>, transform_indices = @transform_16, window_bounds = array<i64: 16, 1>}, {pipeline_mode = #tpu.pipeline_mode<synchronous>, transform_indices = @transform_17, window_bounds = array<i64: 1, 1>}, {pipeline_mode = #tpu.pipeline_mode<synchronous>, transform_indices = @transform_18, window_bounds = array<i64: 16, 1>}, {pipeline_mode = #tpu.pipeline_mode<synchronous>, transform_indices = @transform_19, window_bounds = array<i64: 1, 1>}, {pipeline_mode = #tpu.pipeline_mode<synchronous>, transform_indices = @transform_20, window_bounds = array<i64: 16, 16>}, {pipeline_mode = #tpu.pipeline_mode<synchronous>, transform_indices = @transform_21, window_bounds = array<i64: 1, 16>}, {pipeline_mode = #tpu.pipeline_mode<synchronous>, transform_indices = @transform_22, window_bounds = array<i64: 16, 16>}, {pipeline_mode = #tpu.pipeline_mode<synchronous>, transform_indices = @transform_23, window_bounds = array<i64: 1, 16>}, {pipeline_mode = #tpu.pipeline_mode<synchronous>, transform_indices = @transform_24, window_bounds = array<i64: 16, 16>}, {pipeline_mode = #tpu.pipeline_mode<synchronous>, transform_indices = @transform_25, window_bounds = array<i64: 1, 16>}, {pipeline_mode = #tpu.pipeline_mode<synchronous>, transform_indices = @transform_26, window_bounds = array<i64: 16, 16>}, {pipeline_mode = #tpu.pipeline_mode<synchronous>, transform_indices = @transform_27, window_bounds = array<i64: 1, 16>}, {pipeline_mode = #tpu.pipeline_mode<synchronous>, transform_indices = @transform_28, window_bounds = array<i64: 16, 1>}, {pipeline_mode = #tpu.pipeline_mode<synchronous>, transform_indices = @transform_29, window_bounds = array<i64: 1, 1>}, {pipeline_mode = #tpu.pipeline_mode<synchronous>, transform_indices = @transform_30, window_bounds = array<i64: 16, 1>}, {pipeline_mode = #tpu.pipeline_mode<synchronous>, transform_indices = @transform_31, window_bounds = array<i64: 1, 1>}, {pipeline_mode = #tpu.pipeline_mode<synchronous>, transform_indices = @transform_32, window_bounds = array<i64: 16, 1>}, {pipeline_mode = #tpu.pipeline_mode<synchronous>, transform_indices = @transform_33, window_bounds = array<i64: 1, 1>}, {pipeline_mode = #tpu.pipeline_mode<synchronous>, transform_indices = @transform_34, window_bounds = array<i64: 16, 1>}, {pipeline_mode = #tpu.pipeline_mode<synchronous>, transform_indices = @transform_35, window_bounds = array<i64: 1, 1>}, {pipeline_mode = #tpu.pipeline_mode<synchronous>, transform_indices = @transform_36, window_bounds = array<i64: 16, 16>}, {pipeline_mode = #tpu.pipeline_mode<synchronous>, transform_indices = @transform_37, window_bounds = array<i64: 1, 16>}, {pipeline_mode = #tpu.pipeline_mode<synchronous>, transform_indices = @transform_38, window_bounds = array<i64: 2, 16>}, {pipeline_mode = #tpu.pipeline_mode<synchronous>, transform_indices = @transform_39, window_bounds = array<i64: 56, 1>}, {pipeline_mode = #tpu.pipeline_mode<synchronous>, transform_indices = @transform_40, window_bounds = array<i64: 56, 1>}, {pipeline_mode = #tpu.pipeline_mode<synchronous>, transform_indices = @transform_41, window_bounds = array<i64: 1, 1>}, {pipeline_mode = #tpu.pipeline_mode<synchronous>, transform_indices = @transform_42, window_bounds = array<i64: 1, 1>}]} {
    %c0 = arith.constant 0 : index
    %c0_0 = arith.constant 0 : index
    %0 = vector.load %arg1[%c0, %c0_0] : memref<56x32xf32, #tpu.memory_space<vmem>>, vector<56x32xf32>
    %c0_1 = arith.constant 0 : index
    %c0_2 = arith.constant 0 : index
    %1 = vector.load %arg5[%c0_1, %c0_2] : memref<32x16xf32, #tpu.memory_space<vmem>>, vector<32x16xf32>
    %cst = arith.constant dense<0.000000e+00> : vector<56x16xf32>
    %2 = tpu.matmul %0, %1, %cst {dimension_numbers = #tpu.dot_dimension_numbers<[1], [0], [0], [1], [0, 0, 1, 1], [], []>} : vector<56x32xf32>, vector<32x16xf32>, vector<56x16xf32> -> vector<56x16xf32>
    %c0_3 = arith.constant 0 : index
    %c0_4 = arith.constant 0 : index
    %3 = vector.load %arg6[%c0_3, %c0_4] : memref<1x16xf32, #tpu.memory_space<vmem>>, vector<1x16xf32>
    %4 = vector.broadcast %3 : vector<1x16xf32> to vector<56x16xf32>
    %5 = arith.addf %2, %4 : vector<56x16xf32>
    %cst_5 = arith.constant 0.000000e+00 : f32
    %6 = vector.broadcast %cst_5 : f32 to vector<56x16xf32>
    %7 = arith.maximumf %5, %6 : vector<56x16xf32>
    %c0_6 = arith.constant 0 : index
    %c0_7 = arith.constant 0 : index
    %8 = vector.load %arg7[%c0_6, %c0_7] : memref<16x16xf32, #tpu.memory_space<vmem>>, vector<16x16xf32>
    %cst_8 = arith.constant dense<0.000000e+00> : vector<56x16xf32>
    %9 = tpu.matmul %7, %8, %cst_8 {dimension_numbers = #tpu.dot_dimension_numbers<[1], [0], [0], [1], [0, 0, 1, 1], [], []>} : vector<56x16xf32>, vector<16x16xf32>, vector<56x16xf32> -> vector<56x16xf32>
    %c0_9 = arith.constant 0 : index
    %c0_10 = arith.constant 0 : index
    %10 = vector.load %arg8[%c0_9, %c0_10] : memref<1x16xf32, #tpu.memory_space<vmem>>, vector<1x16xf32>
    %11 = vector.broadcast %10 : vector<1x16xf32> to vector<56x16xf32>
    %12 = arith.addf %9, %11 : vector<56x16xf32>
    %cst_11 = arith.constant 0.000000e+00 : f32
    %13 = vector.broadcast %cst_11 : f32 to vector<56x16xf32>
    %14 = arith.maximumf %12, %13 : vector<56x16xf32>
    %c0_12 = arith.constant 0 : index
    %c0_13 = arith.constant 0 : index
    %15 = vector.load %arg9[%c0_12, %c0_13] : memref<16x16xf32, #tpu.memory_space<vmem>>, vector<16x16xf32>
    %cst_14 = arith.constant dense<0.000000e+00> : vector<56x16xf32>
    %16 = tpu.matmul %14, %15, %cst_14 {dimension_numbers = #tpu.dot_dimension_numbers<[1], [0], [0], [1], [0, 0, 1, 1], [], []>} : vector<56x16xf32>, vector<16x16xf32>, vector<56x16xf32> -> vector<56x16xf32>
    %c0_15 = arith.constant 0 : index
    %c0_16 = arith.constant 0 : index
    %17 = vector.load %arg10[%c0_15, %c0_16] : memref<1x16xf32, #tpu.memory_space<vmem>>, vector<1x16xf32>
    %18 = vector.broadcast %17 : vector<1x16xf32> to vector<56x16xf32>
    %19 = arith.addf %16, %18 : vector<56x16xf32>
    %c0_17 = arith.constant 0 : index
    %c0_18 = arith.constant 0 : index
    %20 = vector.load %arg11[%c0_17, %c0_18] : memref<16x16xf32, #tpu.memory_space<vmem>>, vector<16x16xf32>
    %cst_19 = arith.constant dense<0.000000e+00> : vector<56x16xf32>
    %21 = tpu.matmul %19, %20, %cst_19 {dimension_numbers = #tpu.dot_dimension_numbers<[1], [0], [0], [1], [0, 0, 1, 1], [], []>} : vector<56x16xf32>, vector<16x16xf32>, vector<56x16xf32> -> vector<56x16xf32>
    %c0_20 = arith.constant 0 : index
    %c0_21 = arith.constant 0 : index
    %22 = vector.load %arg12[%c0_20, %c0_21] : memref<1x16xf32, #tpu.memory_space<vmem>>, vector<1x16xf32>
    %23 = vector.broadcast %22 : vector<1x16xf32> to vector<56x16xf32>
    %24 = arith.addf %21, %23 : vector<56x16xf32>
    %cst_22 = arith.constant 0.000000e+00 : f32
    %25 = vector.broadcast %cst_22 : f32 to vector<56x16xf32>
    %26 = arith.maximumf %24, %25 : vector<56x16xf32>
    %c0_23 = arith.constant 0 : index
    %c0_24 = arith.constant 0 : index
    %27 = vector.load %arg13[%c0_23, %c0_24] : memref<16x16xf32, #tpu.memory_space<vmem>>, vector<16x16xf32>
    %cst_25 = arith.constant dense<0.000000e+00> : vector<56x16xf32>
    %28 = tpu.matmul %26, %27, %cst_25 {dimension_numbers = #tpu.dot_dimension_numbers<[1], [0], [0], [1], [0, 0, 1, 1], [], []>} : vector<56x16xf32>, vector<16x16xf32>, vector<56x16xf32> -> vector<56x16xf32>
    %c0_26 = arith.constant 0 : index
    %c0_27 = arith.constant 0 : index
    %29 = vector.load %arg14[%c0_26, %c0_27] : memref<1x16xf32, #tpu.memory_space<vmem>>, vector<1x16xf32>
    %30 = vector.broadcast %29 : vector<1x16xf32> to vector<56x16xf32>
    %31 = arith.addf %28, %30 : vector<56x16xf32>
    %cst_28 = arith.constant 0.000000e+00 : f32
    %32 = vector.broadcast %cst_28 : f32 to vector<56x16xf32>
    %33 = arith.maximumf %31, %32 : vector<56x16xf32>
    %c0_29 = arith.constant 0 : index
    %c0_30 = arith.constant 0 : index
    %34 = vector.load %arg15[%c0_29, %c0_30] : memref<16x16xf32, #tpu.memory_space<vmem>>, vector<16x16xf32>
    %cst_31 = arith.constant dense<0.000000e+00> : vector<56x16xf32>
    %35 = tpu.matmul %26, %34, %cst_31 {dimension_numbers = #tpu.dot_dimension_numbers<[1], [0], [0], [1], [0, 0, 1, 1], [], []>} : vector<56x16xf32>, vector<16x16xf32>, vector<56x16xf32> -> vector<56x16xf32>
    %c0_32 = arith.constant 0 : index
    %c0_33 = arith.constant 0 : index
    %36 = vector.load %arg16[%c0_32, %c0_33] : memref<1x16xf32, #tpu.memory_space<vmem>>, vector<1x16xf32>
    %37 = vector.broadcast %36 : vector<1x16xf32> to vector<56x16xf32>
    %38 = arith.addf %35, %37 : vector<56x16xf32>
    %cst_34 = arith.constant 0.000000e+00 : f32
    %39 = vector.broadcast %cst_34 : f32 to vector<56x16xf32>
    %40 = arith.maximumf %38, %39 : vector<56x16xf32>
    %c0_35 = arith.constant 0 : index
    %c0_36 = arith.constant 0 : index
    %41 = vector.load %arg17[%c0_35, %c0_36] : memref<16x1xf32, #tpu.memory_space<vmem>>, vector<16x1xf32>
    %cst_37 = arith.constant dense<0.000000e+00> : vector<56x1xf32>
    %42 = tpu.matmul %33, %41, %cst_37 {dimension_numbers = #tpu.dot_dimension_numbers<[1], [0], [0], [1], [0, 0, 1, 1], [], []>} : vector<56x16xf32>, vector<16x1xf32>, vector<56x1xf32> -> vector<56x1xf32>
    %c0_38 = arith.constant 0 : index
    %c0_39 = arith.constant 0 : index
    %43 = vector.load %arg18[%c0_38, %c0_39] : memref<1x1xf32, #tpu.memory_space<vmem>>, vector<1x1xf32>
    %44 = vector.broadcast %43 : vector<1x1xf32> to vector<56x1xf32>
    %45 = arith.addf %42, %44 : vector<56x1xf32>
    %c0_40 = arith.constant 0 : index
    %c0_41 = arith.constant 0 : index
    %46 = vector.load %arg19[%c0_40, %c0_41] : memref<16x1xf32, #tpu.memory_space<vmem>>, vector<16x1xf32>
    %cst_42 = arith.constant dense<0.000000e+00> : vector<56x1xf32>
    %47 = tpu.matmul %33, %46, %cst_42 {dimension_numbers = #tpu.dot_dimension_numbers<[1], [0], [0], [1], [0, 0, 1, 1], [], []>} : vector<56x16xf32>, vector<16x1xf32>, vector<56x1xf32> -> vector<56x1xf32>
    %c0_43 = arith.constant 0 : index
    %c0_44 = arith.constant 0 : index
    %48 = vector.load %arg20[%c0_43, %c0_44] : memref<1x1xf32, #tpu.memory_space<vmem>>, vector<1x1xf32>
    %49 = vector.broadcast %48 : vector<1x1xf32> to vector<56x1xf32>
    %50 = arith.addf %47, %49 : vector<56x1xf32>
    %cst_45 = arith.constant 0.000000e+00 : f32
    %51 = vector.broadcast %cst_45 : f32 to vector<56x1xf32>
    %52 = arith.maximumf %50, %51 : vector<56x1xf32>
    %53 = vector.broadcast %cst_45 : f32 to vector<56x1xf32>
    %54 = arith.subf %50, %53 : vector<56x1xf32>
    %55 = arith.cmpf one, %54, %54 : vector<56x1xf32>
    %56 = vector.broadcast %cst_45 : f32 to vector<56x1xf32>
    %57 = arith.addf %50, %56 : vector<56x1xf32>
    %58 = math.absf %54 : vector<56x1xf32>
    %cst_46 = arith.constant 0.000000e+00 : f32
    %59 = vector.broadcast %cst_46 : f32 to vector<56x1xf32>
    %60 = arith.subf %59, %58 : vector<56x1xf32>
    %61 = math.exp %60 : vector<56x1xf32>
    %62 = math.log1p %61 : vector<56x1xf32>
    %63 = arith.addf %52, %62 : vector<56x1xf32>
    %64 = arith.select %55, %57, %63 : vector<56x1xi1>, vector<56x1xf32>
    %c0_47 = arith.constant 0 : index
    %c0_48 = arith.constant 0 : index
    %65 = vector.load %arg21[%c0_47, %c0_48] : memref<16x16xf32, #tpu.memory_space<vmem>>, vector<16x16xf32>
    %cst_49 = arith.constant dense<0.000000e+00> : vector<56x16xf32>
    %66 = tpu.matmul %40, %65, %cst_49 {dimension_numbers = #tpu.dot_dimension_numbers<[1], [0], [0], [1], [0, 0, 1, 1], [], []>} : vector<56x16xf32>, vector<16x16xf32>, vector<56x16xf32> -> vector<56x16xf32>
    %c0_50 = arith.constant 0 : index
    %c0_51 = arith.constant 0 : index
    %67 = vector.load %arg22[%c0_50, %c0_51] : memref<1x16xf32, #tpu.memory_space<vmem>>, vector<1x16xf32>
    %68 = vector.broadcast %67 : vector<1x16xf32> to vector<56x16xf32>
    %69 = arith.addf %66, %68 : vector<56x16xf32>
    %70 = arith.negf %69 : vector<56x16xf32>
    %71 = math.exp %70 : vector<56x16xf32>
    %cst_52 = arith.constant 1.000000e+00 : f32
    %72 = vector.broadcast %cst_52 : f32 to vector<56x16xf32>
    %73 = arith.addf %72, %71 : vector<56x16xf32>
    %74 = arith.divf %72, %73 : vector<56x16xf32>
    %cst_53 = arith.constant 4.000000e-01 : f32
    %75 = vector.broadcast %cst_53 : f32 to vector<56x16xf32>
    %76 = arith.mulf %75, %74 : vector<56x16xf32>
    %c0_54 = arith.constant 0 : index
    %c0_55 = arith.constant 0 : index
    %77 = vector.load %arg23[%c0_54, %c0_55] : memref<16x16xf32, #tpu.memory_space<vmem>>, vector<16x16xf32>
    %cst_56 = arith.constant dense<0.000000e+00> : vector<56x16xf32>
    %78 = tpu.matmul %19, %77, %cst_56 {dimension_numbers = #tpu.dot_dimension_numbers<[1], [0], [0], [1], [0, 0, 1, 1], [], []>} : vector<56x16xf32>, vector<16x16xf32>, vector<56x16xf32> -> vector<56x16xf32>
    %c0_57 = arith.constant 0 : index
    %c0_58 = arith.constant 0 : index
    %79 = vector.load %arg24[%c0_57, %c0_58] : memref<1x16xf32, #tpu.memory_space<vmem>>, vector<1x16xf32>
    %80 = vector.broadcast %79 : vector<1x16xf32> to vector<56x16xf32>
    %81 = arith.addf %78, %80 : vector<56x16xf32>
    %cst_59 = arith.constant 0.000000e+00 : f32
    %82 = vector.broadcast %cst_59 : f32 to vector<56x16xf32>
    %83 = arith.maximumf %81, %82 : vector<56x16xf32>
    %c0_60 = arith.constant 0 : index
    %c0_61 = arith.constant 0 : index
    %84 = vector.load %arg25[%c0_60, %c0_61] : memref<16x16xf32, #tpu.memory_space<vmem>>, vector<16x16xf32>
    %cst_62 = arith.constant dense<0.000000e+00> : vector<56x16xf32>
    %85 = tpu.matmul %83, %84, %cst_62 {dimension_numbers = #tpu.dot_dimension_numbers<[1], [0], [0], [1], [0, 0, 1, 1], [], []>} : vector<56x16xf32>, vector<16x16xf32>, vector<56x16xf32> -> vector<56x16xf32>
    %c0_63 = arith.constant 0 : index
    %c0_64 = arith.constant 0 : index
    %86 = vector.load %arg26[%c0_63, %c0_64] : memref<1x16xf32, #tpu.memory_space<vmem>>, vector<1x16xf32>
    %87 = vector.broadcast %86 : vector<1x16xf32> to vector<56x16xf32>
    %88 = arith.addf %85, %87 : vector<56x16xf32>
    %cst_65 = arith.constant 0.000000e+00 : f32
    %89 = vector.broadcast %cst_65 : f32 to vector<56x16xf32>
    %90 = arith.maximumf %88, %89 : vector<56x16xf32>
    %c0_66 = arith.constant 0 : index
    %c0_67 = arith.constant 0 : index
    %91 = vector.load %arg27[%c0_66, %c0_67] : memref<16x16xf32, #tpu.memory_space<vmem>>, vector<16x16xf32>
    %cst_68 = arith.constant dense<0.000000e+00> : vector<56x16xf32>
    %92 = tpu.matmul %83, %91, %cst_68 {dimension_numbers = #tpu.dot_dimension_numbers<[1], [0], [0], [1], [0, 0, 1, 1], [], []>} : vector<56x16xf32>, vector<16x16xf32>, vector<56x16xf32> -> vector<56x16xf32>
    %c0_69 = arith.constant 0 : index
    %c0_70 = arith.constant 0 : index
    %93 = vector.load %arg28[%c0_69, %c0_70] : memref<1x16xf32, #tpu.memory_space<vmem>>, vector<1x16xf32>
    %94 = vector.broadcast %93 : vector<1x16xf32> to vector<56x16xf32>
    %95 = arith.addf %92, %94 : vector<56x16xf32>
    %cst_71 = arith.constant 0.000000e+00 : f32
    %96 = vector.broadcast %cst_71 : f32 to vector<56x16xf32>
    %97 = arith.maximumf %95, %96 : vector<56x16xf32>
    %c0_72 = arith.constant 0 : index
    %c0_73 = arith.constant 0 : index
    %98 = vector.load %arg29[%c0_72, %c0_73] : memref<16x1xf32, #tpu.memory_space<vmem>>, vector<16x1xf32>
    %cst_74 = arith.constant dense<0.000000e+00> : vector<56x1xf32>
    %99 = tpu.matmul %90, %98, %cst_74 {dimension_numbers = #tpu.dot_dimension_numbers<[1], [0], [0], [1], [0, 0, 1, 1], [], []>} : vector<56x16xf32>, vector<16x1xf32>, vector<56x1xf32> -> vector<56x1xf32>
    %c0_75 = arith.constant 0 : index
    %c0_76 = arith.constant 0 : index
    %100 = vector.load %arg30[%c0_75, %c0_76] : memref<1x1xf32, #tpu.memory_space<vmem>>, vector<1x1xf32>
    %101 = vector.broadcast %100 : vector<1x1xf32> to vector<56x1xf32>
    %102 = arith.addf %99, %101 : vector<56x1xf32>
    %c0_77 = arith.constant 0 : index
    %c0_78 = arith.constant 0 : index
    %103 = vector.load %arg31[%c0_77, %c0_78] : memref<16x1xf32, #tpu.memory_space<vmem>>, vector<16x1xf32>
    %cst_79 = arith.constant dense<0.000000e+00> : vector<56x1xf32>
    %104 = tpu.matmul %90, %103, %cst_79 {dimension_numbers = #tpu.dot_dimension_numbers<[1], [0], [0], [1], [0, 0, 1, 1], [], []>} : vector<56x16xf32>, vector<16x1xf32>, vector<56x1xf32> -> vector<56x1xf32>
    %c0_80 = arith.constant 0 : index
    %c0_81 = arith.constant 0 : index
    %105 = vector.load %arg32[%c0_80, %c0_81] : memref<1x1xf32, #tpu.memory_space<vmem>>, vector<1x1xf32>
    %106 = vector.broadcast %105 : vector<1x1xf32> to vector<56x1xf32>
    %107 = arith.addf %104, %106 : vector<56x1xf32>
    %cst_82 = arith.constant 0.000000e+00 : f32
    %108 = vector.broadcast %cst_82 : f32 to vector<56x1xf32>
    %109 = arith.maximumf %107, %108 : vector<56x1xf32>
    %110 = vector.broadcast %cst_82 : f32 to vector<56x1xf32>
    %111 = arith.subf %107, %110 : vector<56x1xf32>
    %112 = arith.cmpf one, %111, %111 : vector<56x1xf32>
    %113 = vector.broadcast %cst_82 : f32 to vector<56x1xf32>
    %114 = arith.addf %107, %113 : vector<56x1xf32>
    %115 = math.absf %111 : vector<56x1xf32>
    %cst_83 = arith.constant 0.000000e+00 : f32
    %116 = vector.broadcast %cst_83 : f32 to vector<56x1xf32>
    %117 = arith.subf %116, %115 : vector<56x1xf32>
    %118 = math.exp %117 : vector<56x1xf32>
    %119 = math.log1p %118 : vector<56x1xf32>
    %120 = arith.addf %109, %119 : vector<56x1xf32>
    %121 = arith.select %112, %114, %120 : vector<56x1xi1>, vector<56x1xf32>
    %c0_84 = arith.constant 0 : index
    %c0_85 = arith.constant 0 : index
    %122 = vector.load %arg33[%c0_84, %c0_85] : memref<16x1xf32, #tpu.memory_space<vmem>>, vector<16x1xf32>
    %cst_86 = arith.constant dense<0.000000e+00> : vector<56x1xf32>
    %123 = tpu.matmul %97, %122, %cst_86 {dimension_numbers = #tpu.dot_dimension_numbers<[1], [0], [0], [1], [0, 0, 1, 1], [], []>} : vector<56x16xf32>, vector<16x1xf32>, vector<56x1xf32> -> vector<56x1xf32>
    %c0_87 = arith.constant 0 : index
    %c0_88 = arith.constant 0 : index
    %124 = vector.load %arg34[%c0_87, %c0_88] : memref<1x1xf32, #tpu.memory_space<vmem>>, vector<1x1xf32>
    %125 = vector.broadcast %124 : vector<1x1xf32> to vector<56x1xf32>
    %126 = arith.addf %123, %125 : vector<56x1xf32>
    %c0_89 = arith.constant 0 : index
    %c0_90 = arith.constant 0 : index
    %127 = vector.load %arg35[%c0_89, %c0_90] : memref<16x1xf32, #tpu.memory_space<vmem>>, vector<16x1xf32>
    %cst_91 = arith.constant dense<0.000000e+00> : vector<56x1xf32>
    %128 = tpu.matmul %97, %127, %cst_91 {dimension_numbers = #tpu.dot_dimension_numbers<[1], [0], [0], [1], [0, 0, 1, 1], [], []>} : vector<56x16xf32>, vector<16x1xf32>, vector<56x1xf32> -> vector<56x1xf32>
    %c0_92 = arith.constant 0 : index
    %c0_93 = arith.constant 0 : index
    %129 = vector.load %arg36[%c0_92, %c0_93] : memref<1x1xf32, #tpu.memory_space<vmem>>, vector<1x1xf32>
    %130 = vector.broadcast %129 : vector<1x1xf32> to vector<56x1xf32>
    %131 = arith.addf %128, %130 : vector<56x1xf32>
    %cst_94 = arith.constant 0.000000e+00 : f32
    %132 = vector.broadcast %cst_94 : f32 to vector<56x1xf32>
    %133 = arith.maximumf %131, %132 : vector<56x1xf32>
    %134 = vector.broadcast %cst_94 : f32 to vector<56x1xf32>
    %135 = arith.subf %131, %134 : vector<56x1xf32>
    %136 = arith.cmpf one, %135, %135 : vector<56x1xf32>
    %137 = vector.broadcast %cst_94 : f32 to vector<56x1xf32>
    %138 = arith.addf %131, %137 : vector<56x1xf32>
    %139 = math.absf %135 : vector<56x1xf32>
    %cst_95 = arith.constant 0.000000e+00 : f32
    %140 = vector.broadcast %cst_95 : f32 to vector<56x1xf32>
    %141 = arith.subf %140, %139 : vector<56x1xf32>
    %142 = math.exp %141 : vector<56x1xf32>
    %143 = math.log1p %142 : vector<56x1xf32>
    %144 = arith.addf %133, %143 : vector<56x1xf32>
    %145 = arith.select %136, %138, %144 : vector<56x1xi1>, vector<56x1xf32>
    %cst_96 = arith.constant 2.000000e+00 : f32
    %146 = vector.broadcast %cst_96 : f32 to vector<56x1xf32>
    %147 = arith.mulf %146, %126 : vector<56x1xf32>
    %cst_97 = arith.constant 1.000000e+00 : f32
    %148 = vector.broadcast %cst_97 : f32 to vector<56x1xf32>
    %149 = arith.subf %147, %148 : vector<56x1xf32>
    %150 = arith.mulf %149, %149 : vector<56x1xf32>
    %cst_98 = arith.constant 8.000000e+00 : f32
    %151 = vector.broadcast %cst_98 : f32 to vector<56x1xf32>
    %152 = arith.mulf %151, %145 : vector<56x1xf32>
    %153 = arith.mulf %152, %145 : vector<56x1xf32>
    %154 = arith.addf %150, %153 : vector<56x1xf32>
    %155 = math.sqrt %154 : vector<56x1xf32>
    %156 = arith.addf %149, %155 : vector<56x1xf32>
    %cst_99 = arith.constant 2.500000e-01 : f32
    %157 = vector.broadcast %cst_99 : f32 to vector<56x1xf32>
    %158 = arith.mulf %157, %156 : vector<56x1xf32>
    %cst_100 = arith.constant 9.99999997E-7 : f32
    %159 = vector.broadcast %cst_100 : f32 to vector<56x1xf32>
    %160 = arith.addf %158, %159 : vector<56x1xf32>
    %161 = math.sqrt %160 : vector<56x1xf32>
    %c0_101 = arith.constant 0 : index
    %c0_102 = arith.constant 0 : index
    %162 = vector.load %arg2[%c0_101, %c0_102] : memref<56x1xf32, #tpu.memory_space<vmem>>, vector<56x1xf32>
    %163 = arith.mulf %162, %161 : vector<56x1xf32>
    %164 = arith.addf %163, %160 : vector<56x1xf32>
    %cst_103 = arith.constant 0.000000e+00 : f32
    %165 = vector.broadcast %cst_103 : f32 to vector<56x1xf32>
    %166 = arith.maximumf %164, %165 : vector<56x1xf32>
    %167 = vector.broadcast %cst_103 : f32 to vector<56x1xf32>
    %168 = arith.subf %164, %167 : vector<56x1xf32>
    %169 = arith.cmpf one, %168, %168 : vector<56x1xf32>
    %170 = vector.broadcast %cst_103 : f32 to vector<56x1xf32>
    %171 = arith.addf %164, %170 : vector<56x1xf32>
    %172 = math.absf %168 : vector<56x1xf32>
    %cst_104 = arith.constant 0.000000e+00 : f32
    %173 = vector.broadcast %cst_104 : f32 to vector<56x1xf32>
    %174 = arith.subf %173, %172 : vector<56x1xf32>
    %175 = math.exp %174 : vector<56x1xf32>
    %176 = math.log1p %175 : vector<56x1xf32>
    %177 = arith.addf %166, %176 : vector<56x1xf32>
    %178 = arith.select %169, %171, %177 : vector<56x1xi1>, vector<56x1xf32>
    %179 = math.sqrt %178 : vector<56x1xf32>
    %180 = arith.mulf %178, %102 : vector<56x1xf32>
    %181 = arith.mulf %179, %121 : vector<56x1xf32>
    %c0_105 = arith.constant 0 : index
    %c0_106 = arith.constant 0 : index
    %182 = vector.load %arg3[%c0_105, %c0_106] : memref<56x1xf32, #tpu.memory_space<vmem>>, vector<56x1xf32>
    %183 = arith.mulf %182, %181 : vector<56x1xf32>
    %184 = arith.addf %183, %180 : vector<56x1xf32>
    %185 = arith.mulf %184, %178 : vector<56x1xf32>
    %cst_107 = arith.constant 0.000000e+00 : f32
    %186 = vector.broadcast %cst_107 : f32 to vector<56x1xf32>
    %187 = arith.maximumf %185, %186 : vector<56x1xf32>
    %c0_108 = arith.constant 0 : index
    %c0_109 = arith.constant 0 : index
    %188 = vector.load %arg40[%c0_108, %c0_109] : memref<56x1xf32, #tpu.memory_space<vmem>>, vector<56x1xf32>
    tpu.vector_store %arg40[%c0_108, %c0_109], %178 {strides = array<i32>} : memref<56x1xf32, #tpu.memory_space<vmem>>, vector<56x1xf32>,
    %c0_110 = arith.constant 0 : index
    %c0_111 = arith.constant 0 : index
    %189 = vector.load %arg41[%c0_110, %c0_111] : memref<56x1xf32, #tpu.memory_space<vmem>>, vector<56x1xf32>
    tpu.vector_store %arg41[%c0_110, %c0_111], %187 {strides = array<i32>} : memref<56x1xf32, #tpu.memory_space<vmem>>, vector<56x1xf32>,
    %c0_112 = arith.constant 0 : index
    %c0_113 = arith.constant 0 : index
    %190 = vector.load %arg4[%c0_112, %c0_113] : memref<2x56xf32, #tpu.memory_space<vmem>>, vector<2x56xf32>
    %191 = vector.broadcast %187 : vector<56x1xf32> to vector<56x16xf32>
    %192 = arith.mulf %191, %19 : vector<56x16xf32>
    %cst_114 = arith.constant dense<0.000000e+00> : vector<2x16xf32>
    %193 = tpu.matmul %190, %192, %cst_114 {dimension_numbers = #tpu.dot_dimension_numbers<[1], [0], [0], [1], [0, 0, 1, 1], [], []>} : vector<2x56xf32>, vector<56x16xf32>, vector<2x16xf32> -> vector<2x16xf32>
    %cst_115 = arith.constant dense<0.000000e+00> : vector<2x1xf32>
    %194 = tpu.matmul %190, %187, %cst_115 {dimension_numbers = #tpu.dot_dimension_numbers<[1], [0], [0], [1], [0, 0, 1, 1], [], []>} : vector<2x56xf32>, vector<56x1xf32>, vector<2x1xf32> -> vector<2x1xf32>
    %cst_116 = arith.constant 9.99999997E-7 : f32
    %195 = vector.broadcast %cst_116 : f32 to vector<2x1xf32>
    %196 = arith.addf %194, %195 : vector<2x1xf32>
    %197 = vector.broadcast %196 : vector<2x1xf32> to vector<2x16xf32>
    %198 = arith.divf %193, %197 : vector<2x16xf32>
    %c0_117 = arith.constant 0 : index
    %c0_118 = arith.constant 0 : index
    %199 = vector.load %arg37[%c0_117, %c0_118] : memref<16x16xf32, #tpu.memory_space<vmem>>, vector<16x16xf32>
    %cst_119 = arith.constant dense<0.000000e+00> : vector<2x16xf32>
    %200 = tpu.matmul %198, %199, %cst_119 {dimension_numbers = #tpu.dot_dimension_numbers<[1], [0], [0], [1], [0, 0, 1, 1], [], []>} : vector<2x16xf32>, vector<16x16xf32>, vector<2x16xf32> -> vector<2x16xf32>
    %c0_120 = arith.constant 0 : index
    %c0_121 = arith.constant 0 : index
    %201 = vector.load %arg38[%c0_120, %c0_121] : memref<1x16xf32, #tpu.memory_space<vmem>>, vector<1x16xf32>
    %202 = vector.broadcast %201 : vector<1x16xf32> to vector<2x16xf32>
    %203 = arith.addf %200, %202 : vector<2x16xf32>
    %c0_122 = arith.constant 0 : index
    %c0_123 = arith.constant 0 : index
    %204 = vector.load %arg39[%c0_122, %c0_123] : memref<2x16xf32, #tpu.memory_space<vmem>>, vector<2x16xf32>
    tpu.vector_store %arg39[%c0_122, %c0_123], %203 {strides = array<i32>} : memref<2x16xf32, #tpu.memory_space<vmem>>, vector<2x16xf32>,
    %205 = arith.mulf %178, %45 : vector<56x1xf32>
    %206 = arith.mulf %179, %64 : vector<56x1xf32>
    %cst_124 = arith.constant 9.99999997E-7 : f32
    %207 = vector.broadcast %cst_124 : f32 to vector<56x1xf32>
    %208 = arith.addf %206, %207 : vector<56x1xf32>
    %209 = math.log %208 : vector<56x1xf32>
    %cst_125 = arith.constant 2.000000e+00 : f32
    %210 = vector.broadcast %cst_125 : f32 to vector<56x1xf32>
    %211 = arith.mulf %210, %209 : vector<56x1xf32>
    %cst_126 = arith.constant 9.99999997E-7 : f32
    %212 = vector.broadcast %cst_126 : f32 to vector<56x1xf32>
    %213 = arith.addf %181, %212 : vector<56x1xf32>
    %214 = math.log %213 : vector<56x1xf32>
    %cst_127 = arith.constant 2.000000e+00 : f32
    %215 = vector.broadcast %cst_127 : f32 to vector<56x1xf32>
    %216 = arith.mulf %215, %214 : vector<56x1xf32>
    %217 = arith.subf %211, %216 : vector<56x1xf32>
    %218 = arith.mulf %181, %181 : vector<56x1xf32>
    %219 = arith.subf %180, %205 : vector<56x1xf32>
    %220 = arith.mulf %219, %219 : vector<56x1xf32>
    %221 = arith.addf %218, %220 : vector<56x1xf32>
    %cst_128 = arith.constant 9.99999997E-7 : f32
    %222 = vector.broadcast %cst_128 : f32 to vector<56x1xf32>
    %223 = arith.addf %206, %222 : vector<56x1xf32>
    %cst_129 = arith.constant 9.99999997E-7 : f32
    %224 = vector.broadcast %cst_129 : f32 to vector<56x1xf32>
    %225 = arith.addf %206, %224 : vector<56x1xf32>
    %226 = arith.mulf %223, %225 : vector<56x1xf32>
    %227 = arith.divf %221, %226 : vector<56x1xf32>
    %228 = arith.addf %217, %227 : vector<56x1xf32>
    %cst_130 = arith.constant 1.000000e+00 : f32
    %229 = vector.broadcast %cst_130 : f32 to vector<56x1xf32>
    %230 = arith.subf %228, %229 : vector<56x1xf32>
    %231 = math.absf %230 : vector<56x1xf32>
    %cst_131 = arith.constant dense<0.000000e+00> : vector<1xf32>
    %232 = vector.multi_reduction <add>, %231, %cst_131 [0] : vector<56x1xf32> to vector<1xf32>
    %233 = vector.shape_cast %232 : vector<1xf32> to vector<1x1xf32>
    %cst_132 = arith.constant 5.000000e-01 : f32
    %234 = vector.broadcast %cst_132 : f32 to vector<1x1xf32>
    %235 = arith.mulf %234, %233 : vector<1x1xf32>
    %c0_133 = arith.constant 0 : index
    %c0_134 = arith.constant 0 : index
    %236 = vector.load %arg42[%c0_133, %c0_134] : memref<1x1xf32, #tpu.memory_space<vmem>>, vector<1x1xf32>
    tpu.vector_store %arg42[%c0_133, %c0_134], %235 {strides = array<i32>} : memref<1x1xf32, #tpu.memory_space<vmem>>, vector<1x1xf32>,
    %237 = vector.broadcast %160 : vector<56x1xf32> to vector<56x16xf32>
    %238 = arith.subf %76, %237 : vector<56x16xf32>
    %cst_135 = arith.constant 9.99999997E-7 : f32
    %239 = vector.broadcast %cst_135 : f32 to vector<56x1xf32>
    %240 = arith.addf %160, %239 : vector<56x1xf32>
    %241 = math.log %240 : vector<56x1xf32>
    %cst_136 = arith.constant 9.99999997E-7 : f32
    %242 = vector.broadcast %cst_136 : f32 to vector<56x16xf32>
    %243 = arith.addf %76, %242 : vector<56x16xf32>
    %244 = math.log %243 : vector<56x16xf32>
    %245 = vector.broadcast %241 : vector<56x1xf32> to vector<56x16xf32>
    %246 = arith.subf %245, %244 : vector<56x16xf32>
    %247 = vector.broadcast %160 : vector<56x1xf32> to vector<56x16xf32>
    %248 = arith.mulf %247, %246 : vector<56x16xf32>
    %249 = arith.addf %238, %248 : vector<56x16xf32>
    %250 = math.absf %249 : vector<56x16xf32>
    %cst_137 = arith.constant dense<0.000000e+00> : vector<56xf32>
    %251 = vector.multi_reduction <add>, %250, %cst_137 [1] : vector<56x16xf32> to vector<56xf32>
    %252 = vector.shape_cast %251 : vector<56xf32> to vector<56x1xf32>
    %cst_138 = arith.constant dense<0.000000e+00> : vector<1xf32>
    %253 = vector.multi_reduction <add>, %252, %cst_138 [0] : vector<56x1xf32> to vector<1xf32>
    %254 = vector.shape_cast %253 : vector<1xf32> to vector<1x1xf32>
    %c0_139 = arith.constant 0 : index
    %c0_140 = arith.constant 0 : index
    %255 = vector.load %arg43[%c0_139, %c0_140] : memref<1x1xf32, #tpu.memory_space<vmem>>, vector<1x1xf32>
    tpu.vector_store %arg43[%c0_139, %c0_140], %254 {strides = array<i32>} : memref<1x1xf32, #tpu.memory_space<vmem>>, vector<1x1xf32>,
    return
  }
  func.func @transform_0(%arg0: i32) -> (i32, i32) {
    %c0_i32 = arith.constant 0 : i32
    %c0_i32_0 = arith.constant 0 : i32
    %c0_i32_1 = arith.constant 0 : i32
    return %c0_i32, %c0_i32_0 : i32, i32
  }
  func.func @transform_1(%arg0: i32) -> (i32, i32) {
    %c0_i32 = arith.constant 0 : i32
    %c0_i32_0 = arith.constant 0 : i32
    %c0_i32_1 = arith.constant 0 : i32
    return %c0_i32, %c0_i32_0 : i32, i32
  }
  func.func @transform_2(%arg0: i32) -> (i32, i32) {
    %c0_i32 = arith.constant 0 : i32
    %c0_i32_0 = arith.constant 0 : i32
    %c0_i32_1 = arith.constant 0 : i32
    return %c0_i32, %c0_i32_0 : i32, i32
  }
  func.func @transform_3(%arg0: i32) -> (i32, i32) {
    %c0_i32 = arith.constant 0 : i32
    %c0_i32_0 = arith.constant 0 : i32
    %c0_i32_1 = arith.constant 0 : i32
    return %c0_i32, %c0_i32_0 : i32, i32
  }
  func.func @transform_4(%arg0: i32) -> (i32, i32) {
    %c0_i32 = arith.constant 0 : i32
    %c0_i32_0 = arith.constant 0 : i32
    %c0_i32_1 = arith.constant 0 : i32
    return %c0_i32, %c0_i32_0 : i32, i32
  }
  func.func @transform_5(%arg0: i32) -> (i32, i32) {
    %c0_i32 = arith.constant 0 : i32
    %c0_i32_0 = arith.constant 0 : i32
    %c0_i32_1 = arith.constant 0 : i32
    return %c0_i32, %c0_i32_0 : i32, i32
  }
  func.func @transform_6(%arg0: i32) -> (i32, i32) {
    %c0_i32 = arith.constant 0 : i32
    %c0_i32_0 = arith.constant 0 : i32
    %c0_i32_1 = arith.constant 0 : i32
    return %c0_i32, %c0_i32_0 : i32, i32
  }
  func.func @transform_7(%arg0: i32) -> (i32, i32) {
    %c0_i32 = arith.constant 0 : i32
    %c0_i32_0 = arith.constant 0 : i32
    %c0_i32_1 = arith.constant 0 : i32
    return %c0_i32, %c0_i32_0 : i32, i32
  }
  func.func @transform_8(%arg0: i32) -> (i32, i32) {
    %c0_i32 = arith.constant 0 : i32
    %c0_i32_0 = arith.constant 0 : i32
    %c0_i32_1 = arith.constant 0 : i32
    return %c0_i32, %c0_i32_0 : i32, i32
  }
  func.func @transform_9(%arg0: i32) -> (i32, i32) {
    %c0_i32 = arith.constant 0 : i32
    %c0_i32_0 = arith.constant 0 : i32
    %c0_i32_1 = arith.constant 0 : i32
    return %c0_i32, %c0_i32_0 : i32, i32
  }
  func.func @transform_10(%arg0: i32) -> (i32, i32) {
    %c0_i32 = arith.constant 0 : i32
    %c0_i32_0 = arith.constant 0 : i32
    %c0_i32_1 = arith.constant 0 : i32
    return %c0_i32, %c0_i32_0 : i32, i32
  }
  func.func @transform_11(%arg0: i32) -> (i32, i32) {
    %c0_i32 = arith.constant 0 : i32
    %c0_i32_0 = arith.constant 0 : i32
    %c0_i32_1 = arith.constant 0 : i32
    return %c0_i32, %c0_i32_0 : i32, i32
  }
  func.func @transform_12(%arg0: i32) -> (i32, i32) {
    %c0_i32 = arith.constant 0 : i32
    %c0_i32_0 = arith.constant 0 : i32
    %c0_i32_1 = arith.constant 0 : i32
    return %c0_i32, %c0_i32_0 : i32, i32
  }
  func.func @transform_13(%arg0: i32) -> (i32, i32) {
    %c0_i32 = arith.constant 0 : i32
    %c0_i32_0 = arith.constant 0 : i32
    %c0_i32_1 = arith.constant 0 : i32
    return %c0_i32, %c0_i32_0 : i32, i32
  }
  func.func @transform_14(%arg0: i32) -> (i32, i32) {
    %c0_i32 = arith.constant 0 : i32
    %c0_i32_0 = arith.constant 0 : i32
    %c0_i32_1 = arith.constant 0 : i32
    return %c0_i32, %c0_i32_0 : i32, i32
  }
  func.func @transform_15(%arg0: i32) -> (i32, i32) {
    %c0_i32 = arith.constant 0 : i32
    %c0_i32_0 = arith.constant 0 : i32
    %c0_i32_1 = arith.constant 0 : i32
    return %c0_i32, %c0_i32_0 : i32, i32
  }
  func.func @transform_16(%arg0: i32) -> (i32, i32) {
    %c0_i32 = arith.constant 0 : i32
    %c0_i32_0 = arith.constant 0 : i32
    %c0_i32_1 = arith.constant 0 : i32
    return %c0_i32, %c0_i32_0 : i32, i32
  }
  func.func @transform_17(%arg0: i32) -> (i32, i32) {
    %c0_i32 = arith.constant 0 : i32
    %c0_i32_0 = arith.constant 0 : i32
    %c0_i32_1 = arith.constant 0 : i32
    return %c0_i32, %c0_i32_0 : i32, i32
  }
  func.func @transform_18(%arg0: i32) -> (i32, i32) {
    %c0_i32 = arith.constant 0 : i32
    %c0_i32_0 = arith.constant 0 : i32
    %c0_i32_1 = arith.constant 0 : i32
    return %c0_i32, %c0_i32_0 : i32, i32
  }
  func.func @transform_19(%arg0: i32) -> (i32, i32) {
    %c0_i32 = arith.constant 0 : i32
    %c0_i32_0 = arith.constant 0 : i32
    %c0_i32_1 = arith.constant 0 : i32
    return %c0_i32, %c0_i32_0 : i32, i32
  }
  func.func @transform_20(%arg0: i32) -> (i32, i32) {
    %c0_i32 = arith.constant 0 : i32
    %c0_i32_0 = arith.constant 0 : i32
    %c0_i32_1 = arith.constant 0 : i32
    return %c0_i32, %c0_i32_0 : i32, i32
  }
  func.func @transform_21(%arg0: i32) -> (i32, i32) {
    %c0_i32 = arith.constant 0 : i32
    %c0_i32_0 = arith.constant 0 : i32
    %c0_i32_1 = arith.constant 0 : i32
    return %c0_i32, %c0_i32_0 : i32, i32
  }
  func.func @transform_22(%arg0: i32) -> (i32, i32) {
    %c0_i32 = arith.constant 0 : i32
    %c0_i32_0 = arith.constant 0 : i32
    %c0_i32_1 = arith.constant 0 : i32
    return %c0_i32, %c0_i32_0 : i32, i32
  }
  func.func @transform_23(%arg0: i32) -> (i32, i32) {
    %c0_i32 = arith.constant 0 : i32
    %c0_i32_0 = arith.constant 0 : i32
    %c0_i32_1 = arith.constant 0 : i32
    return %c0_i32, %c0_i32_0 : i32, i32
  }
  func.func @transform_24(%arg0: i32) -> (i32, i32) {
    %c0_i32 = arith.constant 0 : i32
    %c0_i32_0 = arith.constant 0 : i32
    %c0_i32_1 = arith.constant 0 : i32
    return %c0_i32, %c0_i32_0 : i32, i32
  }
  func.func @transform_25(%arg0: i32) -> (i32, i32) {
    %c0_i32 = arith.constant 0 : i32
    %c0_i32_0 = arith.constant 0 : i32
    %c0_i32_1 = arith.constant 0 : i32
    return %c0_i32, %c0_i32_0 : i32, i32
  }
  func.func @transform_26(%arg0: i32) -> (i32, i32) {
    %c0_i32 = arith.constant 0 : i32
    %c0_i32_0 = arith.constant 0 : i32
    %c0_i32_1 = arith.constant 0 : i32
    return %c0_i32, %c0_i32_0 : i32, i32
  }
  func.func @transform_27(%arg0: i32) -> (i32, i32) {
    %c0_i32 = arith.constant 0 : i32
    %c0_i32_0 = arith.constant 0 : i32
    %c0_i32_1 = arith.constant 0 : i32
    return %c0_i32, %c0_i32_0 : i32, i32
  }
  func.func @transform_28(%arg0: i32) -> (i32, i32) {
    %c0_i32 = arith.constant 0 : i32
    %c0_i32_0 = arith.constant 0 : i32
    %c0_i32_1 = arith.constant 0 : i32
    return %c0_i32, %c0_i32_0 : i32, i32
  }
  func.func @transform_29(%arg0: i32) -> (i32, i32) {
    %c0_i32 = arith.constant 0 : i32
    %c0_i32_0 = arith.constant 0 : i32
    %c0_i32_1 = arith.constant 0 : i32
    return %c0_i32, %c0_i32_0 : i32, i32
  }
  func.func @transform_30(%arg0: i32) -> (i32, i32) {
    %c0_i32 = arith.constant 0 : i32
    %c0_i32_0 = arith.constant 0 : i32
    %c0_i32_1 = arith.constant 0 : i32
    return %c0_i32, %c0_i32_0 : i32, i32
  }
  func.func @transform_31(%arg0: i32) -> (i32, i32) {
    %c0_i32 = arith.constant 0 : i32
    %c0_i32_0 = arith.constant 0 : i32
    %c0_i32_1 = arith.constant 0 : i32
    return %c0_i32, %c0_i32_0 : i32, i32
  }
  func.func @transform_32(%arg0: i32) -> (i32, i32) {
    %c0_i32 = arith.constant 0 : i32
    %c0_i32_0 = arith.constant 0 : i32
    %c0_i32_1 = arith.constant 0 : i32
    return %c0_i32, %c0_i32_0 : i32, i32
  }
  func.func @transform_33(%arg0: i32) -> (i32, i32) {
    %c0_i32 = arith.constant 0 : i32
    %c0_i32_0 = arith.constant 0 : i32
    %c0_i32_1 = arith.constant 0 : i32
    return %c0_i32, %c0_i32_0 : i32, i32
  }
  func.func @transform_34(%arg0: i32) -> (i32, i32) {
    %c0_i32 = arith.constant 0 : i32
    %c0_i32_0 = arith.constant 0 : i32
    %c0_i32_1 = arith.constant 0 : i32
    return %c0_i32, %c0_i32_0 : i32, i32
  }
  func.func @transform_35(%arg0: i32) -> (i32, i32) {
    %c0_i32 = arith.constant 0 : i32
    %c0_i32_0 = arith.constant 0 : i32
    %c0_i32_1 = arith.constant 0 : i32
    return %c0_i32, %c0_i32_0 : i32, i32
  }
  func.func @transform_36(%arg0: i32) -> (i32, i32) {
    %c0_i32 = arith.constant 0 : i32
    %c0_i32_0 = arith.constant 0 : i32
    %c0_i32_1 = arith.constant 0 : i32
    return %c0_i32, %c0_i32_0 : i32, i32
  }
  func.func @transform_37(%arg0: i32) -> (i32, i32) {
    %c0_i32 = arith.constant 0 : i32
    %c0_i32_0 = arith.constant 0 : i32
    %c0_i32_1 = arith.constant 0 : i32
    return %c0_i32, %c0_i32_0 : i32, i32
  }
  func.func @transform_38(%arg0: i32) -> (i32, i32) {
    %c0_i32 = arith.constant 0 : i32
    %c0_i32_0 = arith.constant 0 : i32
    %c0_i32_1 = arith.constant 0 : i32
    return %c0_i32, %c0_i32_0 : i32, i32
  }
  func.func @transform_39(%arg0: i32) -> (i32, i32) {
    %c0_i32 = arith.constant 0 : i32
    %c0_i32_0 = arith.constant 0 : i32
    %c0_i32_1 = arith.constant 0 : i32
    return %c0_i32, %c0_i32_0 : i32, i32
  }
  func.func @transform_40(%arg0: i32) -> (i32, i32) {
    %c0_i32 = arith.constant 0 : i32
    %c0_i32_0 = arith.constant 0 : i32
    %c0_i32_1 = arith.constant 0 : i32
    return %c0_i32, %c0_i32_0 : i32, i32
  }
  func.func @transform_41(%arg0: i32) -> (i32, i32) {
    %c0_i32 = arith.constant 0 : i32
    %c0_i32_0 = arith.constant 0 : i32
    %c0_i32_1 = arith.constant 0 : i32
    return %c0_i32, %c0_i32_0 : i32, i32
  }
  func.func @transform_42(%arg0: i32) -> (i32, i32) {
    %c0_i32 = arith.constant 0 : i32
    %c0_i32_0 = arith.constant 0 : i32
    %c0_i32_1 = arith.constant 0 : i32
    return %c0_i32, %c0_i32_0 : i32, i32
  }
}

module attributes {stable_mosaic.version = 11 : i64} {
  func.func @_sru_stack_kernel(%arg0: i32, %arg1: memref<16x16xf32, #tpu.memory_space<vmem>>, %arg2: memref<16x32xf32, #tpu.memory_space<vmem>>, %arg3: memref<1x32xf32, #tpu.memory_space<vmem>>, %arg4: memref<16x32xf32, #tpu.memory_space<vmem>>, %arg5: memref<1x32xf32, #tpu.memory_space<vmem>>, %arg6: memref<16x32xf32, #tpu.memory_space<vmem>>, %arg7: memref<1x32xf32, #tpu.memory_space<vmem>>, %arg8: memref<16x32xf32, #tpu.memory_space<vmem>>, %arg9: memref<1x32xf32, #tpu.memory_space<vmem>>, %arg10: memref<32x32xf32, #tpu.memory_space<vmem>>, %arg11: memref<1x32xf32, #tpu.memory_space<vmem>>, %arg12: memref<32x32xf32, #tpu.memory_space<vmem>>, %arg13: memref<1x32xf32, #tpu.memory_space<vmem>>, %arg14: memref<32x32xf32, #tpu.memory_space<vmem>>, %arg15: memref<1x32xf32, #tpu.memory_space<vmem>>, %arg16: memref<16x32xf32, #tpu.memory_space<vmem>>) attributes {dimension_semantics = [#tpu.dimension_semantics<arbitrary>], iteration_bounds = array<i64: 1>, scalar_prefetch = 0 : i64, scratch_operands = 0 : i64, tpu.core_type = #tpu.core_type<tc>, window_params = [{pipeline_mode = #tpu.pipeline_mode<synchronous>, transform_indices = @transform_0, window_bounds = array<i64: 16, 16>}, {pipeline_mode = #tpu.pipeline_mode<synchronous>, transform_indices = @transform_1, window_bounds = array<i64: 16, 32>}, {pipeline_mode = #tpu.pipeline_mode<synchronous>, transform_indices = @transform_2, window_bounds = array<i64: 1, 32>}, {pipeline_mode = #tpu.pipeline_mode<synchronous>, transform_indices = @transform_3, window_bounds = array<i64: 16, 32>}, {pipeline_mode = #tpu.pipeline_mode<synchronous>, transform_indices = @transform_4, window_bounds = array<i64: 1, 32>}, {pipeline_mode = #tpu.pipeline_mode<synchronous>, transform_indices = @transform_5, window_bounds = array<i64: 16, 32>}, {pipeline_mode = #tpu.pipeline_mode<synchronous>, transform_indices = @transform_6, window_bounds = array<i64: 1, 32>}, {pipeline_mode = #tpu.pipeline_mode<synchronous>, transform_indices = @transform_7, window_bounds = array<i64: 16, 32>}, {pipeline_mode = #tpu.pipeline_mode<synchronous>, transform_indices = @transform_8, window_bounds = array<i64: 1, 32>}, {pipeline_mode = #tpu.pipeline_mode<synchronous>, transform_indices = @transform_9, window_bounds = array<i64: 32, 32>}, {pipeline_mode = #tpu.pipeline_mode<synchronous>, transform_indices = @transform_10, window_bounds = array<i64: 1, 32>}, {pipeline_mode = #tpu.pipeline_mode<synchronous>, transform_indices = @transform_11, window_bounds = array<i64: 32, 32>}, {pipeline_mode = #tpu.pipeline_mode<synchronous>, transform_indices = @transform_12, window_bounds = array<i64: 1, 32>}, {pipeline_mode = #tpu.pipeline_mode<synchronous>, transform_indices = @transform_13, window_bounds = array<i64: 32, 32>}, {pipeline_mode = #tpu.pipeline_mode<synchronous>, transform_indices = @transform_14, window_bounds = array<i64: 1, 32>}, {pipeline_mode = #tpu.pipeline_mode<synchronous>, transform_indices = @transform_15, window_bounds = array<i64: 16, 32>}]} {
    %c0 = arith.constant 0 : index
    %c0_0 = arith.constant 0 : index
    %0 = vector.load %arg1[%c0, %c0_0] : memref<16x16xf32, #tpu.memory_space<vmem>>, vector<16x16xf32>
    %c0_1 = arith.constant 0 : index
    %c0_2 = arith.constant 0 : index
    %1 = vector.load %arg2[%c0_1, %c0_2] : memref<16x32xf32, #tpu.memory_space<vmem>>, vector<16x32xf32>
    %cst = arith.constant dense<0.000000e+00> : vector<16x32xf32>
    %2 = tpu.matmul %0, %1, %cst {dimension_numbers = #tpu.dot_dimension_numbers<[1], [0], [0], [1], [0, 0, 1, 1], [], []>} : vector<16x16xf32>, vector<16x32xf32>, vector<16x32xf32> -> vector<16x32xf32>
    %c0_3 = arith.constant 0 : index
    %c0_4 = arith.constant 0 : index
    %3 = vector.load %arg3[%c0_3, %c0_4] : memref<1x32xf32, #tpu.memory_space<vmem>>, vector<1x32xf32>
    %4 = vector.broadcast %3 : vector<1x32xf32> to vector<16x32xf32>
    %5 = arith.addf %2, %4 : vector<16x32xf32>
    %c0_5 = arith.constant 0 : index
    %c0_6 = arith.constant 0 : index
    %6 = vector.load %arg4[%c0_5, %c0_6] : memref<16x32xf32, #tpu.memory_space<vmem>>, vector<16x32xf32>
    %cst_7 = arith.constant dense<0.000000e+00> : vector<16x32xf32>
    %7 = tpu.matmul %0, %6, %cst_7 {dimension_numbers = #tpu.dot_dimension_numbers<[1], [0], [0], [1], [0, 0, 1, 1], [], []>} : vector<16x16xf32>, vector<16x32xf32>, vector<16x32xf32> -> vector<16x32xf32>
    %c0_8 = arith.constant 0 : index
    %c0_9 = arith.constant 0 : index
    %8 = vector.load %arg5[%c0_8, %c0_9] : memref<1x32xf32, #tpu.memory_space<vmem>>, vector<1x32xf32>
    %9 = vector.broadcast %8 : vector<1x32xf32> to vector<16x32xf32>
    %10 = arith.addf %7, %9 : vector<16x32xf32>
    %11 = arith.negf %10 : vector<16x32xf32>
    %12 = math.exp %11 : vector<16x32xf32>
    %cst_10 = arith.constant 1.000000e+00 : f32
    %13 = vector.broadcast %cst_10 : f32 to vector<16x32xf32>
    %14 = arith.addf %13, %12 : vector<16x32xf32>
    %15 = arith.divf %13, %14 : vector<16x32xf32>
    %c0_11 = arith.constant 0 : index
    %c0_12 = arith.constant 0 : index
    %16 = vector.load %arg6[%c0_11, %c0_12] : memref<16x32xf32, #tpu.memory_space<vmem>>, vector<16x32xf32>
    %cst_13 = arith.constant dense<0.000000e+00> : vector<16x32xf32>
    %17 = tpu.matmul %0, %16, %cst_13 {dimension_numbers = #tpu.dot_dimension_numbers<[1], [0], [0], [1], [0, 0, 1, 1], [], []>} : vector<16x16xf32>, vector<16x32xf32>, vector<16x32xf32> -> vector<16x32xf32>
    %c0_14 = arith.constant 0 : index
    %c0_15 = arith.constant 0 : index
    %18 = vector.load %arg7[%c0_14, %c0_15] : memref<1x32xf32, #tpu.memory_space<vmem>>, vector<1x32xf32>
    %19 = vector.broadcast %18 : vector<1x32xf32> to vector<16x32xf32>
    %20 = arith.addf %17, %19 : vector<16x32xf32>
    %21 = arith.negf %20 : vector<16x32xf32>
    %22 = math.exp %21 : vector<16x32xf32>
    %cst_16 = arith.constant 1.000000e+00 : f32
    %23 = vector.broadcast %cst_16 : f32 to vector<16x32xf32>
    %24 = arith.addf %23, %22 : vector<16x32xf32>
    %25 = arith.divf %23, %24 : vector<16x32xf32>
    %c0_17 = arith.constant 0 : index
    %c0_18 = arith.constant 0 : index
    %26 = vector.load %arg8[%c0_17, %c0_18] : memref<16x32xf32, #tpu.memory_space<vmem>>, vector<16x32xf32>
    %cst_19 = arith.constant dense<0.000000e+00> : vector<16x32xf32>
    %27 = tpu.matmul %0, %26, %cst_19 {dimension_numbers = #tpu.dot_dimension_numbers<[1], [0], [0], [1], [0, 0, 1, 1], [], []>} : vector<16x16xf32>, vector<16x32xf32>, vector<16x32xf32> -> vector<16x32xf32>
    %c0_20 = arith.constant 0 : index
    %c0_21 = arith.constant 0 : index
    %28 = vector.load %arg9[%c0_20, %c0_21] : memref<1x32xf32, #tpu.memory_space<vmem>>, vector<1x32xf32>
    %29 = vector.broadcast %28 : vector<1x32xf32> to vector<16x32xf32>
    %30 = arith.addf %27, %29 : vector<16x32xf32>
    %cst_22 = arith.constant 0.000000e+00 : f32
    %31 = vector.broadcast %cst_22 : f32 to vector<2x32xf32>
    %32 = vector.extract_strided_slice %15 {offsets = [0, 0], sizes = [2, 32], strides = [1, 1]} : vector<16x32xf32> to vector<2x32xf32>
    %33 = vector.extract_strided_slice %25 {offsets = [0, 0], sizes = [2, 32], strides = [1, 1]} : vector<16x32xf32> to vector<2x32xf32>
    %34 = arith.mulf %32, %31 : vector<2x32xf32>
    %cst_23 = arith.constant 1.000000e+00 : f32
    %35 = vector.broadcast %cst_23 : f32 to vector<2x32xf32>
    %36 = arith.subf %35, %32 : vector<2x32xf32>
    %37 = vector.extract_strided_slice %5 {offsets = [0, 0], sizes = [2, 32], strides = [1, 1]} : vector<16x32xf32> to vector<2x32xf32>
    %38 = arith.mulf %36, %37 : vector<2x32xf32>
    %39 = arith.addf %34, %38 : vector<2x32xf32>
    %40 = math.tanh %39 : vector<2x32xf32>
    %41 = arith.mulf %33, %40 : vector<2x32xf32>
    %cst_24 = arith.constant 1.000000e+00 : f32
    %42 = vector.broadcast %cst_24 : f32 to vector<2x32xf32>
    %43 = arith.subf %42, %33 : vector<2x32xf32>
    %44 = vector.extract_strided_slice %30 {offsets = [0, 0], sizes = [2, 32], strides = [1, 1]} : vector<16x32xf32> to vector<2x32xf32>
    %45 = arith.mulf %43, %44 : vector<2x32xf32>
    %46 = arith.addf %41, %45 : vector<2x32xf32>
    %47 = vector.extract_strided_slice %15 {offsets = [2, 0], sizes = [2, 32], strides = [1, 1]} : vector<16x32xf32> to vector<2x32xf32>
    %48 = vector.extract_strided_slice %25 {offsets = [2, 0], sizes = [2, 32], strides = [1, 1]} : vector<16x32xf32> to vector<2x32xf32>
    %49 = arith.mulf %47, %39 : vector<2x32xf32>
    %cst_25 = arith.constant 1.000000e+00 : f32
    %50 = vector.broadcast %cst_25 : f32 to vector<2x32xf32>
    %51 = arith.subf %50, %47 : vector<2x32xf32>
    %52 = vector.extract_strided_slice %5 {offsets = [2, 0], sizes = [2, 32], strides = [1, 1]} : vector<16x32xf32> to vector<2x32xf32>
    %53 = arith.mulf %51, %52 : vector<2x32xf32>
    %54 = arith.addf %49, %53 : vector<2x32xf32>
    %55 = math.tanh %54 : vector<2x32xf32>
    %56 = arith.mulf %48, %55 : vector<2x32xf32>
    %cst_26 = arith.constant 1.000000e+00 : f32
    %57 = vector.broadcast %cst_26 : f32 to vector<2x32xf32>
    %58 = arith.subf %57, %48 : vector<2x32xf32>
    %59 = vector.extract_strided_slice %30 {offsets = [2, 0], sizes = [2, 32], strides = [1, 1]} : vector<16x32xf32> to vector<2x32xf32>
    %60 = arith.mulf %58, %59 : vector<2x32xf32>
    %61 = arith.addf %56, %60 : vector<2x32xf32>
    %62 = vector.extract_strided_slice %15 {offsets = [4, 0], sizes = [2, 32], strides = [1, 1]} : vector<16x32xf32> to vector<2x32xf32>
    %63 = vector.extract_strided_slice %25 {offsets = [4, 0], sizes = [2, 32], strides = [1, 1]} : vector<16x32xf32> to vector<2x32xf32>
    %64 = arith.mulf %62, %54 : vector<2x32xf32>
    %cst_27 = arith.constant 1.000000e+00 : f32
    %65 = vector.broadcast %cst_27 : f32 to vector<2x32xf32>
    %66 = arith.subf %65, %62 : vector<2x32xf32>
    %67 = vector.extract_strided_slice %5 {offsets = [4, 0], sizes = [2, 32], strides = [1, 1]} : vector<16x32xf32> to vector<2x32xf32>
    %68 = arith.mulf %66, %67 : vector<2x32xf32>
    %69 = arith.addf %64, %68 : vector<2x32xf32>
    %70 = math.tanh %69 : vector<2x32xf32>
    %71 = arith.mulf %63, %70 : vector<2x32xf32>
    %cst_28 = arith.constant 1.000000e+00 : f32
    %72 = vector.broadcast %cst_28 : f32 to vector<2x32xf32>
    %73 = arith.subf %72, %63 : vector<2x32xf32>
    %74 = vector.extract_strided_slice %30 {offsets = [4, 0], sizes = [2, 32], strides = [1, 1]} : vector<16x32xf32> to vector<2x32xf32>
    %75 = arith.mulf %73, %74 : vector<2x32xf32>
    %76 = arith.addf %71, %75 : vector<2x32xf32>
    %77 = vector.extract_strided_slice %15 {offsets = [6, 0], sizes = [2, 32], strides = [1, 1]} : vector<16x32xf32> to vector<2x32xf32>
    %78 = vector.extract_strided_slice %25 {offsets = [6, 0], sizes = [2, 32], strides = [1, 1]} : vector<16x32xf32> to vector<2x32xf32>
    %79 = arith.mulf %77, %69 : vector<2x32xf32>
    %cst_29 = arith.constant 1.000000e+00 : f32
    %80 = vector.broadcast %cst_29 : f32 to vector<2x32xf32>
    %81 = arith.subf %80, %77 : vector<2x32xf32>
    %82 = vector.extract_strided_slice %5 {offsets = [6, 0], sizes = [2, 32], strides = [1, 1]} : vector<16x32xf32> to vector<2x32xf32>
    %83 = arith.mulf %81, %82 : vector<2x32xf32>
    %84 = arith.addf %79, %83 : vector<2x32xf32>
    %85 = math.tanh %84 : vector<2x32xf32>
    %86 = arith.mulf %78, %85 : vector<2x32xf32>
    %cst_30 = arith.constant 1.000000e+00 : f32
    %87 = vector.broadcast %cst_30 : f32 to vector<2x32xf32>
    %88 = arith.subf %87, %78 : vector<2x32xf32>
    %89 = vector.extract_strided_slice %30 {offsets = [6, 0], sizes = [2, 32], strides = [1, 1]} : vector<16x32xf32> to vector<2x32xf32>
    %90 = arith.mulf %88, %89 : vector<2x32xf32>
    %91 = arith.addf %86, %90 : vector<2x32xf32>
    %92 = vector.extract_strided_slice %15 {offsets = [8, 0], sizes = [2, 32], strides = [1, 1]} : vector<16x32xf32> to vector<2x32xf32>
    %93 = vector.extract_strided_slice %25 {offsets = [8, 0], sizes = [2, 32], strides = [1, 1]} : vector<16x32xf32> to vector<2x32xf32>
    %94 = arith.mulf %92, %84 : vector<2x32xf32>
    %cst_31 = arith.constant 1.000000e+00 : f32
    %95 = vector.broadcast %cst_31 : f32 to vector<2x32xf32>
    %96 = arith.subf %95, %92 : vector<2x32xf32>
    %97 = vector.extract_strided_slice %5 {offsets = [8, 0], sizes = [2, 32], strides = [1, 1]} : vector<16x32xf32> to vector<2x32xf32>
    %98 = arith.mulf %96, %97 : vector<2x32xf32>
    %99 = arith.addf %94, %98 : vector<2x32xf32>
    %100 = math.tanh %99 : vector<2x32xf32>
    %101 = arith.mulf %93, %100 : vector<2x32xf32>
    %cst_32 = arith.constant 1.000000e+00 : f32
    %102 = vector.broadcast %cst_32 : f32 to vector<2x32xf32>
    %103 = arith.subf %102, %93 : vector<2x32xf32>
    %104 = vector.extract_strided_slice %30 {offsets = [8, 0], sizes = [2, 32], strides = [1, 1]} : vector<16x32xf32> to vector<2x32xf32>
    %105 = arith.mulf %103, %104 : vector<2x32xf32>
    %106 = arith.addf %101, %105 : vector<2x32xf32>
    %107 = vector.extract_strided_slice %15 {offsets = [10, 0], sizes = [2, 32], strides = [1, 1]} : vector<16x32xf32> to vector<2x32xf32>
    %108 = vector.extract_strided_slice %25 {offsets = [10, 0], sizes = [2, 32], strides = [1, 1]} : vector<16x32xf32> to vector<2x32xf32>
    %109 = arith.mulf %107, %99 : vector<2x32xf32>
    %cst_33 = arith.constant 1.000000e+00 : f32
    %110 = vector.broadcast %cst_33 : f32 to vector<2x32xf32>
    %111 = arith.subf %110, %107 : vector<2x32xf32>
    %112 = vector.extract_strided_slice %5 {offsets = [10, 0], sizes = [2, 32], strides = [1, 1]} : vector<16x32xf32> to vector<2x32xf32>
    %113 = arith.mulf %111, %112 : vector<2x32xf32>
    %114 = arith.addf %109, %113 : vector<2x32xf32>
    %115 = math.tanh %114 : vector<2x32xf32>
    %116 = arith.mulf %108, %115 : vector<2x32xf32>
    %cst_34 = arith.constant 1.000000e+00 : f32
    %117 = vector.broadcast %cst_34 : f32 to vector<2x32xf32>
    %118 = arith.subf %117, %108 : vector<2x32xf32>
    %119 = vector.extract_strided_slice %30 {offsets = [10, 0], sizes = [2, 32], strides = [1, 1]} : vector<16x32xf32> to vector<2x32xf32>
    %120 = arith.mulf %118, %119 : vector<2x32xf32>
    %121 = arith.addf %116, %120 : vector<2x32xf32>
    %122 = vector.extract_strided_slice %15 {offsets = [12, 0], sizes = [2, 32], strides = [1, 1]} : vector<16x32xf32> to vector<2x32xf32>
    %123 = vector.extract_strided_slice %25 {offsets = [12, 0], sizes = [2, 32], strides = [1, 1]} : vector<16x32xf32> to vector<2x32xf32>
    %124 = arith.mulf %122, %114 : vector<2x32xf32>
    %cst_35 = arith.constant 1.000000e+00 : f32
    %125 = vector.broadcast %cst_35 : f32 to vector<2x32xf32>
    %126 = arith.subf %125, %122 : vector<2x32xf32>
    %127 = vector.extract_strided_slice %5 {offsets = [12, 0], sizes = [2, 32], strides = [1, 1]} : vector<16x32xf32> to vector<2x32xf32>
    %128 = arith.mulf %126, %127 : vector<2x32xf32>
    %129 = arith.addf %124, %128 : vector<2x32xf32>
    %130 = math.tanh %129 : vector<2x32xf32>
    %131 = arith.mulf %123, %130 : vector<2x32xf32>
    %cst_36 = arith.constant 1.000000e+00 : f32
    %132 = vector.broadcast %cst_36 : f32 to vector<2x32xf32>
    %133 = arith.subf %132, %123 : vector<2x32xf32>
    %134 = vector.extract_strided_slice %30 {offsets = [12, 0], sizes = [2, 32], strides = [1, 1]} : vector<16x32xf32> to vector<2x32xf32>
    %135 = arith.mulf %133, %134 : vector<2x32xf32>
    %136 = arith.addf %131, %135 : vector<2x32xf32>
    %137 = vector.extract_strided_slice %15 {offsets = [14, 0], sizes = [2, 32], strides = [1, 1]} : vector<16x32xf32> to vector<2x32xf32>
    %138 = vector.extract_strided_slice %25 {offsets = [14, 0], sizes = [2, 32], strides = [1, 1]} : vector<16x32xf32> to vector<2x32xf32>
    %139 = arith.mulf %137, %129 : vector<2x32xf32>
    %cst_37 = arith.constant 1.000000e+00 : f32
    %140 = vector.broadcast %cst_37 : f32 to vector<2x32xf32>
    %141 = arith.subf %140, %137 : vector<2x32xf32>
    %142 = vector.extract_strided_slice %5 {offsets = [14, 0], sizes = [2, 32], strides = [1, 1]} : vector<16x32xf32> to vector<2x32xf32>
    %143 = arith.mulf %141, %142 : vector<2x32xf32>
    %144 = arith.addf %139, %143 : vector<2x32xf32>
    %145 = math.tanh %144 : vector<2x32xf32>
    %146 = arith.mulf %138, %145 : vector<2x32xf32>
    %cst_38 = arith.constant 1.000000e+00 : f32
    %147 = vector.broadcast %cst_38 : f32 to vector<2x32xf32>
    %148 = arith.subf %147, %138 : vector<2x32xf32>
    %149 = vector.extract_strided_slice %30 {offsets = [14, 0], sizes = [2, 32], strides = [1, 1]} : vector<16x32xf32> to vector<2x32xf32>
    %150 = arith.mulf %148, %149 : vector<2x32xf32>
    %151 = arith.addf %146, %150 : vector<2x32xf32>
    %152 = tpu.concatenate %46, %61, %76, %91, %106, %121, %136, %151 in 0 : vector<2x32xf32>, vector<2x32xf32>, vector<2x32xf32>, vector<2x32xf32>, vector<2x32xf32>, vector<2x32xf32>, vector<2x32xf32>, vector<2x32xf32> -> vector<16x32xf32>
    %c0_39 = arith.constant 0 : index
    %c0_40 = arith.constant 0 : index
    %153 = vector.load %arg10[%c0_39, %c0_40] : memref<32x32xf32, #tpu.memory_space<vmem>>, vector<32x32xf32>
    %cst_41 = arith.constant dense<0.000000e+00> : vector<16x32xf32>
    %154 = tpu.matmul %152, %153, %cst_41 {dimension_numbers = #tpu.dot_dimension_numbers<[1], [0], [0], [1], [0, 0, 1, 1], [], []>} : vector<16x32xf32>, vector<32x32xf32>, vector<16x32xf32> -> vector<16x32xf32>
    %c0_42 = arith.constant 0 : index
    %c0_43 = arith.constant 0 : index
    %155 = vector.load %arg11[%c0_42, %c0_43] : memref<1x32xf32, #tpu.memory_space<vmem>>, vector<1x32xf32>
    %156 = vector.broadcast %155 : vector<1x32xf32> to vector<16x32xf32>
    %157 = arith.addf %154, %156 : vector<16x32xf32>
    %c0_44 = arith.constant 0 : index
    %c0_45 = arith.constant 0 : index
    %158 = vector.load %arg12[%c0_44, %c0_45] : memref<32x32xf32, #tpu.memory_space<vmem>>, vector<32x32xf32>
    %cst_46 = arith.constant dense<0.000000e+00> : vector<16x32xf32>
    %159 = tpu.matmul %152, %158, %cst_46 {dimension_numbers = #tpu.dot_dimension_numbers<[1], [0], [0], [1], [0, 0, 1, 1], [], []>} : vector<16x32xf32>, vector<32x32xf32>, vector<16x32xf32> -> vector<16x32xf32>
    %c0_47 = arith.constant 0 : index
    %c0_48 = arith.constant 0 : index
    %160 = vector.load %arg13[%c0_47, %c0_48] : memref<1x32xf32, #tpu.memory_space<vmem>>, vector<1x32xf32>
    %161 = vector.broadcast %160 : vector<1x32xf32> to vector<16x32xf32>
    %162 = arith.addf %159, %161 : vector<16x32xf32>
    %163 = arith.negf %162 : vector<16x32xf32>
    %164 = math.exp %163 : vector<16x32xf32>
    %cst_49 = arith.constant 1.000000e+00 : f32
    %165 = vector.broadcast %cst_49 : f32 to vector<16x32xf32>
    %166 = arith.addf %165, %164 : vector<16x32xf32>
    %167 = arith.divf %165, %166 : vector<16x32xf32>
    %c0_50 = arith.constant 0 : index
    %c0_51 = arith.constant 0 : index
    %168 = vector.load %arg14[%c0_50, %c0_51] : memref<32x32xf32, #tpu.memory_space<vmem>>, vector<32x32xf32>
    %cst_52 = arith.constant dense<0.000000e+00> : vector<16x32xf32>
    %169 = tpu.matmul %152, %168, %cst_52 {dimension_numbers = #tpu.dot_dimension_numbers<[1], [0], [0], [1], [0, 0, 1, 1], [], []>} : vector<16x32xf32>, vector<32x32xf32>, vector<16x32xf32> -> vector<16x32xf32>
    %c0_53 = arith.constant 0 : index
    %c0_54 = arith.constant 0 : index
    %170 = vector.load %arg15[%c0_53, %c0_54] : memref<1x32xf32, #tpu.memory_space<vmem>>, vector<1x32xf32>
    %171 = vector.broadcast %170 : vector<1x32xf32> to vector<16x32xf32>
    %172 = arith.addf %169, %171 : vector<16x32xf32>
    %173 = arith.negf %172 : vector<16x32xf32>
    %174 = math.exp %173 : vector<16x32xf32>
    %cst_55 = arith.constant 1.000000e+00 : f32
    %175 = vector.broadcast %cst_55 : f32 to vector<16x32xf32>
    %176 = arith.addf %175, %174 : vector<16x32xf32>
    %177 = arith.divf %175, %176 : vector<16x32xf32>
    %cst_56 = arith.constant 0.000000e+00 : f32
    %178 = vector.broadcast %cst_56 : f32 to vector<2x32xf32>
    %179 = vector.extract_strided_slice %167 {offsets = [0, 0], sizes = [2, 32], strides = [1, 1]} : vector<16x32xf32> to vector<2x32xf32>
    %180 = vector.extract_strided_slice %177 {offsets = [0, 0], sizes = [2, 32], strides = [1, 1]} : vector<16x32xf32> to vector<2x32xf32>
    %181 = arith.mulf %179, %178 : vector<2x32xf32>
    %cst_57 = arith.constant 1.000000e+00 : f32
    %182 = vector.broadcast %cst_57 : f32 to vector<2x32xf32>
    %183 = arith.subf %182, %179 : vector<2x32xf32>
    %184 = vector.extract_strided_slice %157 {offsets = [0, 0], sizes = [2, 32], strides = [1, 1]} : vector<16x32xf32> to vector<2x32xf32>
    %185 = arith.mulf %183, %184 : vector<2x32xf32>
    %186 = arith.addf %181, %185 : vector<2x32xf32>
    %187 = math.tanh %186 : vector<2x32xf32>
    %188 = arith.mulf %180, %187 : vector<2x32xf32>
    %cst_58 = arith.constant 1.000000e+00 : f32
    %189 = vector.broadcast %cst_58 : f32 to vector<2x32xf32>
    %190 = arith.subf %189, %180 : vector<2x32xf32>
    %191 = vector.extract_strided_slice %152 {offsets = [0, 0], sizes = [2, 32], strides = [1, 1]} : vector<16x32xf32> to vector<2x32xf32>
    %192 = arith.mulf %190, %191 : vector<2x32xf32>
    %193 = arith.addf %188, %192 : vector<2x32xf32>
    %194 = vector.extract_strided_slice %167 {offsets = [2, 0], sizes = [2, 32], strides = [1, 1]} : vector<16x32xf32> to vector<2x32xf32>
    %195 = vector.extract_strided_slice %177 {offsets = [2, 0], sizes = [2, 32], strides = [1, 1]} : vector<16x32xf32> to vector<2x32xf32>
    %196 = arith.mulf %194, %186 : vector<2x32xf32>
    %cst_59 = arith.constant 1.000000e+00 : f32
    %197 = vector.broadcast %cst_59 : f32 to vector<2x32xf32>
    %198 = arith.subf %197, %194 : vector<2x32xf32>
    %199 = vector.extract_strided_slice %157 {offsets = [2, 0], sizes = [2, 32], strides = [1, 1]} : vector<16x32xf32> to vector<2x32xf32>
    %200 = arith.mulf %198, %199 : vector<2x32xf32>
    %201 = arith.addf %196, %200 : vector<2x32xf32>
    %202 = math.tanh %201 : vector<2x32xf32>
    %203 = arith.mulf %195, %202 : vector<2x32xf32>
    %cst_60 = arith.constant 1.000000e+00 : f32
    %204 = vector.broadcast %cst_60 : f32 to vector<2x32xf32>
    %205 = arith.subf %204, %195 : vector<2x32xf32>
    %206 = vector.extract_strided_slice %152 {offsets = [2, 0], sizes = [2, 32], strides = [1, 1]} : vector<16x32xf32> to vector<2x32xf32>
    %207 = arith.mulf %205, %206 : vector<2x32xf32>
    %208 = arith.addf %203, %207 : vector<2x32xf32>
    %209 = vector.extract_strided_slice %167 {offsets = [4, 0], sizes = [2, 32], strides = [1, 1]} : vector<16x32xf32> to vector<2x32xf32>
    %210 = vector.extract_strided_slice %177 {offsets = [4, 0], sizes = [2, 32], strides = [1, 1]} : vector<16x32xf32> to vector<2x32xf32>
    %211 = arith.mulf %209, %201 : vector<2x32xf32>
    %cst_61 = arith.constant 1.000000e+00 : f32
    %212 = vector.broadcast %cst_61 : f32 to vector<2x32xf32>
    %213 = arith.subf %212, %209 : vector<2x32xf32>
    %214 = vector.extract_strided_slice %157 {offsets = [4, 0], sizes = [2, 32], strides = [1, 1]} : vector<16x32xf32> to vector<2x32xf32>
    %215 = arith.mulf %213, %214 : vector<2x32xf32>
    %216 = arith.addf %211, %215 : vector<2x32xf32>
    %217 = math.tanh %216 : vector<2x32xf32>
    %218 = arith.mulf %210, %217 : vector<2x32xf32>
    %cst_62 = arith.constant 1.000000e+00 : f32
    %219 = vector.broadcast %cst_62 : f32 to vector<2x32xf32>
    %220 = arith.subf %219, %210 : vector<2x32xf32>
    %221 = vector.extract_strided_slice %152 {offsets = [4, 0], sizes = [2, 32], strides = [1, 1]} : vector<16x32xf32> to vector<2x32xf32>
    %222 = arith.mulf %220, %221 : vector<2x32xf32>
    %223 = arith.addf %218, %222 : vector<2x32xf32>
    %224 = vector.extract_strided_slice %167 {offsets = [6, 0], sizes = [2, 32], strides = [1, 1]} : vector<16x32xf32> to vector<2x32xf32>
    %225 = vector.extract_strided_slice %177 {offsets = [6, 0], sizes = [2, 32], strides = [1, 1]} : vector<16x32xf32> to vector<2x32xf32>
    %226 = arith.mulf %224, %216 : vector<2x32xf32>
    %cst_63 = arith.constant 1.000000e+00 : f32
    %227 = vector.broadcast %cst_63 : f32 to vector<2x32xf32>
    %228 = arith.subf %227, %224 : vector<2x32xf32>
    %229 = vector.extract_strided_slice %157 {offsets = [6, 0], sizes = [2, 32], strides = [1, 1]} : vector<16x32xf32> to vector<2x32xf32>
    %230 = arith.mulf %228, %229 : vector<2x32xf32>
    %231 = arith.addf %226, %230 : vector<2x32xf32>
    %232 = math.tanh %231 : vector<2x32xf32>
    %233 = arith.mulf %225, %232 : vector<2x32xf32>
    %cst_64 = arith.constant 1.000000e+00 : f32
    %234 = vector.broadcast %cst_64 : f32 to vector<2x32xf32>
    %235 = arith.subf %234, %225 : vector<2x32xf32>
    %236 = vector.extract_strided_slice %152 {offsets = [6, 0], sizes = [2, 32], strides = [1, 1]} : vector<16x32xf32> to vector<2x32xf32>
    %237 = arith.mulf %235, %236 : vector<2x32xf32>
    %238 = arith.addf %233, %237 : vector<2x32xf32>
    %239 = vector.extract_strided_slice %167 {offsets = [8, 0], sizes = [2, 32], strides = [1, 1]} : vector<16x32xf32> to vector<2x32xf32>
    %240 = vector.extract_strided_slice %177 {offsets = [8, 0], sizes = [2, 32], strides = [1, 1]} : vector<16x32xf32> to vector<2x32xf32>
    %241 = arith.mulf %239, %231 : vector<2x32xf32>
    %cst_65 = arith.constant 1.000000e+00 : f32
    %242 = vector.broadcast %cst_65 : f32 to vector<2x32xf32>
    %243 = arith.subf %242, %239 : vector<2x32xf32>
    %244 = vector.extract_strided_slice %157 {offsets = [8, 0], sizes = [2, 32], strides = [1, 1]} : vector<16x32xf32> to vector<2x32xf32>
    %245 = arith.mulf %243, %244 : vector<2x32xf32>
    %246 = arith.addf %241, %245 : vector<2x32xf32>
    %247 = math.tanh %246 : vector<2x32xf32>
    %248 = arith.mulf %240, %247 : vector<2x32xf32>
    %cst_66 = arith.constant 1.000000e+00 : f32
    %249 = vector.broadcast %cst_66 : f32 to vector<2x32xf32>
    %250 = arith.subf %249, %240 : vector<2x32xf32>
    %251 = vector.extract_strided_slice %152 {offsets = [8, 0], sizes = [2, 32], strides = [1, 1]} : vector<16x32xf32> to vector<2x32xf32>
    %252 = arith.mulf %250, %251 : vector<2x32xf32>
    %253 = arith.addf %248, %252 : vector<2x32xf32>
    %254 = vector.extract_strided_slice %167 {offsets = [10, 0], sizes = [2, 32], strides = [1, 1]} : vector<16x32xf32> to vector<2x32xf32>
    %255 = vector.extract_strided_slice %177 {offsets = [10, 0], sizes = [2, 32], strides = [1, 1]} : vector<16x32xf32> to vector<2x32xf32>
    %256 = arith.mulf %254, %246 : vector<2x32xf32>
    %cst_67 = arith.constant 1.000000e+00 : f32
    %257 = vector.broadcast %cst_67 : f32 to vector<2x32xf32>
    %258 = arith.subf %257, %254 : vector<2x32xf32>
    %259 = vector.extract_strided_slice %157 {offsets = [10, 0], sizes = [2, 32], strides = [1, 1]} : vector<16x32xf32> to vector<2x32xf32>
    %260 = arith.mulf %258, %259 : vector<2x32xf32>
    %261 = arith.addf %256, %260 : vector<2x32xf32>
    %262 = math.tanh %261 : vector<2x32xf32>
    %263 = arith.mulf %255, %262 : vector<2x32xf32>
    %cst_68 = arith.constant 1.000000e+00 : f32
    %264 = vector.broadcast %cst_68 : f32 to vector<2x32xf32>
    %265 = arith.subf %264, %255 : vector<2x32xf32>
    %266 = vector.extract_strided_slice %152 {offsets = [10, 0], sizes = [2, 32], strides = [1, 1]} : vector<16x32xf32> to vector<2x32xf32>
    %267 = arith.mulf %265, %266 : vector<2x32xf32>
    %268 = arith.addf %263, %267 : vector<2x32xf32>
    %269 = vector.extract_strided_slice %167 {offsets = [12, 0], sizes = [2, 32], strides = [1, 1]} : vector<16x32xf32> to vector<2x32xf32>
    %270 = vector.extract_strided_slice %177 {offsets = [12, 0], sizes = [2, 32], strides = [1, 1]} : vector<16x32xf32> to vector<2x32xf32>
    %271 = arith.mulf %269, %261 : vector<2x32xf32>
    %cst_69 = arith.constant 1.000000e+00 : f32
    %272 = vector.broadcast %cst_69 : f32 to vector<2x32xf32>
    %273 = arith.subf %272, %269 : vector<2x32xf32>
    %274 = vector.extract_strided_slice %157 {offsets = [12, 0], sizes = [2, 32], strides = [1, 1]} : vector<16x32xf32> to vector<2x32xf32>
    %275 = arith.mulf %273, %274 : vector<2x32xf32>
    %276 = arith.addf %271, %275 : vector<2x32xf32>
    %277 = math.tanh %276 : vector<2x32xf32>
    %278 = arith.mulf %270, %277 : vector<2x32xf32>
    %cst_70 = arith.constant 1.000000e+00 : f32
    %279 = vector.broadcast %cst_70 : f32 to vector<2x32xf32>
    %280 = arith.subf %279, %270 : vector<2x32xf32>
    %281 = vector.extract_strided_slice %152 {offsets = [12, 0], sizes = [2, 32], strides = [1, 1]} : vector<16x32xf32> to vector<2x32xf32>
    %282 = arith.mulf %280, %281 : vector<2x32xf32>
    %283 = arith.addf %278, %282 : vector<2x32xf32>
    %284 = vector.extract_strided_slice %167 {offsets = [14, 0], sizes = [2, 32], strides = [1, 1]} : vector<16x32xf32> to vector<2x32xf32>
    %285 = vector.extract_strided_slice %177 {offsets = [14, 0], sizes = [2, 32], strides = [1, 1]} : vector<16x32xf32> to vector<2x32xf32>
    %286 = arith.mulf %284, %276 : vector<2x32xf32>
    %cst_71 = arith.constant 1.000000e+00 : f32
    %287 = vector.broadcast %cst_71 : f32 to vector<2x32xf32>
    %288 = arith.subf %287, %284 : vector<2x32xf32>
    %289 = vector.extract_strided_slice %157 {offsets = [14, 0], sizes = [2, 32], strides = [1, 1]} : vector<16x32xf32> to vector<2x32xf32>
    %290 = arith.mulf %288, %289 : vector<2x32xf32>
    %291 = arith.addf %286, %290 : vector<2x32xf32>
    %292 = math.tanh %291 : vector<2x32xf32>
    %293 = arith.mulf %285, %292 : vector<2x32xf32>
    %cst_72 = arith.constant 1.000000e+00 : f32
    %294 = vector.broadcast %cst_72 : f32 to vector<2x32xf32>
    %295 = arith.subf %294, %285 : vector<2x32xf32>
    %296 = vector.extract_strided_slice %152 {offsets = [14, 0], sizes = [2, 32], strides = [1, 1]} : vector<16x32xf32> to vector<2x32xf32>
    %297 = arith.mulf %295, %296 : vector<2x32xf32>
    %298 = arith.addf %293, %297 : vector<2x32xf32>
    %299 = tpu.concatenate %193, %208, %223, %238, %253, %268, %283, %298 in 0 : vector<2x32xf32>, vector<2x32xf32>, vector<2x32xf32>, vector<2x32xf32>, vector<2x32xf32>, vector<2x32xf32>, vector<2x32xf32>, vector<2x32xf32> -> vector<16x32xf32>
    %c0_73 = arith.constant 0 : index
    %c0_74 = arith.constant 0 : index
    %300 = vector.load %arg16[%c0_73, %c0_74] : memref<16x32xf32, #tpu.memory_space<vmem>>, vector<16x32xf32>
    tpu.vector_store %arg16[%c0_73, %c0_74], %299 {strides = array<i32>} : memref<16x32xf32, #tpu.memory_space<vmem>>, vector<16x32xf32>,
    return
  }
  func.func @transform_0(%arg0: i32) -> (i32, i32) {
    %c0_i32 = arith.constant 0 : i32
    %c0_i32_0 = arith.constant 0 : i32
    %c0_i32_1 = arith.constant 0 : i32
    return %c0_i32, %c0_i32_0 : i32, i32
  }
  func.func @transform_1(%arg0: i32) -> (i32, i32) {
    %c0_i32 = arith.constant 0 : i32
    %c0_i32_0 = arith.constant 0 : i32
    %c0_i32_1 = arith.constant 0 : i32
    return %c0_i32, %c0_i32_0 : i32, i32
  }
  func.func @transform_2(%arg0: i32) -> (i32, i32) {
    %c0_i32 = arith.constant 0 : i32
    %c0_i32_0 = arith.constant 0 : i32
    %c0_i32_1 = arith.constant 0 : i32
    return %c0_i32, %c0_i32_0 : i32, i32
  }
  func.func @transform_3(%arg0: i32) -> (i32, i32) {
    %c0_i32 = arith.constant 0 : i32
    %c0_i32_0 = arith.constant 0 : i32
    %c0_i32_1 = arith.constant 0 : i32
    return %c0_i32, %c0_i32_0 : i32, i32
  }
  func.func @transform_4(%arg0: i32) -> (i32, i32) {
    %c0_i32 = arith.constant 0 : i32
    %c0_i32_0 = arith.constant 0 : i32
    %c0_i32_1 = arith.constant 0 : i32
    return %c0_i32, %c0_i32_0 : i32, i32
  }
  func.func @transform_5(%arg0: i32) -> (i32, i32) {
    %c0_i32 = arith.constant 0 : i32
    %c0_i32_0 = arith.constant 0 : i32
    %c0_i32_1 = arith.constant 0 : i32
    return %c0_i32, %c0_i32_0 : i32, i32
  }
  func.func @transform_6(%arg0: i32) -> (i32, i32) {
    %c0_i32 = arith.constant 0 : i32
    %c0_i32_0 = arith.constant 0 : i32
    %c0_i32_1 = arith.constant 0 : i32
    return %c0_i32, %c0_i32_0 : i32, i32
  }
  func.func @transform_7(%arg0: i32) -> (i32, i32) {
    %c0_i32 = arith.constant 0 : i32
    %c0_i32_0 = arith.constant 0 : i32
    %c0_i32_1 = arith.constant 0 : i32
    return %c0_i32, %c0_i32_0 : i32, i32
  }
  func.func @transform_8(%arg0: i32) -> (i32, i32) {
    %c0_i32 = arith.constant 0 : i32
    %c0_i32_0 = arith.constant 0 : i32
    %c0_i32_1 = arith.constant 0 : i32
    return %c0_i32, %c0_i32_0 : i32, i32
  }
  func.func @transform_9(%arg0: i32) -> (i32, i32) {
    %c0_i32 = arith.constant 0 : i32
    %c0_i32_0 = arith.constant 0 : i32
    %c0_i32_1 = arith.constant 0 : i32
    return %c0_i32, %c0_i32_0 : i32, i32
  }
  func.func @transform_10(%arg0: i32) -> (i32, i32) {
    %c0_i32 = arith.constant 0 : i32
    %c0_i32_0 = arith.constant 0 : i32
    %c0_i32_1 = arith.constant 0 : i32
    return %c0_i32, %c0_i32_0 : i32, i32
  }
  func.func @transform_11(%arg0: i32) -> (i32, i32) {
    %c0_i32 = arith.constant 0 : i32
    %c0_i32_0 = arith.constant 0 : i32
    %c0_i32_1 = arith.constant 0 : i32
    return %c0_i32, %c0_i32_0 : i32, i32
  }
  func.func @transform_12(%arg0: i32) -> (i32, i32) {
    %c0_i32 = arith.constant 0 : i32
    %c0_i32_0 = arith.constant 0 : i32
    %c0_i32_1 = arith.constant 0 : i32
    return %c0_i32, %c0_i32_0 : i32, i32
  }
  func.func @transform_13(%arg0: i32) -> (i32, i32) {
    %c0_i32 = arith.constant 0 : i32
    %c0_i32_0 = arith.constant 0 : i32
    %c0_i32_1 = arith.constant 0 : i32
    return %c0_i32, %c0_i32_0 : i32, i32
  }
  func.func @transform_14(%arg0: i32) -> (i32, i32) {
    %c0_i32 = arith.constant 0 : i32
    %c0_i32_0 = arith.constant 0 : i32
    %c0_i32_1 = arith.constant 0 : i32
    return %c0_i32, %c0_i32_0 : i32, i32
  }
  func.func @transform_15(%arg0: i32) -> (i32, i32) {
    %c0_i32 = arith.constant 0 : i32
    %c0_i32_0 = arith.constant 0 : i32
    %c0_i32_1 = arith.constant 0 : i32
    return %c0_i32, %c0_i32_0 : i32, i32
  }
}

</mosaic_0001>

<llo_original>
// kernel: rtn_forward.3
$region0: #{rtn_forward.3}
  #allocation0 [shape = 'u32[]', space=smem, size = 0x4, offset = 0x4, fixed_abs, tag = 'smem constant byte address 0x4 - core index']
  #allocation1 [shape = 'u32[144,128]{1,0:T(1,128)}', space=vmem, size = 0x12000, scoped, tag = 'internal scratch']
  %s0 = inlined_call_operand.vmem [shape: f32[16,32], index: 0, kind: input, shape index: {}]
  %s1 = inlined_call_operand.vmem [shape: f32[32,32], index: 1, kind: input, shape index: {}]
  %s2 = inlined_call_operand.vmem [shape: f32[1,32], index: 2, kind: input, shape index: {}]
  %s3 = inlined_call_operand.vmem [shape: f32[32,16], index: 3, kind: input, shape index: {}]
  %s4 = inlined_call_operand.vmem [shape: f32[1,16], index: 4, kind: input, shape index: {}]
  %s5 = inlined_call_operand.vmem [shape: f32[16,16], index: 5, kind: output, shape index: {}]
  %s6 = sld [smem:[#allocation0]]
  $region30: #{rtn_forward.3} parent=0
    _
  %s8 = ssub.s32 1, %s6
  %s9 = scalar_select 0, %s8, %s6
  // Predicated region
  $region2: #{rtn_forward.3} parent=0 // pred_check
    _
  $region3: #{rtn_forward.3} parent=0 // pred_check_branch
    %11 = sbr.rel (0) target = $region5
  $region4: #{rtn_forward.3} parent=0 // pred_region
    _
  $region5: #{rtn_forward.3} parent=0 // pred_fallthru
    _
  // Predicated region
  $region6: #{rtn_forward.3} parent=0 // pred_check
    _
  $region7: #{rtn_forward.3} parent=0 // pred_check_branch
    %13 = sbr.rel (0) target = $region9
  $region8: #{rtn_forward.3} parent=0 // pred_region
    _
  $region9: #{rtn_forward.3} parent=0 // pred_fallthru
    _
  // Predicated region
  $region10: #{rtn_forward.3} parent=0 // pred_check
    _
  $region11: #{rtn_forward.3} parent=0 // pred_check_branch
    %15 = sbr.rel (0) target = $region13
  $region12: #{rtn_forward.3} parent=0 // pred_region
    _
  $region13: #{rtn_forward.3} parent=0 // pred_fallthru
    _
  // Predicated region
  $region14: #{rtn_forward.3} parent=0 // pred_check
    _
  $region15: #{rtn_forward.3} parent=0 // pred_check_branch
    %17 = sbr.rel (0) target = $region17
  $region16: #{rtn_forward.3} parent=0 // pred_region
    _
  $region17: #{rtn_forward.3} parent=0 // pred_fallthru
    _
  // Predicated region
  $region18: #{rtn_forward.3} parent=0 // pred_check
    _
  $region19: #{rtn_forward.3} parent=0 // pred_check_branch
    %19 = sbr.rel (0) target = $region21
  $region20: #{rtn_forward.3} parent=0 // pred_region
    _
  $region21: #{rtn_forward.3} parent=0 // pred_fallthru
    _
  %v20 = vld [vmem:[%s0] sm:$0xff]
  %v21 = vld [vmem:[%s0 + $0x8] sm:$0xff]
  %v22 = vld [vmem:[%s1] sm:$0xff]
  %v23 = vld [vmem:[%s1 + $0x8] sm:$0xff]
  %v24 = vld [vmem:[%s1 + $0x10] sm:$0xff]
  %v25 = vld [vmem:[%s1 + $0x18] sm:$0xff]
  %v26 = vld [vmem:[%s2] sm:$0x1]
  %v28 = vlaneseq
  %v29 = vshrl.u32 %v28, 7
  %v30 = vsub.s32 0, %v29
  %v31 = vrot.slane %v26, %v30
  %vm33 = vcmask 261120
  %v35 = vsel %vm33, %v20, 0
  %v38 = vsel %vm33, %v21, 0
  %40 = vmatprep.subr.mxu0 0.0
  %41 = vmatpush1.msra.mxu0 0.0
  %42 = vmatprep.subr.mxu0 0.0
  %43 = vmatpush1.msra.mxu0 0.0
  %44 = vmatprep.subr.mxu0 0.0
  %45 = vmatpush1.msra.mxu0 0.0
  %46 = vmatprep.subr.mxu0 0.0
  %47 = vmatpush1.msra.mxu0 0.0
  %48 = vmatprep.subr.mxu0 0.0
  %49 = vmatpush1.msra.mxu0 0.0
  %50 = vmatprep.subr.mxu0 0.0
  %51 = vmatpush1.msra.mxu0 0.0
  %52 = vmatprep.subr.mxu0 0.0
  %53 = vmatpush1.msra.mxu0 0.0
  %54 = vmatprep.subr.mxu0 0.0
  %55 = vmatpush1.msra.mxu0 0.0
  %56 = vmatprep.subr.mxu0 0.0
  %57 = vmatpush1.msra.mxu0 0.0
  %58 = vmatprep.subr.mxu0 0.0
  %59 = vmatpush1.msra.mxu0 0.0
  %60 = vmatprep.subr.mxu0 0.0
  %61 = vmatpush1.msra.mxu0 0.0
  %62 = vmatprep.subr.mxu0 0.0
  %63 = vmatpush1.msra.mxu0 0.0
  %64 = vmatprep.subr.mxu0 0.0
  %65 = vmatpush1.msra.mxu0 %v25
  %66 = vmatprep.subr.mxu0 0.0
  %67 = vmatpush1.msra.mxu0 %v24
  %68 = vmatprep.subr.mxu0 0.0
  %69 = vmatpush1.msra.mxu0 %v23
  %70 = vmatprep.subr.mxu0 0.0
  %71 = vmatpush1.msra.mxu0 %v22
  %72 = vmatprep.subr.mxu0 0.0
  %73 = vmatpush2.msra.mxu0 0.0
  %74 = vmatprep.subr.mxu0 0.0
  %75 = vmatpush2.msra.mxu0 0.0
  %76 = vmatprep.subr.mxu0 0.0
  %77 = vmatpush2.msra.mxu0 0.0
  %78 = vmatprep.subr.mxu0 0.0
  %79 = vmatpush2.msra.mxu0 0.0
  %80 = vmatprep.subr.mxu0 0.0
  %81 = vmatpush2.msra.mxu0 0.0
  %82 = vmatprep.subr.mxu0 0.0
  %83 = vmatpush2.msra.mxu0 0.0
  %84 = vmatprep.subr.mxu0 0.0
  %85 = vmatpush2.msra.mxu0 0.0
  %86 = vmatprep.subr.mxu0 0.0
  %87 = vmatpush2.msra.mxu0 0.0
  %88 = vmatprep.subr.mxu0 0.0
  %89 = vmatpush2.msra.mxu0 0.0
  %90 = vmatprep.subr.mxu0 0.0
  %91 = vmatpush2.msra.mxu0 0.0
  %92 = vmatprep.subr.mxu0 0.0
  %93 = vmatpush2.msra.mxu0 0.0
  %94 = vmatprep.subr.mxu0 0.0
  %95 = vmatpush2.msra.mxu0 0.0
  %96 = vmatprep.subr.mxu0 0.0
  %97 = vmatpush2.msra.mxu0 0.0
  %98 = vmatprep.subr.mxu0 0.0
  %99 = vmatpush2.msra.mxu0 0.0
  %100 = vmatprep.subr.mxu0 0.0
  %101 = vmatpush2.msra.mxu0 0.0
  %102 = vmatprep.subr.mxu0 0.0
  %103 = vmatpush2.msra.mxu0 0.0
  %104 = vmatprep.mubr.f32.mxu0 0.0
  %105 = vmatmul.mubr.f32.gmra.mxu0 %v35
  %v106 = vpop.f32.mrf.mxu0
  %v107 = vadd.f32 %v31, %v106
  %v108 = vpop.f32.mrf.mxu0
  %109 = vmatprep.mubr.f32.mxu0 0.0
  %110 = vmatmul.mubr.f32.gmra.mxu0 %v38
  %v111 = vpop.f32.mrf.mxu0
  %v112 = vadd.f32 %v31, %v111
  %v113 = vpop.f32.mrf.mxu0
  %114 = vdwg.mxu0
  %v115 = vxor.u32 %v107, 2147483648
  %v116 = vxor.u32 %v112, 2147483648
  %v117 = vmul.f32 %v115, 1.442695
  %v118 = vpow.pop %v117
  %v119 = vmul.f32 %v116, 1.442695
  %v120 = vpow.pop %v119
  %v121 = vadd.f32 %v118, 1.0
  %v122 = vadd.f32 %v120, 1.0
  %v123 = vrcp.pop %v121
  %v124 = vmul.f32 1.0, %v123
  %v125 = vrcp.pop %v122
  %v126 = vmul.f32 1.0, %v125
  %v127 = vmul.f32 %v124, %v20
  %v128 = vmul.f32 %v126, %v21
  %v129 = vsub.f32 1.0, %v124
  %v130 = vsub.f32 1.0, %v126
  %v131 = vtanh.pop %v20
  %v132 = vtanh.pop %v21
  %v133 = vmul.f32 %v129, %v131
  %v134 = vmul.f32 %v130, %v132
  %v135 = vadd.f32 %v127, %v133
  %v136 = vadd.f32 %v128, %v134
  %v137 = vld [vmem:[%s3] sm:$0xff]
  %v138 = vld [vmem:[%s3 + $0x8] sm:$0xff]
  %v139 = vld [vmem:[%s3 + $0x10] sm:$0xff]
  %v140 = vld [vmem:[%s3 + $0x18] sm:$0xff]
  %v141 = vld [vmem:[%s4] sm:$0x1]
  %v143 = vlaneseq
  %v144 = vshrl.u32 %v143, 7
  %v145 = vsub.s32 0, %v144
  %v146 = vrot.slane %v141, %v145
  %v149 = vsel %vm33, %v135, 0
  %v152 = vsel %vm33, %v136, 0
  %154 = vmatprep.subr.mxu0 0.0
  %155 = vmatpush1.msra.mxu0 0.0
  %156 = vmatprep.subr.mxu0 0.0
  %157 = vmatpush1.msra.mxu0 0.0
  %158 = vmatprep.subr.mxu0 0.0
  %159 = vmatpush1.msra.mxu0 0.0
  %160 = vmatprep.subr.mxu0 0.0
  %161 = vmatpush1.msra.mxu0 0.0
  %162 = vmatprep.subr.mxu0 0.0
  %163 = vmatpush1.msra.mxu0 0.0
  %164 = vmatprep.subr.mxu0 0.0
  %165 = vmatpush1.msra.mxu0 0.0
  %166 = vmatprep.subr.mxu0 0.0
  %167 = vmatpush1.msra.mxu0 0.0
  %168 = vmatprep.subr.mxu0 0.0
  %169 = vmatpush1.msra.mxu0 0.0
  %170 = vmatprep.subr.mxu0 0.0
  %171 = vmatpush1.msra.mxu0 0.0
  %172 = vmatprep.subr.mxu0 0.0
  %173 = vmatpush1.msra.mxu0 0.0
  %174 = vmatprep.subr.mxu0 0.0
  %175 = vmatpush1.msra.mxu0 0.0
  %176 = vmatprep.subr.mxu0 0.0
  %177 = vmatpush1.msra.mxu0 0.0
  %178 = vmatprep.subr.mxu0 0.0
  %179 = vmatpush1.msra.mxu0 %v140
  %180 = vmatprep.subr.mxu0 0.0
  %181 = vmatpush1.msra.mxu0 %v139
  %182 = vmatprep.subr.mxu0 0.0
  %183 = vmatpush1.msra.mxu0 %v138
  %184 = vmatprep.subr.mxu0 0.0
  %185 = vmatpush1.msra.mxu0 %v137
  %186 = vmatprep.subr.mxu0 0.0
  %187 = vmatpush2.msra.mxu0 0.0
  %188 = vmatprep.subr.mxu0 0.0
  %189 = vmatpush2.msra.mxu0 0.0
  %190 = vmatprep.subr.mxu0 0.0
  %191 = vmatpush2.msra.mxu0 0.0
  %192 = vmatprep.subr.mxu0 0.0
  %193 = vmatpush2.msra.mxu0 0.0
  %194 = vmatprep.subr.mxu0 0.0
  %195 = vmatpush2.msra.mxu0 0.0
  %196 = vmatprep.subr.mxu0 0.0
  %197 = vmatpush2.msra.mxu0 0.0
  %198 = vmatprep.subr.mxu0 0.0
  %199 = vmatpush2.msra.mxu0 0.0
  %200 = vmatprep.subr.mxu0 0.0
  %201 = vmatpush2.msra.mxu0 0.0
  %202 = vmatprep.subr.mxu0 0.0
  %203 = vmatpush2.msra.mxu0 0.0
  %204 = vmatprep.subr.mxu0 0.0
  %205 = vmatpush2.msra.mxu0 0.0
  %206 = vmatprep.subr.mxu0 0.0
  %207 = vmatpush2.msra.mxu0 0.0
  %208 = vmatprep.subr.mxu0 0.0
  %209 = vmatpush2.msra.mxu0 0.0
  %210 = vmatprep.subr.mxu0 0.0
  %211 = vmatpush2.msra.mxu0 0.0
  %212 = vmatprep.subr.mxu0 0.0
  %213 = vmatpush2.msra.mxu0 0.0
  %214 = vmatprep.subr.mxu0 0.0
  %215 = vmatpush2.msra.mxu0 0.0
  %216 = vmatprep.subr.mxu0 0.0
  %217 = vmatpush2.msra.mxu0 0.0
  %218 = vmatprep.mubr.f32.mxu0 0.0
  %219 = vmatmul.mubr.f32.gmra.mxu0 %v149
  %v220 = vpop.f32.mrf.mxu0
  %v221 = vadd.f32 %v146, %v220
  %v222 = vpop.f32.mrf.mxu0
  %223 = vmatprep.mubr.f32.mxu0 0.0
  %224 = vmatmul.mubr.f32.gmra.mxu0 %v152
  %v225 = vpop.f32.mrf.mxu0
  %v226 = vadd.f32 %v146, %v225
  %v227 = vpop.f32.mrf.mxu0
  %228 = vdwg.mxu0
  %v229 = vmax.f32 %v221, 0.0
  %v230 = vmax.f32 %v226, 0.0
  %vm231 = vcmask 130048
  %232 = vst.msk [vmem:[%s5] sm:$0xff] %vm231, %v229
  %233 = vst.msk [vmem:[%s5 + $0x8] sm:$0xff] %vm231, %v230
  // Predicated region
  $region22: #{rtn_forward.3} parent=0 // pred_check
    _
  $region23: #{rtn_forward.3} parent=0 // pred_check_branch
    %235 = sbr.rel (0) target = $region25
  $region24: #{rtn_forward.3} parent=0 // pred_region
    _
  $region25: #{rtn_forward.3} parent=0 // pred_fallthru
    _
  // Predicated region
  $region26: #{rtn_forward.3} parent=0 // pred_check
    _
  $region27: #{rtn_forward.3} parent=0 // pred_check_branch
    %237 = sbr.rel (0) target = $region29
  $region28: #{rtn_forward.3} parent=0 // pred_region
    _
  $region29: #{rtn_forward.3} parent=0 // pred_fallthru
    _

// kernel: rtn_forward.5
$region0: #{rtn_forward.5}
  #allocation0 [shape = 'u32[]', space=smem, size = 0x4, offset = 0x4, fixed_abs, tag = 'smem constant byte address 0x4 - core index']
  #allocation1 [shape = 'u32[144,128]{1,0:T(1,128)}', space=vmem, size = 0x12000, scoped, tag = 'internal scratch']
  %s0 = inlined_call_operand.vmem [shape: f32[16,16], index: 0, kind: input, shape index: {}]
  %s1 = inlined_call_operand.vmem [shape: f32[16,32], index: 1, kind: input, shape index: {}]
  %s2 = inlined_call_operand.vmem [shape: f32[1,32], index: 2, kind: input, shape index: {}]
  %s3 = inlined_call_operand.vmem [shape: f32[16,32], index: 3, kind: input, shape index: {}]
  %s4 = inlined_call_operand.vmem [shape: f32[1,32], index: 4, kind: input, shape index: {}]
  %s5 = inlined_call_operand.vmem [shape: f32[16,32], index: 5, kind: input, shape index: {}]
  %s6 = inlined_call_operand.vmem [shape: f32[1,32], index: 6, kind: input, shape index: {}]
  %s7 = inlined_call_operand.vmem [shape: f32[16,32], index: 7, kind: input, shape index: {}]
  %s8 = inlined_call_operand.vmem [shape: f32[1,32], index: 8, kind: input, shape index: {}]
  %s9 = inlined_call_operand.vmem [shape: f32[32,32], index: 9, kind: input, shape index: {}]
  %s10 = inlined_call_operand.vmem [shape: f32[1,32], index: 10, kind: input, shape index: {}]
  %s11 = inlined_call_operand.vmem [shape: f32[32,32], index: 11, kind: input, shape index: {}]
  %s12 = inlined_call_operand.vmem [shape: f32[1,32], index: 12, kind: input, shape index: {}]
  %s13 = inlined_call_operand.vmem [shape: f32[32,32], index: 13, kind: input, shape index: {}]
  %s14 = inlined_call_operand.vmem [shape: f32[1,32], index: 14, kind: input, shape index: {}]
  %s15 = inlined_call_operand.hbm [shape: f32[16,32], index: 15, kind: output, shape index: {}]
  %s16 = sld [smem:[#allocation0]]
  $region70: #{rtn_forward.5} parent=0
    _
  %s18 = ssub.s32 1, %s16
  %s19 = scalar_select 0, %s18, %s16
  $region1: #{rtn_forward.5} parent=0
    #allocation2 [shape = 'u8[8192]{0}', space=vmem, size = 0x2000, scoped, tag = 'output window, operand 0, single buffered']
    #allocation3 [shape = 's32[1]{0}', space=sflag, size = 0x4, scoped, tag = 'scoped memory for rtn_forward.5']
    %20 = vsyncpa [#allocation3], 0
    // Predicated region
    $region2: #{rtn_forward.5} parent=1 // pred_check
      _
    $region3: #{rtn_forward.5} parent=1 // pred_check_branch
      %22 = sbr.rel (0) target = $region5
    $region4: #{rtn_forward.5} parent=1 // pred_region
      _
    $region5: #{rtn_forward.5} parent=1 // pred_fallthru
      _
    // Predicated region
    $region6: #{rtn_forward.5} parent=1 // pred_check
      _
    $region7: #{rtn_forward.5} parent=1 // pred_check_branch
      %24 = sbr.rel (0) target = $region9
    $region8: #{rtn_forward.5} parent=1 // pred_region
      _
    $region9: #{rtn_forward.5} parent=1 // pred_fallthru
      _
    // Predicated region
    $region10: #{rtn_forward.5} parent=1 // pred_check
      _
    $region11: #{rtn_forward.5} parent=1 // pred_check_branch
      %26 = sbr.rel (0) target = $region13
    $region12: #{rtn_forward.5} parent=1 // pred_region
      _
    $region13: #{rtn_forward.5} parent=1 // pred_fallthru
      _
    // Predicated region
    $region14: #{rtn_forward.5} parent=1 // pred_check
      _
    $region15: #{rtn_forward.5} parent=1 // pred_check_branch
      %28 = sbr.rel (0) target = $region17
    $region16: #{rtn_forward.5} parent=1 // pred_region
      _
    $region17: #{rtn_forward.5} parent=1 // pred_fallthru
      _
    // Predicated region
    $region18: #{rtn_forward.5} parent=1 // pred_check
      _
    $region19: #{rtn_forward.5} parent=1 // pred_check_branch
      %30 = sbr.rel (0) target = $region21
    $region20: #{rtn_forward.5} parent=1 // pred_region
      _
    $region21: #{rtn_forward.5} parent=1 // pred_fallthru
      _
    // Predicated region
    $region22: #{rtn_forward.5} parent=1 // pred_check
      _
    $region23: #{rtn_forward.5} parent=1 // pred_check_branch
      %32 = sbr.rel (0) target = $region25
    $region24: #{rtn_forward.5} parent=1 // pred_region
      _
    $region25: #{rtn_forward.5} parent=1 // pred_fallthru
      _
    // Predicated region
    $region26: #{rtn_forward.5} parent=1 // pred_check
      _
    $region27: #{rtn_forward.5} parent=1 // pred_check_branch
      %34 = sbr.rel (0) target = $region29
    $region28: #{rtn_forward.5} parent=1 // pred_region
      _
    $region29: #{rtn_forward.5} parent=1 // pred_fallthru
      _
    // Predicated region
    $region30: #{rtn_forward.5} parent=1 // pred_check
      _
    $region31: #{rtn_forward.5} parent=1 // pred_check_branch
      %36 = sbr.rel (0) target = $region33
    $region32: #{rtn_forward.5} parent=1 // pred_region
      _
    $region33: #{rtn_forward.5} parent=1 // pred_fallthru
      _
    // Predicated region
    $region34: #{rtn_forward.5} parent=1 // pred_check
      _
    $region35: #{rtn_forward.5} parent=1 // pred_check_branch
      %38 = sbr.rel (0) target = $region37
    $region36: #{rtn_forward.5} parent=1 // pred_region
      _
    $region37: #{rtn_forward.5} parent=1 // pred_fallthru
      _
    // Predicated region
    $region38: #{rtn_forward.5} parent=1 // pred_check
      _
    $region39: #{rtn_forward.5} parent=1 // pred_check_branch
      %40 = sbr.rel (0) target = $region41
    $region40: #{rtn_forward.5} parent=1 // pred_region
      _
    $region41: #{rtn_forward.5} parent=1 // pred_fallthru
      _
    // Predicated region
    $region42: #{rtn_forward.5} parent=1 // pred_check
      _
    $region43: #{rtn_forward.5} parent=1 // pred_check_branch
      %42 = sbr.rel (0) target = $region45
    $region44: #{rtn_forward.5} parent=1 // pred_region
      _
    $region45: #{rtn_forward.5} parent=1 // pred_fallthru
      _
    // Predicated region
    $region46: #{rtn_forward.5} parent=1 // pred_check
      _
    $region47: #{rtn_forward.5} parent=1 // pred_check_branch
      %44 = sbr.rel (0) target = $region49
    $region48: #{rtn_forward.5} parent=1 // pred_region
      _
    $region49: #{rtn_forward.5} parent=1 // pred_fallthru
      _
    // Predicated region
    $region50: #{rtn_forward.5} parent=1 // pred_check
      _
    $region51: #{rtn_forward.5} parent=1 // pred_check_branch
      %46 = sbr.rel (0) target = $region53
    $region52: #{rtn_forward.5} parent=1 // pred_region
      _
    $region53: #{rtn_forward.5} parent=1 // pred_fallthru
      _
    // Predicated region
    $region54: #{rtn_forward.5} parent=1 // pred_check
      _
    $region55: #{rtn_forward.5} parent=1 // pred_check_branch
      %48 = sbr.rel (0) target = $region57
    $region56: #{rtn_forward.5} parent=1 // pred_region
      _
    $region57: #{rtn_forward.5} parent=1 // pred_fallthru
      _
    // Predicated region
    $region58: #{rtn_forward.5} parent=1 // pred_check
      _
    $region59: #{rtn_forward.5} parent=1 // pred_check_branch
      %50 = sbr.rel (0) target = $region61
    $region60: #{rtn_forward.5} parent=1 // pred_region
      _
    $region61: #{rtn_forward.5} parent=1 // pred_fallthru
      _
    %v51 = vld [vmem:[%s0] sm:$0xff]
    %v52 = vld [vmem:[%s0 + $0x8] sm:$0xff]
    %v53 = vld [vmem:[%s1] sm:$0xff]
    %v54 = vld [vmem:[%s1 + $0x8] sm:$0xff]
    %v55 = vld [vmem:[%s2] sm:$0x1]
    %v57 = vlaneseq
    %v58 = vshrl.u32 %v57, 7
    %v59 = vsub.s32 0, %v58
    %v60 = vrot.slane %v55, %v59
    %vm62 = vcmask 130048
    %v64 = vsel %vm62, %v51, 0
    %v67 = vsel %vm62, %v52, 0
    %69 = vmatprep.subr.mxu0 0.0
    %70 = vmatpush1.msra.mxu0 0.0
    %71 = vmatprep.subr.mxu0 0.0
    %72 = vmatpush1.msra.mxu0 0.0
    %73 = vmatprep.subr.mxu0 0.0
    %74 = vmatpush1.msra.mxu0 0.0
    %75 = vmatprep.subr.mxu0 0.0
    %76 = vmatpush1.msra.mxu0 0.0
    %77 = vmatprep.subr.mxu0 0.0
    %78 = vmatpush1.msra.mxu0 0.0
    %79 = vmatprep.subr.mxu0 0.0
    %80 = vmatpush1.msra.mxu0 0.0
    %81 = vmatprep.subr.mxu0 0.0
    %82 = vmatpush1.msra.mxu0 0.0
    %83 = vmatprep.subr.mxu0 0.0
    %84 = vmatpush1.msra.mxu0 0.0
    %85 = vmatprep.subr.mxu0 0.0
    %86 = vmatpush1.msra.mxu0 0.0
    %87 = vmatprep.subr.mxu0 0.0
    %88 = vmatpush1.msra.mxu0 0.0
    %89 = vmatprep.subr.mxu0 0.0
    %90 = vmatpush1.msra.mxu0 0.0
    %91 = vmatprep.subr.mxu0 0.0
    %92 = vmatpush1.msra.mxu0 0.0
    %93 = vmatprep.subr.mxu0 0.0
    %94 = vmatpush1.msra.mxu0 0.0
    %95 = vmatprep.subr.mxu0 0.0
    %96 = vmatpush1.msra.mxu0 0.0
    %97 = vmatprep.subr.mxu0 0.0
    %98 = vmatpush1.msra.mxu0 %v54
    %99 = vmatprep.subr.mxu0 0.0
    %100 = vmatpush1.msra.mxu0 %v53
    %101 = vmatprep.subr.mxu0 0.0
    %102 = vmatpush2.msra.mxu0 0.0
    %103 = vmatprep.subr.mxu0 0.0
    %104 = vmatpush2.msra.mxu0 0.0
    %105 = vmatprep.subr.mxu0 0.0
    %106 = vmatpush2.msra.mxu0 0.0
    %107 = vmatprep.subr.mxu0 0.0
    %108 = vmatpush2.msra.mxu0 0.0
    %109 = vmatprep.subr.mxu0 0.0
    %110 = vmatpush2.msra.mxu0 0.0
    %111 = vmatprep.subr.mxu0 0.0
    %112 = vmatpush2.msra.mxu0 0.0
    %113 = vmatprep.subr.mxu0 0.0
    %114 = vmatpush2.msra.mxu0 0.0
    %115 = vmatprep.subr.mxu0 0.0
    %116 = vmatpush2.msra.mxu0 0.0
    %117 = vmatprep.subr.mxu0 0.0
    %118 = vmatpush2.msra.mxu0 0.0
    %119 = vmatprep.subr.mxu0 0.0
    %120 = vmatpush2.msra.mxu0 0.0
    %121 = vmatprep.subr.mxu0 0.0
    %122 = vmatpush2.msra.mxu0 0.0
    %123 = vmatprep.subr.mxu0 0.0
    %124 = vmatpush2.msra.mxu0 0.0
    %125 = vmatprep.subr.mxu0 0.0
    %126 = vmatpush2.msra.mxu0 0.0
    %127 = vmatprep.subr.mxu0 0.0
    %128 = vmatpush2.msra.mxu0 0.0
    %129 = vmatprep.subr.mxu0 0.0
    %130 = vmatpush2.msra.mxu0 0.0
    %131 = vmatprep.subr.mxu0 0.0
    %132 = vmatpush2.msra.mxu0 0.0
    %133 = vmatprep.mubr.f32.mxu0 0.0
    %134 = vmatmul.mubr.f32.gmra.mxu0 %v64
    %v135 = vpop.f32.mrf.mxu0
    %v136 = vadd.f32 %v60, %v135
    %v137 = vpop.f32.mrf.mxu0
    %138 = vmatprep.mubr.f32.mxu0 0.0
    %139 = vmatmul.mubr.f32.gmra.mxu0 %v67
    %v140 = vpop.f32.mrf.mxu0
    %v141 = vadd.f32 %v60, %v140
    %v142 = vpop.f32.mrf.mxu0
    %143 = vdwg.mxu0
    %v144 = vld [vmem:[%s3] sm:$0xff]
    %v145 = vld [vmem:[%s3 + $0x8] sm:$0xff]
    %v146 = vld [vmem:[%s4] sm:$0x1]
    %v148 = vlaneseq
    %v149 = vshrl.u32 %v148, 7
    %v150 = vsub.s32 0, %v149
    %v151 = vrot.slane %v146, %v150
    %153 = vmatprep.subr.mxu0 0.0
    %154 = vmatpush1.msra.mxu0 0.0
    %155 = vmatprep.subr.mxu0 0.0
    %156 = vmatpush1.msra.mxu0 0.0
    %157 = vmatprep.subr.mxu0 0.0
    %158 = vmatpush1.msra.mxu0 0.0
    %159 = vmatprep.subr.mxu0 0.0
    %160 = vmatpush1.msra.mxu0 0.0
    %161 = vmatprep.subr.mxu0 0.0
    %162 = vmatpush1.msra.mxu0 0.0
    %163 = vmatprep.subr.mxu0 0.0
    %164 = vmatpush1.msra.mxu0 0.0
    %165 = vmatprep.subr.mxu0 0.0
    %166 = vmatpush1.msra.mxu0 0.0
    %167 = vmatprep.subr.mxu0 0.0
    %168 = vmatpush1.msra.mxu0 0.0
    %169 = vmatprep.subr.mxu0 0.0
    %170 = vmatpush1.msra.mxu0 0.0
    %171 = vmatprep.subr.mxu0 0.0
    %172 = vmatpush1.msra.mxu0 0.0
    %173 = vmatprep.subr.mxu0 0.0
    %174 = vmatpush1.msra.mxu0 0.0
    %175 = vmatprep.subr.mxu0 0.0
    %176 = vmatpush1.msra.mxu0 0.0
    %177 = vmatprep.subr.mxu0 0.0
    %178 = vmatpush1.msra.mxu0 0.0
    %179 = vmatprep.subr.mxu0 0.0
    %180 = vmatpush1.msra.mxu0 0.0
    %181 = vmatprep.subr.mxu0 0.0
    %182 = vmatpush1.msra.mxu0 %v145
    %183 = vmatprep.subr.mxu0 0.0
    %184 = vmatpush1.msra.mxu0 %v144
    %185 = vmatprep.subr.mxu0 0.0
    %186 = vmatpush2.msra.mxu0 0.0
    %187 = vmatprep.subr.mxu0 0.0
    %188 = vmatpush2.msra.mxu0 0.0
    %189 = vmatprep.subr.mxu0 0.0
    %190 = vmatpush2.msra.mxu0 0.0
    %191 = vmatprep.subr.mxu0 0.0
    %192 = vmatpush2.msra.mxu0 0.0
    %193 = vmatprep.subr.mxu0 0.0
    %194 = vmatpush2.msra.mxu0 0.0
    %195 = vmatprep.subr.mxu0 0.0
    %196 = vmatpush2.msra.mxu0 0.0
    %197 = vmatprep.subr.mxu0 0.0
    %198 = vmatpush2.msra.mxu0 0.0
    %199 = vmatprep.subr.mxu0 0.0
    %200 = vmatpush2.msra.mxu0 0.0
    %201 = vmatprep.subr.mxu0 0.0
    %202 = vmatpush2.msra.mxu0 0.0
    %203 = vmatprep.subr.mxu0 0.0
    %204 = vmatpush2.msra.mxu0 0.0
    %205 = vmatprep.subr.mxu0 0.0
    %206 = vmatpush2.msra.mxu0 0.0
    %207 = vmatprep.subr.mxu0 0.0
    %208 = vmatpush2.msra.mxu0 0.0
    %209 = vmatprep.subr.mxu0 0.0
    %210 = vmatpush2.msra.mxu0 0.0
    %211 = vmatprep.subr.mxu0 0.0
    %212 = vmatpush2.msra.mxu0 0.0
    %213 = vmatprep.subr.mxu0 0.0
    %214 = vmatpush2.msra.mxu0 0.0
    %215 = vmatprep.subr.mxu0 0.0
    %216 = vmatpush2.msra.mxu0 0.0
    %217 = vmatprep.mubr.f32.mxu0 0.0
    %218 = vmatmul.mubr.f32.gmra.mxu0 %v64
    %v219 = vpop.f32.mrf.mxu0
    %v220 = vadd.f32 %v151, %v219
    %v221 = vpop.f32.mrf.mxu0
    %222 = vmatprep.mubr.f32.mxu0 0.0
    %223 = vmatmul.mubr.f32.gmra.mxu0 %v67
    %v224 = vpop.f32.mrf.mxu0
    %v225 = vadd.f32 %v151, %v224
    %v226 = vpop.f32.mrf.mxu0
    %227 = vdwg.mxu0
    %v228 = vxor.u32 %v220, 2147483648
    %v229 = vxor.u32 %v225, 2147483648
    %v230 = vmul.f32 %v228, 1.442695
    %v231 = vpow.pop %v230
    %v232 = vmul.f32 %v229, 1.442695
    %v233 = vpow.pop %v232
    %v234 = vadd.f32 %v231, 1.0
    %v235 = vadd.f32 %v233, 1.0
    %v236 = vrcp.pop %v234
    %v237 = vmul.f32 1.0, %v236
    %v238 = vrcp.pop %v235
    %v239 = vmul.f32 1.0, %v238
    %v240 = vld [vmem:[%s5] sm:$0xff]
    %v241 = vld [vmem:[%s5 + $0x8] sm:$0xff]
    %v242 = vld [vmem:[%s6] sm:$0x1]
    %v244 = vlaneseq
    %v245 = vshrl.u32 %v244, 7
    %v246 = vsub.s32 0, %v245
    %v247 = vrot.slane %v242, %v246
    %249 = vmatprep.subr.mxu0 0.0
    %250 = vmatpush1.msra.mxu0 0.0
    %251 = vmatprep.subr.mxu0 0.0
    %252 = vmatpush1.msra.mxu0 0.0
    %253 = vmatprep.subr.mxu0 0.0
    %254 = vmatpush1.msra.mxu0 0.0
    %255 = vmatprep.subr.mxu0 0.0
    %256 = vmatpush1.msra.mxu0 0.0
    %257 = vmatprep.subr.mxu0 0.0
    %258 = vmatpush1.msra.mxu0 0.0
    %259 = vmatprep.subr.mxu0 0.0
    %260 = vmatpush1.msra.mxu0 0.0
    %261 = vmatprep.subr.mxu0 0.0
    %262 = vmatpush1.msra.mxu0 0.0
    %263 = vmatprep.subr.mxu0 0.0
    %264 = vmatpush1.msra.mxu0 0.0
    %265 = vmatprep.subr.mxu0 0.0
    %266 = vmatpush1.msra.mxu0 0.0
    %267 = vmatprep.subr.mxu0 0.0
    %268 = vmatpush1.msra.mxu0 0.0
    %269 = vmatprep.subr.mxu0 0.0
    %270 = vmatpush1.msra.mxu0 0.0
    %271 = vmatprep.subr.mxu0 0.0
    %272 = vmatpush1.msra.mxu0 0.0
    %273 = vmatprep.subr.mxu0 0.0
    %274 = vmatpush1.msra.mxu0 0.0
    %275 = vmatprep.subr.mxu0 0.0
    %276 = vmatpush1.msra.mxu0 0.0
    %277 = vmatprep.subr.mxu0 0.0
    %278 = vmatpush1.msra.mxu0 %v241
    %279 = vmatprep.subr.mxu0 0.0
    %280 = vmatpush1.msra.mxu0 %v240
    %281 = vmatprep.subr.mxu0 0.0
    %282 = vmatpush2.msra.mxu0 0.0
    %283 = vmatprep.subr.mxu0 0.0
    %284 = vmatpush2.msra.mxu0 0.0
    %285 = vmatprep.subr.mxu0 0.0
    %286 = vmatpush2.msra.mxu0 0.0
    %287 = vmatprep.subr.mxu0 0.0
    %288 = vmatpush2.msra.mxu0 0.0
    %289 = vmatprep.subr.mxu0 0.0
    %290 = vmatpush2.msra.mxu0 0.0
    %291 = vmatprep.subr.mxu0 0.0
    %292 = vmatpush2.msra.mxu0 0.0
    %293 = vmatprep.subr.mxu0 0.0
    %294 = vmatpush2.msra.mxu0 0.0
    %295 = vmatprep.subr.mxu0 0.0
    %296 = vmatpush2.msra.mxu0 0.0
    %297 = vmatprep.subr.mxu0 0.0
    %298 = vmatpush2.msra.mxu0 0.0
    %299 = vmatprep.subr.mxu0 0.0
    %300 = vmatpush2.msra.mxu0 0.0
    %301 = vmatprep.subr.mxu0 0.0
    %302 = vmatpush2.msra.mxu0 0.0
    %303 = vmatprep.subr.mxu0 0.0
    %304 = vmatpush2.msra.mxu0 0.0
    %305 = vmatprep.subr.mxu0 0.0
    %306 = vmatpush2.msra.mxu0 0.0
    %307 = vmatprep.subr.mxu0 0.0
    %308 = vmatpush2.msra.mxu0 0.0
    %309 = vmatprep.subr.mxu0 0.0
    %310 = vmatpush2.msra.mxu0 0.0
    %311 = vmatprep.subr.mxu0 0.0
    %312 = vmatpush2.msra.mxu0 0.0
    %313 = vmatprep.mubr.f32.mxu0 0.0
    %314 = vmatmul.mubr.f32.gmra.mxu0 %v64
    %v315 = vpop.f32.mrf.mxu0
    %v316 = vadd.f32 %v247, %v315
    %v317 = vpop.f32.mrf.mxu0
    %318 = vmatprep.mubr.f32.mxu0 0.0
    %319 = vmatmul.mubr.f32.gmra.mxu0 %v67
    %v320 = vpop.f32.mrf.mxu0
    %v321 = vadd.f32 %v247, %v320
    %v322 = vpop.f32.mrf.mxu0
    %323 = vdwg.mxu0
    %v324 = vxor.u32 %v316, 2147483648
    %v325 = vxor.u32 %v321, 2147483648
    %v326 = vmul.f32 %v324, 1.442695
    %v327 = vpow.pop %v326
    %v328 = vmul.f32 %v325, 1.442695
    %v329 = vpow.pop %v328
    %v330 = vadd.f32 %v327, 1.0
    %v331 = vadd.f32 %v329, 1.0
    %v332 = vrcp.pop %v330
    %v333 = vmul.f32 1.0, %v332
    %v334 = vrcp.pop %v331
    %v335 = vmul.f32 1.0, %v334
    %v336 = vld [vmem:[%s7] sm:$0xff]
    %v337 = vld [vmem:[%s7 + $0x8] sm:$0xff]
    %v338 = vld [vmem:[%s8] sm:$0x1]
    %v340 = vlaneseq
    %v341 = vshrl.u32 %v340, 7
    %v342 = vsub.s32 0, %v341
    %v343 = vrot.slane %v338, %v342
    %345 = vmatprep.subr.mxu0 0.0
    %346 = vmatpush1.msra.mxu0 0.0
    %347 = vmatprep.subr.mxu0 0.0
    %348 = vmatpush1.msra.mxu0 0.0
    %349 = vmatprep.subr.mxu0 0.0
    %350 = vmatpush1.msra.mxu0 0.0
    %351 = vmatprep.subr.mxu0 0.0
    %352 = vmatpush1.msra.mxu0 0.0
    %353 = vmatprep.subr.mxu0 0.0
    %354 = vmatpush1.msra.mxu0 0.0
    %355 = vmatprep.subr.mxu0 0.0
    %356 = vmatpush1.msra.mxu0 0.0
    %357 = vmatprep.subr.mxu0 0.0
    %358 = vmatpush1.msra.mxu0 0.0
    %359 = vmatprep.subr.mxu0 0.0
    %360 = vmatpush1.msra.mxu0 0.0
    %361 = vmatprep.subr.mxu0 0.0
    %362 = vmatpush1.msra.mxu0 0.0
    %363 = vmatprep.subr.mxu0 0.0
    %364 = vmatpush1.msra.mxu0 0.0
    %365 = vmatprep.subr.mxu0 0.0
    %366 = vmatpush1.msra.mxu0 0.0
    %367 = vmatprep.subr.mxu0 0.0
    %368 = vmatpush1.msra.mxu0 0.0
    %369 = vmatprep.subr.mxu0 0.0
    %370 = vmatpush1.msra.mxu0 0.0
    %371 = vmatprep.subr.mxu0 0.0
    %372 = vmatpush1.msra.mxu0 0.0
    %373 = vmatprep.subr.mxu0 0.0
    %374 = vmatpush1.msra.mxu0 %v337
    %375 = vmatprep.subr.mxu0 0.0
    %376 = vmatpush1.msra.mxu0 %v336
    %377 = vmatprep.subr.mxu0 0.0
    %378 = vmatpush2.msra.mxu0 0.0
    %379 = vmatprep.subr.mxu0 0.0
    %380 = vmatpush2.msra.mxu0 0.0
    %381 = vmatprep.subr.mxu0 0.0
    %382 = vmatpush2.msra.mxu0 0.0
    %383 = vmatprep.subr.mxu0 0.0
    %384 = vmatpush2.msra.mxu0 0.0
    %385 = vmatprep.subr.mxu0 0.0
    %386 = vmatpush2.msra.mxu0 0.0
    %387 = vmatprep.subr.mxu0 0.0
    %388 = vmatpush2.msra.mxu0 0.0
    %389 = vmatprep.subr.mxu0 0.0
    %390 = vmatpush2.msra.mxu0 0.0
    %391 = vmatprep.subr.mxu0 0.0
    %392 = vmatpush2.msra.mxu0 0.0
    %393 = vmatprep.subr.mxu0 0.0
    %394 = vmatpush2.msra.mxu0 0.0
    %395 = vmatprep.subr.mxu0 0.0
    %396 = vmatpush2.msra.mxu0 0.0
    %397 = vmatprep.subr.mxu0 0.0
    %398 = vmatpush2.msra.mxu0 0.0
    %399 = vmatprep.subr.mxu0 0.0
    %400 = vmatpush2.msra.mxu0 0.0
    %401 = vmatprep.subr.mxu0 0.0
    %402 = vmatpush2.msra.mxu0 0.0
    %403 = vmatprep.subr.mxu0 0.0
    %404 = vmatpush2.msra.mxu0 0.0
    %405 = vmatprep.subr.mxu0 0.0
    %406 = vmatpush2.msra.mxu0 0.0
    %407 = vmatprep.subr.mxu0 0.0
    %408 = vmatpush2.msra.mxu0 0.0
    %409 = vmatprep.mubr.f32.mxu0 0.0
    %410 = vmatmul.mubr.f32.gmra.mxu0 %v64
    %v411 = vpop.f32.mrf.mxu0
    %v412 = vadd.f32 %v343, %v411
    %v413 = vpop.f32.mrf.mxu0
    %414 = vmatprep.mubr.f32.mxu0 0.0
    %415 = vmatmul.mubr.f32.gmra.mxu0 %v67
    %v416 = vpop.f32.mrf.mxu0
    %v417 = vadd.f32 %v343, %v416
    %v418 = vpop.f32.mrf.mxu0
    %419 = vdwg.mxu0
    %v420 = vmul.f32 %v237, 0.0
    %v421 = vsub.f32 1.0, %v237
    %v422 = vmul.f32 %v421, %v136
    %v423 = vadd.f32 %v420, %v422
    %v424 = vtanh.pop %v423
    %v425 = vmul.f32 %v333, %v424
    %v426 = vsub.f32 1.0, %v333
    %v427 = vmul.f32 %v426, %v412
    %v428 = vadd.f32 %v425, %v427
    %v430 = vrot.slane %v423, 6
    %v432 = vmul.f32 %v237, %v430
    %v433 = vadd.f32 %v432, %v422
    %v434 = vtanh.pop %v433
    %v435 = vmul.f32 %v333, %v434
    %v436 = vadd.f32 %v435, %v427
    %v438 = vrot.slane %v433, 6
    %v440 = vmul.f32 %v237, %v438
    %v441 = vadd.f32 %v440, %v422
    %v442 = vtanh.pop %v441
    %v443 = vmul.f32 %v333, %v442
    %v444 = vadd.f32 %v443, %v427
    %v446 = vrot.slane %v441, 6
    %v448 = vmul.f32 %v237, %v446
    %v449 = vadd.f32 %v448, %v422
    %v450 = vtanh.pop %v449
    %v451 = vmul.f32 %v333, %v450
    %v452 = vadd.f32 %v451, %v427
    %v454 = vrot.slane %v449, 6
    %v456 = vmul.f32 %v239, %v454
    %v457 = vsub.f32 1.0, %v239
    %v458 = vmul.f32 %v457, %v141
    %v459 = vadd.f32 %v456, %v458
    %v460 = vtanh.pop %v459
    %v461 = vmul.f32 %v335, %v460
    %v462 = vsub.f32 1.0, %v335
    %v463 = vmul.f32 %v462, %v417
    %v464 = vadd.f32 %v461, %v463
    %v466 = vrot.slane %v459, 6
    %v468 = vmul.f32 %v239, %v466
    %v469 = vadd.f32 %v468, %v458
    %v470 = vtanh.pop %v469
    %v471 = vmul.f32 %v335, %v470
    %v472 = vadd.f32 %v471, %v463
    %v474 = vrot.slane %v469, 6
    %v476 = vmul.f32 %v239, %v474
    %v477 = vadd.f32 %v476, %v458
    %v478 = vtanh.pop %v477
    %v479 = vmul.f32 %v335, %v478
    %v480 = vadd.f32 %v479, %v463
    %v482 = vrot.slane %v477, 6
    %v484 = vmul.f32 %v239, %v482
    %v485 = vadd.f32 %v484, %v458
    %v486 = vtanh.pop %v485
    %v487 = vmul.f32 %v335, %v486
    %v488 = vadd.f32 %v487, %v463
    %vm489 = vcmask 1041408
    %v490 = vsel %vm489, %v428, %v436
    %vm491 = vcmask 1043456
    %v492 = vsel %vm491, %v490, %v444
    %vm493 = vcmask 1045504
    %v494 = vsel %vm493, %v492, %v452
    %v495 = vsel %vm489, %v464, %v472
    %v496 = vsel %vm491, %v495, %v480
    %v497 = vsel %vm493, %v496, %v488
    %v498 = vld [vmem:[%s9] sm:$0xff]
    %v499 = vld [vmem:[%s9 + $0x8] sm:$0xff]
    %v500 = vld [vmem:[%s9 + $0x10] sm:$0xff]
    %v501 = vld [vmem:[%s9 + $0x18] sm:$0xff]
    %v502 = vld [vmem:[%s10] sm:$0x1]
    %v504 = vlaneseq
    %v505 = vshrl.u32 %v504, 7
    %v506 = vsub.s32 0, %v505
    %v507 = vrot.slane %v502, %v506
    %vm509 = vcmask 261120
    %v511 = vsel %vm509, %v494, 0
    %v514 = vsel %vm509, %v497, 0
    %516 = vmatprep.subr.mxu0 0.0
    %517 = vmatpush1.msra.mxu0 0.0
    %518 = vmatprep.subr.mxu0 0.0
    %519 = vmatpush1.msra.mxu0 0.0
    %520 = vmatprep.subr.mxu0 0.0
    %521 = vmatpush1.msra.mxu0 0.0
    %522 = vmatprep.subr.mxu0 0.0
    %523 = vmatpush1.msra.mxu0 0.0
    %524 = vmatprep.subr.mxu0 0.0
    %525 = vmatpush1.msra.mxu0 0.0
    %526 = vmatprep.subr.mxu0 0.0
    %527 = vmatpush1.msra.mxu0 0.0
    %528 = vmatprep.subr.mxu0 0.0
    %529 = vmatpush1.msra.mxu0 0.0
    %530 = vmatprep.subr.mxu0 0.0
    %531 = vmatpush1.msra.mxu0 0.0
    %532 = vmatprep.subr.mxu0 0.0
    %533 = vmatpush1.msra.mxu0 0.0
    %534 = vmatprep.subr.mxu0 0.0
    %535 = vmatpush1.msra.mxu0 0.0
    %536 = vmatprep.subr.mxu0 0.0
    %537 = vmatpush1.msra.mxu0 0.0
    %538 = vmatprep.subr.mxu0 0.0
    %539 = vmatpush1.msra.mxu0 0.0
    %540 = vmatprep.subr.mxu0 0.0
    %541 = vmatpush1.msra.mxu0 %v501
    %542 = vmatprep.subr.mxu0 0.0
    %543 = vmatpush1.msra.mxu0 %v500
    %544 = vmatprep.subr.mxu0 0.0
    %545 = vmatpush1.msra.mxu0 %v499
    %546 = vmatprep.subr.mxu0 0.0
    %547 = vmatpush1.msra.mxu0 %v498
    %548 = vmatprep.subr.mxu0 0.0
    %549 = vmatpush2.msra.mxu0 0.0
    %550 = vmatprep.subr.mxu0 0.0
    %551 = vmatpush2.msra.mxu0 0.0
    %552 = vmatprep.subr.mxu0 0.0
    %553 = vmatpush2.msra.mxu0 0.0
    %554 = vmatprep.subr.mxu0 0.0
    %555 = vmatpush2.msra.mxu0 0.0
    %556 = vmatprep.subr.mxu0 0.0
    %557 = vmatpush2.msra.mxu0 0.0
    %558 = vmatprep.subr.mxu0 0.0
    %559 = vmatpush2.msra.mxu0 0.0
    %560 = vmatprep.subr.mxu0 0.0
    %561 = vmatpush2.msra.mxu0 0.0
    %562 = vmatprep.subr.mxu0 0.0
    %563 = vmatpush2.msra.mxu0 0.0
    %564 = vmatprep.subr.mxu0 0.0
    %565 = vmatpush2.msra.mxu0 0.0
    %566 = vmatprep.subr.mxu0 0.0
    %567 = vmatpush2.msra.mxu0 0.0
    %568 = vmatprep.subr.mxu0 0.0
    %569 = vmatpush2.msra.mxu0 0.0
    %570 = vmatprep.subr.mxu0 0.0
    %571 = vmatpush2.msra.mxu0 0.0
    %572 = vmatprep.subr.mxu0 0.0
    %573 = vmatpush2.msra.mxu0 0.0
    %574 = vmatprep.subr.mxu0 0.0
    %575 = vmatpush2.msra.mxu0 0.0
    %576 = vmatprep.subr.mxu0 0.0
    %577 = vmatpush2.msra.mxu0 0.0
    %578 = vmatprep.subr.mxu0 0.0
    %579 = vmatpush2.msra.mxu0 0.0
    %580 = vmatprep.mubr.f32.mxu0 0.0
    %581 = vmatmul.mubr.f32.gmra.mxu0 %v511
    %v582 = vpop.f32.mrf.mxu0
    %v583 = vadd.f32 %v507, %v582
    %v584 = vpop.f32.mrf.mxu0
    %585 = vmatprep.mubr.f32.mxu0 0.0
    %586 = vmatmul.mubr.f32.gmra.mxu0 %v514
    %v587 = vpop.f32.mrf.mxu0
    %v588 = vadd.f32 %v507, %v587
    %v589 = vpop.f32.mrf.mxu0
    %590 = vdwg.mxu0
    %v591 = vld [vmem:[%s11] sm:$0xff]
    %v592 = vld [vmem:[%s11 + $0x8] sm:$0xff]
    %v593 = vld [vmem:[%s11 + $0x10] sm:$0xff]
    %v594 = vld [vmem:[%s11 + $0x18] sm:$0xff]
    %v595 = vld [vmem:[%s12] sm:$0x1]
    %v597 = vlaneseq
    %v598 = vshrl.u32 %v597, 7
    %v599 = vsub.s32 0, %v598
    %v600 = vrot.slane %v595, %v599
    %602 = vmatprep.subr.mxu0 0.0
    %603 = vmatpush1.msra.mxu0 0.0
    %604 = vmatprep.subr.mxu0 0.0
    %605 = vmatpush1.msra.mxu0 0.0
    %606 = vmatprep.subr.mxu0 0.0
    %607 = vmatpush1.msra.mxu0 0.0
    %608 = vmatprep.subr.mxu0 0.0
    %609 = vmatpush1.msra.mxu0 0.0
    %610 = vmatprep.subr.mxu0 0.0
    %611 = vmatpush1.msra.mxu0 0.0
    %612 = vmatprep.subr.mxu0 0.0
    %613 = vmatpush1.msra.mxu0 0.0
    %614 = vmatprep.subr.mxu0 0.0
    %615 = vmatpush1.msra.mxu0 0.0
    %616 = vmatprep.subr.mxu0 0.0
    %617 = vmatpush1.msra.mxu0 0.0
    %618 = vmatprep.subr.mxu0 0.0
    %619 = vmatpush1.msra.mxu0 0.0
    %620 = vmatprep.subr.mxu0 0.0
    %621 = vmatpush1.msra.mxu0 0.0
    %622 = vmatprep.subr.mxu0 0.0
    %623 = vmatpush1.msra.mxu0 0.0
    %624 = vmatprep.subr.mxu0 0.0
    %625 = vmatpush1.msra.mxu0 0.0
    %626 = vmatprep.subr.mxu0 0.0
    %627 = vmatpush1.msra.mxu0 %v594
    %628 = vmatprep.subr.mxu0 0.0
    %629 = vmatpush1.msra.mxu0 %v593
    %630 = vmatprep.subr.mxu0 0.0
    %631 = vmatpush1.msra.mxu0 %v592
    %632 = vmatprep.subr.mxu0 0.0
    %633 = vmatpush1.msra.mxu0 %v591
    %634 = vmatprep.subr.mxu0 0.0
    %635 = vmatpush2.msra.mxu0 0.0
    %636 = vmatprep.subr.mxu0 0.0
    %637 = vmatpush2.msra.mxu0 0.0
    %638 = vmatprep.subr.mxu0 0.0
    %639 = vmatpush2.msra.mxu0 0.0
    %640 = vmatprep.subr.mxu0 0.0
    %641 = vmatpush2.msra.mxu0 0.0
    %642 = vmatprep.subr.mxu0 0.0
    %643 = vmatpush2.msra.mxu0 0.0
    %644 = vmatprep.subr.mxu0 0.0
    %645 = vmatpush2.msra.mxu0 0.0
    %646 = vmatprep.subr.mxu0 0.0
    %647 = vmatpush2.msra.mxu0 0.0
    %648 = vmatprep.subr.mxu0 0.0
    %649 = vmatpush2.msra.mxu0 0.0
    %650 = vmatprep.subr.mxu0 0.0
    %651 = vmatpush2.msra.mxu0 0.0
    %652 = vmatprep.subr.mxu0 0.0
    %653 = vmatpush2.msra.mxu0 0.0
    %654 = vmatprep.subr.mxu0 0.0
    %655 = vmatpush2.msra.mxu0 0.0
    %656 = vmatprep.subr.mxu0 0.0
    %657 = vmatpush2.msra.mxu0 0.0
    %658 = vmatprep.subr.mxu0 0.0
    %659 = vmatpush2.msra.mxu0 0.0
    %660 = vmatprep.subr.mxu0 0.0
    %661 = vmatpush2.msra.mxu0 0.0
    %662 = vmatprep.subr.mxu0 0.0
    %663 = vmatpush2.msra.mxu0 0.0
    %664 = vmatprep.subr.mxu0 0.0
    %665 = vmatpush2.msra.mxu0 0.0
    %666 = vmatprep.mubr.f32.mxu0 0.0
    %667 = vmatmul.mubr.f32.gmra.mxu0 %v511
    %v668 = vpop.f32.mrf.mxu0
    %v669 = vadd.f32 %v600, %v668
    %v670 = vpop.f32.mrf.mxu0
    %671 = vmatprep.mubr.f32.mxu0 0.0
    %672 = vmatmul.mubr.f32.gmra.mxu0 %v514
    %v673 = vpop.f32.mrf.mxu0
    %v674 = vadd.f32 %v600, %v673
    %v675 = vpop.f32.mrf.mxu0
    %676 = vdwg.mxu0
    %v677 = vxor.u32 %v669, 2147483648
    %v678 = vxor.u32 %v674, 2147483648
    %v679 = vmul.f32 %v677, 1.442695
    %v680 = vpow.pop %v679
    %v681 = vmul.f32 %v678, 1.442695
    %v682 = vpow.pop %v681
    %v683 = vadd.f32 %v680, 1.0
    %v684 = vadd.f32 %v682, 1.0
    %v685 = vrcp.pop %v683
    %v686 = vmul.f32 1.0, %v685
    %v687 = vrcp.pop %v684
    %v688 = vmul.f32 1.0, %v687
    %v689 = vld [vmem:[%s13] sm:$0xff]
    %v690 = vld [vmem:[%s13 + $0x8] sm:$0xff]
    %v691 = vld [vmem:[%s13 + $0x10] sm:$0xff]
    %v692 = vld [vmem:[%s13 + $0x18] sm:$0xff]
    %v693 = vld [vmem:[%s14] sm:$0x1]
    %v695 = vlaneseq
    %v696 = vshrl.u32 %v695, 7
    %v697 = vsub.s32 0, %v696
    %v698 = vrot.slane %v693, %v697
    %700 = vmatprep.subr.mxu0 0.0
    %701 = vmatpush1.msra.mxu0 0.0
    %702 = vmatprep.subr.mxu0 0.0
    %703 = vmatpush1.msra.mxu0 0.0
    %704 = vmatprep.subr.mxu0 0.0
    %705 = vmatpush1.msra.mxu0 0.0
    %706 = vmatprep.subr.mxu0 0.0
    %707 = vmatpush1.msra.mxu0 0.0
    %708 = vmatprep.subr.mxu0 0.0
    %709 = vmatpush1.msra.mxu0 0.0
    %710 = vmatprep.subr.mxu0 0.0
    %711 = vmatpush1.msra.mxu0 0.0
    %712 = vmatprep.subr.mxu0 0.0
    %713 = vmatpush1.msra.mxu0 0.0
    %714 = vmatprep.subr.mxu0 0.0
    %715 = vmatpush1.msra.mxu0 0.0
    %716 = vmatprep.subr.mxu0 0.0
    %717 = vmatpush1.msra.mxu0 0.0
    %718 = vmatprep.subr.mxu0 0.0
    %719 = vmatpush1.msra.mxu0 0.0
    %720 = vmatprep.subr.mxu0 0.0
    %721 = vmatpush1.msra.mxu0 0.0
    %722 = vmatprep.subr.mxu0 0.0
    %723 = vmatpush1.msra.mxu0 0.0
    %724 = vmatprep.subr.mxu0 0.0
    %725 = vmatpush1.msra.mxu0 %v692
    %726 = vmatprep.subr.mxu0 0.0
    %727 = vmatpush1.msra.mxu0 %v691
    %728 = vmatprep.subr.mxu0 0.0
    %729 = vmatpush1.msra.mxu0 %v690
    %730 = vmatprep.subr.mxu0 0.0
    %731 = vmatpush1.msra.mxu0 %v689
    %732 = vmatprep.subr.mxu0 0.0
    %733 = vmatpush2.msra.mxu0 0.0
    %734 = vmatprep.subr.mxu0 0.0
    %735 = vmatpush2.msra.mxu0 0.0
    %736 = vmatprep.subr.mxu0 0.0
    %737 = vmatpush2.msra.mxu0 0.0
    %738 = vmatprep.subr.mxu0 0.0
    %739 = vmatpush2.msra.mxu0 0.0
    %740 = vmatprep.subr.mxu0 0.0
    %741 = vmatpush2.msra.mxu0 0.0
    %742 = vmatprep.subr.mxu0 0.0
    %743 = vmatpush2.msra.mxu0 0.0
    %744 = vmatprep.subr.mxu0 0.0
    %745 = vmatpush2.msra.mxu0 0.0
    %746 = vmatprep.subr.mxu0 0.0
    %747 = vmatpush2.msra.mxu0 0.0
    %748 = vmatprep.subr.mxu0 0.0
    %749 = vmatpush2.msra.mxu0 0.0
    %750 = vmatprep.subr.mxu0 0.0
    %751 = vmatpush2.msra.mxu0 0.0
    %752 = vmatprep.subr.mxu0 0.0
    %753 = vmatpush2.msra.mxu0 0.0
    %754 = vmatprep.subr.mxu0 0.0
    %755 = vmatpush2.msra.mxu0 0.0
    %756 = vmatprep.subr.mxu0 0.0
    %757 = vmatpush2.msra.mxu0 0.0
    %758 = vmatprep.subr.mxu0 0.0
    %759 = vmatpush2.msra.mxu0 0.0
    %760 = vmatprep.subr.mxu0 0.0
    %761 = vmatpush2.msra.mxu0 0.0
    %762 = vmatprep.subr.mxu0 0.0
    %763 = vmatpush2.msra.mxu0 0.0
    %764 = vmatprep.mubr.f32.mxu0 0.0
    %765 = vmatmul.mubr.f32.gmra.mxu0 %v511
    %v766 = vpop.f32.mrf.mxu0
    %v767 = vadd.f32 %v698, %v766
    %v768 = vpop.f32.mrf.mxu0
    %769 = vmatprep.mubr.f32.mxu0 0.0
    %770 = vmatmul.mubr.f32.gmra.mxu0 %v514
    %v771 = vpop.f32.mrf.mxu0
    %v772 = vadd.f32 %v698, %v771
    %v773 = vpop.f32.mrf.mxu0
    %774 = vdwg.mxu0
    %v775 = vxor.u32 %v767, 2147483648
    %v776 = vxor.u32 %v772, 2147483648
    %v777 = vmul.f32 %v775, 1.442695
    %v778 = vpow.pop %v777
    %v779 = vmul.f32 %v776, 1.442695
    %v780 = vpow.pop %v779
    %v781 = vadd.f32 %v778, 1.0
    %v782 = vadd.f32 %v780, 1.0
    %v783 = vrcp.pop %v781
    %v784 = vmul.f32 1.0, %v783
    %v785 = vrcp.pop %v782
    %v786 = vmul.f32 1.0, %v785
    %v787 = vmul.f32 %v686, 0.0
    %v788 = vsub.f32 1.0, %v686
    %v789 = vmul.f32 %v788, %v583
    %v790 = vadd.f32 %v787, %v789
    %v791 = vtanh.pop %v790
    %v792 = vmul.f32 %v784, %v791
    %v793 = vsub.f32 1.0, %v784
    %v794 = vmul.f32 %v793, %v494
    %v795 = vadd.f32 %v792, %v794
    %v797 = vrot.slane %v790, 6
    %v799 = vmul.f32 %v686, %v797
    %v800 = vadd.f32 %v799, %v789
    %v801 = vtanh.pop %v800
    %v802 = vmul.f32 %v784, %v801
    %v803 = vadd.f32 %v802, %v794
    %v805 = vrot.slane %v800, 6
    %v807 = vmul.f32 %v686, %v805
    %v808 = vadd.f32 %v807, %v789
    %v809 = vtanh.pop %v808
    %v810 = vmul.f32 %v784, %v809
    %v811 = vadd.f32 %v810, %v794
    %v813 = vrot.slane %v808, 6
    %v815 = vmul.f32 %v686, %v813
    %v816 = vadd.f32 %v815, %v789
    %v817 = vtanh.pop %v816
    %v818 = vmul.f32 %v784, %v817
    %v819 = vadd.f32 %v818, %v794
    %v821 = vrot.slane %v816, 6
    %v823 = vmul.f32 %v688, %v821
    %v824 = vsub.f32 1.0, %v688
    %v825 = vmul.f32 %v824, %v588
    %v826 = vadd.f32 %v823, %v825
    %v827 = vtanh.pop %v826
    %v828 = vmul.f32 %v786, %v827
    %v829 = vsub.f32 1.0, %v786
    %v830 = vmul.f32 %v829, %v497
    %v831 = vadd.f32 %v828, %v830
    %v833 = vrot.slane %v826, 6
    %v835 = vmul.f32 %v688, %v833
    %v836 = vadd.f32 %v835, %v825
    %v837 = vtanh.pop %v836
    %v838 = vmul.f32 %v786, %v837
    %v839 = vadd.f32 %v838, %v830
    %v841 = vrot.slane %v836, 6
    %v843 = vmul.f32 %v688, %v841
    %v844 = vadd.f32 %v843, %v825
    %v845 = vtanh.pop %v844
    %v846 = vmul.f32 %v786, %v845
    %v847 = vadd.f32 %v846, %v830
    %v849 = vrot.slane %v844, 6
    %v851 = vmul.f32 %v688, %v849
    %v852 = vadd.f32 %v851, %v825
    %v853 = vtanh.pop %v852
    %v854 = vmul.f32 %v786, %v853
    %v855 = vadd.f32 %v854, %v830
    %v856 = vsel %vm489, %v795, %v803
    %v857 = vsel %vm491, %v856, %v811
    %v858 = vsel %vm493, %v857, %v819
    %v859 = vsel %vm489, %v831, %v839
    %v860 = vsel %vm491, %v859, %v847
    %v861 = vsel %vm493, %v860, %v855
    %862 = vst.msk [vmem:[#allocation2] sm:$0xff] %vm509, %v858
    %863 = vst.msk [vmem:[#allocation2 + $0x8] sm:$0xff] %vm509, %v861
    // Predicated region
    $region62: #{rtn_forward.5} parent=1 // pred_check
      _
    $region63: #{rtn_forward.5} parent=1 // pred_check_branch
      %865 = sbr.rel (0) target = $region65
    $region64: #{rtn_forward.5} parent=1 // pred_region
      %s867 = ssub.s32 256, 256
      %868 = vsyncadd [#allocation3], %s867
      %s869 = sshll.u32 [#allocation2], 4
      %s870 = int_to_ptr.vmem [resolvable:$true] %s869
      %875 = dma.vmem_to_hbm [thread:$0]  %s870, 256, %s15, [#allocation3], 128, 128, 8
    $region65: #{rtn_forward.5} parent=1 // pred_fallthru
      _
    // Predicated region
    $region66: #{rtn_forward.5} parent=1 // pred_check
      _
    $region67: #{rtn_forward.5} parent=1 // pred_check_branch
      %877 = sbr.rel (0) target = $region69
    $region68: #{rtn_forward.5} parent=1 // pred_region
      %878 = dma.done [#allocation3], 256
    $region69: #{rtn_forward.5} parent=1 // pred_fallthru
      _
    %879 = vsyncpa [#allocation3], 1

// kernel: rtn_forward.4
$region0: #{rtn_forward.4}
  #allocation0 [shape = 'u32[]', space=smem, size = 0x4, offset = 0x4, fixed_abs, tag = 'smem constant byte address 0x4 - core index']
  #allocation1 [shape = 'u32[144,128]{1,0:T(1,128)}', space=vmem, size = 0x12000, scoped, tag = 'internal scratch']
  #allocation2 [shape = 'f32[1,1]{1,0:T(1,128)S(1)}', space=vmem, size = 0x200, scoped, tag = 'scoped memory for rtn_forward.4']
  #allocation3 [shape = 'f32[1,1]{1,0:T(1,128)S(1)}', space=vmem, size = 0x200, scoped, tag = 'scoped memory for rtn_forward.4']
  #allocation4 [shape = 'f32[1,1]{1,0:T(1,128)S(1)}', space=vmem, size = 0x200, scoped, tag = 'scoped memory for rtn_forward.4']
  #allocation5 [shape = 'f32[1,1]{1,0:T(1,128)S(1)}', space=vmem, size = 0x200, scoped, tag = 'scoped memory for rtn_forward.4']
  #allocation6 [shape = 'f32[1,1]{1,0:T(1,128)S(1)}', space=vmem, size = 0x200, scoped, tag = 'scoped memory for rtn_forward.4']
  #allocation7 [shape = 'f32[1,1]{1,0:T(1,128)S(1)}', space=vmem, size = 0x200, scoped, tag = 'scoped memory for rtn_forward.4']
  %s0 = inlined_call_operand.smem [shape: u32[43], index: -1, kind: input, shape index: {}]
  %s1 = sld [smem:[%s0]]
  %s2 = scalar_lea.smem %s0, 1
  %s3 = sld [smem:[%s2]]
  %s4 = scalar_lea.smem %s0, 2
  %s5 = sld [smem:[%s4]]
  %s6 = scalar_lea.smem %s0, 3
  %s7 = sld [smem:[%s6]]
  %s8 = scalar_lea.smem %s0, 4
  %s9 = sld [smem:[%s8]]
  %s10 = scalar_lea.smem %s0, 5
  %s11 = sld [smem:[%s10]]
  %s12 = scalar_lea.smem %s0, 6
  %s13 = sld [smem:[%s12]]
  %s14 = scalar_lea.smem %s0, 7
  %s15 = sld [smem:[%s14]]
  %s16 = scalar_lea.smem %s0, 8
  %s17 = sld [smem:[%s16]]
  %s18 = scalar_lea.smem %s0, 9
  %s19 = sld [smem:[%s18]]
  %s20 = scalar_lea.smem %s0, 10
  %s21 = sld [smem:[%s20]]
  %s22 = scalar_lea.smem %s0, 11
  %s23 = sld [smem:[%s22]]
  %s24 = scalar_lea.smem %s0, 12
  %s25 = sld [smem:[%s24]]
  %s26 = scalar_lea.smem %s0, 13
  %s27 = sld [smem:[%s26]]
  %s28 = scalar_lea.smem %s0, 14
  %s29 = sld [smem:[%s28]]
  %s30 = scalar_lea.smem %s0, 15
  %s31 = sld [smem:[%s30]]
  %s32 = scalar_lea.smem %s0, 16
  %s33 = sld [smem:[%s32]]
  %s34 = scalar_lea.smem %s0, 17
  %s35 = sld [smem:[%s34]]
  %s36 = scalar_lea.smem %s0, 18
  %s37 = sld [smem:[%s36]]
  %s38 = scalar_lea.smem %s0, 19
  %s39 = sld [smem:[%s38]]
  %s40 = scalar_lea.smem %s0, 20
  %s41 = sld [smem:[%s40]]
  %s42 = scalar_lea.smem %s0, 21
  %s43 = sld [smem:[%s42]]
  %s44 = scalar_lea.smem %s0, 22
  %s45 = sld [smem:[%s44]]
  %s46 = scalar_lea.smem %s0, 23
  %s47 = sld [smem:[%s46]]
  %s48 = scalar_lea.smem %s0, 24
  %s49 = sld [smem:[%s48]]
  %s50 = scalar_lea.smem %s0, 25
  %s51 = sld [smem:[%s50]]
  %s52 = scalar_lea.smem %s0, 26
  %s53 = sld [smem:[%s52]]
  %s54 = scalar_lea.smem %s0, 27
  %s55 = sld [smem:[%s54]]
  %s56 = scalar_lea.smem %s0, 28
  %s57 = sld [smem:[%s56]]
  %s58 = scalar_lea.smem %s0, 29
  %s59 = sld [smem:[%s58]]
  %s60 = scalar_lea.smem %s0, 30
  %s61 = sld [smem:[%s60]]
  %s62 = scalar_lea.smem %s0, 31
  %s63 = sld [smem:[%s62]]
  %s64 = scalar_lea.smem %s0, 32
  %s65 = sld [smem:[%s64]]
  %s66 = scalar_lea.smem %s0, 33
  %s67 = sld [smem:[%s66]]
  %s68 = scalar_lea.smem %s0, 34
  %s69 = sld [smem:[%s68]]
  %s70 = scalar_lea.smem %s0, 35
  %s71 = sld [smem:[%s70]]
  %s72 = scalar_lea.smem %s0, 36
  %s73 = sld [smem:[%s72]]
  %s74 = scalar_lea.smem %s0, 37
  %s75 = sld [smem:[%s74]]
  %s76 = scalar_lea.smem %s0, 38
  %s77 = sld [smem:[%s76]]
  %s78 = scalar_lea.smem %s0, 39
  %s79 = sld [smem:[%s78]]
  %s80 = scalar_lea.smem %s0, 40
  %s81 = sld [smem:[%s80]]
  %s82 = scalar_lea.smem %s0, 41
  %s83 = sld [smem:[%s82]]
  %s84 = scalar_lea.smem %s0, 42
  %s85 = sld [smem:[%s84]]
  %86 = xla_tuple %s77, %s79, %s81, %s83, %s85
  %s87 = sld [smem:[#allocation0]]
  $region194: #{rtn_forward.4} parent=0
    _
  %s89 = ssub.s32 1, %s87
  %s90 = scalar_select 0, %s89, %s87
  %v91 = vstv %s35
  %92 = vst [vmem:[#allocation2] sm:$0x1] %v91
  %v93 = vstv %s39
  %94 = vst [vmem:[#allocation3] sm:$0x1] %v93
  %v95 = vstv %s59
  %96 = vst [vmem:[#allocation4] sm:$0x1] %v95
  %v97 = vstv %s63
  %98 = vst [vmem:[#allocation5] sm:$0x1] %v97
  %v99 = vstv %s67
  %100 = vst [vmem:[#allocation6] sm:$0x1] %v99
  %v101 = vstv %s71
  %102 = vst [vmem:[#allocation7] sm:$0x1] %v101
  $region1: #{rtn_forward.4} parent=0
    #allocation8 [shape = 'u8[512]{0}', space=vmem, size = 0x400, scoped, tag = 'output window, operand 3, single buffered']
    #allocation9 [shape = 's32[1]{0}', space=sflag, size = 0x4, scoped, tag = 'scoped memory for rtn_forward.4']
    #allocation10 [shape = 'u8[512]{0}', space=vmem, size = 0x400, scoped, tag = 'output window, operand 4, single buffered']
    #allocation11 [shape = 's32[1]{0}', space=sflag, size = 0x4, scoped, tag = 'scoped memory for rtn_forward.4']
    %103 = vsyncpa [#allocation9], 0
    %104 = vsyncpa [#allocation11], 0
    // Predicated region
    $region2: #{rtn_forward.4} parent=1 // pred_check
      _
    $region3: #{rtn_forward.4} parent=1 // pred_check_branch
      %106 = sbr.rel (0) target = $region5
    $region4: #{rtn_forward.4} parent=1 // pred_region
      _
    $region5: #{rtn_forward.4} parent=1 // pred_fallthru
      _
    // Predicated region
    $region6: #{rtn_forward.4} parent=1 // pred_check
      _
    $region7: #{rtn_forward.4} parent=1 // pred_check_branch
      %108 = sbr.rel (0) target = $region9
    $region8: #{rtn_forward.4} parent=1 // pred_region
      _
    $region9: #{rtn_forward.4} parent=1 // pred_fallthru
      _
    // Predicated region
    $region10: #{rtn_forward.4} parent=1 // pred_check
      _
    $region11: #{rtn_forward.4} parent=1 // pred_check_branch
      %110 = sbr.rel (0) target = $region13
    $region12: #{rtn_forward.4} parent=1 // pred_region
      _
    $region13: #{rtn_forward.4} parent=1 // pred_fallthru
      _
    // Predicated region
    $region14: #{rtn_forward.4} parent=1 // pred_check
      _
    $region15: #{rtn_forward.4} parent=1 // pred_check_branch
      %112 = sbr.rel (0) target = $region17
    $region16: #{rtn_forward.4} parent=1 // pred_region
      _
    $region17: #{rtn_forward.4} parent=1 // pred_fallthru
      _
    // Predicated region
    $region18: #{rtn_forward.4} parent=1 // pred_check
      _
    $region19: #{rtn_forward.4} parent=1 // pred_check_branch
      %114 = sbr.rel (0) target = $region21
    $region20: #{rtn_forward.4} parent=1 // pred_region
      _
    $region21: #{rtn_forward.4} parent=1 // pred_fallthru
      _
    // Predicated region
    $region22: #{rtn_forward.4} parent=1 // pred_check
      _
    $region23: #{rtn_forward.4} parent=1 // pred_check_branch
      %116 = sbr.rel (0) target = $region25
    $region24: #{rtn_forward.4} parent=1 // pred_region
      _
    $region25: #{rtn_forward.4} parent=1 // pred_fallthru
      _
    // Predicated region
    $region26: #{rtn_forward.4} parent=1 // pred_check
      _
    $region27: #{rtn_forward.4} parent=1 // pred_check_branch
      %118 = sbr.rel (0) target = $region29
    $region28: #{rtn_forward.4} parent=1 // pred_region
      _
    $region29: #{rtn_forward.4} parent=1 // pred_fallthru
      _
    // Predicated region
    $region30: #{rtn_forward.4} parent=1 // pred_check
      _
    $region31: #{rtn_forward.4} parent=1 // pred_check_branch
      %120 = sbr.rel (0) target = $region33
    $region32: #{rtn_forward.4} parent=1 // pred_region
      _
    $region33: #{rtn_forward.4} parent=1 // pred_fallthru
      _
    // Predicated region
    $region34: #{rtn_forward.4} parent=1 // pred_check
      _
    $region35: #{rtn_forward.4} parent=1 // pred_check_branch
      %122 = sbr.rel (0) target = $region37
    $region36: #{rtn_forward.4} parent=1 // pred_region
      _
    $region37: #{rtn_forward.4} parent=1 // pred_fallthru
      _
    // Predicated region
    $region38: #{rtn_forward.4} parent=1 // pred_check
      _
    $region39: #{rtn_forward.4} parent=1 // pred_check_branch
      %124 = sbr.rel (0) target = $region41
    $region40: #{rtn_forward.4} parent=1 // pred_region
      _
    $region41: #{rtn_forward.4} parent=1 // pred_fallthru
      _
    // Predicated region
    $region42: #{rtn_forward.4} parent=1 // pred_check
      _
    $region43: #{rtn_forward.4} parent=1 // pred_check_branch
      %126 = sbr.rel (0) target = $region45
    $region44: #{rtn_forward.4} parent=1 // pred_region
      _
    $region45: #{rtn_forward.4} parent=1 // pred_fallthru
      _
    // Predicated region
    $region46: #{rtn_forward.4} parent=1 // pred_check
      _
    $region47: #{rtn_forward.4} parent=1 // pred_check_branch
      %128 = sbr.rel (0) target = $region49
    $region48: #{rtn_forward.4} parent=1 // pred_region
      _
    $region49: #{rtn_forward.4} parent=1 // pred_fallthru
      _
    // Predicated region
    $region50: #{rtn_forward.4} parent=1 // pred_check
      _
    $region51: #{rtn_forward.4} parent=1 // pred_check_branch
      %130 = sbr.rel (0) target = $region53
    $region52: #{rtn_forward.4} parent=1 // pred_region
      _
    $region53: #{rtn_forward.4} parent=1 // pred_fallthru
      _
    // Predicated region
    $region54: #{rtn_forward.4} parent=1 // pred_check
      _
    $region55: #{rtn_forward.4} parent=1 // pred_check_branch
      %132 = sbr.rel (0) target = $region57
    $region56: #{rtn_forward.4} parent=1 // pred_region
      _
    $region57: #{rtn_forward.4} parent=1 // pred_fallthru
      _
    // Predicated region
    $region58: #{rtn_forward.4} parent=1 // pred_check
      _
    $region59: #{rtn_forward.4} parent=1 // pred_check_branch
      %134 = sbr.rel (0) target = $region61
    $region60: #{rtn_forward.4} parent=1 // pred_region
      _
    $region61: #{rtn_forward.4} parent=1 // pred_fallthru
      _
    // Predicated region
    $region62: #{rtn_forward.4} parent=1 // pred_check
      _
    $region63: #{rtn_forward.4} parent=1 // pred_check_branch
      %136 = sbr.rel (0) target = $region65
    $region64: #{rtn_forward.4} parent=1 // pred_region
      _
    $region65: #{rtn_forward.4} parent=1 // pred_fallthru
      _
    // Predicated region
    $region66: #{rtn_forward.4} parent=1 // pred_check
      _
    $region67: #{rtn_forward.4} parent=1 // pred_check_branch
      %138 = sbr.rel (0) target = $region69
    $region68: #{rtn_forward.4} parent=1 // pred_region
      _
    $region69: #{rtn_forward.4} parent=1 // pred_fallthru
      _
    // Predicated region
    $region70: #{rtn_forward.4} parent=1 // pred_check
      _
    $region71: #{rtn_forward.4} parent=1 // pred_check_branch
      %140 = sbr.rel (0) target = $region73
    $region72: #{rtn_forward.4} parent=1 // pred_region
      _
    $region73: #{rtn_forward.4} parent=1 // pred_fallthru
      _
    // Predicated region
    $region74: #{rtn_forward.4} parent=1 // pred_check
      _
    $region75: #{rtn_forward.4} parent=1 // pred_check_branch
      %142 = sbr.rel (0) target = $region77
    $region76: #{rtn_forward.4} parent=1 // pred_region
      _
    $region77: #{rtn_forward.4} parent=1 // pred_fallthru
      _
    // Predicated region
    $region78: #{rtn_forward.4} parent=1 // pred_check
      _
    $region79: #{rtn_forward.4} parent=1 // pred_check_branch
      %144 = sbr.rel (0) target = $region81
    $region80: #{rtn_forward.4} parent=1 // pred_region
      _
    $region81: #{rtn_forward.4} parent=1 // pred_fallthru
      _
    // Predicated region
    $region82: #{rtn_forward.4} parent=1 // pred_check
      _
    $region83: #{rtn_forward.4} parent=1 // pred_check_branch
      %146 = sbr.rel (0) target = $region85
    $region84: #{rtn_forward.4} parent=1 // pred_region
      _
    $region85: #{rtn_forward.4} parent=1 // pred_fallthru
      _
    // Predicated region
    $region86: #{rtn_forward.4} parent=1 // pred_check
      _
    $region87: #{rtn_forward.4} parent=1 // pred_check_branch
      %148 = sbr.rel (0) target = $region89
    $region88: #{rtn_forward.4} parent=1 // pred_region
      _
    $region89: #{rtn_forward.4} parent=1 // pred_fallthru
      _
    // Predicated region
    $region90: #{rtn_forward.4} parent=1 // pred_check
      _
    $region91: #{rtn_forward.4} parent=1 // pred_check_branch
      %150 = sbr.rel (0) target = $region93
    $region92: #{rtn_forward.4} parent=1 // pred_region
      _
    $region93: #{rtn_forward.4} parent=1 // pred_fallthru
      _
    // Predicated region
    $region94: #{rtn_forward.4} parent=1 // pred_check
      _
    $region95: #{rtn_forward.4} parent=1 // pred_check_branch
      %152 = sbr.rel (0) target = $region97
    $region96: #{rtn_forward.4} parent=1 // pred_region
      _
    $region97: #{rtn_forward.4} parent=1 // pred_fallthru
      _
    // Predicated region
    $region98: #{rtn_forward.4} parent=1 // pred_check
      _
    $region99: #{rtn_forward.4} parent=1 // pred_check_branch
      %154 = sbr.rel (0) target = $region101
    $region100: #{rtn_forward.4} parent=1 // pred_region
      _
    $region101: #{rtn_forward.4} parent=1 // pred_fallthru
      _
    // Predicated region
    $region102: #{rtn_forward.4} parent=1 // pred_check
      _
    $region103: #{rtn_forward.4} parent=1 // pred_check_branch
      %156 = sbr.rel (0) target = $region105
    $region104: #{rtn_forward.4} parent=1 // pred_region
      _
    $region105: #{rtn_forward.4} parent=1 // pred_fallthru
      _
    // Predicated region
    $region106: #{rtn_forward.4} parent=1 // pred_check
      _
    $region107: #{rtn_forward.4} parent=1 // pred_check_branch
      %158 = sbr.rel (0) target = $region109
    $region108: #{rtn_forward.4} parent=1 // pred_region
      _
    $region109: #{rtn_forward.4} parent=1 // pred_fallthru
      _
    // Predicated region
    $region110: #{rtn_forward.4} parent=1 // pred_check
      _
    $region111: #{rtn_forward.4} parent=1 // pred_check_branch
      %160 = sbr.rel (0) target = $region113
    $region112: #{rtn_forward.4} parent=1 // pred_region
      _
    $region113: #{rtn_forward.4} parent=1 // pred_fallthru
      _
    // Predicated region
    $region114: #{rtn_forward.4} parent=1 // pred_check
      _
    $region115: #{rtn_forward.4} parent=1 // pred_check_branch
      %162 = sbr.rel (0) target = $region117
    $region116: #{rtn_forward.4} parent=1 // pred_region
      _
    $region117: #{rtn_forward.4} parent=1 // pred_fallthru
      _
    // Predicated region
    $region118: #{rtn_forward.4} parent=1 // pred_check
      _
    $region119: #{rtn_forward.4} parent=1 // pred_check_branch
      %164 = sbr.rel (0) target = $region121
    $region120: #{rtn_forward.4} parent=1 // pred_region
      _
    $region121: #{rtn_forward.4} parent=1 // pred_fallthru
      _
    // Predicated region
    $region122: #{rtn_forward.4} parent=1 // pred_check
      _
    $region123: #{rtn_forward.4} parent=1 // pred_check_branch
      %166 = sbr.rel (0) target = $region125
    $region124: #{rtn_forward.4} parent=1 // pred_region
      _
    $region125: #{rtn_forward.4} parent=1 // pred_fallthru
      _
    // Predicated region
    $region126: #{rtn_forward.4} parent=1 // pred_check
      _
    $region127: #{rtn_forward.4} parent=1 // pred_check_branch
      %168 = sbr.rel (0) target = $region129
    $region128: #{rtn_forward.4} parent=1 // pred_region
      _
    $region129: #{rtn_forward.4} parent=1 // pred_fallthru
      _
    // Predicated region
    $region130: #{rtn_forward.4} parent=1 // pred_check
      _
    $region131: #{rtn_forward.4} parent=1 // pred_check_branch
      %170 = sbr.rel (0) target = $region133
    $region132: #{rtn_forward.4} parent=1 // pred_region
      _
    $region133: #{rtn_forward.4} parent=1 // pred_fallthru
      _
    // Predicated region
    $region134: #{rtn_forward.4} parent=1 // pred_check
      _
    $region135: #{rtn_forward.4} parent=1 // pred_check_branch
      %172 = sbr.rel (0) target = $region137
    $region136: #{rtn_forward.4} parent=1 // pred_region
      _
    $region137: #{rtn_forward.4} parent=1 // pred_fallthru
      _
    // Predicated region
    $region138: #{rtn_forward.4} parent=1 // pred_check
      _
    $region139: #{rtn_forward.4} parent=1 // pred_check_branch
      %174 = sbr.rel (0) target = $region141
    $region140: #{rtn_forward.4} parent=1 // pred_region
      _
    $region141: #{rtn_forward.4} parent=1 // pred_fallthru
      _
    // Predicated region
    $region142: #{rtn_forward.4} parent=1 // pred_check
      _
    $region143: #{rtn_forward.4} parent=1 // pred_check_branch
      %176 = sbr.rel (0) target = $region145
    $region144: #{rtn_forward.4} parent=1 // pred_region
      _
    $region145: #{rtn_forward.4} parent=1 // pred_fallthru
      _
    // Predicated region
    $region146: #{rtn_forward.4} parent=1 // pred_check
      _
    $region147: #{rtn_forward.4} parent=1 // pred_check_branch
      %178 = sbr.rel (0) target = $region149
    $region148: #{rtn_forward.4} parent=1 // pred_region
      _
    $region149: #{rtn_forward.4} parent=1 // pred_fallthru
      _
    // Predicated region
    $region150: #{rtn_forward.4} parent=1 // pred_check
      _
    $region151: #{rtn_forward.4} parent=1 // pred_check_branch
      %180 = sbr.rel (0) target = $region153
    $region152: #{rtn_forward.4} parent=1 // pred_region
      _
    $region153: #{rtn_forward.4} parent=1 // pred_fallthru
      _
    %v181 = vld [vmem:[%s1] sm:$0xff]
    %v182 = vld [vmem:[%s1 + $0x8] sm:$0xff]
    %v183 = vld [vmem:[%s1 + $0x10] sm:$0xff]
    %v184 = vld [vmem:[%s1 + $0x18] sm:$0xff]
    %v185 = vld [vmem:[%s1 + $0x20] sm:$0xff]
    %v186 = vld [vmem:[%s1 + $0x28] sm:$0xff]
    %v187 = vld [vmem:[%s1 + $0x30] sm:$0xff]
    %v188 = vld [vmem:[%s9] sm:$0xff]
    %v189 = vld [vmem:[%s9 + $0x8] sm:$0xff]
    %v190 = vld [vmem:[%s9 + $0x10] sm:$0xff]
    %v191 = vld [vmem:[%s9 + $0x18] sm:$0xff]
    %v192 = vld [vmem:[%s11] sm:$0x1]
    %v194 = vlaneseq
    %v195 = vshrl.u32 %v194, 7
    %v196 = vsub.s32 0, %v195
    %v197 = vrot.slane %v192, %v196
    %vm199 = vcmask 261120
    %v201 = vsel %vm199, %v181, 0
    %v204 = vsel %vm199, %v182, 0
    %v207 = vsel %vm199, %v183, 0
    %v210 = vsel %vm199, %v184, 0
    %v213 = vsel %vm199, %v185, 0
    %v216 = vsel %vm199, %v186, 0
    %v219 = vsel %vm199, %v187, 0
    %221 = vmatprep.subr.mxu0 0.0
    %222 = vmatpush1.msra.mxu0 0.0
    %223 = vmatprep.subr.mxu0 0.0
    %224 = vmatpush1.msra.mxu0 0.0
    %225 = vmatprep.subr.mxu0 0.0
    %226 = vmatpush1.msra.mxu0 0.0
    %227 = vmatprep.subr.mxu0 0.0
    %228 = vmatpush1.msra.mxu0 0.0
    %229 = vmatprep.subr.mxu0 0.0
    %230 = vmatpush1.msra.mxu0 0.0
    %231 = vmatprep.subr.mxu0 0.0
    %232 = vmatpush1.msra.mxu0 0.0
    %233 = vmatprep.subr.mxu0 0.0
    %234 = vmatpush1.msra.mxu0 0.0
    %235 = vmatprep.subr.mxu0 0.0
    %236 = vmatpush1.msra.mxu0 0.0
    %237 = vmatprep.subr.mxu0 0.0
    %238 = vmatpush1.msra.mxu0 0.0
    %239 = vmatprep.subr.mxu0 0.0
    %240 = vmatpush1.msra.mxu0 0.0
    %241 = vmatprep.subr.mxu0 0.0
    %242 = vmatpush1.msra.mxu0 0.0
    %243 = vmatprep.subr.mxu0 0.0
    %244 = vmatpush1.msra.mxu0 0.0
    %245 = vmatprep.subr.mxu0 0.0
    %246 = vmatpush1.msra.mxu0 %v191
    %247 = vmatprep.subr.mxu0 0.0
    %248 = vmatpush1.msra.mxu0 %v190
    %249 = vmatprep.subr.mxu0 0.0
    %250 = vmatpush1.msra.mxu0 %v189
    %251 = vmatprep.subr.mxu0 0.0
    %252 = vmatpush1.msra.mxu0 %v188
    %253 = vmatprep.subr.mxu0 0.0
    %254 = vmatpush2.msra.mxu0 0.0
    %255 = vmatprep.subr.mxu0 0.0
    %256 = vmatpush2.msra.mxu0 0.0
    %257 = vmatprep.subr.mxu0 0.0
    %258 = vmatpush2.msra.mxu0 0.0
    %259 = vmatprep.subr.mxu0 0.0
    %260 = vmatpush2.msra.mxu0 0.0
    %261 = vmatprep.subr.mxu0 0.0
    %262 = vmatpush2.msra.mxu0 0.0
    %263 = vmatprep.subr.mxu0 0.0
    %264 = vmatpush2.msra.mxu0 0.0
    %265 = vmatprep.subr.mxu0 0.0
    %266 = vmatpush2.msra.mxu0 0.0
    %267 = vmatprep.subr.mxu0 0.0
    %268 = vmatpush2.msra.mxu0 0.0
    %269 = vmatprep.subr.mxu0 0.0
    %270 = vmatpush2.msra.mxu0 0.0
    %271 = vmatprep.subr.mxu0 0.0
    %272 = vmatpush2.msra.mxu0 0.0
    %273 = vmatprep.subr.mxu0 0.0
    %274 = vmatpush2.msra.mxu0 0.0
    %275 = vmatprep.subr.mxu0 0.0
    %276 = vmatpush2.msra.mxu0 0.0
    %277 = vmatprep.subr.mxu0 0.0
    %278 = vmatpush2.msra.mxu0 0.0
    %279 = vmatprep.subr.mxu0 0.0
    %280 = vmatpush2.msra.mxu0 0.0
    %281 = vmatprep.subr.mxu0 0.0
    %282 = vmatpush2.msra.mxu0 0.0
    %283 = vmatprep.subr.mxu0 0.0
    %284 = vmatpush2.msra.mxu0 0.0
    %285 = vmatprep.mubr.f32.mxu0 0.0
    %286 = vmatmul.mubr.f32.gmra.mxu0 %v201
    %v287 = vpop.f32.mrf.mxu0
    %v288 = vadd.f32 %v197, %v287
    %v289 = vpop.f32.mrf.mxu0
    %290 = vmatprep.mubr.f32.mxu0 0.0
    %291 = vmatmul.mubr.f32.gmra.mxu0 %v204
    %v292 = vpop.f32.mrf.mxu0
    %v293 = vadd.f32 %v197, %v292
    %v294 = vpop.f32.mrf.mxu0
    %295 = vmatprep.mubr.f32.mxu0 0.0
    %296 = vmatmul.mubr.f32.gmra.mxu0 %v207
    %v297 = vpop.f32.mrf.mxu0
    %v298 = vadd.f32 %v197, %v297
    %v299 = vpop.f32.mrf.mxu0
    %300 = vmatprep.mubr.f32.mxu0 0.0
    %301 = vmatmul.mubr.f32.gmra.mxu0 %v210
    %v302 = vpop.f32.mrf.mxu0
    %v303 = vadd.f32 %v197, %v302
    %v304 = vpop.f32.mrf.mxu0
    %305 = vmatprep.mubr.f32.mxu0 0.0
    %306 = vmatmul.mubr.f32.gmra.mxu0 %v213
    %v307 = vpop.f32.mrf.mxu0
    %v308 = vadd.f32 %v197, %v307
    %v309 = vpop.f32.mrf.mxu0
    %310 = vmatprep.mubr.f32.mxu0 0.0
    %311 = vmatmul.mubr.f32.gmra.mxu0 %v216
    %v312 = vpop.f32.mrf.mxu0
    %v313 = vadd.f32 %v197, %v312
    %v314 = vpop.f32.mrf.mxu0
    %315 = vmatprep.mubr.f32.mxu0 0.0
    %316 = vmatmul.mubr.f32.gmra.mxu0 %v219
    %v317 = vpop.f32.mrf.mxu0
    %v318 = vadd.f32 %v197, %v317
    %v319 = vpop.f32.mrf.mxu0
    %320 = vdwg.mxu0
    %v321 = vmax.f32 %v288, 0.0
    %v322 = vmax.f32 %v293, 0.0
    %v323 = vmax.f32 %v298, 0.0
    %v324 = vmax.f32 %v303, 0.0
    %v325 = vmax.f32 %v308, 0.0
    %v326 = vmax.f32 %v313, 0.0
    %v327 = vmax.f32 %v318, 0.0
    %v328 = vld [vmem:[%s13] sm:$0xff]
    %v329 = vld [vmem:[%s13 + $0x8] sm:$0xff]
    %v330 = vld [vmem:[%s15] sm:$0x1]
    %v332 = vlaneseq
    %v333 = vshrl.u32 %v332, 7
    %v334 = vsub.s32 0, %v333
    %v335 = vrot.slane %v330, %v334
    %vm337 = vcmask 130048
    %v339 = vsel %vm337, %v321, 0
    %v342 = vsel %vm337, %v322, 0
    %v345 = vsel %vm337, %v323, 0
    %v348 = vsel %vm337, %v324, 0
    %v351 = vsel %vm337, %v325, 0
    %v354 = vsel %vm337, %v326, 0
    %v357 = vsel %vm337, %v327, 0
    %359 = vmatprep.subr.mxu0 0.0
    %360 = vmatpush1.msra.mxu0 0.0
    %361 = vmatprep.subr.mxu0 0.0
    %362 = vmatpush1.msra.mxu0 0.0
    %363 = vmatprep.subr.mxu0 0.0
    %364 = vmatpush1.msra.mxu0 0.0
    %365 = vmatprep.subr.mxu0 0.0
    %366 = vmatpush1.msra.mxu0 0.0
    %367 = vmatprep.subr.mxu0 0.0
    %368 = vmatpush1.msra.mxu0 0.0
    %369 = vmatprep.subr.mxu0 0.0
    %370 = vmatpush1.msra.mxu0 0.0
    %371 = vmatprep.subr.mxu0 0.0
    %372 = vmatpush1.msra.mxu0 0.0
    %373 = vmatprep.subr.mxu0 0.0
    %374 = vmatpush1.msra.mxu0 0.0
    %375 = vmatprep.subr.mxu0 0.0
    %376 = vmatpush1.msra.mxu0 0.0
    %377 = vmatprep.subr.mxu0 0.0
    %378 = vmatpush1.msra.mxu0 0.0
    %379 = vmatprep.subr.mxu0 0.0
    %380 = vmatpush1.msra.mxu0 0.0
    %381 = vmatprep.subr.mxu0 0.0
    %382 = vmatpush1.msra.mxu0 0.0
    %383 = vmatprep.subr.mxu0 0.0
    %384 = vmatpush1.msra.mxu0 0.0
    %385 = vmatprep.subr.mxu0 0.0
    %386 = vmatpush1.msra.mxu0 0.0
    %387 = vmatprep.subr.mxu0 0.0
    %388 = vmatpush1.msra.mxu0 %v329
    %389 = vmatprep.subr.mxu0 0.0
    %390 = vmatpush1.msra.mxu0 %v328
    %391 = vmatprep.subr.mxu0 0.0
    %392 = vmatpush2.msra.mxu0 0.0
    %393 = vmatprep.subr.mxu0 0.0
    %394 = vmatpush2.msra.mxu0 0.0
    %395 = vmatprep.subr.mxu0 0.0
    %396 = vmatpush2.msra.mxu0 0.0
    %397 = vmatprep.subr.mxu0 0.0
    %398 = vmatpush2.msra.mxu0 0.0
    %399 = vmatprep.subr.mxu0 0.0
    %400 = vmatpush2.msra.mxu0 0.0
    %401 = vmatprep.subr.mxu0 0.0
    %402 = vmatpush2.msra.mxu0 0.0
    %403 = vmatprep.subr.mxu0 0.0
    %404 = vmatpush2.msra.mxu0 0.0
    %405 = vmatprep.subr.mxu0 0.0
    %406 = vmatpush2.msra.mxu0 0.0
    %407 = vmatprep.subr.mxu0 0.0
    %408 = vmatpush2.msra.mxu0 0.0
    %409 = vmatprep.subr.mxu0 0.0
    %410 = vmatpush2.msra.mxu0 0.0
    %411 = vmatprep.subr.mxu0 0.0
    %412 = vmatpush2.msra.mxu0 0.0
    %413 = vmatprep.subr.mxu0 0.0
    %414 = vmatpush2.msra.mxu0 0.0
    %415 = vmatprep.subr.mxu0 0.0
    %416 = vmatpush2.msra.mxu0 0.0
    %417 = vmatprep.subr.mxu0 0.0
    %418 = vmatpush2.msra.mxu0 0.0
    %419 = vmatprep.subr.mxu0 0.0
    %420 = vmatpush2.msra.mxu0 0.0
    %421 = vmatprep.subr.mxu0 0.0
    %422 = vmatpush2.msra.mxu0 0.0
    %423 = vmatprep.mubr.f32.mxu0 0.0
    %424 = vmatmul.mubr.f32.gmra.mxu0 %v339
    %v425 = vpop.f32.mrf.mxu0
    %v426 = vadd.f32 %v335, %v425
    %v427 = vpop.f32.mrf.mxu0
    %428 = vmatprep.mubr.f32.mxu0 0.0
    %429 = vmatmul.mubr.f32.gmra.mxu0 %v342
    %v430 = vpop.f32.mrf.mxu0
    %v431 = vadd.f32 %v335, %v430
    %v432 = vpop.f32.mrf.mxu0
    %433 = vmatprep.mubr.f32.mxu0 0.0
    %434 = vmatmul.mubr.f32.gmra.mxu0 %v345
    %v435 = vpop.f32.mrf.mxu0
    %v436 = vadd.f32 %v335, %v435
    %v437 = vpop.f32.mrf.mxu0
    %438 = vmatprep.mubr.f32.mxu0 0.0
    %439 = vmatmul.mubr.f32.gmra.mxu0 %v348
    %v440 = vpop.f32.mrf.mxu0
    %v441 = vadd.f32 %v335, %v440
    %v442 = vpop.f32.mrf.mxu0
    %443 = vmatprep.mubr.f32.mxu0 0.0
    %444 = vmatmul.mubr.f32.gmra.mxu0 %v351
    %v445 = vpop.f32.mrf.mxu0
    %v446 = vadd.f32 %v335, %v445
    %v447 = vpop.f32.mrf.mxu0
    %448 = vmatprep.mubr.f32.mxu0 0.0
    %449 = vmatmul.mubr.f32.gmra.mxu0 %v354
    %v450 = vpop.f32.mrf.mxu0
    %v451 = vadd.f32 %v335, %v450
    %v452 = vpop.f32.mrf.mxu0
    %453 = vmatprep.mubr.f32.mxu0 0.0
    %454 = vmatmul.mubr.f32.gmra.mxu0 %v357
    %v455 = vpop.f32.mrf.mxu0
    %v456 = vadd.f32 %v335, %v455
    %v457 = vpop.f32.mrf.mxu0
    %458 = vdwg.mxu0
    %v459 = vmax.f32 %v426, 0.0
    %v460 = vmax.f32 %v431, 0.0
    %v461 = vmax.f32 %v436, 0.0
    %v462 = vmax.f32 %v441, 0.0
    %v463 = vmax.f32 %v446, 0.0
    %v464 = vmax.f32 %v451, 0.0
    %v465 = vmax.f32 %v456, 0.0
    %v466 = vld [vmem:[%s17] sm:$0xff]
    %v467 = vld [vmem:[%s17 + $0x8] sm:$0xff]
    %v468 = vld [vmem:[%s19] sm:$0x1]
    %v470 = vlaneseq
    %v471 = vshrl.u32 %v470, 7
    %v472 = vsub.s32 0, %v471
    %v473 = vrot.slane %v468, %v472
    %v476 = vsel %vm337, %v459, 0
    %v479 = vsel %vm337, %v460, 0
    %v482 = vsel %vm337, %v461, 0
    %v485 = vsel %vm337, %v462, 0
    %v488 = vsel %vm337, %v463, 0
    %v491 = vsel %vm337, %v464, 0
    %v494 = vsel %vm337, %v465, 0
    %496 = vmatprep.subr.mxu0 0.0
    %497 = vmatpush1.msra.mxu0 0.0
    %498 = vmatprep.subr.mxu0 0.0
    %499 = vmatpush1.msra.mxu0 0.0
    %500 = vmatprep.subr.mxu0 0.0
    %501 = vmatpush1.msra.mxu0 0.0
    %502 = vmatprep.subr.mxu0 0.0
    %503 = vmatpush1.msra.mxu0 0.0
    %504 = vmatprep.subr.mxu0 0.0
    %505 = vmatpush1.msra.mxu0 0.0
    %506 = vmatprep.subr.mxu0 0.0
    %507 = vmatpush1.msra.mxu0 0.0
    %508 = vmatprep.subr.mxu0 0.0
    %509 = vmatpush1.msra.mxu0 0.0
    %510 = vmatprep.subr.mxu0 0.0
    %511 = vmatpush1.msra.mxu0 0.0
    %512 = vmatprep.subr.mxu0 0.0
    %513 = vmatpush1.msra.mxu0 0.0
    %514 = vmatprep.subr.mxu0 0.0
    %515 = vmatpush1.msra.mxu0 0.0
    %516 = vmatprep.subr.mxu0 0.0
    %517 = vmatpush1.msra.mxu0 0.0
    %518 = vmatprep.subr.mxu0 0.0
    %519 = vmatpush1.msra.mxu0 0.0
    %520 = vmatprep.subr.mxu0 0.0
    %521 = vmatpush1.msra.mxu0 0.0
    %522 = vmatprep.subr.mxu0 0.0
    %523 = vmatpush1.msra.mxu0 0.0
    %524 = vmatprep.subr.mxu0 0.0
    %525 = vmatpush1.msra.mxu0 %v467
    %526 = vmatprep.subr.mxu0 0.0
    %527 = vmatpush1.msra.mxu0 %v466
    %528 = vmatprep.subr.mxu0 0.0
    %529 = vmatpush2.msra.mxu0 0.0
    %530 = vmatprep.subr.mxu0 0.0
    %531 = vmatpush2.msra.mxu0 0.0
    %532 = vmatprep.subr.mxu0 0.0
    %533 = vmatpush2.msra.mxu0 0.0
    %534 = vmatprep.subr.mxu0 0.0
    %535 = vmatpush2.msra.mxu0 0.0
    %536 = vmatprep.subr.mxu0 0.0
    %537 = vmatpush2.msra.mxu0 0.0
    %538 = vmatprep.subr.mxu0 0.0
    %539 = vmatpush2.msra.mxu0 0.0
    %540 = vmatprep.subr.mxu0 0.0
    %541 = vmatpush2.msra.mxu0 0.0
    %542 = vmatprep.subr.mxu0 0.0
    %543 = vmatpush2.msra.mxu0 0.0
    %544 = vmatprep.subr.mxu0 0.0
    %545 = vmatpush2.msra.mxu0 0.0
    %546 = vmatprep.subr.mxu0 0.0
    %547 = vmatpush2.msra.mxu0 0.0
    %548 = vmatprep.subr.mxu0 0.0
    %549 = vmatpush2.msra.mxu0 0.0
    %550 = vmatprep.subr.mxu0 0.0
    %551 = vmatpush2.msra.mxu0 0.0
    %552 = vmatprep.subr.mxu0 0.0
    %553 = vmatpush2.msra.mxu0 0.0
    %554 = vmatprep.subr.mxu0 0.0
    %555 = vmatpush2.msra.mxu0 0.0
    %556 = vmatprep.subr.mxu0 0.0
    %557 = vmatpush2.msra.mxu0 0.0
    %558 = vmatprep.subr.mxu0 0.0
    %559 = vmatpush2.msra.mxu0 0.0
    %560 = vmatprep.mubr.f32.mxu0 0.0
    %561 = vmatmul.mubr.f32.gmra.mxu0 %v476
    %v562 = vpop.f32.mrf.mxu0
    %v563 = vadd.f32 %v473, %v562
    %v564 = vpop.f32.mrf.mxu0
    %565 = vmatprep.mubr.f32.mxu0 0.0
    %566 = vmatmul.mubr.f32.gmra.mxu0 %v479
    %v567 = vpop.f32.mrf.mxu0
    %v568 = vadd.f32 %v473, %v567
    %v569 = vpop.f32.mrf.mxu0
    %570 = vmatprep.mubr.f32.mxu0 0.0
    %571 = vmatmul.mubr.f32.gmra.mxu0 %v482
    %v572 = vpop.f32.mrf.mxu0
    %v573 = vadd.f32 %v473, %v572
    %v574 = vpop.f32.mrf.mxu0
    %575 = vmatprep.mubr.f32.mxu0 0.0
    %576 = vmatmul.mubr.f32.gmra.mxu0 %v485
    %v577 = vpop.f32.mrf.mxu0
    %v578 = vadd.f32 %v473, %v577
    %v579 = vpop.f32.mrf.mxu0
    %580 = vmatprep.mubr.f32.mxu0 0.0
    %581 = vmatmul.mubr.f32.gmra.mxu0 %v488
    %v582 = vpop.f32.mrf.mxu0
    %v583 = vadd.f32 %v473, %v582
    %v584 = vpop.f32.mrf.mxu0
    %585 = vmatprep.mubr.f32.mxu0 0.0
    %586 = vmatmul.mubr.f32.gmra.mxu0 %v491
    %v587 = vpop.f32.mrf.mxu0
    %v588 = vadd.f32 %v473, %v587
    %v589 = vpop.f32.mrf.mxu0
    %590 = vmatprep.mubr.f32.mxu0 0.0
    %591 = vmatmul.mubr.f32.gmra.mxu0 %v494
    %v592 = vpop.f32.mrf.mxu0
    %v593 = vadd.f32 %v473, %v592
    %v594 = vpop.f32.mrf.mxu0
    %595 = vdwg.mxu0
    %v596 = vld [vmem:[%s21] sm:$0xff]
    %v597 = vld [vmem:[%s21 + $0x8] sm:$0xff]
    %v598 = vld [vmem:[%s23] sm:$0x1]
    %v600 = vlaneseq
    %v601 = vshrl.u32 %v600, 7
    %v602 = vsub.s32 0, %v601
    %v603 = vrot.slane %v598, %v602
    %v606 = vsel %vm337, %v563, 0
    %v609 = vsel %vm337, %v568, 0
    %v612 = vsel %vm337, %v573, 0
    %v615 = vsel %vm337, %v578, 0
    %v618 = vsel %vm337, %v583, 0
    %v621 = vsel %vm337, %v588, 0
    %v624 = vsel %vm337, %v593, 0
    %626 = vmatprep.subr.mxu0 0.0
    %627 = vmatpush1.msra.mxu0 0.0
    %628 = vmatprep.subr.mxu0 0.0
    %629 = vmatpush1.msra.mxu0 0.0
    %630 = vmatprep.subr.mxu0 0.0
    %631 = vmatpush1.msra.mxu0 0.0
    %632 = vmatprep.subr.mxu0 0.0
    %633 = vmatpush1.msra.mxu0 0.0
    %634 = vmatprep.subr.mxu0 0.0
    %635 = vmatpush1.msra.mxu0 0.0
    %636 = vmatprep.subr.mxu0 0.0
    %637 = vmatpush1.msra.mxu0 0.0
    %638 = vmatprep.subr.mxu0 0.0
    %639 = vmatpush1.msra.mxu0 0.0
    %640 = vmatprep.subr.mxu0 0.0
    %641 = vmatpush1.msra.mxu0 0.0
    %642 = vmatprep.subr.mxu0 0.0
    %643 = vmatpush1.msra.mxu0 0.0
    %644 = vmatprep.subr.mxu0 0.0
    %645 = vmatpush1.msra.mxu0 0.0
    %646 = vmatprep.subr.mxu0 0.0
    %647 = vmatpush1.msra.mxu0 0.0
    %648 = vmatprep.subr.mxu0 0.0
    %649 = vmatpush1.msra.mxu0 0.0
    %650 = vmatprep.subr.mxu0 0.0
    %651 = vmatpush1.msra.mxu0 0.0
    %652 = vmatprep.subr.mxu0 0.0
    %653 = vmatpush1.msra.mxu0 0.0
    %654 = vmatprep.subr.mxu0 0.0
    %655 = vmatpush1.msra.mxu0 %v597
    %656 = vmatprep.subr.mxu0 0.0
    %657 = vmatpush1.msra.mxu0 %v596
    %658 = vmatprep.subr.mxu0 0.0
    %659 = vmatpush2.msra.mxu0 0.0
    %660 = vmatprep.subr.mxu0 0.0
    %661 = vmatpush2.msra.mxu0 0.0
    %662 = vmatprep.subr.mxu0 0.0
    %663 = vmatpush2.msra.mxu0 0.0
    %664 = vmatprep.subr.mxu0 0.0
    %665 = vmatpush2.msra.mxu0 0.0
    %666 = vmatprep.subr.mxu0 0.0
    %667 = vmatpush2.msra.mxu0 0.0
    %668 = vmatprep.subr.mxu0 0.0
    %669 = vmatpush2.msra.mxu0 0.0
    %670 = vmatprep.subr.mxu0 0.0
    %671 = vmatpush2.msra.mxu0 0.0
    %672 = vmatprep.subr.mxu0 0.0
    %673 = vmatpush2.msra.mxu0 0.0
    %674 = vmatprep.subr.mxu0 0.0
    %675 = vmatpush2.msra.mxu0 0.0
    %676 = vmatprep.subr.mxu0 0.0
    %677 = vmatpush2.msra.mxu0 0.0
    %678 = vmatprep.subr.mxu0 0.0
    %679 = vmatpush2.msra.mxu0 0.0
    %680 = vmatprep.subr.mxu0 0.0
    %681 = vmatpush2.msra.mxu0 0.0
    %682 = vmatprep.subr.mxu0 0.0
    %683 = vmatpush2.msra.mxu0 0.0
    %684 = vmatprep.subr.mxu0 0.0
    %685 = vmatpush2.msra.mxu0 0.0
    %686 = vmatprep.subr.mxu0 0.0
    %687 = vmatpush2.msra.mxu0 0.0
    %688 = vmatprep.subr.mxu0 0.0
    %689 = vmatpush2.msra.mxu0 0.0
    %690 = vmatprep.mubr.f32.mxu0 0.0
    %691 = vmatmul.mubr.f32.gmra.mxu0 %v606
    %v692 = vpop.f32.mrf.mxu0
    %v693 = vadd.f32 %v603, %v692
    %v694 = vpop.f32.mrf.mxu0
    %695 = vmatprep.mubr.f32.mxu0 0.0
    %696 = vmatmul.mubr.f32.gmra.mxu0 %v609
    %v697 = vpop.f32.mrf.mxu0
    %v698 = vadd.f32 %v603, %v697
    %v699 = vpop.f32.mrf.mxu0
    %700 = vmatprep.mubr.f32.mxu0 0.0
    %701 = vmatmul.mubr.f32.gmra.mxu0 %v612
    %v702 = vpop.f32.mrf.mxu0
    %v703 = vadd.f32 %v603, %v702
    %v704 = vpop.f32.mrf.mxu0
    %705 = vmatprep.mubr.f32.mxu0 0.0
    %706 = vmatmul.mubr.f32.gmra.mxu0 %v615
    %v707 = vpop.f32.mrf.mxu0
    %v708 = vadd.f32 %v603, %v707
    %v709 = vpop.f32.mrf.mxu0
    %710 = vmatprep.mubr.f32.mxu0 0.0
    %711 = vmatmul.mubr.f32.gmra.mxu0 %v618
    %v712 = vpop.f32.mrf.mxu0
    %v713 = vadd.f32 %v603, %v712
    %v714 = vpop.f32.mrf.mxu0
    %715 = vmatprep.mubr.f32.mxu0 0.0
    %716 = vmatmul.mubr.f32.gmra.mxu0 %v621
    %v717 = vpop.f32.mrf.mxu0
    %v718 = vadd.f32 %v603, %v717
    %v719 = vpop.f32.mrf.mxu0
    %720 = vmatprep.mubr.f32.mxu0 0.0
    %721 = vmatmul.mubr.f32.gmra.mxu0 %v624
    %v722 = vpop.f32.mrf.mxu0
    %v723 = vadd.f32 %v603, %v722
    %v724 = vpop.f32.mrf.mxu0
    %725 = vdwg.mxu0
    %v726 = vmax.f32 %v693, 0.0
    %v727 = vmax.f32 %v698, 0.0
    %v728 = vmax.f32 %v703, 0.0
    %v729 = vmax.f32 %v708, 0.0
    %v730 = vmax.f32 %v713, 0.0
    %v731 = vmax.f32 %v718, 0.0
    %v732 = vmax.f32 %v723, 0.0
    %v733 = vld [vmem:[%s25] sm:$0xff]
    %v734 = vld [vmem:[%s25 + $0x8] sm:$0xff]
    %v735 = vld [vmem:[%s27] sm:$0x1]
    %v737 = vlaneseq
    %v738 = vshrl.u32 %v737, 7
    %v739 = vsub.s32 0, %v738
    %v740 = vrot.slane %v735, %v739
    %v743 = vsel %vm337, %v726, 0
    %v746 = vsel %vm337, %v727, 0
    %v749 = vsel %vm337, %v728, 0
    %v752 = vsel %vm337, %v729, 0
    %v755 = vsel %vm337, %v730, 0
    %v758 = vsel %vm337, %v731, 0
    %v761 = vsel %vm337, %v732, 0
    %763 = vmatprep.subr.mxu0 0.0
    %764 = vmatpush1.msra.mxu0 0.0
    %765 = vmatprep.subr.mxu0 0.0
    %766 = vmatpush1.msra.mxu0 0.0
    %767 = vmatprep.subr.mxu0 0.0
    %768 = vmatpush1.msra.mxu0 0.0
    %769 = vmatprep.subr.mxu0 0.0
    %770 = vmatpush1.msra.mxu0 0.0
    %771 = vmatprep.subr.mxu0 0.0
    %772 = vmatpush1.msra.mxu0 0.0
    %773 = vmatprep.subr.mxu0 0.0
    %774 = vmatpush1.msra.mxu0 0.0
    %775 = vmatprep.subr.mxu0 0.0
    %776 = vmatpush1.msra.mxu0 0.0
    %777 = vmatprep.subr.mxu0 0.0
    %778 = vmatpush1.msra.mxu0 0.0
    %779 = vmatprep.subr.mxu0 0.0
    %780 = vmatpush1.msra.mxu0 0.0
    %781 = vmatprep.subr.mxu0 0.0
    %782 = vmatpush1.msra.mxu0 0.0
    %783 = vmatprep.subr.mxu0 0.0
    %784 = vmatpush1.msra.mxu0 0.0
    %785 = vmatprep.subr.mxu0 0.0
    %786 = vmatpush1.msra.mxu0 0.0
    %787 = vmatprep.subr.mxu0 0.0
    %788 = vmatpush1.msra.mxu0 0.0
    %789 = vmatprep.subr.mxu0 0.0
    %790 = vmatpush1.msra.mxu0 0.0
    %791 = vmatprep.subr.mxu0 0.0
    %792 = vmatpush1.msra.mxu0 %v734
    %793 = vmatprep.subr.mxu0 0.0
    %794 = vmatpush1.msra.mxu0 %v733
    %795 = vmatprep.subr.mxu0 0.0
    %796 = vmatpush2.msra.mxu0 0.0
    %797 = vmatprep.subr.mxu0 0.0
    %798 = vmatpush2.msra.mxu0 0.0
    %799 = vmatprep.subr.mxu0 0.0
    %800 = vmatpush2.msra.mxu0 0.0
    %801 = vmatprep.subr.mxu0 0.0
    %802 = vmatpush2.msra.mxu0 0.0
    %803 = vmatprep.subr.mxu0 0.0
    %804 = vmatpush2.msra.mxu0 0.0
    %805 = vmatprep.subr.mxu0 0.0
    %806 = vmatpush2.msra.mxu0 0.0
    %807 = vmatprep.subr.mxu0 0.0
    %808 = vmatpush2.msra.mxu0 0.0
    %809 = vmatprep.subr.mxu0 0.0
    %810 = vmatpush2.msra.mxu0 0.0
    %811 = vmatprep.subr.mxu0 0.0
    %812 = vmatpush2.msra.mxu0 0.0
    %813 = vmatprep.subr.mxu0 0.0
    %814 = vmatpush2.msra.mxu0 0.0
    %815 = vmatprep.subr.mxu0 0.0
    %816 = vmatpush2.msra.mxu0 0.0
    %817 = vmatprep.subr.mxu0 0.0
    %818 = vmatpush2.msra.mxu0 0.0
    %819 = vmatprep.subr.mxu0 0.0
    %820 = vmatpush2.msra.mxu0 0.0
    %821 = vmatprep.subr.mxu0 0.0
    %822 = vmatpush2.msra.mxu0 0.0
    %823 = vmatprep.subr.mxu0 0.0
    %824 = vmatpush2.msra.mxu0 0.0
    %825 = vmatprep.subr.mxu0 0.0
    %826 = vmatpush2.msra.mxu0 0.0
    %827 = vmatprep.mubr.f32.mxu0 0.0
    %828 = vmatmul.mubr.f32.gmra.mxu0 %v743
    %v829 = vpop.f32.mrf.mxu0
    %v830 = vadd.f32 %v740, %v829
    %v831 = vpop.f32.mrf.mxu0
    %832 = vmatprep.mubr.f32.mxu0 0.0
    %833 = vmatmul.mubr.f32.gmra.mxu0 %v746
    %v834 = vpop.f32.mrf.mxu0
    %v835 = vadd.f32 %v740, %v834
    %v836 = vpop.f32.mrf.mxu0
    %837 = vmatprep.mubr.f32.mxu0 0.0
    %838 = vmatmul.mubr.f32.gmra.mxu0 %v749
    %v839 = vpop.f32.mrf.mxu0
    %v840 = vadd.f32 %v740, %v839
    %v841 = vpop.f32.mrf.mxu0
    %842 = vmatprep.mubr.f32.mxu0 0.0
    %843 = vmatmul.mubr.f32.gmra.mxu0 %v752
    %v844 = vpop.f32.mrf.mxu0
    %v845 = vadd.f32 %v740, %v844
    %v846 = vpop.f32.mrf.mxu0
    %847 = vmatprep.mubr.f32.mxu0 0.0
    %848 = vmatmul.mubr.f32.gmra.mxu0 %v755
    %v849 = vpop.f32.mrf.mxu0
    %v850 = vadd.f32 %v740, %v849
    %v851 = vpop.f32.mrf.mxu0
    %852 = vmatprep.mubr.f32.mxu0 0.0
    %853 = vmatmul.mubr.f32.gmra.mxu0 %v758
    %v854 = vpop.f32.mrf.mxu0
    %v855 = vadd.f32 %v740, %v854
    %v856 = vpop.f32.mrf.mxu0
    %857 = vmatprep.mubr.f32.mxu0 0.0
    %858 = vmatmul.mubr.f32.gmra.mxu0 %v761
    %v859 = vpop.f32.mrf.mxu0
    %v860 = vadd.f32 %v740, %v859
    %v861 = vpop.f32.mrf.mxu0
    %862 = vdwg.mxu0
    %v863 = vmax.f32 %v830, 0.0
    %v864 = vmax.f32 %v835, 0.0
    %v865 = vmax.f32 %v840, 0.0
    %v866 = vmax.f32 %v845, 0.0
    %v867 = vmax.f32 %v850, 0.0
    %v868 = vmax.f32 %v855, 0.0
    %v869 = vmax.f32 %v860, 0.0
    %v870 = vld [vmem:[%s29] sm:$0xff]
    %v871 = vld [vmem:[%s29 + $0x8] sm:$0xff]
    %v872 = vld [vmem:[%s31] sm:$0x1]
    %v874 = vlaneseq
    %v875 = vshrl.u32 %v874, 7
    %v876 = vsub.s32 0, %v875
    %v877 = vrot.slane %v872, %v876
    %879 = vmatprep.subr.mxu0 0.0
    %880 = vmatpush1.msra.mxu0 0.0
    %881 = vmatprep.subr.mxu0 0.0
    %882 = vmatpush1.msra.mxu0 0.0
    %883 = vmatprep.subr.mxu0 0.0
    %884 = vmatpush1.msra.mxu0 0.0
    %885 = vmatprep.subr.mxu0 0.0
    %886 = vmatpush1.msra.mxu0 0.0
    %887 = vmatprep.subr.mxu0 0.0
    %888 = vmatpush1.msra.mxu0 0.0
    %889 = vmatprep.subr.mxu0 0.0
    %890 = vmatpush1.msra.mxu0 0.0
    %891 = vmatprep.subr.mxu0 0.0
    %892 = vmatpush1.msra.mxu0 0.0
    %893 = vmatprep.subr.mxu0 0.0
    %894 = vmatpush1.msra.mxu0 0.0
    %895 = vmatprep.subr.mxu0 0.0
    %896 = vmatpush1.msra.mxu0 0.0
    %897 = vmatprep.subr.mxu0 0.0
    %898 = vmatpush1.msra.mxu0 0.0
    %899 = vmatprep.subr.mxu0 0.0
    %900 = vmatpush1.msra.mxu0 0.0
    %901 = vmatprep.subr.mxu0 0.0
    %902 = vmatpush1.msra.mxu0 0.0
    %903 = vmatprep.subr.mxu0 0.0
    %904 = vmatpush1.msra.mxu0 0.0
    %905 = vmatprep.subr.mxu0 0.0
    %906 = vmatpush1.msra.mxu0 0.0
    %907 = vmatprep.subr.mxu0 0.0
    %908 = vmatpush1.msra.mxu0 %v871
    %909 = vmatprep.subr.mxu0 0.0
    %910 = vmatpush1.msra.mxu0 %v870
    %911 = vmatprep.subr.mxu0 0.0
    %912 = vmatpush2.msra.mxu0 0.0
    %913 = vmatprep.subr.mxu0 0.0
    %914 = vmatpush2.msra.mxu0 0.0
    %915 = vmatprep.subr.mxu0 0.0
    %916 = vmatpush2.msra.mxu0 0.0
    %917 = vmatprep.subr.mxu0 0.0
    %918 = vmatpush2.msra.mxu0 0.0
    %919 = vmatprep.subr.mxu0 0.0
    %920 = vmatpush2.msra.mxu0 0.0
    %921 = vmatprep.subr.mxu0 0.0
    %922 = vmatpush2.msra.mxu0 0.0
    %923 = vmatprep.subr.mxu0 0.0
    %924 = vmatpush2.msra.mxu0 0.0
    %925 = vmatprep.subr.mxu0 0.0
    %926 = vmatpush2.msra.mxu0 0.0
    %927 = vmatprep.subr.mxu0 0.0
    %928 = vmatpush2.msra.mxu0 0.0
    %929 = vmatprep.subr.mxu0 0.0
    %930 = vmatpush2.msra.mxu0 0.0
    %931 = vmatprep.subr.mxu0 0.0
    %932 = vmatpush2.msra.mxu0 0.0
    %933 = vmatprep.subr.mxu0 0.0
    %934 = vmatpush2.msra.mxu0 0.0
    %935 = vmatprep.subr.mxu0 0.0
    %936 = vmatpush2.msra.mxu0 0.0
    %937 = vmatprep.subr.mxu0 0.0
    %938 = vmatpush2.msra.mxu0 0.0
    %939 = vmatprep.subr.mxu0 0.0
    %940 = vmatpush2.msra.mxu0 0.0
    %941 = vmatprep.subr.mxu0 0.0
    %942 = vmatpush2.msra.mxu0 0.0
    %943 = vmatprep.mubr.f32.mxu0 0.0
    %944 = vmatmul.mubr.f32.gmra.mxu0 %v743
    %v945 = vpop.f32.mrf.mxu0
    %v946 = vadd.f32 %v877, %v945
    %v947 = vpop.f32.mrf.mxu0
    %948 = vmatprep.mubr.f32.mxu0 0.0
    %949 = vmatmul.mubr.f32.gmra.mxu0 %v746
    %v950 = vpop.f32.mrf.mxu0
    %v951 = vadd.f32 %v877, %v950
    %v952 = vpop.f32.mrf.mxu0
    %953 = vmatprep.mubr.f32.mxu0 0.0
    %954 = vmatmul.mubr.f32.gmra.mxu0 %v749
    %v955 = vpop.f32.mrf.mxu0
    %v956 = vadd.f32 %v877, %v955
    %v957 = vpop.f32.mrf.mxu0
    %958 = vmatprep.mubr.f32.mxu0 0.0
    %959 = vmatmul.mubr.f32.gmra.mxu0 %v752
    %v960 = vpop.f32.mrf.mxu0
    %v961 = vadd.f32 %v877, %v960
    %v962 = vpop.f32.mrf.mxu0
    %963 = vmatprep.mubr.f32.mxu0 0.0
    %964 = vmatmul.mubr.f32.gmra.mxu0 %v755
    %v965 = vpop.f32.mrf.mxu0
    %v966 = vadd.f32 %v877, %v965
    %v967 = vpop.f32.mrf.mxu0
    %968 = vmatprep.mubr.f32.mxu0 0.0
    %969 = vmatmul.mubr.f32.gmra.mxu0 %v758
    %v970 = vpop.f32.mrf.mxu0
    %v971 = vadd.f32 %v877, %v970
    %v972 = vpop.f32.mrf.mxu0
    %973 = vmatprep.mubr.f32.mxu0 0.0
    %974 = vmatmul.mubr.f32.gmra.mxu0 %v761
    %v975 = vpop.f32.mrf.mxu0
    %v976 = vadd.f32 %v877, %v975
    %v977 = vpop.f32.mrf.mxu0
    %978 = vdwg.mxu0
    %v979 = vmax.f32 %v946, 0.0
    %v980 = vmax.f32 %v951, 0.0
    %v981 = vmax.f32 %v956, 0.0
    %v982 = vmax.f32 %v961, 0.0
    %v983 = vmax.f32 %v966, 0.0
    %v984 = vmax.f32 %v971, 0.0
    %v985 = vmax.f32 %v976, 0.0
    %v986 = vld [vmem:[%s33] sm:$0xff]
    %v987 = vld [vmem:[%s33 + $0x8] sm:$0xff]
    %v988 = vld [vmem:[#allocation2] sm:$0x1]
    %v990 = vlaneseq
    %v991 = vshrl.u32 %v990, 7
    %v992 = vsub.s32 0, %v991
    %v993 = vrot.slane %v988, %v992
    %v996 = vsel %vm337, %v863, 0
    %v999 = vsel %vm337, %v864, 0
    %v1002 = vsel %vm337, %v865, 0
    %v1005 = vsel %vm337, %v866, 0
    %v1008 = vsel %vm337, %v867, 0
    %v1011 = vsel %vm337, %v868, 0
    %v1014 = vsel %vm337, %v869, 0
    %1016 = vmatprep.subr.mxu0 0.0
    %1017 = vmatpush1.msra.mxu0 0.0
    %1018 = vmatprep.subr.mxu0 0.0
    %1019 = vmatpush1.msra.mxu0 0.0
    %1020 = vmatprep.subr.mxu0 0.0
    %1021 = vmatpush1.msra.mxu0 0.0
    %1022 = vmatprep.subr.mxu0 0.0
    %1023 = vmatpush1.msra.mxu0 0.0
    %1024 = vmatprep.subr.mxu0 0.0
    %1025 = vmatpush1.msra.mxu0 0.0
    %1026 = vmatprep.subr.mxu0 0.0
    %1027 = vmatpush1.msra.mxu0 0.0
    %1028 = vmatprep.subr.mxu0 0.0
    %1029 = vmatpush1.msra.mxu0 0.0
    %1030 = vmatprep.subr.mxu0 0.0
    %1031 = vmatpush1.msra.mxu0 0.0
    %1032 = vmatprep.subr.mxu0 0.0
    %1033 = vmatpush1.msra.mxu0 0.0
    %1034 = vmatprep.subr.mxu0 0.0
    %1035 = vmatpush1.msra.mxu0 0.0
    %1036 = vmatprep.subr.mxu0 0.0
    %1037 = vmatpush1.msra.mxu0 0.0
    %1038 = vmatprep.subr.mxu0 0.0
    %1039 = vmatpush1.msra.mxu0 0.0
    %1040 = vmatprep.subr.mxu0 0.0
    %1041 = vmatpush1.msra.mxu0 0.0
    %1042 = vmatprep.subr.mxu0 0.0
    %1043 = vmatpush1.msra.mxu0 0.0
    %1044 = vmatprep.subr.mxu0 0.0
    %1045 = vmatpush1.msra.mxu0 %v987
    %1046 = vmatprep.subr.mxu0 0.0
    %1047 = vmatpush1.msra.mxu0 %v986
    %1048 = vmatprep.subr.mxu0 0.0
    %1049 = vmatpush2.msra.mxu0 0.0
    %1050 = vmatprep.subr.mxu0 0.0
    %1051 = vmatpush2.msra.mxu0 0.0
    %1052 = vmatprep.subr.mxu0 0.0
    %1053 = vmatpush2.msra.mxu0 0.0
    %1054 = vmatprep.subr.mxu0 0.0
    %1055 = vmatpush2.msra.mxu0 0.0
    %1056 = vmatprep.subr.mxu0 0.0
    %1057 = vmatpush2.msra.mxu0 0.0
    %1058 = vmatprep.subr.mxu0 0.0
    %1059 = vmatpush2.msra.mxu0 0.0
    %1060 = vmatprep.subr.mxu0 0.0
    %1061 = vmatpush2.msra.mxu0 0.0
    %1062 = vmatprep.subr.mxu0 0.0
    %1063 = vmatpush2.msra.mxu0 0.0
    %1064 = vmatprep.subr.mxu0 0.0
    %1065 = vmatpush2.msra.mxu0 0.0
    %1066 = vmatprep.subr.mxu0 0.0
    %1067 = vmatpush2.msra.mxu0 0.0
    %1068 = vmatprep.subr.mxu0 0.0
    %1069 = vmatpush2.msra.mxu0 0.0
    %1070 = vmatprep.subr.mxu0 0.0
    %1071 = vmatpush2.msra.mxu0 0.0
    %1072 = vmatprep.subr.mxu0 0.0
    %1073 = vmatpush2.msra.mxu0 0.0
    %1074 = vmatprep.subr.mxu0 0.0
    %1075 = vmatpush2.msra.mxu0 0.0
    %1076 = vmatprep.subr.mxu0 0.0
    %1077 = vmatpush2.msra.mxu0 0.0
    %1078 = vmatprep.subr.mxu0 0.0
    %1079 = vmatpush2.msra.mxu0 0.0
    %1080 = vmatprep.mubr.f32.mxu0 0.0
    %1081 = vmatmul.mubr.f32.gmra.mxu0 %v996
    %v1082 = vpop.f32.mrf.mxu0
    %v1083 = vadd.f32 %v993, %v1082
    %v1084 = vpop.f32.mrf.mxu0
    %1085 = vmatprep.mubr.f32.mxu0 0.0
    %1086 = vmatmul.mubr.f32.gmra.mxu0 %v999
    %v1087 = vpop.f32.mrf.mxu0
    %v1088 = vadd.f32 %v993, %v1087
    %v1089 = vpop.f32.mrf.mxu0
    %1090 = vmatprep.mubr.f32.mxu0 0.0
    %1091 = vmatmul.mubr.f32.gmra.mxu0 %v1002
    %v1092 = vpop.f32.mrf.mxu0
    %v1093 = vadd.f32 %v993, %v1092
    %v1094 = vpop.f32.mrf.mxu0
    %1095 = vmatprep.mubr.f32.mxu0 0.0
    %1096 = vmatmul.mubr.f32.gmra.mxu0 %v1005
    %v1097 = vpop.f32.mrf.mxu0
    %v1098 = vadd.f32 %v993, %v1097
    %v1099 = vpop.f32.mrf.mxu0
    %1100 = vmatprep.mubr.f32.mxu0 0.0
    %1101 = vmatmul.mubr.f32.gmra.mxu0 %v1008
    %v1102 = vpop.f32.mrf.mxu0
    %v1103 = vadd.f32 %v993, %v1102
    %v1104 = vpop.f32.mrf.mxu0
    %1105 = vmatprep.mubr.f32.mxu0 0.0
    %1106 = vmatmul.mubr.f32.gmra.mxu0 %v1011
    %v1107 = vpop.f32.mrf.mxu0
    %v1108 = vadd.f32 %v993, %v1107
    %v1109 = vpop.f32.mrf.mxu0
    %1110 = vmatprep.mubr.f32.mxu0 0.0
    %1111 = vmatmul.mubr.f32.gmra.mxu0 %v1014
    %v1112 = vpop.f32.mrf.mxu0
    %v1113 = vadd.f32 %v993, %v1112
    %v1114 = vpop.f32.mrf.mxu0
    %1115 = vdwg.mxu0
    %v1116 = vld [vmem:[%s37] sm:$0xff]
    %v1117 = vld [vmem:[%s37 + $0x8] sm:$0xff]
    %v1118 = vld [vmem:[#allocation3] sm:$0x1]
    %v1120 = vlaneseq
    %v1121 = vshrl.u32 %v1120, 7
    %v1122 = vsub.s32 0, %v1121
    %v1123 = vrot.slane %v1118, %v1122
    %1125 = vmatprep.subr.mxu0 0.0
    %1126 = vmatpush1.msra.mxu0 0.0
    %1127 = vmatprep.subr.mxu0 0.0
    %1128 = vmatpush1.msra.mxu0 0.0
    %1129 = vmatprep.subr.mxu0 0.0
    %1130 = vmatpush1.msra.mxu0 0.0
    %1131 = vmatprep.subr.mxu0 0.0
    %1132 = vmatpush1.msra.mxu0 0.0
    %1133 = vmatprep.subr.mxu0 0.0
    %1134 = vmatpush1.msra.mxu0 0.0
    %1135 = vmatprep.subr.mxu0 0.0
    %1136 = vmatpush1.msra.mxu0 0.0
    %1137 = vmatprep.subr.mxu0 0.0
    %1138 = vmatpush1.msra.mxu0 0.0
    %1139 = vmatprep.subr.mxu0 0.0
    %1140 = vmatpush1.msra.mxu0 0.0
    %1141 = vmatprep.subr.mxu0 0.0
    %1142 = vmatpush1.msra.mxu0 0.0
    %1143 = vmatprep.subr.mxu0 0.0
    %1144 = vmatpush1.msra.mxu0 0.0
    %1145 = vmatprep.subr.mxu0 0.0
    %1146 = vmatpush1.msra.mxu0 0.0
    %1147 = vmatprep.subr.mxu0 0.0
    %1148 = vmatpush1.msra.mxu0 0.0
    %1149 = vmatprep.subr.mxu0 0.0
    %1150 = vmatpush1.msra.mxu0 0.0
    %1151 = vmatprep.subr.mxu0 0.0
    %1152 = vmatpush1.msra.mxu0 0.0
    %1153 = vmatprep.subr.mxu0 0.0
    %1154 = vmatpush1.msra.mxu0 %v1117
    %1155 = vmatprep.subr.mxu0 0.0
    %1156 = vmatpush1.msra.mxu0 %v1116
    %1157 = vmatprep.subr.mxu0 0.0
    %1158 = vmatpush2.msra.mxu0 0.0
    %1159 = vmatprep.subr.mxu0 0.0
    %1160 = vmatpush2.msra.mxu0 0.0
    %1161 = vmatprep.subr.mxu0 0.0
    %1162 = vmatpush2.msra.mxu0 0.0
    %1163 = vmatprep.subr.mxu0 0.0
    %1164 = vmatpush2.msra.mxu0 0.0
    %1165 = vmatprep.subr.mxu0 0.0
    %1166 = vmatpush2.msra.mxu0 0.0
    %1167 = vmatprep.subr.mxu0 0.0
    %1168 = vmatpush2.msra.mxu0 0.0
    %1169 = vmatprep.subr.mxu0 0.0
    %1170 = vmatpush2.msra.mxu0 0.0
    %1171 = vmatprep.subr.mxu0 0.0
    %1172 = vmatpush2.msra.mxu0 0.0
    %1173 = vmatprep.subr.mxu0 0.0
    %1174 = vmatpush2.msra.mxu0 0.0
    %1175 = vmatprep.subr.mxu0 0.0
    %1176 = vmatpush2.msra.mxu0 0.0
    %1177 = vmatprep.subr.mxu0 0.0
    %1178 = vmatpush2.msra.mxu0 0.0
    %1179 = vmatprep.subr.mxu0 0.0
    %1180 = vmatpush2.msra.mxu0 0.0
    %1181 = vmatprep.subr.mxu0 0.0
    %1182 = vmatpush2.msra.mxu0 0.0
    %1183 = vmatprep.subr.mxu0 0.0
    %1184 = vmatpush2.msra.mxu0 0.0
    %1185 = vmatprep.subr.mxu0 0.0
    %1186 = vmatpush2.msra.mxu0 0.0
    %1187 = vmatprep.subr.mxu0 0.0
    %1188 = vmatpush2.msra.mxu0 0.0
    %1189 = vmatprep.mubr.f32.mxu0 0.0
    %1190 = vmatmul.mubr.f32.gmra.mxu0 %v996
    %v1191 = vpop.f32.mrf.mxu0
    %v1192 = vadd.f32 %v1123, %v1191
    %v1193 = vpop.f32.mrf.mxu0
    %1194 = vmatprep.mubr.f32.mxu0 0.0
    %1195 = vmatmul.mubr.f32.gmra.mxu0 %v999
    %v1196 = vpop.f32.mrf.mxu0
    %v1197 = vadd.f32 %v1123, %v1196
    %v1198 = vpop.f32.mrf.mxu0
    %1199 = vmatprep.mubr.f32.mxu0 0.0
    %1200 = vmatmul.mubr.f32.gmra.mxu0 %v1002
    %v1201 = vpop.f32.mrf.mxu0
    %v1202 = vadd.f32 %v1123, %v1201
    %v1203 = vpop.f32.mrf.mxu0
    %1204 = vmatprep.mubr.f32.mxu0 0.0
    %1205 = vmatmul.mubr.f32.gmra.mxu0 %v1005
    %v1206 = vpop.f32.mrf.mxu0
    %v1207 = vadd.f32 %v1123, %v1206
    %v1208 = vpop.f32.mrf.mxu0
    %1209 = vmatprep.mubr.f32.mxu0 0.0
    %1210 = vmatmul.mubr.f32.gmra.mxu0 %v1008
    %v1211 = vpop.f32.mrf.mxu0
    %v1212 = vadd.f32 %v1123, %v1211
    %v1213 = vpop.f32.mrf.mxu0
    %1214 = vmatprep.mubr.f32.mxu0 0.0
    %1215 = vmatmul.mubr.f32.gmra.mxu0 %v1011
    %v1216 = vpop.f32.mrf.mxu0
    %v1217 = vadd.f32 %v1123, %v1216
    %v1218 = vpop.f32.mrf.mxu0
    %1219 = vmatprep.mubr.f32.mxu0 0.0
    %1220 = vmatmul.mubr.f32.gmra.mxu0 %v1014
    %v1221 = vpop.f32.mrf.mxu0
    %v1222 = vadd.f32 %v1123, %v1221
    %v1223 = vpop.f32.mrf.mxu0
    %1224 = vdwg.mxu0
    %v1225 = vmax.f32 %v1192, 0.0
    %v1226 = vmax.f32 %v1197, 0.0
    %v1227 = vmax.f32 %v1202, 0.0
    %v1228 = vmax.f32 %v1207, 0.0
    %v1229 = vmax.f32 %v1212, 0.0
    %v1230 = vmax.f32 %v1217, 0.0
    %v1231 = vmax.f32 %v1222, 0.0
    %vm1232 = vcmp.ne.f32.partialorder %v1192, %v1192
    %vm1233 = vcmp.ne.f32.partialorder %v1197, %v1197
    %vm1234 = vcmp.ne.f32.partialorder %v1202, %v1202
    %vm1235 = vcmp.ne.f32.partialorder %v1207, %v1207
    %vm1236 = vcmp.ne.f32.partialorder %v1212, %v1212
    %vm1237 = vcmp.ne.f32.partialorder %v1217, %v1217
    %vm1238 = vcmp.ne.f32.partialorder %v1222, %v1222
    %v1239 = vadd.f32 %v1192, 0.0
    %v1240 = vadd.f32 %v1197, 0.0
    %v1241 = vadd.f32 %v1202, 0.0
    %v1242 = vadd.f32 %v1207, 0.0
    %v1243 = vadd.f32 %v1212, 0.0
    %v1244 = vadd.f32 %v1217, 0.0
    %v1245 = vadd.f32 %v1222, 0.0
    %v1246 = vand.u32 2147483647, %v1192
    %v1247 = vand.u32 2147483647, %v1197
    %v1248 = vand.u32 2147483647, %v1202
    %v1249 = vand.u32 2147483647, %v1207
    %v1250 = vand.u32 2147483647, %v1212
    %v1251 = vand.u32 2147483647, %v1217
    %v1252 = vand.u32 2147483647, %v1222
    %v1253 = vsub.f32 0.0, %v1246
    %v1254 = vsub.f32 0.0, %v1247
    %v1255 = vsub.f32 0.0, %v1248
    %v1256 = vsub.f32 0.0, %v1249
    %v1257 = vsub.f32 0.0, %v1250
    %v1258 = vsub.f32 0.0, %v1251
    %v1259 = vsub.f32 0.0, %v1252
    %v1260 = vmul.f32 %v1253, 1.442695
    %v1261 = vpow.pop %v1260
    %v1262 = vmul.f32 %v1254, 1.442695
    %v1263 = vpow.pop %v1262
    %v1264 = vmul.f32 %v1255, 1.442695
    %v1265 = vpow.pop %v1264
    %v1266 = vmul.f32 %v1256, 1.442695
    %v1267 = vpow.pop %v1266
    %v1268 = vmul.f32 %v1257, 1.442695
    %v1269 = vpow.pop %v1268
    %v1270 = vmul.f32 %v1258, 1.442695
    %v1271 = vpow.pop %v1270
    %v1272 = vmul.f32 %v1259, 1.442695
    %v1273 = vpow.pop %v1272
    %v1274 = vadd.f32 %v1261, 1.0
    %v1275 = vlog2.pop %v1274
    %v1276 = vmul.f32 %v1275, 0.6931472
    %v1277 = vmul.f32 -0.5, %v1261
    %v1278 = vadd.f32 %v1277, 1.0
    %v1279 = vmul.f32 %v1278, %v1261
    %v1280 = vand.u32 2147483647, %v1261
    %vm1281 = vcmp.lt.f32.partialorder %v1280, 0.0004427343
    %v1282 = vsel %vm1281, %v1279, %v1276
    %v1283 = vadd.f32 %v1263, 1.0
    %v1284 = vlog2.pop %v1283
    %v1285 = vmul.f32 %v1284, 0.6931472
    %v1286 = vmul.f32 -0.5, %v1263
    %v1287 = vadd.f32 %v1286, 1.0
    %v1288 = vmul.f32 %v1287, %v1263
    %v1289 = vand.u32 2147483647, %v1263
    %vm1290 = vcmp.lt.f32.partialorder %v1289, 0.0004427343
    %v1291 = vsel %vm1290, %v1288, %v1285
    %v1292 = vadd.f32 %v1265, 1.0
    %v1293 = vlog2.pop %v1292
    %v1294 = vmul.f32 %v1293, 0.6931472
    %v1295 = vmul.f32 -0.5, %v1265
    %v1296 = vadd.f32 %v1295, 1.0
    %v1297 = vmul.f32 %v1296, %v1265
    %v1298 = vand.u32 2147483647, %v1265
    %vm1299 = vcmp.lt.f32.partialorder %v1298, 0.0004427343
    %v1300 = vsel %vm1299, %v1297, %v1294
    %v1301 = vadd.f32 %v1267, 1.0
    %v1302 = vlog2.pop %v1301
    %v1303 = vmul.f32 %v1302, 0.6931472
    %v1304 = vmul.f32 -0.5, %v1267
    %v1305 = vadd.f32 %v1304, 1.0
    %v1306 = vmul.f32 %v1305, %v1267
    %v1307 = vand.u32 2147483647, %v1267
    %vm1308 = vcmp.lt.f32.partialorder %v1307, 0.0004427343
    %v1309 = vsel %vm1308, %v1306, %v1303
    %v1310 = vadd.f32 %v1269, 1.0
    %v1311 = vlog2.pop %v1310
    %v1312 = vmul.f32 %v1311, 0.6931472
    %v1313 = vmul.f32 -0.5, %v1269
    %v1314 = vadd.f32 %v1313, 1.0
    %v1315 = vmul.f32 %v1314, %v1269
    %v1316 = vand.u32 2147483647, %v1269
    %vm1317 = vcmp.lt.f32.partialorder %v1316, 0.0004427343
    %v1318 = vsel %vm1317, %v1315, %v1312
    %v1319 = vadd.f32 %v1271, 1.0
    %v1320 = vlog2.pop %v1319
    %v1321 = vmul.f32 %v1320, 0.6931472
    %v1322 = vmul.f32 -0.5, %v1271
    %v1323 = vadd.f32 %v1322, 1.0
    %v1324 = vmul.f32 %v1323, %v1271
    %v1325 = vand.u32 2147483647, %v1271
    %vm1326 = vcmp.lt.f32.partialorder %v1325, 0.0004427343
    %v1327 = vsel %vm1326, %v1324, %v1321
    %v1328 = vadd.f32 %v1273, 1.0
    %v1329 = vlog2.pop %v1328
    %v1330 = vmul.f32 %v1329, 0.6931472
    %v1331 = vmul.f32 -0.5, %v1273
    %v1332 = vadd.f32 %v1331, 1.0
    %v1333 = vmul.f32 %v1332, %v1273
    %v1334 = vand.u32 2147483647, %v1273
    %vm1335 = vcmp.lt.f32.partialorder %v1334, 0.0004427343
    %v1336 = vsel %vm1335, %v1333, %v1330
    %v1337 = vadd.f32 %v1225, %v1282
    %v1338 = vadd.f32 %v1226, %v1291
    %v1339 = vadd.f32 %v1227, %v1300
    %v1340 = vadd.f32 %v1228, %v1309
    %v1341 = vadd.f32 %v1229, %v1318
    %v1342 = vadd.f32 %v1230, %v1327
    %v1343 = vadd.f32 %v1231, %v1336
    %v1344 = vsel %vm1232, %v1239, %v1337
    %v1345 = vsel %vm1233, %v1240, %v1338
    %v1346 = vsel %vm1234, %v1241, %v1339
    %v1347 = vsel %vm1235, %v1242, %v1340
    %v1348 = vsel %vm1236, %v1243, %v1341
    %v1349 = vsel %vm1237, %v1244, %v1342
    %v1350 = vsel %vm1238, %v1245, %v1343
    %v1351 = vld [vmem:[%s41] sm:$0xff]
    %v1352 = vld [vmem:[%s41 + $0x8] sm:$0xff]
    %v1353 = vld [vmem:[%s43] sm:$0x1]
    %v1355 = vlaneseq
    %v1356 = vshrl.u32 %v1355, 7
    %v1357 = vsub.s32 0, %v1356
    %v1358 = vrot.slane %v1353, %v1357
    %v1361 = vsel %vm337, %v979, 0
    %v1364 = vsel %vm337, %v980, 0
    %v1367 = vsel %vm337, %v981, 0
    %v1370 = vsel %vm337, %v982, 0
    %v1373 = vsel %vm337, %v983, 0
    %v1376 = vsel %vm337, %v984, 0
    %v1379 = vsel %vm337, %v985, 0
    %1381 = vmatprep.subr.mxu0 0.0
    %1382 = vmatpush1.msra.mxu0 0.0
    %1383 = vmatprep.subr.mxu0 0.0
    %1384 = vmatpush1.msra.mxu0 0.0
    %1385 = vmatprep.subr.mxu0 0.0
    %1386 = vmatpush1.msra.mxu0 0.0
    %1387 = vmatprep.subr.mxu0 0.0
    %1388 = vmatpush1.msra.mxu0 0.0
    %1389 = vmatprep.subr.mxu0 0.0
    %1390 = vmatpush1.msra.mxu0 0.0
    %1391 = vmatprep.subr.mxu0 0.0
    %1392 = vmatpush1.msra.mxu0 0.0
    %1393 = vmatprep.subr.mxu0 0.0
    %1394 = vmatpush1.msra.mxu0 0.0
    %1395 = vmatprep.subr.mxu0 0.0
    %1396 = vmatpush1.msra.mxu0 0.0
    %1397 = vmatprep.subr.mxu0 0.0
    %1398 = vmatpush1.msra.mxu0 0.0
    %1399 = vmatprep.subr.mxu0 0.0
    %1400 = vmatpush1.msra.mxu0 0.0
    %1401 = vmatprep.subr.mxu0 0.0
    %1402 = vmatpush1.msra.mxu0 0.0
    %1403 = vmatprep.subr.mxu0 0.0
    %1404 = vmatpush1.msra.mxu0 0.0
    %1405 = vmatprep.subr.mxu0 0.0
    %1406 = vmatpush1.msra.mxu0 0.0
    %1407 = vmatprep.subr.mxu0 0.0
    %1408 = vmatpush1.msra.mxu0 0.0
    %1409 = vmatprep.subr.mxu0 0.0
    %1410 = vmatpush1.msra.mxu0 %v1352
    %1411 = vmatprep.subr.mxu0 0.0
    %1412 = vmatpush1.msra.mxu0 %v1351
    %1413 = vmatprep.subr.mxu0 0.0
    %1414 = vmatpush2.msra.mxu0 0.0
    %1415 = vmatprep.subr.mxu0 0.0
    %1416 = vmatpush2.msra.mxu0 0.0
    %1417 = vmatprep.subr.mxu0 0.0
    %1418 = vmatpush2.msra.mxu0 0.0
    %1419 = vmatprep.subr.mxu0 0.0
    %1420 = vmatpush2.msra.mxu0 0.0
    %1421 = vmatprep.subr.mxu0 0.0
    %1422 = vmatpush2.msra.mxu0 0.0
    %1423 = vmatprep.subr.mxu0 0.0
    %1424 = vmatpush2.msra.mxu0 0.0
    %1425 = vmatprep.subr.mxu0 0.0
    %1426 = vmatpush2.msra.mxu0 0.0
    %1427 = vmatprep.subr.mxu0 0.0
    %1428 = vmatpush2.msra.mxu0 0.0
    %1429 = vmatprep.subr.mxu0 0.0
    %1430 = vmatpush2.msra.mxu0 0.0
    %1431 = vmatprep.subr.mxu0 0.0
    %1432 = vmatpush2.msra.mxu0 0.0
    %1433 = vmatprep.subr.mxu0 0.0
    %1434 = vmatpush2.msra.mxu0 0.0
    %1435 = vmatprep.subr.mxu0 0.0
    %1436 = vmatpush2.msra.mxu0 0.0
    %1437 = vmatprep.subr.mxu0 0.0
    %1438 = vmatpush2.msra.mxu0 0.0
    %1439 = vmatprep.subr.mxu0 0.0
    %1440 = vmatpush2.msra.mxu0 0.0
    %1441 = vmatprep.subr.mxu0 0.0
    %1442 = vmatpush2.msra.mxu0 0.0
    %1443 = vmatprep.subr.mxu0 0.0
    %1444 = vmatpush2.msra.mxu0 0.0
    %1445 = vmatprep.mubr.f32.mxu0 0.0
    %1446 = vmatmul.mubr.f32.gmra.mxu0 %v1361
    %v1447 = vpop.f32.mrf.mxu0
    %v1448 = vadd.f32 %v1358, %v1447
    %v1449 = vpop.f32.mrf.mxu0
    %1450 = vmatprep.mubr.f32.mxu0 0.0
    %1451 = vmatmul.mubr.f32.gmra.mxu0 %v1364
    %v1452 = vpop.f32.mrf.mxu0
    %v1453 = vadd.f32 %v1358, %v1452
    %v1454 = vpop.f32.mrf.mxu0
    %1455 = vmatprep.mubr.f32.mxu0 0.0
    %1456 = vmatmul.mubr.f32.gmra.mxu0 %v1367
    %v1457 = vpop.f32.mrf.mxu0
    %v1458 = vadd.f32 %v1358, %v1457
    %v1459 = vpop.f32.mrf.mxu0
    %1460 = vmatprep.mubr.f32.mxu0 0.0
    %1461 = vmatmul.mubr.f32.gmra.mxu0 %v1370
    %v1462 = vpop.f32.mrf.mxu0
    %v1463 = vadd.f32 %v1358, %v1462
    %v1464 = vpop.f32.mrf.mxu0
    %1465 = vmatprep.mubr.f32.mxu0 0.0
    %1466 = vmatmul.mubr.f32.gmra.mxu0 %v1373
    %v1467 = vpop.f32.mrf.mxu0
    %v1468 = vadd.f32 %v1358, %v1467
    %v1469 = vpop.f32.mrf.mxu0
    %1470 = vmatprep.mubr.f32.mxu0 0.0
    %1471 = vmatmul.mubr.f32.gmra.mxu0 %v1376
    %v1472 = vpop.f32.mrf.mxu0
    %v1473 = vadd.f32 %v1358, %v1472
    %v1474 = vpop.f32.mrf.mxu0
    %1475 = vmatprep.mubr.f32.mxu0 0.0
    %1476 = vmatmul.mubr.f32.gmra.mxu0 %v1379
    %v1477 = vpop.f32.mrf.mxu0
    %v1478 = vadd.f32 %v1358, %v1477
    %v1479 = vpop.f32.mrf.mxu0
    %1480 = vdwg.mxu0
    %v1481 = vxor.u32 %v1448, 2147483648
    %v1482 = vxor.u32 %v1453, 2147483648
    %v1483 = vxor.u32 %v1458, 2147483648
    %v1484 = vxor.u32 %v1463, 2147483648
    %v1485 = vxor.u32 %v1468, 2147483648
    %v1486 = vxor.u32 %v1473, 2147483648
    %v1487 = vxor.u32 %v1478, 2147483648
    %v1488 = vmul.f32 %v1481, 1.442695
    %v1489 = vpow.pop %v1488
    %v1490 = vmul.f32 %v1482, 1.442695
    %v1491 = vpow.pop %v1490
    %v1492 = vmul.f32 %v1483, 1.442695
    %v1493 = vpow.pop %v1492
    %v1494 = vmul.f32 %v1484, 1.442695
    %v1495 = vpow.pop %v1494
    %v1496 = vmul.f32 %v1485, 1.442695
    %v1497 = vpow.pop %v1496
    %v1498 = vmul.f32 %v1486, 1.442695
    %v1499 = vpow.pop %v1498
    %v1500 = vmul.f32 %v1487, 1.442695
    %v1501 = vpow.pop %v1500
    %v1502 = vadd.f32 %v1489, 1.0
    %v1503 = vadd.f32 %v1491, 1.0
    %v1504 = vadd.f32 %v1493, 1.0
    %v1505 = vadd.f32 %v1495, 1.0
    %v1506 = vadd.f32 %v1497, 1.0
    %v1507 = vadd.f32 %v1499, 1.0
    %v1508 = vadd.f32 %v1501, 1.0
    %v1509 = vrcp.pop %v1502
    %v1510 = vmul.f32 1.0, %v1509
    %v1511 = vrcp.pop %v1503
    %v1512 = vmul.f32 1.0, %v1511
    %v1513 = vrcp.pop %v1504
    %v1514 = vmul.f32 1.0, %v1513
    %v1515 = vrcp.pop %v1505
    %v1516 = vmul.f32 1.0, %v1515
    %v1517 = vrcp.pop %v1506
    %v1518 = vmul.f32 1.0, %v1517
    %v1519 = vrcp.pop %v1507
    %v1520 = vmul.f32 1.0, %v1519
    %v1521 = vrcp.pop %v1508
    %v1522 = vmul.f32 1.0, %v1521
    %v1523 = vmul.f32 %v1510, 0.4
    %v1524 = vmul.f32 %v1512, 0.4
    %v1525 = vmul.f32 %v1514, 0.4
    %v1526 = vmul.f32 %v1516, 0.4
    %v1527 = vmul.f32 %v1518, 0.4
    %v1528 = vmul.f32 %v1520, 0.4
    %v1529 = vmul.f32 %v1522, 0.4
    %v1530 = vld [vmem:[%s45] sm:$0xff]
    %v1531 = vld [vmem:[%s45 + $0x8] sm:$0xff]
    %v1532 = vld [vmem:[%s47] sm:$0x1]
    %v1534 = vlaneseq
    %v1535 = vshrl.u32 %v1534, 7
    %v1536 = vsub.s32 0, %v1535
    %v1537 = vrot.slane %v1532, %v1536
    %1539 = vmatprep.subr.mxu0 0.0
    %1540 = vmatpush1.msra.mxu0 0.0
    %1541 = vmatprep.subr.mxu0 0.0
    %1542 = vmatpush1.msra.mxu0 0.0
    %1543 = vmatprep.subr.mxu0 0.0
    %1544 = vmatpush1.msra.mxu0 0.0
    %1545 = vmatprep.subr.mxu0 0.0
    %1546 = vmatpush1.msra.mxu0 0.0
    %1547 = vmatprep.subr.mxu0 0.0
    %1548 = vmatpush1.msra.mxu0 0.0
    %1549 = vmatprep.subr.mxu0 0.0
    %1550 = vmatpush1.msra.mxu0 0.0
    %1551 = vmatprep.subr.mxu0 0.0
    %1552 = vmatpush1.msra.mxu0 0.0
    %1553 = vmatprep.subr.mxu0 0.0
    %1554 = vmatpush1.msra.mxu0 0.0
    %1555 = vmatprep.subr.mxu0 0.0
    %1556 = vmatpush1.msra.mxu0 0.0
    %1557 = vmatprep.subr.mxu0 0.0
    %1558 = vmatpush1.msra.mxu0 0.0
    %1559 = vmatprep.subr.mxu0 0.0
    %1560 = vmatpush1.msra.mxu0 0.0
    %1561 = vmatprep.subr.mxu0 0.0
    %1562 = vmatpush1.msra.mxu0 0.0
    %1563 = vmatprep.subr.mxu0 0.0
    %1564 = vmatpush1.msra.mxu0 0.0
    %1565 = vmatprep.subr.mxu0 0.0
    %1566 = vmatpush1.msra.mxu0 0.0
    %1567 = vmatprep.subr.mxu0 0.0
    %1568 = vmatpush1.msra.mxu0 %v1531
    %1569 = vmatprep.subr.mxu0 0.0
    %1570 = vmatpush1.msra.mxu0 %v1530
    %1571 = vmatprep.subr.mxu0 0.0
    %1572 = vmatpush2.msra.mxu0 0.0
    %1573 = vmatprep.subr.mxu0 0.0
    %1574 = vmatpush2.msra.mxu0 0.0
    %1575 = vmatprep.subr.mxu0 0.0
    %1576 = vmatpush2.msra.mxu0 0.0
    %1577 = vmatprep.subr.mxu0 0.0
    %1578 = vmatpush2.msra.mxu0 0.0
    %1579 = vmatprep.subr.mxu0 0.0
    %1580 = vmatpush2.msra.mxu0 0.0
    %1581 = vmatprep.subr.mxu0 0.0
    %1582 = vmatpush2.msra.mxu0 0.0
    %1583 = vmatprep.subr.mxu0 0.0
    %1584 = vmatpush2.msra.mxu0 0.0
    %1585 = vmatprep.subr.mxu0 0.0
    %1586 = vmatpush2.msra.mxu0 0.0
    %1587 = vmatprep.subr.mxu0 0.0
    %1588 = vmatpush2.msra.mxu0 0.0
    %1589 = vmatprep.subr.mxu0 0.0
    %1590 = vmatpush2.msra.mxu0 0.0
    %1591 = vmatprep.subr.mxu0 0.0
    %1592 = vmatpush2.msra.mxu0 0.0
    %1593 = vmatprep.subr.mxu0 0.0
    %1594 = vmatpush2.msra.mxu0 0.0
    %1595 = vmatprep.subr.mxu0 0.0
    %1596 = vmatpush2.msra.mxu0 0.0
    %1597 = vmatprep.subr.mxu0 0.0
    %1598 = vmatpush2.msra.mxu0 0.0
    %1599 = vmatprep.subr.mxu0 0.0
    %1600 = vmatpush2.msra.mxu0 0.0
    %1601 = vmatprep.subr.mxu0 0.0
    %1602 = vmatpush2.msra.mxu0 0.0
    %1603 = vmatprep.mubr.f32.mxu0 0.0
    %1604 = vmatmul.mubr.f32.gmra.mxu0 %v606
    %v1605 = vpop.f32.mrf.mxu0
    %v1606 = vadd.f32 %v1537, %v1605
    %v1607 = vpop.f32.mrf.mxu0
    %1608 = vmatprep.mubr.f32.mxu0 0.0
    %1609 = vmatmul.mubr.f32.gmra.mxu0 %v609
    %v1610 = vpop.f32.mrf.mxu0
    %v1611 = vadd.f32 %v1537, %v1610
    %v1612 = vpop.f32.mrf.mxu0
    %1613 = vmatprep.mubr.f32.mxu0 0.0
    %1614 = vmatmul.mubr.f32.gmra.mxu0 %v612
    %v1615 = vpop.f32.mrf.mxu0
    %v1616 = vadd.f32 %v1537, %v1615
    %v1617 = vpop.f32.mrf.mxu0
    %1618 = vmatprep.mubr.f32.mxu0 0.0
    %1619 = vmatmul.mubr.f32.gmra.mxu0 %v615
    %v1620 = vpop.f32.mrf.mxu0
    %v1621 = vadd.f32 %v1537, %v1620
    %v1622 = vpop.f32.mrf.mxu0
    %1623 = vmatprep.mubr.f32.mxu0 0.0
    %1624 = vmatmul.mubr.f32.gmra.mxu0 %v618
    %v1625 = vpop.f32.mrf.mxu0
    %v1626 = vadd.f32 %v1537, %v1625
    %v1627 = vpop.f32.mrf.mxu0
    %1628 = vmatprep.mubr.f32.mxu0 0.0
    %1629 = vmatmul.mubr.f32.gmra.mxu0 %v621
    %v1630 = vpop.f32.mrf.mxu0
    %v1631 = vadd.f32 %v1537, %v1630
    %v1632 = vpop.f32.mrf.mxu0
    %1633 = vmatprep.mubr.f32.mxu0 0.0
    %1634 = vmatmul.mubr.f32.gmra.mxu0 %v624
    %v1635 = vpop.f32.mrf.mxu0
    %v1636 = vadd.f32 %v1537, %v1635
    %v1637 = vpop.f32.mrf.mxu0
    %1638 = vdwg.mxu0
    %v1639 = vmax.f32 %v1606, 0.0
    %v1640 = vmax.f32 %v1611, 0.0
    %v1641 = vmax.f32 %v1616, 0.0
    %v1642 = vmax.f32 %v1621, 0.0
    %v1643 = vmax.f32 %v1626, 0.0
    %v1644 = vmax.f32 %v1631, 0.0
    %v1645 = vmax.f32 %v1636, 0.0
    %v1646 = vld [vmem:[%s49] sm:$0xff]
    %v1647 = vld [vmem:[%s49 + $0x8] sm:$0xff]
    %v1648 = vld [vmem:[%s51] sm:$0x1]
    %v1650 = vlaneseq
    %v1651 = vshrl.u32 %v1650, 7
    %v1652 = vsub.s32 0, %v1651
    %v1653 = vrot.slane %v1648, %v1652
    %v1656 = vsel %vm337, %v1639, 0
    %v1659 = vsel %vm337, %v1640, 0
    %v1662 = vsel %vm337, %v1641, 0
    %v1665 = vsel %vm337, %v1642, 0
    %v1668 = vsel %vm337, %v1643, 0
    %v1671 = vsel %vm337, %v1644, 0
    %v1674 = vsel %vm337, %v1645, 0
    %1676 = vmatprep.subr.mxu0 0.0
    %1677 = vmatpush1.msra.mxu0 0.0
    %1678 = vmatprep.subr.mxu0 0.0
    %1679 = vmatpush1.msra.mxu0 0.0
    %1680 = vmatprep.subr.mxu0 0.0
    %1681 = vmatpush1.msra.mxu0 0.0
    %1682 = vmatprep.subr.mxu0 0.0
    %1683 = vmatpush1.msra.mxu0 0.0
    %1684 = vmatprep.subr.mxu0 0.0
    %1685 = vmatpush1.msra.mxu0 0.0
    %1686 = vmatprep.subr.mxu0 0.0
    %1687 = vmatpush1.msra.mxu0 0.0
    %1688 = vmatprep.subr.mxu0 0.0
    %1689 = vmatpush1.msra.mxu0 0.0
    %1690 = vmatprep.subr.mxu0 0.0
    %1691 = vmatpush1.msra.mxu0 0.0
    %1692 = vmatprep.subr.mxu0 0.0
    %1693 = vmatpush1.msra.mxu0 0.0
    %1694 = vmatprep.subr.mxu0 0.0
    %1695 = vmatpush1.msra.mxu0 0.0
    %1696 = vmatprep.subr.mxu0 0.0
    %1697 = vmatpush1.msra.mxu0 0.0
    %1698 = vmatprep.subr.mxu0 0.0
    %1699 = vmatpush1.msra.mxu0 0.0
    %1700 = vmatprep.subr.mxu0 0.0
    %1701 = vmatpush1.msra.mxu0 0.0
    %1702 = vmatprep.subr.mxu0 0.0
    %1703 = vmatpush1.msra.mxu0 0.0
    %1704 = vmatprep.subr.mxu0 0.0
    %1705 = vmatpush1.msra.mxu0 %v1647
    %1706 = vmatprep.subr.mxu0 0.0
    %1707 = vmatpush1.msra.mxu0 %v1646
    %1708 = vmatprep.subr.mxu0 0.0
    %1709 = vmatpush2.msra.mxu0 0.0
    %1710 = vmatprep.subr.mxu0 0.0
    %1711 = vmatpush2.msra.mxu0 0.0
    %1712 = vmatprep.subr.mxu0 0.0
    %1713 = vmatpush2.msra.mxu0 0.0
    %1714 = vmatprep.subr.mxu0 0.0
    %1715 = vmatpush2.msra.mxu0 0.0
    %1716 = vmatprep.subr.mxu0 0.0
    %1717 = vmatpush2.msra.mxu0 0.0
    %1718 = vmatprep.subr.mxu0 0.0
    %1719 = vmatpush2.msra.mxu0 0.0
    %1720 = vmatprep.subr.mxu0 0.0
    %1721 = vmatpush2.msra.mxu0 0.0
    %1722 = vmatprep.subr.mxu0 0.0
    %1723 = vmatpush2.msra.mxu0 0.0
    %1724 = vmatprep.subr.mxu0 0.0
    %1725 = vmatpush2.msra.mxu0 0.0
    %1726 = vmatprep.subr.mxu0 0.0
    %1727 = vmatpush2.msra.mxu0 0.0
    %1728 = vmatprep.subr.mxu0 0.0
    %1729 = vmatpush2.msra.mxu0 0.0
    %1730 = vmatprep.subr.mxu0 0.0
    %1731 = vmatpush2.msra.mxu0 0.0
    %1732 = vmatprep.subr.mxu0 0.0
    %1733 = vmatpush2.msra.mxu0 0.0
    %1734 = vmatprep.subr.mxu0 0.0
    %1735 = vmatpush2.msra.mxu0 0.0
    %1736 = vmatprep.subr.mxu0 0.0
    %1737 = vmatpush2.msra.mxu0 0.0
    %1738 = vmatprep.subr.mxu0 0.0
    %1739 = vmatpush2.msra.mxu0 0.0
    %1740 = vmatprep.mubr.f32.mxu0 0.0
    %1741 = vmatmul.mubr.f32.gmra.mxu0 %v1656
    %v1742 = vpop.f32.mrf.mxu0
    %v1743 = vadd.f32 %v1653, %v1742
    %v1744 = vpop.f32.mrf.mxu0
    %1745 = vmatprep.mubr.f32.mxu0 0.0
    %1746 = vmatmul.mubr.f32.gmra.mxu0 %v1659
    %v1747 = vpop.f32.mrf.mxu0
    %v1748 = vadd.f32 %v1653, %v1747
    %v1749 = vpop.f32.mrf.mxu0
    %1750 = vmatprep.mubr.f32.mxu0 0.0
    %1751 = vmatmul.mubr.f32.gmra.mxu0 %v1662
    %v1752 = vpop.f32.mrf.mxu0
    %v1753 = vadd.f32 %v1653, %v1752
    %v1754 = vpop.f32.mrf.mxu0
    %1755 = vmatprep.mubr.f32.mxu0 0.0
    %1756 = vmatmul.mubr.f32.gmra.mxu0 %v1665
    %v1757 = vpop.f32.mrf.mxu0
    %v1758 = vadd.f32 %v1653, %v1757
    %v1759 = vpop.f32.mrf.mxu0
    %1760 = vmatprep.mubr.f32.mxu0 0.0
    %1761 = vmatmul.mubr.f32.gmra.mxu0 %v1668
    %v1762 = vpop.f32.mrf.mxu0
    %v1763 = vadd.f32 %v1653, %v1762
    %v1764 = vpop.f32.mrf.mxu0
    %1765 = vmatprep.mubr.f32.mxu0 0.0
    %1766 = vmatmul.mubr.f32.gmra.mxu0 %v1671
    %v1767 = vpop.f32.mrf.mxu0
    %v1768 = vadd.f32 %v1653, %v1767
    %v1769 = vpop.f32.mrf.mxu0
    %1770 = vmatprep.mubr.f32.mxu0 0.0
    %1771 = vmatmul.mubr.f32.gmra.mxu0 %v1674
    %v1772 = vpop.f32.mrf.mxu0
    %v1773 = vadd.f32 %v1653, %v1772
    %v1774 = vpop.f32.mrf.mxu0
    %1775 = vdwg.mxu0
    %v1776 = vmax.f32 %v1743, 0.0
    %v1777 = vmax.f32 %v1748, 0.0
    %v1778 = vmax.f32 %v1753, 0.0
    %v1779 = vmax.f32 %v1758, 0.0
    %v1780 = vmax.f32 %v1763, 0.0
    %v1781 = vmax.f32 %v1768, 0.0
    %v1782 = vmax.f32 %v1773, 0.0
    %v1783 = vld [vmem:[%s53] sm:$0xff]
    %v1784 = vld [vmem:[%s53 + $0x8] sm:$0xff]
    %v1785 = vld [vmem:[%s55] sm:$0x1]
    %v1787 = vlaneseq
    %v1788 = vshrl.u32 %v1787, 7
    %v1789 = vsub.s32 0, %v1788
    %v1790 = vrot.slane %v1785, %v1789
    %1792 = vmatprep.subr.mxu0 0.0
    %1793 = vmatpush1.msra.mxu0 0.0
    %1794 = vmatprep.subr.mxu0 0.0
    %1795 = vmatpush1.msra.mxu0 0.0
    %1796 = vmatprep.subr.mxu0 0.0
    %1797 = vmatpush1.msra.mxu0 0.0
    %1798 = vmatprep.subr.mxu0 0.0
    %1799 = vmatpush1.msra.mxu0 0.0
    %1800 = vmatprep.subr.mxu0 0.0
    %1801 = vmatpush1.msra.mxu0 0.0
    %1802 = vmatprep.subr.mxu0 0.0
    %1803 = vmatpush1.msra.mxu0 0.0
    %1804 = vmatprep.subr.mxu0 0.0
    %1805 = vmatpush1.msra.mxu0 0.0
    %1806 = vmatprep.subr.mxu0 0.0
    %1807 = vmatpush1.msra.mxu0 0.0
    %1808 = vmatprep.subr.mxu0 0.0
    %1809 = vmatpush1.msra.mxu0 0.0
    %1810 = vmatprep.subr.mxu0 0.0
    %1811 = vmatpush1.msra.mxu0 0.0
    %1812 = vmatprep.subr.mxu0 0.0
    %1813 = vmatpush1.msra.mxu0 0.0
    %1814 = vmatprep.subr.mxu0 0.0
    %1815 = vmatpush1.msra.mxu0 0.0
    %1816 = vmatprep.subr.mxu0 0.0
    %1817 = vmatpush1.msra.mxu0 0.0
    %1818 = vmatprep.subr.mxu0 0.0
    %1819 = vmatpush1.msra.mxu0 0.0
    %1820 = vmatprep.subr.mxu0 0.0
    %1821 = vmatpush1.msra.mxu0 %v1784
    %1822 = vmatprep.subr.mxu0 0.0
    %1823 = vmatpush1.msra.mxu0 %v1783
    %1824 = vmatprep.subr.mxu0 0.0
    %1825 = vmatpush2.msra.mxu0 0.0
    %1826 = vmatprep.subr.mxu0 0.0
    %1827 = vmatpush2.msra.mxu0 0.0
    %1828 = vmatprep.subr.mxu0 0.0
    %1829 = vmatpush2.msra.mxu0 0.0
    %1830 = vmatprep.subr.mxu0 0.0
    %1831 = vmatpush2.msra.mxu0 0.0
    %1832 = vmatprep.subr.mxu0 0.0
    %1833 = vmatpush2.msra.mxu0 0.0
    %1834 = vmatprep.subr.mxu0 0.0
    %1835 = vmatpush2.msra.mxu0 0.0
    %1836 = vmatprep.subr.mxu0 0.0
    %1837 = vmatpush2.msra.mxu0 0.0
    %1838 = vmatprep.subr.mxu0 0.0
    %1839 = vmatpush2.msra.mxu0 0.0
    %1840 = vmatprep.subr.mxu0 0.0
    %1841 = vmatpush2.msra.mxu0 0.0
    %1842 = vmatprep.subr.mxu0 0.0
    %1843 = vmatpush2.msra.mxu0 0.0
    %1844 = vmatprep.subr.mxu0 0.0
    %1845 = vmatpush2.msra.mxu0 0.0
    %1846 = vmatprep.subr.mxu0 0.0
    %1847 = vmatpush2.msra.mxu0 0.0
    %1848 = vmatprep.subr.mxu0 0.0
    %1849 = vmatpush2.msra.mxu0 0.0
    %1850 = vmatprep.subr.mxu0 0.0
    %1851 = vmatpush2.msra.mxu0 0.0
    %1852 = vmatprep.subr.mxu0 0.0
    %1853 = vmatpush2.msra.mxu0 0.0
    %1854 = vmatprep.subr.mxu0 0.0
    %1855 = vmatpush2.msra.mxu0 0.0
    %1856 = vmatprep.mubr.f32.mxu0 0.0
    %1857 = vmatmul.mubr.f32.gmra.mxu0 %v1656
    %v1858 = vpop.f32.mrf.mxu0
    %v1859 = vadd.f32 %v1790, %v1858
    %v1860 = vpop.f32.mrf.mxu0
    %1861 = vmatprep.mubr.f32.mxu0 0.0
    %1862 = vmatmul.mubr.f32.gmra.mxu0 %v1659
    %v1863 = vpop.f32.mrf.mxu0
    %v1864 = vadd.f32 %v1790, %v1863
    %v1865 = vpop.f32.mrf.mxu0
    %1866 = vmatprep.mubr.f32.mxu0 0.0
    %1867 = vmatmul.mubr.f32.gmra.mxu0 %v1662
    %v1868 = vpop.f32.mrf.mxu0
    %v1869 = vadd.f32 %v1790, %v1868
    %v1870 = vpop.f32.mrf.mxu0
    %1871 = vmatprep.mubr.f32.mxu0 0.0
    %1872 = vmatmul.mubr.f32.gmra.mxu0 %v1665
    %v1873 = vpop.f32.mrf.mxu0
    %v1874 = vadd.f32 %v1790, %v1873
    %v1875 = vpop.f32.mrf.mxu0
    %1876 = vmatprep.mubr.f32.mxu0 0.0
    %1877 = vmatmul.mubr.f32.gmra.mxu0 %v1668
    %v1878 = vpop.f32.mrf.mxu0
    %v1879 = vadd.f32 %v1790, %v1878
    %v1880 = vpop.f32.mrf.mxu0
    %1881 = vmatprep.mubr.f32.mxu0 0.0
    %1882 = vmatmul.mubr.f32.gmra.mxu0 %v1671
    %v1883 = vpop.f32.mrf.mxu0
    %v1884 = vadd.f32 %v1790, %v1883
    %v1885 = vpop.f32.mrf.mxu0
    %1886 = vmatprep.mubr.f32.mxu0 0.0
    %1887 = vmatmul.mubr.f32.gmra.mxu0 %v1674
    %v1888 = vpop.f32.mrf.mxu0
    %v1889 = vadd.f32 %v1790, %v1888
    %v1890 = vpop.f32.mrf.mxu0
    %1891 = vdwg.mxu0
    %v1892 = vmax.f32 %v1859, 0.0
    %v1893 = vmax.f32 %v1864, 0.0
    %v1894 = vmax.f32 %v1869, 0.0
    %v1895 = vmax.f32 %v1874, 0.0
    %v1896 = vmax.f32 %v1879, 0.0
    %v1897 = vmax.f32 %v1884, 0.0
    %v1898 = vmax.f32 %v1889, 0.0
    %v1899 = vld [vmem:[%s57] sm:$0xff]
    %v1900 = vld [vmem:[%s57 + $0x8] sm:$0xff]
    %v1901 = vld [vmem:[#allocation4] sm:$0x1]
    %v1903 = vlaneseq
    %v1904 = vshrl.u32 %v1903, 7
    %v1905 = vsub.s32 0, %v1904
    %v1906 = vrot.slane %v1901, %v1905
    %v1909 = vsel %vm337, %v1776, 0
    %v1912 = vsel %vm337, %v1777, 0
    %v1915 = vsel %vm337, %v1778, 0
    %v1918 = vsel %vm337, %v1779, 0
    %v1921 = vsel %vm337, %v1780, 0
    %v1924 = vsel %vm337, %v1781, 0
    %v1927 = vsel %vm337, %v1782, 0
    %1929 = vmatprep.subr.mxu0 0.0
    %1930 = vmatpush1.msra.mxu0 0.0
    %1931 = vmatprep.subr.mxu0 0.0
    %1932 = vmatpush1.msra.mxu0 0.0
    %1933 = vmatprep.subr.mxu0 0.0
    %1934 = vmatpush1.msra.mxu0 0.0
    %1935 = vmatprep.subr.mxu0 0.0
    %1936 = vmatpush1.msra.mxu0 0.0
    %1937 = vmatprep.subr.mxu0 0.0
    %1938 = vmatpush1.msra.mxu0 0.0
    %1939 = vmatprep.subr.mxu0 0.0
    %1940 = vmatpush1.msra.mxu0 0.0
    %1941 = vmatprep.subr.mxu0 0.0
    %1942 = vmatpush1.msra.mxu0 0.0
    %1943 = vmatprep.subr.mxu0 0.0
    %1944 = vmatpush1.msra.mxu0 0.0
    %1945 = vmatprep.subr.mxu0 0.0
    %1946 = vmatpush1.msra.mxu0 0.0
    %1947 = vmatprep.subr.mxu0 0.0
    %1948 = vmatpush1.msra.mxu0 0.0
    %1949 = vmatprep.subr.mxu0 0.0
    %1950 = vmatpush1.msra.mxu0 0.0
    %1951 = vmatprep.subr.mxu0 0.0
    %1952 = vmatpush1.msra.mxu0 0.0
    %1953 = vmatprep.subr.mxu0 0.0
    %1954 = vmatpush1.msra.mxu0 0.0
    %1955 = vmatprep.subr.mxu0 0.0
    %1956 = vmatpush1.msra.mxu0 0.0
    %1957 = vmatprep.subr.mxu0 0.0
    %1958 = vmatpush1.msra.mxu0 %v1900
    %1959 = vmatprep.subr.mxu0 0.0
    %1960 = vmatpush1.msra.mxu0 %v1899
    %1961 = vmatprep.subr.mxu0 0.0
    %1962 = vmatpush2.msra.mxu0 0.0
    %1963 = vmatprep.subr.mxu0 0.0
    %1964 = vmatpush2.msra.mxu0 0.0
    %1965 = vmatprep.subr.mxu0 0.0
    %1966 = vmatpush2.msra.mxu0 0.0
    %1967 = vmatprep.subr.mxu0 0.0
    %1968 = vmatpush2.msra.mxu0 0.0
    %1969 = vmatprep.subr.mxu0 0.0
    %1970 = vmatpush2.msra.mxu0 0.0
    %1971 = vmatprep.subr.mxu0 0.0
    %1972 = vmatpush2.msra.mxu0 0.0
    %1973 = vmatprep.subr.mxu0 0.0
    %1974 = vmatpush2.msra.mxu0 0.0
    %1975 = vmatprep.subr.mxu0 0.0
    %1976 = vmatpush2.msra.mxu0 0.0
    %1977 = vmatprep.subr.mxu0 0.0
    %1978 = vmatpush2.msra.mxu0 0.0
    %1979 = vmatprep.subr.mxu0 0.0
    %1980 = vmatpush2.msra.mxu0 0.0
    %1981 = vmatprep.subr.mxu0 0.0
    %1982 = vmatpush2.msra.mxu0 0.0
    %1983 = vmatprep.subr.mxu0 0.0
    %1984 = vmatpush2.msra.mxu0 0.0
    %1985 = vmatprep.subr.mxu0 0.0
    %1986 = vmatpush2.msra.mxu0 0.0
    %1987 = vmatprep.subr.mxu0 0.0
    %1988 = vmatpush2.msra.mxu0 0.0
    %1989 = vmatprep.subr.mxu0 0.0
    %1990 = vmatpush2.msra.mxu0 0.0
    %1991 = vmatprep.subr.mxu0 0.0
    %1992 = vmatpush2.msra.mxu0 0.0
    %1993 = vmatprep.mubr.f32.mxu0 0.0
    %1994 = vmatmul.mubr.f32.gmra.mxu0 %v1909
    %v1995 = vpop.f32.mrf.mxu0
    %v1996 = vadd.f32 %v1906, %v1995
    %v1997 = vpop.f32.mrf.mxu0
    %1998 = vmatprep.mubr.f32.mxu0 0.0
    %1999 = vmatmul.mubr.f32.gmra.mxu0 %v1912
    %v2000 = vpop.f32.mrf.mxu0
    %v2001 = vadd.f32 %v1906, %v2000
    %v2002 = vpop.f32.mrf.mxu0
    %2003 = vmatprep.mubr.f32.mxu0 0.0
    %2004 = vmatmul.mubr.f32.gmra.mxu0 %v1915
    %v2005 = vpop.f32.mrf.mxu0
    %v2006 = vadd.f32 %v1906, %v2005
    %v2007 = vpop.f32.mrf.mxu0
    %2008 = vmatprep.mubr.f32.mxu0 0.0
    %2009 = vmatmul.mubr.f32.gmra.mxu0 %v1918
    %v2010 = vpop.f32.mrf.mxu0
    %v2011 = vadd.f32 %v1906, %v2010
    %v2012 = vpop.f32.mrf.mxu0
    %2013 = vmatprep.mubr.f32.mxu0 0.0
    %2014 = vmatmul.mubr.f32.gmra.mxu0 %v1921
    %v2015 = vpop.f32.mrf.mxu0
    %v2016 = vadd.f32 %v1906, %v2015
    %v2017 = vpop.f32.mrf.mxu0
    %2018 = vmatprep.mubr.f32.mxu0 0.0
    %2019 = vmatmul.mubr.f32.gmra.mxu0 %v1924
    %v2020 = vpop.f32.mrf.mxu0
    %v2021 = vadd.f32 %v1906, %v2020
    %v2022 = vpop.f32.mrf.mxu0
    %2023 = vmatprep.mubr.f32.mxu0 0.0
    %2024 = vmatmul.mubr.f32.gmra.mxu0 %v1927
    %v2025 = vpop.f32.mrf.mxu0
    %v2026 = vadd.f32 %v1906, %v2025
    %v2027 = vpop.f32.mrf.mxu0
    %2028 = vdwg.mxu0
    %v2029 = vld [vmem:[%s61] sm:$0xff]
    %v2030 = vld [vmem:[%s61 + $0x8] sm:$0xff]
    %v2031 = vld [vmem:[#allocation5] sm:$0x1]
    %v2033 = vlaneseq
    %v2034 = vshrl.u32 %v2033, 7
    %v2035 = vsub.s32 0, %v2034
    %v2036 = vrot.slane %v2031, %v2035
    %2038 = vmatprep.subr.mxu0 0.0
    %2039 = vmatpush1.msra.mxu0 0.0
    %2040 = vmatprep.subr.mxu0 0.0
    %2041 = vmatpush1.msra.mxu0 0.0
    %2042 = vmatprep.subr.mxu0 0.0
    %2043 = vmatpush1.msra.mxu0 0.0
    %2044 = vmatprep.subr.mxu0 0.0
    %2045 = vmatpush1.msra.mxu0 0.0
    %2046 = vmatprep.subr.mxu0 0.0
    %2047 = vmatpush1.msra.mxu0 0.0
    %2048 = vmatprep.subr.mxu0 0.0
    %2049 = vmatpush1.msra.mxu0 0.0
    %2050 = vmatprep.subr.mxu0 0.0
    %2051 = vmatpush1.msra.mxu0 0.0
    %2052 = vmatprep.subr.mxu0 0.0
    %2053 = vmatpush1.msra.mxu0 0.0
    %2054 = vmatprep.subr.mxu0 0.0
    %2055 = vmatpush1.msra.mxu0 0.0
    %2056 = vmatprep.subr.mxu0 0.0
    %2057 = vmatpush1.msra.mxu0 0.0
    %2058 = vmatprep.subr.mxu0 0.0
    %2059 = vmatpush1.msra.mxu0 0.0
    %2060 = vmatprep.subr.mxu0 0.0
    %2061 = vmatpush1.msra.mxu0 0.0
    %2062 = vmatprep.subr.mxu0 0.0
    %2063 = vmatpush1.msra.mxu0 0.0
    %2064 = vmatprep.subr.mxu0 0.0
    %2065 = vmatpush1.msra.mxu0 0.0
    %2066 = vmatprep.subr.mxu0 0.0
    %2067 = vmatpush1.msra.mxu0 %v2030
    %2068 = vmatprep.subr.mxu0 0.0
    %2069 = vmatpush1.msra.mxu0 %v2029
    %2070 = vmatprep.subr.mxu0 0.0
    %2071 = vmatpush2.msra.mxu0 0.0
    %2072 = vmatprep.subr.mxu0 0.0
    %2073 = vmatpush2.msra.mxu0 0.0
    %2074 = vmatprep.subr.mxu0 0.0
    %2075 = vmatpush2.msra.mxu0 0.0
    %2076 = vmatprep.subr.mxu0 0.0
    %2077 = vmatpush2.msra.mxu0 0.0
    %2078 = vmatprep.subr.mxu0 0.0
    %2079 = vmatpush2.msra.mxu0 0.0
    %2080 = vmatprep.subr.mxu0 0.0
    %2081 = vmatpush2.msra.mxu0 0.0
    %2082 = vmatprep.subr.mxu0 0.0
    %2083 = vmatpush2.msra.mxu0 0.0
    %2084 = vmatprep.subr.mxu0 0.0
    %2085 = vmatpush2.msra.mxu0 0.0
    %2086 = vmatprep.subr.mxu0 0.0
    %2087 = vmatpush2.msra.mxu0 0.0
    %2088 = vmatprep.subr.mxu0 0.0
    %2089 = vmatpush2.msra.mxu0 0.0
    %2090 = vmatprep.subr.mxu0 0.0
    %2091 = vmatpush2.msra.mxu0 0.0
    %2092 = vmatprep.subr.mxu0 0.0
    %2093 = vmatpush2.msra.mxu0 0.0
    %2094 = vmatprep.subr.mxu0 0.0
    %2095 = vmatpush2.msra.mxu0 0.0
    %2096 = vmatprep.subr.mxu0 0.0
    %2097 = vmatpush2.msra.mxu0 0.0
    %2098 = vmatprep.subr.mxu0 0.0
    %2099 = vmatpush2.msra.mxu0 0.0
    %2100 = vmatprep.subr.mxu0 0.0
    %2101 = vmatpush2.msra.mxu0 0.0
    %2102 = vmatprep.mubr.f32.mxu0 0.0
    %2103 = vmatmul.mubr.f32.gmra.mxu0 %v1909
    %v2104 = vpop.f32.mrf.mxu0
    %v2105 = vadd.f32 %v2036, %v2104
    %v2106 = vpop.f32.mrf.mxu0
    %2107 = vmatprep.mubr.f32.mxu0 0.0
    %2108 = vmatmul.mubr.f32.gmra.mxu0 %v1912
    %v2109 = vpop.f32.mrf.mxu0
    %v2110 = vadd.f32 %v2036, %v2109
    %v2111 = vpop.f32.mrf.mxu0
    %2112 = vmatprep.mubr.f32.mxu0 0.0
    %2113 = vmatmul.mubr.f32.gmra.mxu0 %v1915
    %v2114 = vpop.f32.mrf.mxu0
    %v2115 = vadd.f32 %v2036, %v2114
    %v2116 = vpop.f32.mrf.mxu0
    %2117 = vmatprep.mubr.f32.mxu0 0.0
    %2118 = vmatmul.mubr.f32.gmra.mxu0 %v1918
    %v2119 = vpop.f32.mrf.mxu0
    %v2120 = vadd.f32 %v2036, %v2119
    %v2121 = vpop.f32.mrf.mxu0
    %2122 = vmatprep.mubr.f32.mxu0 0.0
    %2123 = vmatmul.mubr.f32.gmra.mxu0 %v1921
    %v2124 = vpop.f32.mrf.mxu0
    %v2125 = vadd.f32 %v2036, %v2124
    %v2126 = vpop.f32.mrf.mxu0
    %2127 = vmatprep.mubr.f32.mxu0 0.0
    %2128 = vmatmul.mubr.f32.gmra.mxu0 %v1924
    %v2129 = vpop.f32.mrf.mxu0
    %v2130 = vadd.f32 %v2036, %v2129
    %v2131 = vpop.f32.mrf.mxu0
    %2132 = vmatprep.mubr.f32.mxu0 0.0
    %2133 = vmatmul.mubr.f32.gmra.mxu0 %v1927
    %v2134 = vpop.f32.mrf.mxu0
    %v2135 = vadd.f32 %v2036, %v2134
    %v2136 = vpop.f32.mrf.mxu0
    %2137 = vdwg.mxu0
    %v2138 = vmax.f32 %v2105, 0.0
    %v2139 = vmax.f32 %v2110, 0.0
    %v2140 = vmax.f32 %v2115, 0.0
    %v2141 = vmax.f32 %v2120, 0.0
    %v2142 = vmax.f32 %v2125, 0.0
    %v2143 = vmax.f32 %v2130, 0.0
    %v2144 = vmax.f32 %v2135, 0.0
    %vm2145 = vcmp.ne.f32.partialorder %v2105, %v2105
    %vm2146 = vcmp.ne.f32.partialorder %v2110, %v2110
    %vm2147 = vcmp.ne.f32.partialorder %v2115, %v2115
    %vm2148 = vcmp.ne.f32.partialorder %v2120, %v2120
    %vm2149 = vcmp.ne.f32.partialorder %v2125, %v2125
    %vm2150 = vcmp.ne.f32.partialorder %v2130, %v2130
    %vm2151 = vcmp.ne.f32.partialorder %v2135, %v2135
    %v2152 = vadd.f32 %v2105, 0.0
    %v2153 = vadd.f32 %v2110, 0.0
    %v2154 = vadd.f32 %v2115, 0.0
    %v2155 = vadd.f32 %v2120, 0.0
    %v2156 = vadd.f32 %v2125, 0.0
    %v2157 = vadd.f32 %v2130, 0.0
    %v2158 = vadd.f32 %v2135, 0.0
    %v2159 = vand.u32 2147483647, %v2105
    %v2160 = vand.u32 2147483647, %v2110
    %v2161 = vand.u32 2147483647, %v2115
    %v2162 = vand.u32 2147483647, %v2120
    %v2163 = vand.u32 2147483647, %v2125
    %v2164 = vand.u32 2147483647, %v2130
    %v2165 = vand.u32 2147483647, %v2135
    %v2166 = vsub.f32 0.0, %v2159
    %v2167 = vsub.f32 0.0, %v2160
    %v2168 = vsub.f32 0.0, %v2161
    %v2169 = vsub.f32 0.0, %v2162
    %v2170 = vsub.f32 0.0, %v2163
    %v2171 = vsub.f32 0.0, %v2164
    %v2172 = vsub.f32 0.0, %v2165
    %v2173 = vmul.f32 %v2166, 1.442695
    %v2174 = vpow.pop %v2173
    %v2175 = vmul.f32 %v2167, 1.442695
    %v2176 = vpow.pop %v2175
    %v2177 = vmul.f32 %v2168, 1.442695
    %v2178 = vpow.pop %v2177
    %v2179 = vmul.f32 %v2169, 1.442695
    %v2180 = vpow.pop %v2179
    %v2181 = vmul.f32 %v2170, 1.442695
    %v2182 = vpow.pop %v2181
    %v2183 = vmul.f32 %v2171, 1.442695
    %v2184 = vpow.pop %v2183
    %v2185 = vmul.f32 %v2172, 1.442695
    %v2186 = vpow.pop %v2185
    %v2187 = vadd.f32 %v2174, 1.0
    %v2188 = vlog2.pop %v2187
    %v2189 = vmul.f32 %v2188, 0.6931472
    %v2190 = vmul.f32 -0.5, %v2174
    %v2191 = vadd.f32 %v2190, 1.0
    %v2192 = vmul.f32 %v2191, %v2174
    %v2193 = vand.u32 2147483647, %v2174
    %vm2194 = vcmp.lt.f32.partialorder %v2193, 0.0004427343
    %v2195 = vsel %vm2194, %v2192, %v2189
    %v2196 = vadd.f32 %v2176, 1.0
    %v2197 = vlog2.pop %v2196
    %v2198 = vmul.f32 %v2197, 0.6931472
    %v2199 = vmul.f32 -0.5, %v2176
    %v2200 = vadd.f32 %v2199, 1.0
    %v2201 = vmul.f32 %v2200, %v2176
    %v2202 = vand.u32 2147483647, %v2176
    %vm2203 = vcmp.lt.f32.partialorder %v2202, 0.0004427343
    %v2204 = vsel %vm2203, %v2201, %v2198
    %v2205 = vadd.f32 %v2178, 1.0
    %v2206 = vlog2.pop %v2205
    %v2207 = vmul.f32 %v2206, 0.6931472
    %v2208 = vmul.f32 -0.5, %v2178
    %v2209 = vadd.f32 %v2208, 1.0
    %v2210 = vmul.f32 %v2209, %v2178
    %v2211 = vand.u32 2147483647, %v2178
    %vm2212 = vcmp.lt.f32.partialorder %v2211, 0.0004427343
    %v2213 = vsel %vm2212, %v2210, %v2207
    %v2214 = vadd.f32 %v2180, 1.0
    %v2215 = vlog2.pop %v2214
    %v2216 = vmul.f32 %v2215, 0.6931472
    %v2217 = vmul.f32 -0.5, %v2180
    %v2218 = vadd.f32 %v2217, 1.0
    %v2219 = vmul.f32 %v2218, %v2180
    %v2220 = vand.u32 2147483647, %v2180
    %vm2221 = vcmp.lt.f32.partialorder %v2220, 0.0004427343
    %v2222 = vsel %vm2221, %v2219, %v2216
    %v2223 = vadd.f32 %v2182, 1.0
    %v2224 = vlog2.pop %v2223
    %v2225 = vmul.f32 %v2224, 0.6931472
    %v2226 = vmul.f32 -0.5, %v2182
    %v2227 = vadd.f32 %v2226, 1.0
    %v2228 = vmul.f32 %v2227, %v2182
    %v2229 = vand.u32 2147483647, %v2182
    %vm2230 = vcmp.lt.f32.partialorder %v2229, 0.0004427343
    %v2231 = vsel %vm2230, %v2228, %v2225
    %v2232 = vadd.f32 %v2184, 1.0
    %v2233 = vlog2.pop %v2232
    %v2234 = vmul.f32 %v2233, 0.6931472
    %v2235 = vmul.f32 -0.5, %v2184
    %v2236 = vadd.f32 %v2235, 1.0
    %v2237 = vmul.f32 %v2236, %v2184
    %v2238 = vand.u32 2147483647, %v2184
    %vm2239 = vcmp.lt.f32.partialorder %v2238, 0.0004427343
    %v2240 = vsel %vm2239, %v2237, %v2234
    %v2241 = vadd.f32 %v2186, 1.0
    %v2242 = vlog2.pop %v2241
    %v2243 = vmul.f32 %v2242, 0.6931472
    %v2244 = vmul.f32 -0.5, %v2186
    %v2245 = vadd.f32 %v2244, 1.0
    %v2246 = vmul.f32 %v2245, %v2186
    %v2247 = vand.u32 2147483647, %v2186
    %vm2248 = vcmp.lt.f32.partialorder %v2247, 0.0004427343
    %v2249 = vsel %vm2248, %v2246, %v2243
    %v2250 = vadd.f32 %v2138, %v2195
    %v2251 = vadd.f32 %v2139, %v2204
    %v2252 = vadd.f32 %v2140, %v2213
    %v2253 = vadd.f32 %v2141, %v2222
    %v2254 = vadd.f32 %v2142, %v2231
    %v2255 = vadd.f32 %v2143, %v2240
    %v2256 = vadd.f32 %v2144, %v2249
    %v2257 = vsel %vm2145, %v2152, %v2250
    %v2258 = vsel %vm2146, %v2153, %v2251
    %v2259 = vsel %vm2147, %v2154, %v2252
    %v2260 = vsel %vm2148, %v2155, %v2253
    %v2261 = vsel %vm2149, %v2156, %v2254
    %v2262 = vsel %vm2150, %v2157, %v2255
    %v2263 = vsel %vm2151, %v2158, %v2256
    %v2264 = vld [vmem:[%s65] sm:$0xff]
    %v2265 = vld [vmem:[%s65 + $0x8] sm:$0xff]
    %v2266 = vld [vmem:[#allocation6] sm:$0x1]
    %v2268 = vlaneseq
    %v2269 = vshrl.u32 %v2268, 7
    %v2270 = vsub.s32 0, %v2269
    %v2271 = vrot.slane %v2266, %v2270
    %v2274 = vsel %vm337, %v1892, 0
    %v2277 = vsel %vm337, %v1893, 0
    %v2280 = vsel %vm337, %v1894, 0
    %v2283 = vsel %vm337, %v1895, 0
    %v2286 = vsel %vm337, %v1896, 0
    %v2289 = vsel %vm337, %v1897, 0
    %v2292 = vsel %vm337, %v1898, 0
    %2294 = vmatprep.subr.mxu0 0.0
    %2295 = vmatpush1.msra.mxu0 0.0
    %2296 = vmatprep.subr.mxu0 0.0
    %2297 = vmatpush1.msra.mxu0 0.0
    %2298 = vmatprep.subr.mxu0 0.0
    %2299 = vmatpush1.msra.mxu0 0.0
    %2300 = vmatprep.subr.mxu0 0.0
    %2301 = vmatpush1.msra.mxu0 0.0
    %2302 = vmatprep.subr.mxu0 0.0
    %2303 = vmatpush1.msra.mxu0 0.0
    %2304 = vmatprep.subr.mxu0 0.0
    %2305 = vmatpush1.msra.mxu0 0.0
    %2306 = vmatprep.subr.mxu0 0.0
    %2307 = vmatpush1.msra.mxu0 0.0
    %2308 = vmatprep.subr.mxu0 0.0
    %2309 = vmatpush1.msra.mxu0 0.0
    %2310 = vmatprep.subr.mxu0 0.0
    %2311 = vmatpush1.msra.mxu0 0.0
    %2312 = vmatprep.subr.mxu0 0.0
    %2313 = vmatpush1.msra.mxu0 0.0
    %2314 = vmatprep.subr.mxu0 0.0
    %2315 = vmatpush1.msra.mxu0 0.0
    %2316 = vmatprep.subr.mxu0 0.0
    %2317 = vmatpush1.msra.mxu0 0.0
    %2318 = vmatprep.subr.mxu0 0.0
    %2319 = vmatpush1.msra.mxu0 0.0
    %2320 = vmatprep.subr.mxu0 0.0
    %2321 = vmatpush1.msra.mxu0 0.0
    %2322 = vmatprep.subr.mxu0 0.0
    %2323 = vmatpush1.msra.mxu0 %v2265
    %2324 = vmatprep.subr.mxu0 0.0
    %2325 = vmatpush1.msra.mxu0 %v2264
    %2326 = vmatprep.subr.mxu0 0.0
    %2327 = vmatpush2.msra.mxu0 0.0
    %2328 = vmatprep.subr.mxu0 0.0
    %2329 = vmatpush2.msra.mxu0 0.0
    %2330 = vmatprep.subr.mxu0 0.0
    %2331 = vmatpush2.msra.mxu0 0.0
    %2332 = vmatprep.subr.mxu0 0.0
    %2333 = vmatpush2.msra.mxu0 0.0
    %2334 = vmatprep.subr.mxu0 0.0
    %2335 = vmatpush2.msra.mxu0 0.0
    %2336 = vmatprep.subr.mxu0 0.0
    %2337 = vmatpush2.msra.mxu0 0.0
    %2338 = vmatprep.subr.mxu0 0.0
    %2339 = vmatpush2.msra.mxu0 0.0
    %2340 = vmatprep.subr.mxu0 0.0
    %2341 = vmatpush2.msra.mxu0 0.0
    %2342 = vmatprep.subr.mxu0 0.0
    %2343 = vmatpush2.msra.mxu0 0.0
    %2344 = vmatprep.subr.mxu0 0.0
    %2345 = vmatpush2.msra.mxu0 0.0
    %2346 = vmatprep.subr.mxu0 0.0
    %2347 = vmatpush2.msra.mxu0 0.0
    %2348 = vmatprep.subr.mxu0 0.0
    %2349 = vmatpush2.msra.mxu0 0.0
    %2350 = vmatprep.subr.mxu0 0.0
    %2351 = vmatpush2.msra.mxu0 0.0
    %2352 = vmatprep.subr.mxu0 0.0
    %2353 = vmatpush2.msra.mxu0 0.0
    %2354 = vmatprep.subr.mxu0 0.0
    %2355 = vmatpush2.msra.mxu0 0.0
    %2356 = vmatprep.subr.mxu0 0.0
    %2357 = vmatpush2.msra.mxu0 0.0
    %2358 = vmatprep.mubr.f32.mxu0 0.0
    %2359 = vmatmul.mubr.f32.gmra.mxu0 %v2274
    %v2360 = vpop.f32.mrf.mxu0
    %v2361 = vadd.f32 %v2271, %v2360
    %v2362 = vpop.f32.mrf.mxu0
    %2363 = vmatprep.mubr.f32.mxu0 0.0
    %2364 = vmatmul.mubr.f32.gmra.mxu0 %v2277
    %v2365 = vpop.f32.mrf.mxu0
    %v2366 = vadd.f32 %v2271, %v2365
    %v2367 = vpop.f32.mrf.mxu0
    %2368 = vmatprep.mubr.f32.mxu0 0.0
    %2369 = vmatmul.mubr.f32.gmra.mxu0 %v2280
    %v2370 = vpop.f32.mrf.mxu0
    %v2371 = vadd.f32 %v2271, %v2370
    %v2372 = vpop.f32.mrf.mxu0
    %2373 = vmatprep.mubr.f32.mxu0 0.0
    %2374 = vmatmul.mubr.f32.gmra.mxu0 %v2283
    %v2375 = vpop.f32.mrf.mxu0
    %v2376 = vadd.f32 %v2271, %v2375
    %v2377 = vpop.f32.mrf.mxu0
    %2378 = vmatprep.mubr.f32.mxu0 0.0
    %2379 = vmatmul.mubr.f32.gmra.mxu0 %v2286
    %v2380 = vpop.f32.mrf.mxu0
    %v2381 = vadd.f32 %v2271, %v2380
    %v2382 = vpop.f32.mrf.mxu0
    %2383 = vmatprep.mubr.f32.mxu0 0.0
    %2384 = vmatmul.mubr.f32.gmra.mxu0 %v2289
    %v2385 = vpop.f32.mrf.mxu0
    %v2386 = vadd.f32 %v2271, %v2385
    %v2387 = vpop.f32.mrf.mxu0
    %2388 = vmatprep.mubr.f32.mxu0 0.0
    %2389 = vmatmul.mubr.f32.gmra.mxu0 %v2292
    %v2390 = vpop.f32.mrf.mxu0
    %v2391 = vadd.f32 %v2271, %v2390
    %v2392 = vpop.f32.mrf.mxu0
    %2393 = vdwg.mxu0
    %v2394 = vld [vmem:[%s69] sm:$0xff]
    %v2395 = vld [vmem:[%s69 + $0x8] sm:$0xff]
    %v2396 = vld [vmem:[#allocation7] sm:$0x1]
    %v2398 = vlaneseq
    %v2399 = vshrl.u32 %v2398, 7
    %v2400 = vsub.s32 0, %v2399
    %v2401 = vrot.slane %v2396, %v2400
    %2403 = vmatprep.subr.mxu0 0.0
    %2404 = vmatpush1.msra.mxu0 0.0
    %2405 = vmatprep.subr.mxu0 0.0
    %2406 = vmatpush1.msra.mxu0 0.0
    %2407 = vmatprep.subr.mxu0 0.0
    %2408 = vmatpush1.msra.mxu0 0.0
    %2409 = vmatprep.subr.mxu0 0.0
    %2410 = vmatpush1.msra.mxu0 0.0
    %2411 = vmatprep.subr.mxu0 0.0
    %2412 = vmatpush1.msra.mxu0 0.0
    %2413 = vmatprep.subr.mxu0 0.0
    %2414 = vmatpush1.msra.mxu0 0.0
    %2415 = vmatprep.subr.mxu0 0.0
    %2416 = vmatpush1.msra.mxu0 0.0
    %2417 = vmatprep.subr.mxu0 0.0
    %2418 = vmatpush1.msra.mxu0 0.0
    %2419 = vmatprep.subr.mxu0 0.0
    %2420 = vmatpush1.msra.mxu0 0.0
    %2421 = vmatprep.subr.mxu0 0.0
    %2422 = vmatpush1.msra.mxu0 0.0
    %2423 = vmatprep.subr.mxu0 0.0
    %2424 = vmatpush1.msra.mxu0 0.0
    %2425 = vmatprep.subr.mxu0 0.0
    %2426 = vmatpush1.msra.mxu0 0.0
    %2427 = vmatprep.subr.mxu0 0.0
    %2428 = vmatpush1.msra.mxu0 0.0
    %2429 = vmatprep.subr.mxu0 0.0
    %2430 = vmatpush1.msra.mxu0 0.0
    %2431 = vmatprep.subr.mxu0 0.0
    %2432 = vmatpush1.msra.mxu0 %v2395
    %2433 = vmatprep.subr.mxu0 0.0
    %2434 = vmatpush1.msra.mxu0 %v2394
    %2435 = vmatprep.subr.mxu0 0.0
    %2436 = vmatpush2.msra.mxu0 0.0
    %2437 = vmatprep.subr.mxu0 0.0
    %2438 = vmatpush2.msra.mxu0 0.0
    %2439 = vmatprep.subr.mxu0 0.0
    %2440 = vmatpush2.msra.mxu0 0.0
    %2441 = vmatprep.subr.mxu0 0.0
    %2442 = vmatpush2.msra.mxu0 0.0
    %2443 = vmatprep.subr.mxu0 0.0
    %2444 = vmatpush2.msra.mxu0 0.0
    %2445 = vmatprep.subr.mxu0 0.0
    %2446 = vmatpush2.msra.mxu0 0.0
    %2447 = vmatprep.subr.mxu0 0.0
    %2448 = vmatpush2.msra.mxu0 0.0
    %2449 = vmatprep.subr.mxu0 0.0
    %2450 = vmatpush2.msra.mxu0 0.0
    %2451 = vmatprep.subr.mxu0 0.0
    %2452 = vmatpush2.msra.mxu0 0.0
    %2453 = vmatprep.subr.mxu0 0.0
    %2454 = vmatpush2.msra.mxu0 0.0
    %2455 = vmatprep.subr.mxu0 0.0
    %2456 = vmatpush2.msra.mxu0 0.0
    %2457 = vmatprep.subr.mxu0 0.0
    %2458 = vmatpush2.msra.mxu0 0.0
    %2459 = vmatprep.subr.mxu0 0.0
    %2460 = vmatpush2.msra.mxu0 0.0
    %2461 = vmatprep.subr.mxu0 0.0
    %2462 = vmatpush2.msra.mxu0 0.0
    %2463 = vmatprep.subr.mxu0 0.0
    %2464 = vmatpush2.msra.mxu0 0.0
    %2465 = vmatprep.subr.mxu0 0.0
    %2466 = vmatpush2.msra.mxu0 0.0
    %2467 = vmatprep.mubr.f32.mxu0 0.0
    %2468 = vmatmul.mubr.f32.gmra.mxu0 %v2274
    %v2469 = vpop.f32.mrf.mxu0
    %v2470 = vadd.f32 %v2401, %v2469
    %v2471 = vpop.f32.mrf.mxu0
    %2472 = vmatprep.mubr.f32.mxu0 0.0
    %2473 = vmatmul.mubr.f32.gmra.mxu0 %v2277
    %v2474 = vpop.f32.mrf.mxu0
    %v2475 = vadd.f32 %v2401, %v2474
    %v2476 = vpop.f32.mrf.mxu0
    %2477 = vmatprep.mubr.f32.mxu0 0.0
    %2478 = vmatmul.mubr.f32.gmra.mxu0 %v2280
    %v2479 = vpop.f32.mrf.mxu0
    %v2480 = vadd.f32 %v2401, %v2479
    %v2481 = vpop.f32.mrf.mxu0
    %2482 = vmatprep.mubr.f32.mxu0 0.0
    %2483 = vmatmul.mubr.f32.gmra.mxu0 %v2283
    %v2484 = vpop.f32.mrf.mxu0
    %v2485 = vadd.f32 %v2401, %v2484
    %v2486 = vpop.f32.mrf.mxu0
    %2487 = vmatprep.mubr.f32.mxu0 0.0
    %2488 = vmatmul.mubr.f32.gmra.mxu0 %v2286
    %v2489 = vpop.f32.mrf.mxu0
    %v2490 = vadd.f32 %v2401, %v2489
    %v2491 = vpop.f32.mrf.mxu0
    %2492 = vmatprep.mubr.f32.mxu0 0.0
    %2493 = vmatmul.mubr.f32.gmra.mxu0 %v2289
    %v2494 = vpop.f32.mrf.mxu0
    %v2495 = vadd.f32 %v2401, %v2494
    %v2496 = vpop.f32.mrf.mxu0
    %2497 = vmatprep.mubr.f32.mxu0 0.0
    %2498 = vmatmul.mubr.f32.gmra.mxu0 %v2292
    %v2499 = vpop.f32.mrf.mxu0
    %v2500 = vadd.f32 %v2401, %v2499
    %v2501 = vpop.f32.mrf.mxu0
    %2502 = vdwg.mxu0
    %v2503 = vmax.f32 %v2470, 0.0
    %v2504 = vmax.f32 %v2475, 0.0
    %v2505 = vmax.f32 %v2480, 0.0
    %v2506 = vmax.f32 %v2485, 0.0
    %v2507 = vmax.f32 %v2490, 0.0
    %v2508 = vmax.f32 %v2495, 0.0
    %v2509 = vmax.f32 %v2500, 0.0
    %vm2510 = vcmp.ne.f32.partialorder %v2470, %v2470
    %vm2511 = vcmp.ne.f32.partialorder %v2475, %v2475
    %vm2512 = vcmp.ne.f32.partialorder %v2480, %v2480
    %vm2513 = vcmp.ne.f32.partialorder %v2485, %v2485
    %vm2514 = vcmp.ne.f32.partialorder %v2490, %v2490
    %vm2515 = vcmp.ne.f32.partialorder %v2495, %v2495
    %vm2516 = vcmp.ne.f32.partialorder %v2500, %v2500
    %v2517 = vadd.f32 %v2470, 0.0
    %v2518 = vadd.f32 %v2475, 0.0
    %v2519 = vadd.f32 %v2480, 0.0
    %v2520 = vadd.f32 %v2485, 0.0
    %v2521 = vadd.f32 %v2490, 0.0
    %v2522 = vadd.f32 %v2495, 0.0
    %v2523 = vadd.f32 %v2500, 0.0
    %v2524 = vand.u32 2147483647, %v2470
    %v2525 = vand.u32 2147483647, %v2475
    %v2526 = vand.u32 2147483647, %v2480
    %v2527 = vand.u32 2147483647, %v2485
    %v2528 = vand.u32 2147483647, %v2490
    %v2529 = vand.u32 2147483647, %v2495
    %v2530 = vand.u32 2147483647, %v2500
    %v2531 = vsub.f32 0.0, %v2524
    %v2532 = vsub.f32 0.0, %v2525
    %v2533 = vsub.f32 0.0, %v2526
    %v2534 = vsub.f32 0.0, %v2527
    %v2535 = vsub.f32 0.0, %v2528
    %v2536 = vsub.f32 0.0, %v2529
    %v2537 = vsub.f32 0.0, %v2530
    %v2538 = vmul.f32 %v2531, 1.442695
    %v2539 = vpow.pop %v2538
    %v2540 = vmul.f32 %v2532, 1.442695
    %v2541 = vpow.pop %v2540
    %v2542 = vmul.f32 %v2533, 1.442695
    %v2543 = vpow.pop %v2542
    %v2544 = vmul.f32 %v2534, 1.442695
    %v2545 = vpow.pop %v2544
    %v2546 = vmul.f32 %v2535, 1.442695
    %v2547 = vpow.pop %v2546
    %v2548 = vmul.f32 %v2536, 1.442695
    %v2549 = vpow.pop %v2548
    %v2550 = vmul.f32 %v2537, 1.442695
    %v2551 = vpow.pop %v2550
    %v2552 = vadd.f32 %v2539, 1.0
    %v2553 = vlog2.pop %v2552
    %v2554 = vmul.f32 %v2553, 0.6931472
    %v2555 = vmul.f32 -0.5, %v2539
    %v2556 = vadd.f32 %v2555, 1.0
    %v2557 = vmul.f32 %v2556, %v2539
    %v2558 = vand.u32 2147483647, %v2539
    %vm2559 = vcmp.lt.f32.partialorder %v2558, 0.0004427343
    %v2560 = vsel %vm2559, %v2557, %v2554
    %v2561 = vadd.f32 %v2541, 1.0
    %v2562 = vlog2.pop %v2561
    %v2563 = vmul.f32 %v2562, 0.6931472
    %v2564 = vmul.f32 -0.5, %v2541
    %v2565 = vadd.f32 %v2564, 1.0
    %v2566 = vmul.f32 %v2565, %v2541
    %v2567 = vand.u32 2147483647, %v2541
    %vm2568 = vcmp.lt.f32.partialorder %v2567, 0.0004427343
    %v2569 = vsel %vm2568, %v2566, %v2563
    %v2570 = vadd.f32 %v2543, 1.0
    %v2571 = vlog2.pop %v2570
    %v2572 = vmul.f32 %v2571, 0.6931472
    %v2573 = vmul.f32 -0.5, %v2543
    %v2574 = vadd.f32 %v2573, 1.0
    %v2575 = vmul.f32 %v2574, %v2543
    %v2576 = vand.u32 2147483647, %v2543
    %vm2577 = vcmp.lt.f32.partialorder %v2576, 0.0004427343
    %v2578 = vsel %vm2577, %v2575, %v2572
    %v2579 = vadd.f32 %v2545, 1.0
    %v2580 = vlog2.pop %v2579
    %v2581 = vmul.f32 %v2580, 0.6931472
    %v2582 = vmul.f32 -0.5, %v2545
    %v2583 = vadd.f32 %v2582, 1.0
    %v2584 = vmul.f32 %v2583, %v2545
    %v2585 = vand.u32 2147483647, %v2545
    %vm2586 = vcmp.lt.f32.partialorder %v2585, 0.0004427343
    %v2587 = vsel %vm2586, %v2584, %v2581
    %v2588 = vadd.f32 %v2547, 1.0
    %v2589 = vlog2.pop %v2588
    %v2590 = vmul.f32 %v2589, 0.6931472
    %v2591 = vmul.f32 -0.5, %v2547
    %v2592 = vadd.f32 %v2591, 1.0
    %v2593 = vmul.f32 %v2592, %v2547
    %v2594 = vand.u32 2147483647, %v2547
    %vm2595 = vcmp.lt.f32.partialorder %v2594, 0.0004427343
    %v2596 = vsel %vm2595, %v2593, %v2590
    %v2597 = vadd.f32 %v2549, 1.0
    %v2598 = vlog2.pop %v2597
    %v2599 = vmul.f32 %v2598, 0.6931472
    %v2600 = vmul.f32 -0.5, %v2549
    %v2601 = vadd.f32 %v2600, 1.0
    %v2602 = vmul.f32 %v2601, %v2549
    %v2603 = vand.u32 2147483647, %v2549
    %vm2604 = vcmp.lt.f32.partialorder %v2603, 0.0004427343
    %v2605 = vsel %vm2604, %v2602, %v2599
    %v2606 = vadd.f32 %v2551, 1.0
    %v2607 = vlog2.pop %v2606
    %v2608 = vmul.f32 %v2607, 0.6931472
    %v2609 = vmul.f32 -0.5, %v2551
    %v2610 = vadd.f32 %v2609, 1.0
    %v2611 = vmul.f32 %v2610, %v2551
    %v2612 = vand.u32 2147483647, %v2551
    %vm2613 = vcmp.lt.f32.partialorder %v2612, 0.0004427343
    %v2614 = vsel %vm2613, %v2611, %v2608
    %v2615 = vadd.f32 %v2503, %v2560
    %v2616 = vadd.f32 %v2504, %v2569
    %v2617 = vadd.f32 %v2505, %v2578
    %v2618 = vadd.f32 %v2506, %v2587
    %v2619 = vadd.f32 %v2507, %v2596
    %v2620 = vadd.f32 %v2508, %v2605
    %v2621 = vadd.f32 %v2509, %v2614
    %v2622 = vsel %vm2510, %v2517, %v2615
    %v2623 = vsel %vm2511, %v2518, %v2616
    %v2624 = vsel %vm2512, %v2519, %v2617
    %v2625 = vsel %vm2513, %v2520, %v2618
    %v2626 = vsel %vm2514, %v2521, %v2619
    %v2627 = vsel %vm2515, %v2522, %v2620
    %v2628 = vsel %vm2516, %v2523, %v2621
    %v2629 = vmul.f32 %v2361, 2.0
    %v2630 = vmul.f32 %v2366, 2.0
    %v2631 = vmul.f32 %v2371, 2.0
    %v2632 = vmul.f32 %v2376, 2.0
    %v2633 = vmul.f32 %v2381, 2.0
    %v2634 = vmul.f32 %v2386, 2.0
    %v2635 = vmul.f32 %v2391, 2.0
    %v2636 = vsub.f32 %v2629, 1.0
    %v2637 = vsub.f32 %v2630, 1.0
    %v2638 = vsub.f32 %v2631, 1.0
    %v2639 = vsub.f32 %v2632, 1.0
    %v2640 = vsub.f32 %v2633, 1.0
    %v2641 = vsub.f32 %v2634, 1.0
    %v2642 = vsub.f32 %v2635, 1.0
    %v2643 = vmul.f32 %v2636, %v2636
    %v2644 = vmul.f32 %v2637, %v2637
    %v2645 = vmul.f32 %v2638, %v2638
    %v2646 = vmul.f32 %v2639, %v2639
    %v2647 = vmul.f32 %v2640, %v2640
    %v2648 = vmul.f32 %v2641, %v2641
    %v2649 = vmul.f32 %v2642, %v2642
    %v2650 = vmul.f32 %v2622, 8.0
    %v2651 = vmul.f32 %v2623, 8.0
    %v2652 = vmul.f32 %v2624, 8.0
    %v2653 = vmul.f32 %v2625, 8.0
    %v2654 = vmul.f32 %v2626, 8.0
    %v2655 = vmul.f32 %v2627, 8.0
    %v2656 = vmul.f32 %v2628, 8.0
    %v2657 = vmul.f32 %v2650, %v2622
    %v2658 = vmul.f32 %v2651, %v2623
    %v2659 = vmul.f32 %v2652, %v2624
    %v2660 = vmul.f32 %v2653, %v2625
    %v2661 = vmul.f32 %v2654, %v2626
    %v2662 = vmul.f32 %v2655, %v2627
    %v2663 = vmul.f32 %v2656, %v2628
    %v2664 = vadd.f32 %v2643, %v2657
    %v2665 = vadd.f32 %v2644, %v2658
    %v2666 = vadd.f32 %v2645, %v2659
    %v2667 = vadd.f32 %v2646, %v2660
    %v2668 = vadd.f32 %v2647, %v2661
    %v2669 = vadd.f32 %v2648, %v2662
    %v2670 = vadd.f32 %v2649, %v2663
    %v2671 = vrsqrt.pop %v2664
    %v2672 = vmul.f32 %v2664, %v2671
    %vm2673 = vcmp.eq.f32.partialorder %v2664, inf
    %v2674 = vsel %vm2673, %v2664, %v2672
    %vm2675 = vcmp.eq.f32.partialorder %v2664, 0.0
    %v2676 = vand.u32 %v2664, 2147483648
    %v2677 = vsel %vm2675, %v2676, %v2674
    %v2678 = vrsqrt.pop %v2665
    %v2679 = vmul.f32 %v2665, %v2678
    %vm2680 = vcmp.eq.f32.partialorder %v2665, inf
    %v2681 = vsel %vm2680, %v2665, %v2679
    %vm2682 = vcmp.eq.f32.partialorder %v2665, 0.0
    %v2683 = vand.u32 %v2665, 2147483648
    %v2684 = vsel %vm2682, %v2683, %v2681
    %v2685 = vrsqrt.pop %v2666
    %v2686 = vmul.f32 %v2666, %v2685
    %vm2687 = vcmp.eq.f32.partialorder %v2666, inf
    %v2688 = vsel %vm2687, %v2666, %v2686
    %vm2689 = vcmp.eq.f32.partialorder %v2666, 0.0
    %v2690 = vand.u32 %v2666, 2147483648
    %v2691 = vsel %vm2689, %v2690, %v2688
    %v2692 = vrsqrt.pop %v2667
    %v2693 = vmul.f32 %v2667, %v2692
    %vm2694 = vcmp.eq.f32.partialorder %v2667, inf
    %v2695 = vsel %vm2694, %v2667, %v2693
    %vm2696 = vcmp.eq.f32.partialorder %v2667, 0.0
    %v2697 = vand.u32 %v2667, 2147483648
    %v2698 = vsel %vm2696, %v2697, %v2695
    %v2699 = vrsqrt.pop %v2668
    %v2700 = vmul.f32 %v2668, %v2699
    %vm2701 = vcmp.eq.f32.partialorder %v2668, inf
    %v2702 = vsel %vm2701, %v2668, %v2700
    %vm2703 = vcmp.eq.f32.partialorder %v2668, 0.0
    %v2704 = vand.u32 %v2668, 2147483648
    %v2705 = vsel %vm2703, %v2704, %v2702
    %v2706 = vrsqrt.pop %v2669
    %v2707 = vmul.f32 %v2669, %v2706
    %vm2708 = vcmp.eq.f32.partialorder %v2669, inf
    %v2709 = vsel %vm2708, %v2669, %v2707
    %vm2710 = vcmp.eq.f32.partialorder %v2669, 0.0
    %v2711 = vand.u32 %v2669, 2147483648
    %v2712 = vsel %vm2710, %v2711, %v2709
    %v2713 = vrsqrt.pop %v2670
    %v2714 = vmul.f32 %v2670, %v2713
    %vm2715 = vcmp.eq.f32.partialorder %v2670, inf
    %v2716 = vsel %vm2715, %v2670, %v2714
    %vm2717 = vcmp.eq.f32.partialorder %v2670, 0.0
    %v2718 = vand.u32 %v2670, 2147483648
    %v2719 = vsel %vm2717, %v2718, %v2716
    %v2720 = vadd.f32 %v2636, %v2677
    %v2721 = vadd.f32 %v2637, %v2684
    %v2722 = vadd.f32 %v2638, %v2691
    %v2723 = vadd.f32 %v2639, %v2698
    %v2724 = vadd.f32 %v2640, %v2705
    %v2725 = vadd.f32 %v2641, %v2712
    %v2726 = vadd.f32 %v2642, %v2719
    %v2727 = vmul.f32 %v2720, 0.25
    %v2728 = vmul.f32 %v2721, 0.25
    %v2729 = vmul.f32 %v2722, 0.25
    %v2730 = vmul.f32 %v2723, 0.25
    %v2731 = vmul.f32 %v2724, 0.25
    %v2732 = vmul.f32 %v2725, 0.25
    %v2733 = vmul.f32 %v2726, 0.25
    %v2734 = vadd.f32 %v2727, 1e-06
    %v2735 = vadd.f32 %v2728, 1e-06
    %v2736 = vadd.f32 %v2729, 1e-06
    %v2737 = vadd.f32 %v2730, 1e-06
    %v2738 = vadd.f32 %v2731, 1e-06
    %v2739 = vadd.f32 %v2732, 1e-06
    %v2740 = vadd.f32 %v2733, 1e-06
    %v2741 = vrsqrt.pop %v2734
    %v2742 = vmul.f32 %v2734, %v2741
    %vm2743 = vcmp.eq.f32.partialorder %v2734, inf
    %v2744 = vsel %vm2743, %v2734, %v2742
    %vm2745 = vcmp.eq.f32.partialorder %v2734, 0.0
    %v2746 = vand.u32 %v2734, 2147483648
    %v2747 = vsel %vm2745, %v2746, %v2744
    %v2748 = vrsqrt.pop %v2735
    %v2749 = vmul.f32 %v2735, %v2748
    %vm2750 = vcmp.eq.f32.partialorder %v2735, inf
    %v2751 = vsel %vm2750, %v2735, %v2749
    %vm2752 = vcmp.eq.f32.partialorder %v2735, 0.0
    %v2753 = vand.u32 %v2735, 2147483648
    %v2754 = vsel %vm2752, %v2753, %v2751
    %v2755 = vrsqrt.pop %v2736
    %v2756 = vmul.f32 %v2736, %v2755
    %vm2757 = vcmp.eq.f32.partialorder %v2736, inf
    %v2758 = vsel %vm2757, %v2736, %v2756
    %vm2759 = vcmp.eq.f32.partialorder %v2736, 0.0
    %v2760 = vand.u32 %v2736, 2147483648
    %v2761 = vsel %vm2759, %v2760, %v2758
    %v2762 = vrsqrt.pop %v2737
    %v2763 = vmul.f32 %v2737, %v2762
    %vm2764 = vcmp.eq.f32.partialorder %v2737, inf
    %v2765 = vsel %vm2764, %v2737, %v2763
    %vm2766 = vcmp.eq.f32.partialorder %v2737, 0.0
    %v2767 = vand.u32 %v2737, 2147483648
    %v2768 = vsel %vm2766, %v2767, %v2765
    %v2769 = vrsqrt.pop %v2738
    %v2770 = vmul.f32 %v2738, %v2769
    %vm2771 = vcmp.eq.f32.partialorder %v2738, inf
    %v2772 = vsel %vm2771, %v2738, %v2770
    %vm2773 = vcmp.eq.f32.partialorder %v2738, 0.0
    %v2774 = vand.u32 %v2738, 2147483648
    %v2775 = vsel %vm2773, %v2774, %v2772
    %v2776 = vrsqrt.pop %v2739
    %v2777 = vmul.f32 %v2739, %v2776
    %vm2778 = vcmp.eq.f32.partialorder %v2739, inf
    %v2779 = vsel %vm2778, %v2739, %v2777
    %vm2780 = vcmp.eq.f32.partialorder %v2739, 0.0
    %v2781 = vand.u32 %v2739, 2147483648
    %v2782 = vsel %vm2780, %v2781, %v2779
    %v2783 = vrsqrt.pop %v2740
    %v2784 = vmul.f32 %v2740, %v2783
    %vm2785 = vcmp.eq.f32.partialorder %v2740, inf
    %v2786 = vsel %vm2785, %v2740, %v2784
    %vm2787 = vcmp.eq.f32.partialorder %v2740, 0.0
    %v2788 = vand.u32 %v2740, 2147483648
    %v2789 = vsel %vm2787, %v2788, %v2786
    %v2790 = vld [vmem:[%s3] sm:$0xff]
    %v2791 = vld [vmem:[%s3 + $0x8] sm:$0xff]
    %v2792 = vld [vmem:[%s3 + $0x10] sm:$0xff]
    %v2793 = vld [vmem:[%s3 + $0x18] sm:$0xff]
    %v2794 = vld [vmem:[%s3 + $0x20] sm:$0xff]
    %v2795 = vld [vmem:[%s3 + $0x28] sm:$0xff]
    %v2796 = vld [vmem:[%s3 + $0x30] sm:$0xff]
    %v2797 = vmul.f32 %v2790, %v2747
    %v2798 = vmul.f32 %v2791, %v2754
    %v2799 = vmul.f32 %v2792, %v2761
    %v2800 = vmul.f32 %v2793, %v2768
    %v2801 = vmul.f32 %v2794, %v2775
    %v2802 = vmul.f32 %v2795, %v2782
    %v2803 = vmul.f32 %v2796, %v2789
    %v2804 = vadd.f32 %v2797, %v2734
    %v2805 = vadd.f32 %v2798, %v2735
    %v2806 = vadd.f32 %v2799, %v2736
    %v2807 = vadd.f32 %v2800, %v2737
    %v2808 = vadd.f32 %v2801, %v2738
    %v2809 = vadd.f32 %v2802, %v2739
    %v2810 = vadd.f32 %v2803, %v2740
    %v2811 = vmax.f32 %v2804, 0.0
    %v2812 = vmax.f32 %v2805, 0.0
    %v2813 = vmax.f32 %v2806, 0.0
    %v2814 = vmax.f32 %v2807, 0.0
    %v2815 = vmax.f32 %v2808, 0.0
    %v2816 = vmax.f32 %v2809, 0.0
    %v2817 = vmax.f32 %v2810, 0.0
    %vm2818 = vcmp.ne.f32.partialorder %v2804, %v2804
    %vm2819 = vcmp.ne.f32.partialorder %v2805, %v2805
    %vm2820 = vcmp.ne.f32.partialorder %v2806, %v2806
    %vm2821 = vcmp.ne.f32.partialorder %v2807, %v2807
    %vm2822 = vcmp.ne.f32.partialorder %v2808, %v2808
    %vm2823 = vcmp.ne.f32.partialorder %v2809, %v2809
    %vm2824 = vcmp.ne.f32.partialorder %v2810, %v2810
    %v2825 = vadd.f32 %v2804, 0.0
    %v2826 = vadd.f32 %v2805, 0.0
    %v2827 = vadd.f32 %v2806, 0.0
    %v2828 = vadd.f32 %v2807, 0.0
    %v2829 = vadd.f32 %v2808, 0.0
    %v2830 = vadd.f32 %v2809, 0.0
    %v2831 = vadd.f32 %v2810, 0.0
    %v2832 = vand.u32 2147483647, %v2804
    %v2833 = vand.u32 2147483647, %v2805
    %v2834 = vand.u32 2147483647, %v2806
    %v2835 = vand.u32 2147483647, %v2807
    %v2836 = vand.u32 2147483647, %v2808
    %v2837 = vand.u32 2147483647, %v2809
    %v2838 = vand.u32 2147483647, %v2810
    %v2839 = vsub.f32 0.0, %v2832
    %v2840 = vsub.f32 0.0, %v2833
    %v2841 = vsub.f32 0.0, %v2834
    %v2842 = vsub.f32 0.0, %v2835
    %v2843 = vsub.f32 0.0, %v2836
    %v2844 = vsub.f32 0.0, %v2837
    %v2845 = vsub.f32 0.0, %v2838
    %v2846 = vmul.f32 %v2839, 1.442695
    %v2847 = vpow.pop %v2846
    %v2848 = vmul.f32 %v2840, 1.442695
    %v2849 = vpow.pop %v2848
    %v2850 = vmul.f32 %v2841, 1.442695
    %v2851 = vpow.pop %v2850
    %v2852 = vmul.f32 %v2842, 1.442695
    %v2853 = vpow.pop %v2852
    %v2854 = vmul.f32 %v2843, 1.442695
    %v2855 = vpow.pop %v2854
    %v2856 = vmul.f32 %v2844, 1.442695
    %v2857 = vpow.pop %v2856
    %v2858 = vmul.f32 %v2845, 1.442695
    %v2859 = vpow.pop %v2858
    %v2860 = vadd.f32 %v2847, 1.0
    %v2861 = vlog2.pop %v2860
    %v2862 = vmul.f32 %v2861, 0.6931472
    %v2863 = vmul.f32 -0.5, %v2847
    %v2864 = vadd.f32 %v2863, 1.0
    %v2865 = vmul.f32 %v2864, %v2847
    %v2866 = vand.u32 2147483647, %v2847
    %vm2867 = vcmp.lt.f32.partialorder %v2866, 0.0004427343
    %v2868 = vsel %vm2867, %v2865, %v2862
    %v2869 = vadd.f32 %v2849, 1.0
    %v2870 = vlog2.pop %v2869
    %v2871 = vmul.f32 %v2870, 0.6931472
    %v2872 = vmul.f32 -0.5, %v2849
    %v2873 = vadd.f32 %v2872, 1.0
    %v2874 = vmul.f32 %v2873, %v2849
    %v2875 = vand.u32 2147483647, %v2849
    %vm2876 = vcmp.lt.f32.partialorder %v2875, 0.0004427343
    %v2877 = vsel %vm2876, %v2874, %v2871
    %v2878 = vadd.f32 %v2851, 1.0
    %v2879 = vlog2.pop %v2878
    %v2880 = vmul.f32 %v2879, 0.6931472
    %v2881 = vmul.f32 -0.5, %v2851
    %v2882 = vadd.f32 %v2881, 1.0
    %v2883 = vmul.f32 %v2882, %v2851
    %v2884 = vand.u32 2147483647, %v2851
    %vm2885 = vcmp.lt.f32.partialorder %v2884, 0.0004427343
    %v2886 = vsel %vm2885, %v2883, %v2880
    %v2887 = vadd.f32 %v2853, 1.0
    %v2888 = vlog2.pop %v2887
    %v2889 = vmul.f32 %v2888, 0.6931472
    %v2890 = vmul.f32 -0.5, %v2853
    %v2891 = vadd.f32 %v2890, 1.0
    %v2892 = vmul.f32 %v2891, %v2853
    %v2893 = vand.u32 2147483647, %v2853
    %vm2894 = vcmp.lt.f32.partialorder %v2893, 0.0004427343
    %v2895 = vsel %vm2894, %v2892, %v2889
    %v2896 = vadd.f32 %v2855, 1.0
    %v2897 = vlog2.pop %v2896
    %v2898 = vmul.f32 %v2897, 0.6931472
    %v2899 = vmul.f32 -0.5, %v2855
    %v2900 = vadd.f32 %v2899, 1.0
    %v2901 = vmul.f32 %v2900, %v2855
    %v2902 = vand.u32 2147483647, %v2855
    %vm2903 = vcmp.lt.f32.partialorder %v2902, 0.0004427343
    %v2904 = vsel %vm2903, %v2901, %v2898
    %v2905 = vadd.f32 %v2857, 1.0
    %v2906 = vlog2.pop %v2905
    %v2907 = vmul.f32 %v2906, 0.6931472
    %v2908 = vmul.f32 -0.5, %v2857
    %v2909 = vadd.f32 %v2908, 1.0
    %v2910 = vmul.f32 %v2909, %v2857
    %v2911 = vand.u32 2147483647, %v2857
    %vm2912 = vcmp.lt.f32.partialorder %v2911, 0.0004427343
    %v2913 = vsel %vm2912, %v2910, %v2907
    %v2914 = vadd.f32 %v2859, 1.0
    %v2915 = vlog2.pop %v2914
    %v2916 = vmul.f32 %v2915, 0.6931472
    %v2917 = vmul.f32 -0.5, %v2859
    %v2918 = vadd.f32 %v2917, 1.0
    %v2919 = vmul.f32 %v2918, %v2859
    %v2920 = vand.u32 2147483647, %v2859
    %vm2921 = vcmp.lt.f32.partialorder %v2920, 0.0004427343
    %v2922 = vsel %vm2921, %v2919, %v2916
    %v2923 = vadd.f32 %v2811, %v2868
    %v2924 = vadd.f32 %v2812, %v2877
    %v2925 = vadd.f32 %v2813, %v2886
    %v2926 = vadd.f32 %v2814, %v2895
    %v2927 = vadd.f32 %v2815, %v2904
    %v2928 = vadd.f32 %v2816, %v2913
    %v2929 = vadd.f32 %v2817, %v2922
    %v2930 = vsel %vm2818, %v2825, %v2923
    %v2931 = vsel %vm2819, %v2826, %v2924
    %v2932 = vsel %vm2820, %v2827, %v2925
    %v2933 = vsel %vm2821, %v2828, %v2926
    %v2934 = vsel %vm2822, %v2829, %v2927
    %v2935 = vsel %vm2823, %v2830, %v2928
    %v2936 = vsel %vm2824, %v2831, %v2929
    %v2937 = vrsqrt.pop %v2930
    %v2938 = vmul.f32 %v2930, %v2937
    %vm2939 = vcmp.eq.f32.partialorder %v2930, inf
    %v2940 = vsel %vm2939, %v2930, %v2938
    %vm2941 = vcmp.eq.f32.partialorder %v2930, 0.0
    %v2942 = vand.u32 %v2930, 2147483648
    %v2943 = vsel %vm2941, %v2942, %v2940
    %v2944 = vrsqrt.pop %v2931
    %v2945 = vmul.f32 %v2931, %v2944
    %vm2946 = vcmp.eq.f32.partialorder %v2931, inf
    %v2947 = vsel %vm2946, %v2931, %v2945
    %vm2948 = vcmp.eq.f32.partialorder %v2931, 0.0
    %v2949 = vand.u32 %v2931, 2147483648
    %v2950 = vsel %vm2948, %v2949, %v2947
    %v2951 = vrsqrt.pop %v2932
    %v2952 = vmul.f32 %v2932, %v2951
    %vm2953 = vcmp.eq.f32.partialorder %v2932, inf
    %v2954 = vsel %vm2953, %v2932, %v2952
    %vm2955 = vcmp.eq.f32.partialorder %v2932, 0.0
    %v2956 = vand.u32 %v2932, 2147483648
    %v2957 = vsel %vm2955, %v2956, %v2954
    %v2958 = vrsqrt.pop %v2933
    %v2959 = vmul.f32 %v2933, %v2958
    %vm2960 = vcmp.eq.f32.partialorder %v2933, inf
    %v2961 = vsel %vm2960, %v2933, %v2959
    %vm2962 = vcmp.eq.f32.partialorder %v2933, 0.0
    %v2963 = vand.u32 %v2933, 2147483648
    %v2964 = vsel %vm2962, %v2963, %v2961
    %v2965 = vrsqrt.pop %v2934
    %v2966 = vmul.f32 %v2934, %v2965
    %vm2967 = vcmp.eq.f32.partialorder %v2934, inf
    %v2968 = vsel %vm2967, %v2934, %v2966
    %vm2969 = vcmp.eq.f32.partialorder %v2934, 0.0
    %v2970 = vand.u32 %v2934, 2147483648
    %v2971 = vsel %vm2969, %v2970, %v2968
    %v2972 = vrsqrt.pop %v2935
    %v2973 = vmul.f32 %v2935, %v2972
    %vm2974 = vcmp.eq.f32.partialorder %v2935, inf
    %v2975 = vsel %vm2974, %v2935, %v2973
    %vm2976 = vcmp.eq.f32.partialorder %v2935, 0.0
    %v2977 = vand.u32 %v2935, 2147483648
    %v2978 = vsel %vm2976, %v2977, %v2975
    %v2979 = vrsqrt.pop %v2936
    %v2980 = vmul.f32 %v2936, %v2979
    %vm2981 = vcmp.eq.f32.partialorder %v2936, inf
    %v2982 = vsel %vm2981, %v2936, %v2980
    %vm2983 = vcmp.eq.f32.partialorder %v2936, 0.0
    %v2984 = vand.u32 %v2936, 2147483648
    %v2985 = vsel %vm2983, %v2984, %v2982
    %v2986 = vmul.f32 %v2930, %v1996
    %v2987 = vmul.f32 %v2931, %v2001
    %v2988 = vmul.f32 %v2932, %v2006
    %v2989 = vmul.f32 %v2933, %v2011
    %v2990 = vmul.f32 %v2934, %v2016
    %v2991 = vmul.f32 %v2935, %v2021
    %v2992 = vmul.f32 %v2936, %v2026
    %v2993 = vmul.f32 %v2943, %v2257
    %v2994 = vmul.f32 %v2950, %v2258
    %v2995 = vmul.f32 %v2957, %v2259
    %v2996 = vmul.f32 %v2964, %v2260
    %v2997 = vmul.f32 %v2971, %v2261
    %v2998 = vmul.f32 %v2978, %v2262
    %v2999 = vmul.f32 %v2985, %v2263
    %v3000 = vld [vmem:[%s5] sm:$0xff]
    %v3001 = vld [vmem:[%s5 + $0x8] sm:$0xff]
    %v3002 = vld [vmem:[%s5 + $0x10] sm:$0xff]
    %v3003 = vld [vmem:[%s5 + $0x18] sm:$0xff]
    %v3004 = vld [vmem:[%s5 + $0x20] sm:$0xff]
    %v3005 = vld [vmem:[%s5 + $0x28] sm:$0xff]
    %v3006 = vld [vmem:[%s5 + $0x30] sm:$0xff]
    %v3007 = vmul.f32 %v3000, %v2993
    %v3008 = vmul.f32 %v3001, %v2994
    %v3009 = vmul.f32 %v3002, %v2995
    %v3010 = vmul.f32 %v3003, %v2996
    %v3011 = vmul.f32 %v3004, %v2997
    %v3012 = vmul.f32 %v3005, %v2998
    %v3013 = vmul.f32 %v3006, %v2999
    %v3014 = vadd.f32 %v3007, %v2986
    %v3015 = vadd.f32 %v3008, %v2987
    %v3016 = vadd.f32 %v3009, %v2988
    %v3017 = vadd.f32 %v3010, %v2989
    %v3018 = vadd.f32 %v3011, %v2990
    %v3019 = vadd.f32 %v3012, %v2991
    %v3020 = vadd.f32 %v3013, %v2992
    %v3021 = vmul.f32 %v3014, %v2930
    %v3022 = vmul.f32 %v3015, %v2931
    %v3023 = vmul.f32 %v3016, %v2932
    %v3024 = vmul.f32 %v3017, %v2933
    %v3025 = vmul.f32 %v3018, %v2934
    %v3026 = vmul.f32 %v3019, %v2935
    %v3027 = vmul.f32 %v3020, %v2936
    %v3028 = vmax.f32 %v3021, 0.0
    %v3029 = vmax.f32 %v3022, 0.0
    %v3030 = vmax.f32 %v3023, 0.0
    %v3031 = vmax.f32 %v3024, 0.0
    %v3032 = vmax.f32 %v3025, 0.0
    %v3033 = vmax.f32 %v3026, 0.0
    %v3034 = vmax.f32 %v3027, 0.0
    %vm3035 = vcmask 7168
    %3036 = vst.msk [vmem:[%s79] sm:$0xff] %vm3035, %v2930
    %3037 = vst.msk [vmem:[%s79 + $0x8] sm:$0xff] %vm3035, %v2931
    %3038 = vst.msk [vmem:[%s79 + $0x10] sm:$0xff] %vm3035, %v2932
    %3039 = vst.msk [vmem:[%s79 + $0x18] sm:$0xff] %vm3035, %v2933
    %3040 = vst.msk [vmem:[%s79 + $0x20] sm:$0xff] %vm3035, %v2934
    %3041 = vst.msk [vmem:[%s79 + $0x28] sm:$0xff] %vm3035, %v2935
    %3042 = vst.msk [vmem:[%s79 + $0x30] sm:$0xff] %vm3035, %v2936
    %3043 = vst.msk [vmem:[%s81] sm:$0xff] %vm3035, %v3028
    %3044 = vst.msk [vmem:[%s81 + $0x8] sm:$0xff] %vm3035, %v3029
    %3045 = vst.msk [vmem:[%s81 + $0x10] sm:$0xff] %vm3035, %v3030
    %3046 = vst.msk [vmem:[%s81 + $0x18] sm:$0xff] %vm3035, %v3031
    %3047 = vst.msk [vmem:[%s81 + $0x20] sm:$0xff] %vm3035, %v3032
    %3048 = vst.msk [vmem:[%s81 + $0x28] sm:$0xff] %vm3035, %v3033
    %3049 = vst.msk [vmem:[%s81 + $0x30] sm:$0xff] %vm3035, %v3034
    %v3050 = vld [vmem:[%s7] sm:$0x3]
    %3052 = vset.pattern.permute.xlu0 0
    %3053 = vperm.xlu0 %3052, %v3028
    %v3054 = vpop.permute.xlu0 %3053
    %3057 = vset.pattern.permute.xlu0 0
    %3058 = vperm.xlu0 %3057, %v3029
    %v3059 = vpop.permute.xlu0 %3058
    %3062 = vset.pattern.permute.xlu0 0
    %3063 = vperm.xlu0 %3062, %v3030
    %v3064 = vpop.permute.xlu0 %3063
    %3067 = vset.pattern.permute.xlu0 0
    %3068 = vperm.xlu0 %3067, %v3031
    %v3069 = vpop.permute.xlu0 %3068
    %3072 = vset.pattern.permute.xlu0 0
    %3073 = vperm.xlu0 %3072, %v3032
    %v3074 = vpop.permute.xlu0 %3073
    %3077 = vset.pattern.permute.xlu0 0
    %3078 = vperm.xlu0 %3077, %v3033
    %v3079 = vpop.permute.xlu0 %3078
    %3082 = vset.pattern.permute.xlu0 0
    %3083 = vperm.xlu0 %3082, %v3034
    %v3084 = vpop.permute.xlu0 %3083
    %v3086 = vmul.f32 %v3054, %v563
    %v3087 = vmul.f32 %v3059, %v568
    %v3088 = vmul.f32 %v3064, %v573
    %v3089 = vmul.f32 %v3069, %v578
    %v3090 = vmul.f32 %v3074, %v583
    %v3091 = vmul.f32 %v3079, %v588
    %v3092 = vmul.f32 %v3084, %v593
    %vm3093 = vcmask 457728
    %v3095 = vsel %vm3093, %v3050, 0
    %3097 = vmatprep.subr.mxu0 0.0
    %3098 = vmatpush1.msra.mxu0 0.0
    %3099 = vmatprep.subr.mxu0 0.0
    %3100 = vmatpush1.msra.mxu0 0.0
    %3101 = vmatprep.subr.mxu0 0.0
    %3102 = vmatpush1.msra.mxu0 0.0
    %3103 = vmatprep.subr.mxu0 0.0
    %3104 = vmatpush1.msra.mxu0 0.0
    %3105 = vmatprep.subr.mxu0 0.0
    %3106 = vmatpush1.msra.mxu0 0.0
    %3107 = vmatprep.subr.mxu0 0.0
    %3108 = vmatpush1.msra.mxu0 0.0
    %3109 = vmatprep.subr.mxu0 0.0
    %3110 = vmatpush1.msra.mxu0 0.0
    %3111 = vmatprep.subr.mxu0 0.0
    %3112 = vmatpush1.msra.mxu0 0.0
    %3113 = vmatprep.subr.mxu0 0.0
    %3114 = vmatpush1.msra.mxu0 0.0
    %3115 = vmatprep.subr.mxu0 0.0
    %3116 = vmatpush1.msra.mxu0 %v3092
    %3117 = vmatprep.subr.mxu0 0.0
    %3118 = vmatpush1.msra.mxu0 %v3091
    %3119 = vmatprep.subr.mxu0 0.0
    %3120 = vmatpush1.msra.mxu0 %v3090
    %3121 = vmatprep.subr.mxu0 0.0
    %3122 = vmatpush1.msra.mxu0 %v3089
    %3123 = vmatprep.subr.mxu0 0.0
    %3124 = vmatpush1.msra.mxu0 %v3088
    %3125 = vmatprep.subr.mxu0 0.0
    %3126 = vmatpush1.msra.mxu0 %v3087
    %3127 = vmatprep.subr.mxu0 0.0
    %3128 = vmatpush1.msra.mxu0 %v3086
    %3129 = vmatprep.subr.mxu0 0.0
    %3130 = vmatpush2.msra.mxu0 0.0
    %3131 = vmatprep.subr.mxu0 0.0
    %3132 = vmatpush2.msra.mxu0 0.0
    %3133 = vmatprep.subr.mxu0 0.0
    %3134 = vmatpush2.msra.mxu0 0.0
    %3135 = vmatprep.subr.mxu0 0.0
    %3136 = vmatpush2.msra.mxu0 0.0
    %3137 = vmatprep.subr.mxu0 0.0
    %3138 = vmatpush2.msra.mxu0 0.0
    %3139 = vmatprep.subr.mxu0 0.0
    %3140 = vmatpush2.msra.mxu0 0.0
    %3141 = vmatprep.subr.mxu0 0.0
    %3142 = vmatpush2.msra.mxu0 0.0
    %3143 = vmatprep.subr.mxu0 0.0
    %3144 = vmatpush2.msra.mxu0 0.0
    %3145 = vmatprep.subr.mxu0 0.0
    %3146 = vmatpush2.msra.mxu0 0.0
    %3147 = vmatprep.subr.mxu0 0.0
    %3148 = vmatpush2.msra.mxu0 0.0
    %3149 = vmatprep.subr.mxu0 0.0
    %3150 = vmatpush2.msra.mxu0 0.0
    %3151 = vmatprep.subr.mxu0 0.0
    %3152 = vmatpush2.msra.mxu0 0.0
    %3153 = vmatprep.subr.mxu0 0.0
    %3154 = vmatpush2.msra.mxu0 0.0
    %3155 = vmatprep.subr.mxu0 0.0
    %3156 = vmatpush2.msra.mxu0 0.0
    %3157 = vmatprep.subr.mxu0 0.0
    %3158 = vmatpush2.msra.mxu0 0.0
    %3159 = vmatprep.subr.mxu0 0.0
    %3160 = vmatpush2.msra.mxu0 0.0
    %3161 = vmatprep.mubr.f32.mxu0 0.0
    %3162 = vmatmul.mubr.f32.gmra.mxu0 %v3095
    %v3163 = vpop.f32.mrf.mxu0
    %v3164 = vadd.f32 0.0, %v3163
    %v3165 = vpop.f32.mrf.mxu0
    %3166 = vdwg.mxu0
    %3167 = vmatprep.subr.mxu0 0.0
    %3168 = vmatpush1.msra.mxu0 0.0
    %3169 = vmatprep.subr.mxu0 0.0
    %3170 = vmatpush1.msra.mxu0 0.0
    %3171 = vmatprep.subr.mxu0 0.0
    %3172 = vmatpush1.msra.mxu0 0.0
    %3173 = vmatprep.subr.mxu0 0.0
    %3174 = vmatpush1.msra.mxu0 0.0
    %3175 = vmatprep.subr.mxu0 0.0
    %3176 = vmatpush1.msra.mxu0 0.0
    %3177 = vmatprep.subr.mxu0 0.0
    %3178 = vmatpush1.msra.mxu0 0.0
    %3179 = vmatprep.subr.mxu0 0.0
    %3180 = vmatpush1.msra.mxu0 0.0
    %3181 = vmatprep.subr.mxu0 0.0
    %3182 = vmatpush1.msra.mxu0 0.0
    %3183 = vmatprep.subr.mxu0 0.0
    %3184 = vmatpush1.msra.mxu0 0.0
    %3185 = vmatprep.subr.mxu0 0.0
    %3186 = vmatpush1.msra.mxu0 %v3034
    %3187 = vmatprep.subr.mxu0 0.0
    %3188 = vmatpush1.msra.mxu0 %v3033
    %3189 = vmatprep.subr.mxu0 0.0
    %3190 = vmatpush1.msra.mxu0 %v3032
    %3191 = vmatprep.subr.mxu0 0.0
    %3192 = vmatpush1.msra.mxu0 %v3031
    %3193 = vmatprep.subr.mxu0 0.0
    %3194 = vmatpush1.msra.mxu0 %v3030
    %3195 = vmatprep.subr.mxu0 0.0
    %3196 = vmatpush1.msra.mxu0 %v3029
    %3197 = vmatprep.subr.mxu0 0.0
    %3198 = vmatpush1.msra.mxu0 %v3028
    %3199 = vmatprep.subr.mxu0 0.0
    %3200 = vmatpush2.msra.mxu0 0.0
    %3201 = vmatprep.subr.mxu0 0.0
    %3202 = vmatpush2.msra.mxu0 0.0
    %3203 = vmatprep.subr.mxu0 0.0
    %3204 = vmatpush2.msra.mxu0 0.0
    %3205 = vmatprep.subr.mxu0 0.0
    %3206 = vmatpush2.msra.mxu0 0.0
    %3207 = vmatprep.subr.mxu0 0.0
    %3208 = vmatpush2.msra.mxu0 0.0
    %3209 = vmatprep.subr.mxu0 0.0
    %3210 = vmatpush2.msra.mxu0 0.0
    %3211 = vmatprep.subr.mxu0 0.0
    %3212 = vmatpush2.msra.mxu0 0.0
    %3213 = vmatprep.subr.mxu0 0.0
    %3214 = vmatpush2.msra.mxu0 0.0
    %3215 = vmatprep.subr.mxu0 0.0
    %3216 = vmatpush2.msra.mxu0 0.0
    %3217 = vmatprep.subr.mxu0 0.0
    %3218 = vmatpush2.msra.mxu0 0.0
    %3219 = vmatprep.subr.mxu0 0.0
    %3220 = vmatpush2.msra.mxu0 0.0
    %3221 = vmatprep.subr.mxu0 0.0
    %3222 = vmatpush2.msra.mxu0 0.0
    %3223 = vmatprep.subr.mxu0 0.0
    %3224 = vmatpush2.msra.mxu0 0.0
    %3225 = vmatprep.subr.mxu0 0.0
    %3226 = vmatpush2.msra.mxu0 0.0
    %3227 = vmatprep.subr.mxu0 0.0
    %3228 = vmatpush2.msra.mxu0 0.0
    %3229 = vmatprep.subr.mxu0 0.0
    %3230 = vmatpush2.msra.mxu0 0.0
    %3231 = vmatprep.mubr.f32.mxu0 0.0
    %3232 = vmatmul.mubr.f32.gmra.mxu0 %v3095
    %v3233 = vpop.f32.mrf.mxu0
    %v3234 = vadd.f32 1e-06, %v3233
    %v3235 = vpop.f32.mrf.mxu0
    %3236 = vdwg.mxu0
    %3238 = vset.pattern.permute.xlu0 0
    %3239 = vperm.xlu0 %3238, %v3234
    %v3240 = vpop.permute.xlu0 %3239
    %v3242 = vrcp.pop %v3240
    %v3243 = vmul.f32 %v3164, %v3242
    %v3244 = vld [vmem:[%s73] sm:$0xff]
    %v3245 = vld [vmem:[%s73 + $0x8] sm:$0xff]
    %v3246 = vld [vmem:[%s75] sm:$0x1]
    %v3248 = vlaneseq
    %v3249 = vshrl.u32 %v3248, 7
    %v3250 = vsub.s32 0, %v3249
    %v3251 = vrot.slane %v3246, %v3250
    %v3254 = vsel %vm337, %v3243, 0
    %3256 = vmatprep.subr.mxu0 0.0
    %3257 = vmatpush1.msra.mxu0 0.0
    %3258 = vmatprep.subr.mxu0 0.0
    %3259 = vmatpush1.msra.mxu0 0.0
    %3260 = vmatprep.subr.mxu0 0.0
    %3261 = vmatpush1.msra.mxu0 0.0
    %3262 = vmatprep.subr.mxu0 0.0
    %3263 = vmatpush1.msra.mxu0 0.0
    %3264 = vmatprep.subr.mxu0 0.0
    %3265 = vmatpush1.msra.mxu0 0.0
    %3266 = vmatprep.subr.mxu0 0.0
    %3267 = vmatpush1.msra.mxu0 0.0
    %3268 = vmatprep.subr.mxu0 0.0
    %3269 = vmatpush1.msra.mxu0 0.0
    %3270 = vmatprep.subr.mxu0 0.0
    %3271 = vmatpush1.msra.mxu0 0.0
    %3272 = vmatprep.subr.mxu0 0.0
    %3273 = vmatpush1.msra.mxu0 0.0
    %3274 = vmatprep.subr.mxu0 0.0
    %3275 = vmatpush1.msra.mxu0 0.0
    %3276 = vmatprep.subr.mxu0 0.0
    %3277 = vmatpush1.msra.mxu0 0.0
    %3278 = vmatprep.subr.mxu0 0.0
    %3279 = vmatpush1.msra.mxu0 0.0
    %3280 = vmatprep.subr.mxu0 0.0
    %3281 = vmatpush1.msra.mxu0 0.0
    %3282 = vmatprep.subr.mxu0 0.0
    %3283 = vmatpush1.msra.mxu0 0.0
    %3284 = vmatprep.subr.mxu0 0.0
    %3285 = vmatpush1.msra.mxu0 %v3245
    %3286 = vmatprep.subr.mxu0 0.0
    %3287 = vmatpush1.msra.mxu0 %v3244
    %3288 = vmatprep.subr.mxu0 0.0
    %3289 = vmatpush2.msra.mxu0 0.0
    %3290 = vmatprep.subr.mxu0 0.0
    %3291 = vmatpush2.msra.mxu0 0.0
    %3292 = vmatprep.subr.mxu0 0.0
    %3293 = vmatpush2.msra.mxu0 0.0
    %3294 = vmatprep.subr.mxu0 0.0
    %3295 = vmatpush2.msra.mxu0 0.0
    %3296 = vmatprep.subr.mxu0 0.0
    %3297 = vmatpush2.msra.mxu0 0.0
    %3298 = vmatprep.subr.mxu0 0.0
    %3299 = vmatpush2.msra.mxu0 0.0
    %3300 = vmatprep.subr.mxu0 0.0
    %3301 = vmatpush2.msra.mxu0 0.0
    %3302 = vmatprep.subr.mxu0 0.0
    %3303 = vmatpush2.msra.mxu0 0.0
    %3304 = vmatprep.subr.mxu0 0.0
    %3305 = vmatpush2.msra.mxu0 0.0
    %3306 = vmatprep.subr.mxu0 0.0
    %3307 = vmatpush2.msra.mxu0 0.0
    %3308 = vmatprep.subr.mxu0 0.0
    %3309 = vmatpush2.msra.mxu0 0.0
    %3310 = vmatprep.subr.mxu0 0.0
    %3311 = vmatpush2.msra.mxu0 0.0
    %3312 = vmatprep.subr.mxu0 0.0
    %3313 = vmatpush2.msra.mxu0 0.0
    %3314 = vmatprep.subr.mxu0 0.0
    %3315 = vmatpush2.msra.mxu0 0.0
    %3316 = vmatprep.subr.mxu0 0.0
    %3317 = vmatpush2.msra.mxu0 0.0
    %3318 = vmatprep.subr.mxu0 0.0
    %3319 = vmatpush2.msra.mxu0 0.0
    %3320 = vmatprep.mubr.f32.mxu0 0.0
    %3321 = vmatmul.mubr.f32.gmra.mxu0 %v3254
    %v3322 = vpop.f32.mrf.mxu0
    %v3323 = vadd.f32 %v3251, %v3322
    %v3324 = vpop.f32.mrf.mxu0
    %3325 = vdwg.mxu0
    %vm3326 = vcmask 123904
    %3327 = vst.msk [vmem:[%s77] sm:$0x3] %vm3326, %v3323
    %v3328 = vmul.f32 %v2930, %v1083
    %v3329 = vmul.f32 %v2931, %v1088
    %v3330 = vmul.f32 %v2932, %v1093
    %v3331 = vmul.f32 %v2933, %v1098
    %v3332 = vmul.f32 %v2934, %v1103
    %v3333 = vmul.f32 %v2935, %v1108
    %v3334 = vmul.f32 %v2936, %v1113
    %v3335 = vmul.f32 %v2943, %v1344
    %v3336 = vmul.f32 %v2950, %v1345
    %v3337 = vmul.f32 %v2957, %v1346
    %v3338 = vmul.f32 %v2964, %v1347
    %v3339 = vmul.f32 %v2971, %v1348
    %v3340 = vmul.f32 %v2978, %v1349
    %v3341 = vmul.f32 %v2985, %v1350
    %v3342 = vadd.f32 %v3335, 1e-06
    %v3343 = vadd.f32 %v3336, 1e-06
    %v3344 = vadd.f32 %v3337, 1e-06
    %v3345 = vadd.f32 %v3338, 1e-06
    %v3346 = vadd.f32 %v3339, 1e-06
    %v3347 = vadd.f32 %v3340, 1e-06
    %v3348 = vadd.f32 %v3341, 1e-06
    %v3349 = vlog2.pop %v3342
    %v3350 = vmul.f32 %v3349, 0.6931472
    %v3351 = vlog2.pop %v3343
    %v3352 = vmul.f32 %v3351, 0.6931472
    %v3353 = vlog2.pop %v3344
    %v3354 = vmul.f32 %v3353, 0.6931472
    %v3355 = vlog2.pop %v3345
    %v3356 = vmul.f32 %v3355, 0.6931472
    %v3357 = vlog2.pop %v3346
    %v3358 = vmul.f32 %v3357, 0.6931472
    %v3359 = vlog2.pop %v3347
    %v3360 = vmul.f32 %v3359, 0.6931472
    %v3361 = vlog2.pop %v3348
    %v3362 = vmul.f32 %v3361, 0.6931472
    %v3363 = vmul.f32 %v3350, 2.0
    %v3364 = vmul.f32 %v3352, 2.0
    %v3365 = vmul.f32 %v3354, 2.0
    %v3366 = vmul.f32 %v3356, 2.0
    %v3367 = vmul.f32 %v3358, 2.0
    %v3368 = vmul.f32 %v3360, 2.0
    %v3369 = vmul.f32 %v3362, 2.0
    %v3370 = vadd.f32 %v2993, 1e-06
    %v3371 = vadd.f32 %v2994, 1e-06
    %v3372 = vadd.f32 %v2995, 1e-06
    %v3373 = vadd.f32 %v2996, 1e-06
    %v3374 = vadd.f32 %v2997, 1e-06
    %v3375 = vadd.f32 %v2998, 1e-06
    %v3376 = vadd.f32 %v2999, 1e-06
    %v3377 = vlog2.pop %v3370
    %v3378 = vmul.f32 %v3377, 0.6931472
    %v3379 = vlog2.pop %v3371
    %v3380 = vmul.f32 %v3379, 0.6931472
    %v3381 = vlog2.pop %v3372
    %v3382 = vmul.f32 %v3381, 0.6931472
    %v3383 = vlog2.pop %v3373
    %v3384 = vmul.f32 %v3383, 0.6931472
    %v3385 = vlog2.pop %v3374
    %v3386 = vmul.f32 %v3385, 0.6931472
    %v3387 = vlog2.pop %v3375
    %v3388 = vmul.f32 %v3387, 0.6931472
    %v3389 = vlog2.pop %v3376
    %v3390 = vmul.f32 %v3389, 0.6931472
    %v3391 = vmul.f32 %v3378, 2.0
    %v3392 = vmul.f32 %v3380, 2.0
    %v3393 = vmul.f32 %v3382, 2.0
    %v3394 = vmul.f32 %v3384, 2.0
    %v3395 = vmul.f32 %v3386, 2.0
    %v3396 = vmul.f32 %v3388, 2.0
    %v3397 = vmul.f32 %v3390, 2.0
    %v3398 = vsub.f32 %v3363, %v3391
    %v3399 = vsub.f32 %v3364, %v3392
    %v3400 = vsub.f32 %v3365, %v3393
    %v3401 = vsub.f32 %v3366, %v3394
    %v3402 = vsub.f32 %v3367, %v3395
    %v3403 = vsub.f32 %v3368, %v3396
    %v3404 = vsub.f32 %v3369, %v3397
    %v3405 = vmul.f32 %v2993, %v2993
    %v3406 = vmul.f32 %v2994, %v2994
    %v3407 = vmul.f32 %v2995, %v2995
    %v3408 = vmul.f32 %v2996, %v2996
    %v3409 = vmul.f32 %v2997, %v2997
    %v3410 = vmul.f32 %v2998, %v2998
    %v3411 = vmul.f32 %v2999, %v2999
    %v3412 = vsub.f32 %v2986, %v3328
    %v3413 = vsub.f32 %v2987, %v3329
    %v3414 = vsub.f32 %v2988, %v3330
    %v3415 = vsub.f32 %v2989, %v3331
    %v3416 = vsub.f32 %v2990, %v3332
    %v3417 = vsub.f32 %v2991, %v3333
    %v3418 = vsub.f32 %v2992, %v3334
    %v3419 = vmul.f32 %v3412, %v3412
    %v3420 = vmul.f32 %v3413, %v3413
    %v3421 = vmul.f32 %v3414, %v3414
    %v3422 = vmul.f32 %v3415, %v3415
    %v3423 = vmul.f32 %v3416, %v3416
    %v3424 = vmul.f32 %v3417, %v3417
    %v3425 = vmul.f32 %v3418, %v3418
    %v3426 = vadd.f32 %v3405, %v3419
    %v3427 = vadd.f32 %v3406, %v3420
    %v3428 = vadd.f32 %v3407, %v3421
    %v3429 = vadd.f32 %v3408, %v3422
    %v3430 = vadd.f32 %v3409, %v3423
    %v3431 = vadd.f32 %v3410, %v3424
    %v3432 = vadd.f32 %v3411, %v3425
    %v3433 = vmul.f32 %v3342, %v3342
    %v3434 = vmul.f32 %v3343, %v3343
    %v3435 = vmul.f32 %v3344, %v3344
    %v3436 = vmul.f32 %v3345, %v3345
    %v3437 = vmul.f32 %v3346, %v3346
    %v3438 = vmul.f32 %v3347, %v3347
    %v3439 = vmul.f32 %v3348, %v3348
    %v3440 = vrcp.pop %v3433
    %v3441 = vmul.f32 %v3426, %v3440
    %v3442 = vrcp.pop %v3434
    %v3443 = vmul.f32 %v3427, %v3442
    %v3444 = vrcp.pop %v3435
    %v3445 = vmul.f32 %v3428, %v3444
    %v3446 = vrcp.pop %v3436
    %v3447 = vmul.f32 %v3429, %v3446
    %v3448 = vrcp.pop %v3437
    %v3449 = vmul.f32 %v3430, %v3448
    %v3450 = vrcp.pop %v3438
    %v3451 = vmul.f32 %v3431, %v3450
    %v3452 = vrcp.pop %v3439
    %v3453 = vmul.f32 %v3432, %v3452
    %v3454 = vadd.f32 %v3398, %v3441
    %v3455 = vadd.f32 %v3399, %v3443
    %v3456 = vadd.f32 %v3400, %v3445
    %v3457 = vadd.f32 %v3401, %v3447
    %v3458 = vadd.f32 %v3402, %v3449
    %v3459 = vadd.f32 %v3403, %v3451
    %v3460 = vadd.f32 %v3404, %v3453
    %v3461 = vsub.f32 %v3454, 1.0
    %v3462 = vsub.f32 %v3455, 1.0
    %v3463 = vsub.f32 %v3456, 1.0
    %v3464 = vsub.f32 %v3457, 1.0
    %v3465 = vsub.f32 %v3458, 1.0
    %v3466 = vsub.f32 %v3459, 1.0
    %v3467 = vsub.f32 %v3460, 1.0
    %v3468 = vand.u32 2147483647, %v3461
    %v3469 = vand.u32 2147483647, %v3462
    %v3470 = vand.u32 2147483647, %v3463
    %v3471 = vand.u32 2147483647, %v3464
    %v3472 = vand.u32 2147483647, %v3465
    %v3473 = vand.u32 2147483647, %v3466
    %v3474 = vand.u32 2147483647, %v3467
    %v3475 = vsel %vm3035, %v3468, 0.0
    %v3476 = vsel %vm3035, %v3469, 0.0
    %v3477 = vadd.f32 %v3475, %v3476
    %v3478 = vsel %vm3035, %v3470, 0.0
    %v3479 = vadd.f32 %v3477, %v3478
    %v3480 = vsel %vm3035, %v3471, 0.0
    %v3481 = vadd.f32 %v3479, %v3480
    %v3482 = vsel %vm3035, %v3472, 0.0
    %v3483 = vadd.f32 %v3481, %v3482
    %v3484 = vsel %vm3035, %v3473, 0.0
    %v3485 = vadd.f32 %v3483, %v3484
    %v3486 = vsel %vm3035, %v3474, 0.0
    %v3487 = vadd.f32 %v3485, %v3486
    %v3488 = vrot.slane %v3487, 4
    %v3489 = vadd.f32 %v3487, %v3488
    %v3490 = vrot.slane %v3489, 2
    %v3491 = vadd.f32 %v3489, %v3490
    %v3492 = vrot.slane %v3491, 1
    %v3493 = vadd.f32 %v3491, %v3492
    %v3494 = vmul.f32 %v3493, 0.5
    %vm3495 = vcmask 0
    %3496 = vst.msk [vmem:[#allocation8] sm:$0x1] %vm3495, %v3494
    %3498 = vset.pattern.permute.xlu0 0
    %3499 = vperm.xlu0 %3498, %v2734
    %v3500 = vpop.permute.xlu0 %3499
    %3503 = vset.pattern.permute.xlu0 0
    %3504 = vperm.xlu0 %3503, %v2735
    %v3505 = vpop.permute.xlu0 %3504
    %3508 = vset.pattern.permute.xlu0 0
    %3509 = vperm.xlu0 %3508, %v2736
    %v3510 = vpop.permute.xlu0 %3509
    %3513 = vset.pattern.permute.xlu0 0
    %3514 = vperm.xlu0 %3513, %v2737
    %v3515 = vpop.permute.xlu0 %3514
    %3518 = vset.pattern.permute.xlu0 0
    %3519 = vperm.xlu0 %3518, %v2738
    %v3520 = vpop.permute.xlu0 %3519
    %3523 = vset.pattern.permute.xlu0 0
    %3524 = vperm.xlu0 %3523, %v2739
    %v3525 = vpop.permute.xlu0 %3524
    %3528 = vset.pattern.permute.xlu0 0
    %3529 = vperm.xlu0 %3528, %v2740
    %v3530 = vpop.permute.xlu0 %3529
    %v3532 = vsub.f32 %v1523, %v3500
    %v3533 = vsub.f32 %v1524, %v3505
    %v3534 = vsub.f32 %v1525, %v3510
    %v3535 = vsub.f32 %v1526, %v3515
    %v3536 = vsub.f32 %v1527, %v3520
    %v3537 = vsub.f32 %v1528, %v3525
    %v3538 = vsub.f32 %v1529, %v3530
    %v3539 = vadd.f32 %v2734, 1e-06
    %v3540 = vadd.f32 %v2735, 1e-06
    %v3541 = vadd.f32 %v2736, 1e-06
    %v3542 = vadd.f32 %v2737, 1e-06
    %v3543 = vadd.f32 %v2738, 1e-06
    %v3544 = vadd.f32 %v2739, 1e-06
    %v3545 = vadd.f32 %v2740, 1e-06
    %v3546 = vlog2.pop %v3539
    %v3547 = vmul.f32 %v3546, 0.6931472
    %v3548 = vlog2.pop %v3540
    %v3549 = vmul.f32 %v3548, 0.6931472
    %v3550 = vlog2.pop %v3541
    %v3551 = vmul.f32 %v3550, 0.6931472
    %v3552 = vlog2.pop %v3542
    %v3553 = vmul.f32 %v3552, 0.6931472
    %v3554 = vlog2.pop %v3543
    %v3555 = vmul.f32 %v3554, 0.6931472
    %v3556 = vlog2.pop %v3544
    %v3557 = vmul.f32 %v3556, 0.6931472
    %v3558 = vlog2.pop %v3545
    %v3559 = vmul.f32 %v3558, 0.6931472
    %v3560 = vadd.f32 %v1523, 1e-06
    %v3561 = vadd.f32 %v1524, 1e-06
    %v3562 = vadd.f32 %v1525, 1e-06
    %v3563 = vadd.f32 %v1526, 1e-06
    %v3564 = vadd.f32 %v1527, 1e-06
    %v3565 = vadd.f32 %v1528, 1e-06
    %v3566 = vadd.f32 %v1529, 1e-06
    %v3567 = vlog2.pop %v3560
    %v3568 = vmul.f32 %v3567, 0.6931472
    %v3569 = vlog2.pop %v3561
    %v3570 = vmul.f32 %v3569, 0.6931472
    %v3571 = vlog2.pop %v3562
    %v3572 = vmul.f32 %v3571, 0.6931472
    %v3573 = vlog2.pop %v3563
    %v3574 = vmul.f32 %v3573, 0.6931472
    %v3575 = vlog2.pop %v3564
    %v3576 = vmul.f32 %v3575, 0.6931472
    %v3577 = vlog2.pop %v3565
    %v3578 = vmul.f32 %v3577, 0.6931472
    %v3579 = vlog2.pop %v3566
    %v3580 = vmul.f32 %v3579, 0.6931472
    %3582 = vset.pattern.permute.xlu0 0
    %3583 = vperm.xlu0 %3582, %v3547
    %v3584 = vpop.permute.xlu0 %3583
    %3587 = vset.pattern.permute.xlu0 0
    %3588 = vperm.xlu0 %3587, %v3549
    %v3589 = vpop.permute.xlu0 %3588
    %3592 = vset.pattern.permute.xlu0 0
    %3593 = vperm.xlu0 %3592, %v3551
    %v3594 = vpop.permute.xlu0 %3593
    %3597 = vset.pattern.permute.xlu0 0
    %3598 = vperm.xlu0 %3597, %v3553
    %v3599 = vpop.permute.xlu0 %3598
    %3602 = vset.pattern.permute.xlu0 0
    %3603 = vperm.xlu0 %3602, %v3555
    %v3604 = vpop.permute.xlu0 %3603
    %3607 = vset.pattern.permute.xlu0 0
    %3608 = vperm.xlu0 %3607, %v3557
    %v3609 = vpop.permute.xlu0 %3608
    %3612 = vset.pattern.permute.xlu0 0
    %3613 = vperm.xlu0 %3612, %v3559
    %v3614 = vpop.permute.xlu0 %3613
    %v3616 = vsub.f32 %v3584, %v3568
    %v3617 = vsub.f32 %v3589, %v3570
    %v3618 = vsub.f32 %v3594, %v3572
    %v3619 = vsub.f32 %v3599, %v3574
    %v3620 = vsub.f32 %v3604, %v3576
    %v3621 = vsub.f32 %v3609, %v3578
    %v3622 = vsub.f32 %v3614, %v3580
    %v3623 = vmul.f32 %v3500, %v3616
    %v3624 = vmul.f32 %v3505, %v3617
    %v3625 = vmul.f32 %v3510, %v3618
    %v3626 = vmul.f32 %v3515, %v3619
    %v3627 = vmul.f32 %v3520, %v3620
    %v3628 = vmul.f32 %v3525, %v3621
    %v3629 = vmul.f32 %v3530, %v3622
    %v3630 = vadd.f32 %v3532, %v3623
    %v3631 = vadd.f32 %v3533, %v3624
    %v3632 = vadd.f32 %v3534, %v3625
    %v3633 = vadd.f32 %v3535, %v3626
    %v3634 = vadd.f32 %v3536, %v3627
    %v3635 = vadd.f32 %v3537, %v3628
    %v3636 = vadd.f32 %v3538, %v3629
    %v3637 = vand.u32 2147483647, %v3630
    %v3638 = vand.u32 2147483647, %v3631
    %v3639 = vand.u32 2147483647, %v3632
    %v3640 = vand.u32 2147483647, %v3633
    %v3641 = vand.u32 2147483647, %v3634
    %v3642 = vand.u32 2147483647, %v3635
    %v3643 = vand.u32 2147483647, %v3636
    %v3644 = vsel %vm337, %v3637, 0.0
    %3645 = vadd.xlane.f32.xlu0 %v3644
    %v3646 = vpop.xlane.xlu0 %3645
    %v3647 = vsel %vm337, %v3638, 0.0
    %3648 = vadd.xlane.f32.xlu0 %v3647
    %v3649 = vpop.xlane.xlu0 %3648
    %v3650 = vsel %vm337, %v3639, 0.0
    %3651 = vadd.xlane.f32.xlu0 %v3650
    %v3652 = vpop.xlane.xlu0 %3651
    %v3653 = vsel %vm337, %v3640, 0.0
    %3654 = vadd.xlane.f32.xlu0 %v3653
    %v3655 = vpop.xlane.xlu0 %3654
    %v3656 = vsel %vm337, %v3641, 0.0
    %3657 = vadd.xlane.f32.xlu0 %v3656
    %v3658 = vpop.xlane.xlu0 %3657
    %v3659 = vsel %vm337, %v3642, 0.0
    %3660 = vadd.xlane.f32.xlu0 %v3659
    %v3661 = vpop.xlane.xlu0 %3660
    %v3662 = vsel %vm337, %v3643, 0.0
    %3663 = vadd.xlane.f32.xlu0 %v3662
    %v3664 = vpop.xlane.xlu0 %3663
    %v3665 = vadd.f32 %v3646, %v3649
    %v3666 = vadd.f32 %v3665, %v3652
    %v3667 = vadd.f32 %v3666, %v3655
    %v3668 = vadd.f32 %v3667, %v3658
    %v3669 = vadd.f32 %v3668, %v3661
    %v3670 = vadd.f32 %v3669, %v3664
    %v3671 = vrot.slane %v3670, 4
    %v3672 = vadd.f32 %v3670, %v3671
    %v3673 = vrot.slane %v3672, 2
    %v3674 = vadd.f32 %v3672, %v3673
    %v3675 = vrot.slane %v3674, 1
    %v3676 = vadd.f32 %v3674, %v3675
    %3677 = vst.msk [vmem:[#allocation10] sm:$0x1] %vm3495, %v3676
    // Predicated region
    $region154: #{rtn_forward.4} parent=1 // pred_check
      _
    $region155: #{rtn_forward.4} parent=1 // pred_check_branch
      %3679 = sbr.rel (0) target = $region157
    $region156: #{rtn_forward.4} parent=1 // pred_region
      _
    $region157: #{rtn_forward.4} parent=1 // pred_fallthru
      _
    // Predicated region
    $region158: #{rtn_forward.4} parent=1 // pred_check
      _
    $region159: #{rtn_forward.4} parent=1 // pred_check_branch
      %3681 = sbr.rel (0) target = $region161
    $region160: #{rtn_forward.4} parent=1 // pred_region
      _
    $region161: #{rtn_forward.4} parent=1 // pred_fallthru
      _
    // Predicated region
    $region162: #{rtn_forward.4} parent=1 // pred_check
      _
    $region163: #{rtn_forward.4} parent=1 // pred_check_branch
      %3683 = sbr.rel (0) target = $region165
    $region164: #{rtn_forward.4} parent=1 // pred_region
      _
    $region165: #{rtn_forward.4} parent=1 // pred_fallthru
      _
    // Predicated region
    $region166: #{rtn_forward.4} parent=1 // pred_check
      _
    $region167: #{rtn_forward.4} parent=1 // pred_check_branch
      %3685 = sbr.rel (0) target = $region169
    $region168: #{rtn_forward.4} parent=1 // pred_region
      %s3687 = ssub.s32 16, 16
      %3688 = vsyncadd [#allocation9], %s3687
      %s3690 = sshll.u32 [#allocation8], 4
      %s3691 = int_to_ptr.vmem [resolvable:$true] %s3690
      %3693 = dma.vmem_to_hbm [thread:$0]  %s3691, 16, %s83, [#allocation9]
    $region169: #{rtn_forward.4} parent=1 // pred_fallthru
      _
    // Predicated region
    $region170: #{rtn_forward.4} parent=1 // pred_check
      _
    $region171: #{rtn_forward.4} parent=1 // pred_check_branch
      %3695 = sbr.rel (0) target = $region173
    $region172: #{rtn_forward.4} parent=1 // pred_region
      %s3697 = ssub.s32 16, 16
      %3698 = vsyncadd [#allocation11], %s3697
      %s3700 = sshll.u32 [#allocation10], 4
      %s3701 = int_to_ptr.vmem [resolvable:$true] %s3700
      %3703 = dma.vmem_to_hbm [thread:$0]  %s3701, 16, %s85, [#allocation11]
    $region173: #{rtn_forward.4} parent=1 // pred_fallthru
      _
    // Predicated region
    $region174: #{rtn_forward.4} parent=1 // pred_check
      _
    $region175: #{rtn_forward.4} parent=1 // pred_check_branch
      %3705 = sbr.rel (0) target = $region177
    $region176: #{rtn_forward.4} parent=1 // pred_region
      _
    $region177: #{rtn_forward.4} parent=1 // pred_fallthru
      _
    // Predicated region
    $region178: #{rtn_forward.4} parent=1 // pred_check
      _
    $region179: #{rtn_forward.4} parent=1 // pred_check_branch
      %3707 = sbr.rel (0) target = $region181
    $region180: #{rtn_forward.4} parent=1 // pred_region
      _
    $region181: #{rtn_forward.4} parent=1 // pred_fallthru
      _
    // Predicated region
    $region182: #{rtn_forward.4} parent=1 // pred_check
      _
    $region183: #{rtn_forward.4} parent=1 // pred_check_branch
      %3709 = sbr.rel (0) target = $region185
    $region184: #{rtn_forward.4} parent=1 // pred_region
      _
    $region185: #{rtn_forward.4} parent=1 // pred_fallthru
      _
    // Predicated region
    $region186: #{rtn_forward.4} parent=1 // pred_check
      _
    $region187: #{rtn_forward.4} parent=1 // pred_check_branch
      %3711 = sbr.rel (0) target = $region189
    $region188: #{rtn_forward.4} parent=1 // pred_region
      %3712 = dma.done [#allocation9], 16
    $region189: #{rtn_forward.4} parent=1 // pred_fallthru
      _
    // Predicated region
    $region190: #{rtn_forward.4} parent=1 // pred_check
      _
    $region191: #{rtn_forward.4} parent=1 // pred_check_branch
      %3714 = sbr.rel (0) target = $region193
    $region192: #{rtn_forward.4} parent=1 // pred_region
      %3715 = dma.done [#allocation11], 16
    $region193: #{rtn_forward.4} parent=1 // pred_fallthru
      _
    %3716 = vsyncpa [#allocation9], 1
    %3717 = vsyncpa [#allocation11], 1

</llo_original>
